<compile_context>
chip_gen: v7x
topology: tpu7x:2x2x1
jax: 0.10.0
libtpu: 0.0.40
codegen_flags: <defaults>
</compile_context>

<pallas_src>
import functools
import math

import jax
import jax.numpy as jnp
import numpy as np
from jax import lax
from jax.experimental import pallas as pl
from jax.experimental.pallas import tpu as pltpu


# ----------------------------------------------------------------------------
# small helpers (host-side, no Pallas)
# ----------------------------------------------------------------------------
def find_num_pools(scale, max_num=5, factor=2):
    # TODO(synk): find_num_pools is not defined in the provided spec; this
    # reconstruction returns the largest n <= max_num with factor**n <= scale
    # (scale=25, factor=2 -> 4), which matches how the module consumes it.
    n = 0
    while n < max_num and factor ** (n + 1) <= scale:
        n += 1
    return n


def _pick_row_tile(h, max_tile=64, quantum=8):
    """Largest row tile <= max_tile that is a multiple of `quantum` and divides h.

    Falls back to the full height (always a legal Pallas block shape)."""
    if h <= max_tile:
        return h
    for cand in range(max_tile, 0, -quantum):
        if h % cand == 0:
            return cand
    return h


def _interp_matrix(out_size, in_size):
    """Dense (out_size, in_size) bilinear interpolation matrix.

    Matches PyTorch bilinear with align_corners=False:
      src = (dst + 0.5) * in/out - 0.5, clamped to [0, in-1]."""
    scale = in_size / out_size
    dst = np.arange(out_size, dtype=np.float64)
    src = np.clip((dst + 0.5) * scale - 0.5, 0.0, in_size - 1)
    i0 = np.clip(np.floor(src).astype(np.int64), 0, in_size - 1)
    i1 = np.minimum(i0 + 1, in_size - 1)
    w1 = (src - i0).astype(np.float32)
    rows = np.arange(out_size, dtype=np.int64)
    m = np.zeros((out_size, in_size), dtype=np.float32)
    np.add.at(m, (rows, i0), 1.0 - w1)
    np.add.at(m, (rows, i1), w1)
    return jnp.asarray(m)


# ----------------------------------------------------------------------------
# Pallas kernel 1: 3x3 conv (NCHW) + bias + optional ReLU
# ----------------------------------------------------------------------------
def _conv3x3_kernel(w_ref, b_ref, x_ref, o_ref, *, relu):
    """One output row-tile of a 3x3 conv on one (padded) NCHW image.

    w_ref: SMEM (9*Cin*Cout,) flat weights, index ((dy*3+dx)*Cin + ci)*Cout + co
    b_ref: SMEM (Cout,)
    x_ref: VMEM (1, Cin, H+2, W+2)  padded input image (one batch element)
    o_ref: VMEM (1, Cout, TH, W)    one row-tile of the output
    """
    _, cout, th, wdt = o_ref.shape
    cin = x_ref.shape[1]
    y0 = pl.program_id(1) * th  # first output row of this tile (== padded-row offset)

    for co in range(cout):
        acc = jnp.zeros((th, wdt), dtype=jnp.float32)
        for ci in range(cin):
            for dy in range(3):
                for dx in range(3):
                    w_s = w_ref[((dy * 3 + dx) * cin + ci) * cout + co]
                    slab = x_ref[0, ci, pl.ds(y0 + dy, th), pl.ds(dx, wdt)]
                    acc = acc + w_s * slab
        acc = acc + b_ref[co]
        if relu:
            acc = jnp.maximum(acc, 0.0)
        o_ref[0, co] = acc.astype(o_ref.dtype)


def conv3x3(x, w_oihw, b, *, pad_mode, relu):
    """3x3 stride-1 conv (NCHW), padding done in the wrapper, fused bias/ReLU."""
    bsz, cin, h, wdt = x.shape
    cout = w_oihw.shape[0]
    xp = jnp.pad(x, ((0, 0), (0, 0), (1, 1), (1, 1)), mode=pad_mode)
    hp, wp = h + 2, wdt + 2
    # (Cout, Cin, 3, 3) -> flat (dy, dx, ci, co) order for SMEM scalar indexing.
    w_flat = jnp.transpose(w_oihw, (2, 3, 1, 0)).reshape(-1)

    th = _pick_row_tile(h)
    grid = (bsz, h // th)
    kernel = functools.partial(_conv3x3_kernel, relu=relu)

    # TODO(synk): for very large images the full padded image per batch element
    # exceeds v7x VMEM; that regime needs halo row-tiling of the *input* too.
    return pl.pallas_call(
        kernel,
        out_shape=jax.ShapeDtypeStruct((bsz, cout, h, wdt), x.dtype),
        grid=grid,
        in_specs=[
            pl.BlockSpec(memory_space=pltpu.MemorySpace.SMEM),          # weights
            pl.BlockSpec(memory_space=pltpu.MemorySpace.SMEM),          # bias
            pl.BlockSpec((1, cin, hp, wp), lambda nb, t: (nb, 0, 0, 0)),
        ],
        out_specs=pl.BlockSpec((1, cout, th, wdt), lambda nb, t: (nb, 0, t, 0)),
        compiler_params=pltpu.CompilerParams(
            dimension_semantics=("parallel", "parallel")),
        cost_estimate=pl.CostEstimate(
            flops=2 * bsz * h * wdt * 9 * cin * cout,
            transcendentals=0,
            bytes_accessed=4 * (bsz * cin * hp * wp + bsz * cout * h * wdt
                                + int(w_flat.size) + int(b.size)),
        ),
    )(w_flat, b, xp)


# ----------------------------------------------------------------------------
# Pallas kernel 2: per-plane matmuls for bilinear resize
# ----------------------------------------------------------------------------
def _left_matmul_kernel(m_ref, x_ref, o_ref):
    # o[0] = m @ x[0]   (interpolate along the height axis of one plane)
    o_ref[0] = jnp.dot(m_ref[...], x_ref[0],
                       preferred_element_type=jnp.float32).astype(o_ref.dtype)


def _right_matmul_kernel(x_ref, m_ref, o_ref):
    # o[0] = x[0] @ m   (interpolate along the width axis of one plane)
    o_ref[0] = jnp.dot(x_ref[0], m_ref[...],
                       preferred_element_type=jnp.float32).astype(o_ref.dtype)


def _left_matmul_planes(mat, planes):
    """out[p] = mat @ planes[p];  planes: (P, H, W), mat: (HO, H) -> (P, HO, W)."""
    p, h, w = planes.shape
    ho = mat.shape[0]
    return pl.pallas_call(
        _left_matmul_kernel,
        out_shape=jax.ShapeDtypeStruct((p, ho, w), planes.dtype),
        grid=(p,),
        in_specs=[
            pl.BlockSpec((ho, h), lambda i: (0, 0)),
            pl.BlockSpec((1, h, w), lambda i: (i, 0, 0)),
        ],
        out_specs=pl.BlockSpec((1, ho, w), lambda i: (i, 0, 0)),
        compiler_params=pltpu.CompilerParams(dimension_semantics=("parallel",)),
        cost_estimate=pl.CostEstimate(
            flops=2 * p * ho * h * w, transcendentals=0,
            bytes_accessed=4 * (p * h * w + ho * h + p * ho * w)),
    )(mat, planes)


def _right_matmul_planes(planes, mat):
    """out[p] = planes[p] @ mat;  planes: (P, H, W), mat: (W, WO) -> (P, H, WO)."""
    p, h, w = planes.shape
    wo = mat.shape[1]
    return pl.pallas_call(
        _right_matmul_kernel,
        out_shape=jax.ShapeDtypeStruct((p, h, wo), planes.dtype),
        grid=(p,),
        in_specs=[
            pl.BlockSpec((1, h, w), lambda i: (i, 0, 0)),
            pl.BlockSpec((w, wo), lambda i: (0, 0)),
        ],
        out_specs=pl.BlockSpec((1, h, wo), lambda i: (i, 0, 0)),
        compiler_params=pltpu.CompilerParams(dimension_semantics=("parallel",)),
        cost_estimate=pl.CostEstimate(
            flops=2 * p * h * w * wo, transcendentals=0,
            bytes_accessed=4 * (p * h * w + w * wo + p * h * wo)),
    )(planes, mat)


def bilinear_resize(x, out_h, out_w):
    """Bilinear resize (align_corners=False) of an NCHW tensor: Wy @ plane @ Wx^T."""
    bsz, c, h, w = x.shape
    wy = _interp_matrix(out_h, h)        # (out_h, h)
    wx_t = _interp_matrix(out_w, w).T    # (w, out_w)
    planes = x.reshape(bsz * c, h, w)
    t = _left_matmul_planes(wy, planes)  # (B*C, out_h, w)
    r = _right_matmul_planes(t, wx_t)    # (B*C, out_h, out_w)
    return r.reshape(bsz, c, out_h, out_w)


# ----------------------------------------------------------------------------
# RefineField parameters + forward
# ----------------------------------------------------------------------------
def _conv_init(key, cin, cout):
    kw, kb = jax.random.split(key)
    bound = 1.0 / math.sqrt(cin * 9)
    w = jax.random.uniform(kw, (cout, cin, 3, 3), jnp.float32, -bound, bound)
    b = jax.random.uniform(kb, (cout,), jnp.float32, -bound, bound)
    return w, b


def init_refine_field(key, lores_fields, filters, outsize, scale=25, scale_factor=2):
    n = find_num_pools(scale, max_num=5, factor=scale_factor)
    nups = min(n, len(filters))
    keys = iter(jax.random.split(key, 2 * max(nups, 1) + 3))
    params = {"nups": nups, "scale": scale, "scale_factor": scale_factor,
              "pre_ups": [], "post_ups": []}
    for i in range(nups):
        cin = lores_fields if i == 0 else filters[i - 1]
        params["pre_ups"].append(_conv_init(next(keys), cin, filters[i]))
        params["post_ups"].append(_conv_init(next(keys), filters[i], filters[i]))
    if nups == 0:
        params["embed"] = _conv_init(next(keys), lores_fields, filters[0])
    last_filt = min(max(1, nups), len(filters) - 1)
    params["pre_interp"] = _conv_init(next(keys), filters[max(0, nups - 1)],
                                      filters[last_filt])
    params["post_interp"] = _conv_init(next(keys), filters[last_filt], outsize)
    return params


def refine_field_forward(params, x):
    """Pallas forward pass.  x: (B, C, H, W) float32 (NCHW, like the PyTorch module)."""
    nups = params["nups"]
    sf = params["scale_factor"]
    if nups > 0:
        for i in range(nups):
            w, b = params["pre_ups"][i]
            x = conv3x3(x, w, b, pad_mode="constant", relu=False)   # padding='same'
            _, _, h, wdt = x.shape
            x = bilinear_resize(x, h * sf, wdt * sf)                # nn.Upsample(x2, bilinear)
            w, b = params["post_ups"][i]
            x = conv3x3(x, w, b, pad_mode="reflect", relu=True)     # ReflectionPad+Conv+ReLU
    else:
        w, b = params["embed"]
        x = conv3x3(x, w, b, pad_mode="constant", relu=False)
    w, b = params["pre_interp"]
    x = conv3x3(x, w, b, pad_mode="constant", relu=False)
    final_sf = params["scale"] / (sf ** nups)
    _, _, h, wdt = x.shape
    x = bilinear_resize(x, int(math.floor(h * final_sf)), int(math.floor(wdt * final_sf)))
    w, b = params["post_interp"]
    x = conv3x3(x, w, b, pad_mode="reflect", relu=False)
    return x


# ----------------------------------------------------------------------------
# Pure-JAX reference (mirrors the PyTorch forward) for numerical validation
# ----------------------------------------------------------------------------
def _conv3x3_ref(x, w_oihw, b, *, pad_mode, relu):
    xp = jnp.pad(x, ((0, 0), (0, 0), (1, 1), (1, 1)), mode=pad_mode)
    out = lax.conv_general_dilated(
        xp, w_oihw, window_strides=(1, 1), padding="VALID",
        dimension_numbers=("NCHW", "OIHW", "NCHW"),
        precision=lax.Precision.HIGHEST)
    out = out + b[None, :, None, None]
    return jnp.maximum(out, 0.0) if relu else out


def _bilinear_resize_ref(x, out_h, out_w):
    wy = _interp_matrix(out_h, x.shape[2])
    wx = _interp_matrix(out_w, x.shape[3])
    t = jnp.einsum("oh,bchw->bcow", wy, x, precision=lax.Precision.HIGHEST)
    return jnp.einsum("pw,bcow->bcop", wx, t, precision=lax.Precision.HIGHEST)


def refine_field_forward_ref(params, x):
    nups = params["nups"]
    sf = params["scale_factor"]
    if nups > 0:
        for i in range(nups):
            w, b = params["pre_ups"][i]
            x = _conv3x3_ref(x, w, b, pad_mode="constant", relu=False)
            _, _, h, wdt = x.shape
            x = _bilinear_resize_ref(x, h * sf, wdt * sf)
            w, b = params["post_ups"][i]
            x = _conv3x3_ref(x, w, b, pad_mode="reflect", relu=True)
    else:
        w, b = params["embed"]
        x = _conv3x3_ref(x, w, b, pad_mode="constant", relu=False)
    w, b = params["pre_interp"]
    x = _conv3x3_ref(x, w, b, pad_mode="constant", relu=False)
    final_sf = params["scale"] / (sf ** nups)
    _, _, h, wdt = x.shape
    x = _bilinear_resize_ref(x, int(math.floor(h * final_sf)),
                             int(math.floor(wdt * final_sf)))
    w, b = params["post_interp"]
    x = _conv3x3_ref(x, w, b, pad_mode="reflect", relu=False)
    return x


# ----------------------------------------------------------------------------
if __name__ == "__main__":
    key = jax.random.PRNGKey(0)
    kp, kx = jax.random.split(key)

    lores_fields, filters, outsize = 4, (8, 8), 3
    params = init_refine_field(kp, lores_fields, filters, outsize,
                               scale=25, scale_factor=2)

    # NCHW input, small spatial size; the module upsamples 8 -> 16 -> 32 -> 200.
    x = jax.random.normal(kx, (2, lores_fields, 8, 8), dtype=jnp.float32)

    out = jax.block_until_ready(refine_field_forward(params, x))
    ref = jax.block_until_ready(refine_field_forward_ref(params, x))

    assert out.shape == ref.shape and out.dtype == ref.dtype
    np.testing.assert_allclose(np.asarray(out), np.asarray(ref),
                               rtol=2e-4, atol=2e-4)
    print("KERNEL_OK")
</pallas_src>

<mosaic_0001>
module attributes {stable_mosaic.version = 11 : i64} {
  func.func @_conv3x3_kernel(%arg0: i32, %arg1: i32, %arg2: memref<288xf32, #tpu.memory_space<smem>>, %arg3: memref<8xf32, #tpu.memory_space<smem>>, %arg4: memref<1x4x10x10xf32, #tpu.memory_space<vmem>>, %arg5: memref<1x8x8x8xf32, #tpu.memory_space<vmem>>) attributes {dimension_semantics = [#tpu.dimension_semantics<parallel>, #tpu.dimension_semantics<parallel>], iteration_bounds = array<i64: 2, 1>, scalar_prefetch = 0 : i64, scratch_operands = 0 : i64, tpu.core_type = #tpu.core_type<tc>, window_params = [{transform_indices = @transform_0, window_bounds = array<i64: 288>}, {transform_indices = @transform_1, window_bounds = array<i64: 8>}, {transform_indices = @transform_2, window_bounds = array<i64: 1, 4, 10, 10>}, {transform_indices = @transform_3, window_bounds = array<i64: 1, 8, 8, 8>}]} {
    %c8_i32 = arith.constant 8 : i32
    %0 = arith.muli %arg1, %c8_i32 : i32
    %cst = arith.constant 0.000000e+00 : f32
    %1 = vector.broadcast %cst : f32 to vector<8x8xf32>
    %c0 = arith.constant 0 : index
    %2 = memref.load %arg2[%c0] : memref<288xf32, #tpu.memory_space<smem>>
    %c0_i32 = arith.constant 0 : i32
    %3 = arith.addi %0, %c0_i32 : i32
    %c0_0 = arith.constant 0 : index
    %c0_1 = arith.constant 0 : index
    %4 = arith.index_cast %3 : i32 to index
    %c0_2 = arith.constant 0 : index
    %5 = vector.load %arg4[%c0_0, %c0_1, %4, %c0_2] : memref<1x4x10x10xf32, #tpu.memory_space<vmem>>, vector<1x1x8x8xf32>
    %6 = vector.shape_cast %5 : vector<1x1x8x8xf32> to vector<8x8xf32>
    %7 = vector.broadcast %2 : f32 to vector<8x8xf32>
    %8 = arith.mulf %7, %6 : vector<8x8xf32>
    %9 = arith.addf %1, %8 : vector<8x8xf32>
    %c32 = arith.constant 32 : index
    %10 = memref.load %arg2[%c32] : memref<288xf32, #tpu.memory_space<smem>>
    %c0_i32_3 = arith.constant 0 : i32
    %11 = arith.addi %0, %c0_i32_3 : i32
    %c0_4 = arith.constant 0 : index
    %c0_5 = arith.constant 0 : index
    %12 = arith.index_cast %11 : i32 to index
    %c1 = arith.constant 1 : index
    %13 = vector.load %arg4[%c0_4, %c0_5, %12, %c1] : memref<1x4x10x10xf32, #tpu.memory_space<vmem>>, vector<1x1x8x8xf32>
    %14 = vector.shape_cast %13 : vector<1x1x8x8xf32> to vector<8x8xf32>
    %15 = vector.broadcast %10 : f32 to vector<8x8xf32>
    %16 = arith.mulf %15, %14 : vector<8x8xf32>
    %17 = arith.addf %9, %16 : vector<8x8xf32>
    %c64 = arith.constant 64 : index
    %18 = memref.load %arg2[%c64] : memref<288xf32, #tpu.memory_space<smem>>
    %c0_i32_6 = arith.constant 0 : i32
    %19 = arith.addi %0, %c0_i32_6 : i32
    %c0_7 = arith.constant 0 : index
    %c0_8 = arith.constant 0 : index
    %20 = arith.index_cast %19 : i32 to index
    %c2 = arith.constant 2 : index
    %21 = vector.load %arg4[%c0_7, %c0_8, %20, %c2] : memref<1x4x10x10xf32, #tpu.memory_space<vmem>>, vector<1x1x8x8xf32>
    %22 = vector.shape_cast %21 : vector<1x1x8x8xf32> to vector<8x8xf32>
    %23 = vector.broadcast %18 : f32 to vector<8x8xf32>
    %24 = arith.mulf %23, %22 : vector<8x8xf32>
    %25 = arith.addf %17, %24 : vector<8x8xf32>
    %c96 = arith.constant 96 : index
    %26 = memref.load %arg2[%c96] : memref<288xf32, #tpu.memory_space<smem>>
    %c1_i32 = arith.constant 1 : i32
    %27 = arith.addi %0, %c1_i32 : i32
    %c0_9 = arith.constant 0 : index
    %c0_10 = arith.constant 0 : index
    %28 = arith.index_cast %27 : i32 to index
    %c0_11 = arith.constant 0 : index
    %29 = vector.load %arg4[%c0_9, %c0_10, %28, %c0_11] : memref<1x4x10x10xf32, #tpu.memory_space<vmem>>, vector<1x1x8x8xf32>
    %30 = vector.shape_cast %29 : vector<1x1x8x8xf32> to vector<8x8xf32>
    %31 = vector.broadcast %26 : f32 to vector<8x8xf32>
    %32 = arith.mulf %31, %30 : vector<8x8xf32>
    %33 = arith.addf %25, %32 : vector<8x8xf32>
    %c128 = arith.constant 128 : index
    %34 = memref.load %arg2[%c128] : memref<288xf32, #tpu.memory_space<smem>>
    %c1_i32_12 = arith.constant 1 : i32
    %35 = arith.addi %0, %c1_i32_12 : i32
    %c0_13 = arith.constant 0 : index
    %c0_14 = arith.constant 0 : index
    %36 = arith.index_cast %35 : i32 to index
    %c1_15 = arith.constant 1 : index
    %37 = vector.load %arg4[%c0_13, %c0_14, %36, %c1_15] : memref<1x4x10x10xf32, #tpu.memory_space<vmem>>, vector<1x1x8x8xf32>
    %38 = vector.shape_cast %37 : vector<1x1x8x8xf32> to vector<8x8xf32>
    %39 = vector.broadcast %34 : f32 to vector<8x8xf32>
    %40 = arith.mulf %39, %38 : vector<8x8xf32>
    %41 = arith.addf %33, %40 : vector<8x8xf32>
    %c160 = arith.constant 160 : index
    %42 = memref.load %arg2[%c160] : memref<288xf32, #tpu.memory_space<smem>>
    %c1_i32_16 = arith.constant 1 : i32
    %43 = arith.addi %0, %c1_i32_16 : i32
    %c0_17 = arith.constant 0 : index
    %c0_18 = arith.constant 0 : index
    %44 = arith.index_cast %43 : i32 to index
    %c2_19 = arith.constant 2 : index
    %45 = vector.load %arg4[%c0_17, %c0_18, %44, %c2_19] : memref<1x4x10x10xf32, #tpu.memory_space<vmem>>, vector<1x1x8x8xf32>
    %46 = vector.shape_cast %45 : vector<1x1x8x8xf32> to vector<8x8xf32>
    %47 = vector.broadcast %42 : f32 to vector<8x8xf32>
    %48 = arith.mulf %47, %46 : vector<8x8xf32>
    %49 = arith.addf %41, %48 : vector<8x8xf32>
    %c192 = arith.constant 192 : index
    %50 = memref.load %arg2[%c192] : memref<288xf32, #tpu.memory_space<smem>>
    %c2_i32 = arith.constant 2 : i32
    %51 = arith.addi %0, %c2_i32 : i32
    %c0_20 = arith.constant 0 : index
    %c0_21 = arith.constant 0 : index
    %52 = arith.index_cast %51 : i32 to index
    %c0_22 = arith.constant 0 : index
    %53 = vector.load %arg4[%c0_20, %c0_21, %52, %c0_22] : memref<1x4x10x10xf32, #tpu.memory_space<vmem>>, vector<1x1x8x8xf32>
    %54 = vector.shape_cast %53 : vector<1x1x8x8xf32> to vector<8x8xf32>
    %55 = vector.broadcast %50 : f32 to vector<8x8xf32>
    %56 = arith.mulf %55, %54 : vector<8x8xf32>
    %57 = arith.addf %49, %56 : vector<8x8xf32>
    %c224 = arith.constant 224 : index
    %58 = memref.load %arg2[%c224] : memref<288xf32, #tpu.memory_space<smem>>
    %c2_i32_23 = arith.constant 2 : i32
    %59 = arith.addi %0, %c2_i32_23 : i32
    %c0_24 = arith.constant 0 : index
    %c0_25 = arith.constant 0 : index
    %60 = arith.index_cast %59 : i32 to index
    %c1_26 = arith.constant 1 : index
    %61 = vector.load %arg4[%c0_24, %c0_25, %60, %c1_26] : memref<1x4x10x10xf32, #tpu.memory_space<vmem>>, vector<1x1x8x8xf32>
    %62 = vector.shape_cast %61 : vector<1x1x8x8xf32> to vector<8x8xf32>
    %63 = vector.broadcast %58 : f32 to vector<8x8xf32>
    %64 = arith.mulf %63, %62 : vector<8x8xf32>
    %65 = arith.addf %57, %64 : vector<8x8xf32>
    %c256 = arith.constant 256 : index
    %66 = memref.load %arg2[%c256] : memref<288xf32, #tpu.memory_space<smem>>
    %c2_i32_27 = arith.constant 2 : i32
    %67 = arith.addi %0, %c2_i32_27 : i32
    %c0_28 = arith.constant 0 : index
    %c0_29 = arith.constant 0 : index
    %68 = arith.index_cast %67 : i32 to index
    %c2_30 = arith.constant 2 : index
    %69 = vector.load %arg4[%c0_28, %c0_29, %68, %c2_30] : memref<1x4x10x10xf32, #tpu.memory_space<vmem>>, vector<1x1x8x8xf32>
    %70 = vector.shape_cast %69 : vector<1x1x8x8xf32> to vector<8x8xf32>
    %71 = vector.broadcast %66 : f32 to vector<8x8xf32>
    %72 = arith.mulf %71, %70 : vector<8x8xf32>
    %73 = arith.addf %65, %72 : vector<8x8xf32>
    %c8 = arith.constant 8 : index
    %74 = memref.load %arg2[%c8] : memref<288xf32, #tpu.memory_space<smem>>
    %c0_i32_31 = arith.constant 0 : i32
    %75 = arith.addi %0, %c0_i32_31 : i32
    %c0_32 = arith.constant 0 : index
    %c1_33 = arith.constant 1 : index
    %76 = arith.index_cast %75 : i32 to index
    %c0_34 = arith.constant 0 : index
    %77 = vector.load %arg4[%c0_32, %c1_33, %76, %c0_34] : memref<1x4x10x10xf32, #tpu.memory_space<vmem>>, vector<1x1x8x8xf32>
    %78 = vector.shape_cast %77 : vector<1x1x8x8xf32> to vector<8x8xf32>
    %79 = vector.broadcast %74 : f32 to vector<8x8xf32>
    %80 = arith.mulf %79, %78 : vector<8x8xf32>
    %81 = arith.addf %73, %80 : vector<8x8xf32>
    %c40 = arith.constant 40 : index
    %82 = memref.load %arg2[%c40] : memref<288xf32, #tpu.memory_space<smem>>
    %c0_i32_35 = arith.constant 0 : i32
    %83 = arith.addi %0, %c0_i32_35 : i32
    %c0_36 = arith.constant 0 : index
    %c1_37 = arith.constant 1 : index
    %84 = arith.index_cast %83 : i32 to index
    %c1_38 = arith.constant 1 : index
    %85 = vector.load %arg4[%c0_36, %c1_37, %84, %c1_38] : memref<1x4x10x10xf32, #tpu.memory_space<vmem>>, vector<1x1x8x8xf32>
    %86 = vector.shape_cast %85 : vector<1x1x8x8xf32> to vector<8x8xf32>
    %87 = vector.broadcast %82 : f32 to vector<8x8xf32>
    %88 = arith.mulf %87, %86 : vector<8x8xf32>
    %89 = arith.addf %81, %88 : vector<8x8xf32>
    %c72 = arith.constant 72 : index
    %90 = memref.load %arg2[%c72] : memref<288xf32, #tpu.memory_space<smem>>
    %c0_i32_39 = arith.constant 0 : i32
    %91 = arith.addi %0, %c0_i32_39 : i32
    %c0_40 = arith.constant 0 : index
    %c1_41 = arith.constant 1 : index
    %92 = arith.index_cast %91 : i32 to index
    %c2_42 = arith.constant 2 : index
    %93 = vector.load %arg4[%c0_40, %c1_41, %92, %c2_42] : memref<1x4x10x10xf32, #tpu.memory_space<vmem>>, vector<1x1x8x8xf32>
    %94 = vector.shape_cast %93 : vector<1x1x8x8xf32> to vector<8x8xf32>
    %95 = vector.broadcast %90 : f32 to vector<8x8xf32>
    %96 = arith.mulf %95, %94 : vector<8x8xf32>
    %97 = arith.addf %89, %96 : vector<8x8xf32>
    %c104 = arith.constant 104 : index
    %98 = memref.load %arg2[%c104] : memref<288xf32, #tpu.memory_space<smem>>
    %c1_i32_43 = arith.constant 1 : i32
    %99 = arith.addi %0, %c1_i32_43 : i32
    %c0_44 = arith.constant 0 : index
    %c1_45 = arith.constant 1 : index
    %100 = arith.index_cast %99 : i32 to index
    %c0_46 = arith.constant 0 : index
    %101 = vector.load %arg4[%c0_44, %c1_45, %100, %c0_46] : memref<1x4x10x10xf32, #tpu.memory_space<vmem>>, vector<1x1x8x8xf32>
    %102 = vector.shape_cast %101 : vector<1x1x8x8xf32> to vector<8x8xf32>
    %103 = vector.broadcast %98 : f32 to vector<8x8xf32>
    %104 = arith.mulf %103, %102 : vector<8x8xf32>
    %105 = arith.addf %97, %104 : vector<8x8xf32>
    %c136 = arith.constant 136 : index
    %106 = memref.load %arg2[%c136] : memref<288xf32, #tpu.memory_space<smem>>
    %c1_i32_47 = arith.constant 1 : i32
    %107 = arith.addi %0, %c1_i32_47 : i32
    %c0_48 = arith.constant 0 : index
    %c1_49 = arith.constant 1 : index
    %108 = arith.index_cast %107 : i32 to index
    %c1_50 = arith.constant 1 : index
    %109 = vector.load %arg4[%c0_48, %c1_49, %108, %c1_50] : memref<1x4x10x10xf32, #tpu.memory_space<vmem>>, vector<1x1x8x8xf32>
    %110 = vector.shape_cast %109 : vector<1x1x8x8xf32> to vector<8x8xf32>
    %111 = vector.broadcast %106 : f32 to vector<8x8xf32>
    %112 = arith.mulf %111, %110 : vector<8x8xf32>
    %113 = arith.addf %105, %112 : vector<8x8xf32>
    %c168 = arith.constant 168 : index
    %114 = memref.load %arg2[%c168] : memref<288xf32, #tpu.memory_space<smem>>
    %c1_i32_51 = arith.constant 1 : i32
    %115 = arith.addi %0, %c1_i32_51 : i32
    %c0_52 = arith.constant 0 : index
    %c1_53 = arith.constant 1 : index
    %116 = arith.index_cast %115 : i32 to index
    %c2_54 = arith.constant 2 : index
    %117 = vector.load %arg4[%c0_52, %c1_53, %116, %c2_54] : memref<1x4x10x10xf32, #tpu.memory_space<vmem>>, vector<1x1x8x8xf32>
    %118 = vector.shape_cast %117 : vector<1x1x8x8xf32> to vector<8x8xf32>
    %119 = vector.broadcast %114 : f32 to vector<8x8xf32>
    %120 = arith.mulf %119, %118 : vector<8x8xf32>
    %121 = arith.addf %113, %120 : vector<8x8xf32>
    %c200 = arith.constant 200 : index
    %122 = memref.load %arg2[%c200] : memref<288xf32, #tpu.memory_space<smem>>
    %c2_i32_55 = arith.constant 2 : i32
    %123 = arith.addi %0, %c2_i32_55 : i32
    %c0_56 = arith.constant 0 : index
    %c1_57 = arith.constant 1 : index
    %124 = arith.index_cast %123 : i32 to index
    %c0_58 = arith.constant 0 : index
    %125 = vector.load %arg4[%c0_56, %c1_57, %124, %c0_58] : memref<1x4x10x10xf32, #tpu.memory_space<vmem>>, vector<1x1x8x8xf32>
    %126 = vector.shape_cast %125 : vector<1x1x8x8xf32> to vector<8x8xf32>
    %127 = vector.broadcast %122 : f32 to vector<8x8xf32>
    %128 = arith.mulf %127, %126 : vector<8x8xf32>
    %129 = arith.addf %121, %128 : vector<8x8xf32>
    %c232 = arith.constant 232 : index
    %130 = memref.load %arg2[%c232] : memref<288xf32, #tpu.memory_space<smem>>
    %c2_i32_59 = arith.constant 2 : i32
    %131 = arith.addi %0, %c2_i32_59 : i32
    %c0_60 = arith.constant 0 : index
    %c1_61 = arith.constant 1 : index
    %132 = arith.index_cast %131 : i32 to index
    %c1_62 = arith.constant 1 : index
    %133 = vector.load %arg4[%c0_60, %c1_61, %132, %c1_62] : memref<1x4x10x10xf32, #tpu.memory_space<vmem>>, vector<1x1x8x8xf32>
    %134 = vector.shape_cast %133 : vector<1x1x8x8xf32> to vector<8x8xf32>
    %135 = vector.broadcast %130 : f32 to vector<8x8xf32>
    %136 = arith.mulf %135, %134 : vector<8x8xf32>
    %137 = arith.addf %129, %136 : vector<8x8xf32>
    %c264 = arith.constant 264 : index
    %138 = memref.load %arg2[%c264] : memref<288xf32, #tpu.memory_space<smem>>
    %c2_i32_63 = arith.constant 2 : i32
    %139 = arith.addi %0, %c2_i32_63 : i32
    %c0_64 = arith.constant 0 : index
    %c1_65 = arith.constant 1 : index
    %140 = arith.index_cast %139 : i32 to index
    %c2_66 = arith.constant 2 : index
    %141 = vector.load %arg4[%c0_64, %c1_65, %140, %c2_66] : memref<1x4x10x10xf32, #tpu.memory_space<vmem>>, vector<1x1x8x8xf32>
    %142 = vector.shape_cast %141 : vector<1x1x8x8xf32> to vector<8x8xf32>
    %143 = vector.broadcast %138 : f32 to vector<8x8xf32>
    %144 = arith.mulf %143, %142 : vector<8x8xf32>
    %145 = arith.addf %137, %144 : vector<8x8xf32>
    %c16 = arith.constant 16 : index
    %146 = memref.load %arg2[%c16] : memref<288xf32, #tpu.memory_space<smem>>
    %c0_i32_67 = arith.constant 0 : i32
    %147 = arith.addi %0, %c0_i32_67 : i32
    %c0_68 = arith.constant 0 : index
    %c2_69 = arith.constant 2 : index
    %148 = arith.index_cast %147 : i32 to index
    %c0_70 = arith.constant 0 : index
    %149 = vector.load %arg4[%c0_68, %c2_69, %148, %c0_70] : memref<1x4x10x10xf32, #tpu.memory_space<vmem>>, vector<1x1x8x8xf32>
    %150 = vector.shape_cast %149 : vector<1x1x8x8xf32> to vector<8x8xf32>
    %151 = vector.broadcast %146 : f32 to vector<8x8xf32>
    %152 = arith.mulf %151, %150 : vector<8x8xf32>
    %153 = arith.addf %145, %152 : vector<8x8xf32>
    %c48 = arith.constant 48 : index
    %154 = memref.load %arg2[%c48] : memref<288xf32, #tpu.memory_space<smem>>
    %c0_i32_71 = arith.constant 0 : i32
    %155 = arith.addi %0, %c0_i32_71 : i32
    %c0_72 = arith.constant 0 : index
    %c2_73 = arith.constant 2 : index
    %156 = arith.index_cast %155 : i32 to index
    %c1_74 = arith.constant 1 : index
    %157 = vector.load %arg4[%c0_72, %c2_73, %156, %c1_74] : memref<1x4x10x10xf32, #tpu.memory_space<vmem>>, vector<1x1x8x8xf32>
    %158 = vector.shape_cast %157 : vector<1x1x8x8xf32> to vector<8x8xf32>
    %159 = vector.broadcast %154 : f32 to vector<8x8xf32>
    %160 = arith.mulf %159, %158 : vector<8x8xf32>
    %161 = arith.addf %153, %160 : vector<8x8xf32>
    %c80 = arith.constant 80 : index
    %162 = memref.load %arg2[%c80] : memref<288xf32, #tpu.memory_space<smem>>
    %c0_i32_75 = arith.constant 0 : i32
    %163 = arith.addi %0, %c0_i32_75 : i32
    %c0_76 = arith.constant 0 : index
    %c2_77 = arith.constant 2 : index
    %164 = arith.index_cast %163 : i32 to index
    %c2_78 = arith.constant 2 : index
    %165 = vector.load %arg4[%c0_76, %c2_77, %164, %c2_78] : memref<1x4x10x10xf32, #tpu.memory_space<vmem>>, vector<1x1x8x8xf32>
    %166 = vector.shape_cast %165 : vector<1x1x8x8xf32> to vector<8x8xf32>
    %167 = vector.broadcast %162 : f32 to vector<8x8xf32>
    %168 = arith.mulf %167, %166 : vector<8x8xf32>
    %169 = arith.addf %161, %168 : vector<8x8xf32>
    %c112 = arith.constant 112 : index
    %170 = memref.load %arg2[%c112] : memref<288xf32, #tpu.memory_space<smem>>
    %c1_i32_79 = arith.constant 1 : i32
    %171 = arith.addi %0, %c1_i32_79 : i32
    %c0_80 = arith.constant 0 : index
    %c2_81 = arith.constant 2 : index
    %172 = arith.index_cast %171 : i32 to index
    %c0_82 = arith.constant 0 : index
    %173 = vector.load %arg4[%c0_80, %c2_81, %172, %c0_82] : memref<1x4x10x10xf32, #tpu.memory_space<vmem>>, vector<1x1x8x8xf32>
    %174 = vector.shape_cast %173 : vector<1x1x8x8xf32> to vector<8x8xf32>
    %175 = vector.broadcast %170 : f32 to vector<8x8xf32>
    %176 = arith.mulf %175, %174 : vector<8x8xf32>
    %177 = arith.addf %169, %176 : vector<8x8xf32>
    %c144 = arith.constant 144 : index
    %178 = memref.load %arg2[%c144] : memref<288xf32, #tpu.memory_space<smem>>
    %c1_i32_83 = arith.constant 1 : i32
    %179 = arith.addi %0, %c1_i32_83 : i32
    %c0_84 = arith.constant 0 : index
    %c2_85 = arith.constant 2 : index
    %180 = arith.index_cast %179 : i32 to index
    %c1_86 = arith.constant 1 : index
    %181 = vector.load %arg4[%c0_84, %c2_85, %180, %c1_86] : memref<1x4x10x10xf32, #tpu.memory_space<vmem>>, vector<1x1x8x8xf32>
    %182 = vector.shape_cast %181 : vector<1x1x8x8xf32> to vector<8x8xf32>
    %183 = vector.broadcast %178 : f32 to vector<8x8xf32>
    %184 = arith.mulf %183, %182 : vector<8x8xf32>
    %185 = arith.addf %177, %184 : vector<8x8xf32>
    %c176 = arith.constant 176 : index
    %186 = memref.load %arg2[%c176] : memref<288xf32, #tpu.memory_space<smem>>
    %c1_i32_87 = arith.constant 1 : i32
    %187 = arith.addi %0, %c1_i32_87 : i32
    %c0_88 = arith.constant 0 : index
    %c2_89 = arith.constant 2 : index
    %188 = arith.index_cast %187 : i32 to index
    %c2_90 = arith.constant 2 : index
    %189 = vector.load %arg4[%c0_88, %c2_89, %188, %c2_90] : memref<1x4x10x10xf32, #tpu.memory_space<vmem>>, vector<1x1x8x8xf32>
    %190 = vector.shape_cast %189 : vector<1x1x8x8xf32> to vector<8x8xf32>
    %191 = vector.broadcast %186 : f32 to vector<8x8xf32>
    %192 = arith.mulf %191, %190 : vector<8x8xf32>
    %193 = arith.addf %185, %192 : vector<8x8xf32>
    %c208 = arith.constant 208 : index
    %194 = memref.load %arg2[%c208] : memref<288xf32, #tpu.memory_space<smem>>
    %c2_i32_91 = arith.constant 2 : i32
    %195 = arith.addi %0, %c2_i32_91 : i32
    %c0_92 = arith.constant 0 : index
    %c2_93 = arith.constant 2 : index
    %196 = arith.index_cast %195 : i32 to index
    %c0_94 = arith.constant 0 : index
    %197 = vector.load %arg4[%c0_92, %c2_93, %196, %c0_94] : memref<1x4x10x10xf32, #tpu.memory_space<vmem>>, vector<1x1x8x8xf32>
    %198 = vector.shape_cast %197 : vector<1x1x8x8xf32> to vector<8x8xf32>
    %199 = vector.broadcast %194 : f32 to vector<8x8xf32>
    %200 = arith.mulf %199, %198 : vector<8x8xf32>
    %201 = arith.addf %193, %200 : vector<8x8xf32>
    %c240 = arith.constant 240 : index
    %202 = memref.load %arg2[%c240] : memref<288xf32, #tpu.memory_space<smem>>
    %c2_i32_95 = arith.constant 2 : i32
    %203 = arith.addi %0, %c2_i32_95 : i32
    %c0_96 = arith.constant 0 : index
    %c2_97 = arith.constant 2 : index
    %204 = arith.index_cast %203 : i32 to index
    %c1_98 = arith.constant 1 : index
    %205 = vector.load %arg4[%c0_96, %c2_97, %204, %c1_98] : memref<1x4x10x10xf32, #tpu.memory_space<vmem>>, vector<1x1x8x8xf32>
    %206 = vector.shape_cast %205 : vector<1x1x8x8xf32> to vector<8x8xf32>
    %207 = vector.broadcast %202 : f32 to vector<8x8xf32>
    %208 = arith.mulf %207, %206 : vector<8x8xf32>
    %209 = arith.addf %201, %208 : vector<8x8xf32>
    %c272 = arith.constant 272 : index
    %210 = memref.load %arg2[%c272] : memref<288xf32, #tpu.memory_space<smem>>
    %c2_i32_99 = arith.constant 2 : i32
    %211 = arith.addi %0, %c2_i32_99 : i32
    %c0_100 = arith.constant 0 : index
    %c2_101 = arith.constant 2 : index
    %212 = arith.index_cast %211 : i32 to index
    %c2_102 = arith.constant 2 : index
    %213 = vector.load %arg4[%c0_100, %c2_101, %212, %c2_102] : memref<1x4x10x10xf32, #tpu.memory_space<vmem>>, vector<1x1x8x8xf32>
    %214 = vector.shape_cast %213 : vector<1x1x8x8xf32> to vector<8x8xf32>
    %215 = vector.broadcast %210 : f32 to vector<8x8xf32>
    %216 = arith.mulf %215, %214 : vector<8x8xf32>
    %217 = arith.addf %209, %216 : vector<8x8xf32>
    %c24 = arith.constant 24 : index
    %218 = memref.load %arg2[%c24] : memref<288xf32, #tpu.memory_space<smem>>
    %c0_i32_103 = arith.constant 0 : i32
    %219 = arith.addi %0, %c0_i32_103 : i32
    %c0_104 = arith.constant 0 : index
    %c3 = arith.constant 3 : index
    %220 = arith.index_cast %219 : i32 to index
    %c0_105 = arith.constant 0 : index
    %221 = vector.load %arg4[%c0_104, %c3, %220, %c0_105] : memref<1x4x10x10xf32, #tpu.memory_space<vmem>>, vector<1x1x8x8xf32>
    %222 = vector.shape_cast %221 : vector<1x1x8x8xf32> to vector<8x8xf32>
    %223 = vector.broadcast %218 : f32 to vector<8x8xf32>
    %224 = arith.mulf %223, %222 : vector<8x8xf32>
    %225 = arith.addf %217, %224 : vector<8x8xf32>
    %c56 = arith.constant 56 : index
    %226 = memref.load %arg2[%c56] : memref<288xf32, #tpu.memory_space<smem>>
    %c0_i32_106 = arith.constant 0 : i32
    %227 = arith.addi %0, %c0_i32_106 : i32
    %c0_107 = arith.constant 0 : index
    %c3_108 = arith.constant 3 : index
    %228 = arith.index_cast %227 : i32 to index
    %c1_109 = arith.constant 1 : index
    %229 = vector.load %arg4[%c0_107, %c3_108, %228, %c1_109] : memref<1x4x10x10xf32, #tpu.memory_space<vmem>>, vector<1x1x8x8xf32>
    %230 = vector.shape_cast %229 : vector<1x1x8x8xf32> to vector<8x8xf32>
    %231 = vector.broadcast %226 : f32 to vector<8x8xf32>
    %232 = arith.mulf %231, %230 : vector<8x8xf32>
    %233 = arith.addf %225, %232 : vector<8x8xf32>
    %c88 = arith.constant 88 : index
    %234 = memref.load %arg2[%c88] : memref<288xf32, #tpu.memory_space<smem>>
    %c0_i32_110 = arith.constant 0 : i32
    %235 = arith.addi %0, %c0_i32_110 : i32
    %c0_111 = arith.constant 0 : index
    %c3_112 = arith.constant 3 : index
    %236 = arith.index_cast %235 : i32 to index
    %c2_113 = arith.constant 2 : index
    %237 = vector.load %arg4[%c0_111, %c3_112, %236, %c2_113] : memref<1x4x10x10xf32, #tpu.memory_space<vmem>>, vector<1x1x8x8xf32>
    %238 = vector.shape_cast %237 : vector<1x1x8x8xf32> to vector<8x8xf32>
    %239 = vector.broadcast %234 : f32 to vector<8x8xf32>
    %240 = arith.mulf %239, %238 : vector<8x8xf32>
    %241 = arith.addf %233, %240 : vector<8x8xf32>
    %c120 = arith.constant 120 : index
    %242 = memref.load %arg2[%c120] : memref<288xf32, #tpu.memory_space<smem>>
    %c1_i32_114 = arith.constant 1 : i32
    %243 = arith.addi %0, %c1_i32_114 : i32
    %c0_115 = arith.constant 0 : index
    %c3_116 = arith.constant 3 : index
    %244 = arith.index_cast %243 : i32 to index
    %c0_117 = arith.constant 0 : index
    %245 = vector.load %arg4[%c0_115, %c3_116, %244, %c0_117] : memref<1x4x10x10xf32, #tpu.memory_space<vmem>>, vector<1x1x8x8xf32>
    %246 = vector.shape_cast %245 : vector<1x1x8x8xf32> to vector<8x8xf32>
    %247 = vector.broadcast %242 : f32 to vector<8x8xf32>
    %248 = arith.mulf %247, %246 : vector<8x8xf32>
    %249 = arith.addf %241, %248 : vector<8x8xf32>
    %c152 = arith.constant 152 : index
    %250 = memref.load %arg2[%c152] : memref<288xf32, #tpu.memory_space<smem>>
    %c1_i32_118 = arith.constant 1 : i32
    %251 = arith.addi %0, %c1_i32_118 : i32
    %c0_119 = arith.constant 0 : index
    %c3_120 = arith.constant 3 : index
    %252 = arith.index_cast %251 : i32 to index
    %c1_121 = arith.constant 1 : index
    %253 = vector.load %arg4[%c0_119, %c3_120, %252, %c1_121] : memref<1x4x10x10xf32, #tpu.memory_space<vmem>>, vector<1x1x8x8xf32>
    %254 = vector.shape_cast %253 : vector<1x1x8x8xf32> to vector<8x8xf32>
    %255 = vector.broadcast %250 : f32 to vector<8x8xf32>
    %256 = arith.mulf %255, %254 : vector<8x8xf32>
    %257 = arith.addf %249, %256 : vector<8x8xf32>
    %c184 = arith.constant 184 : index
    %258 = memref.load %arg2[%c184] : memref<288xf32, #tpu.memory_space<smem>>
    %c1_i32_122 = arith.constant 1 : i32
    %259 = arith.addi %0, %c1_i32_122 : i32
    %c0_123 = arith.constant 0 : index
    %c3_124 = arith.constant 3 : index
    %260 = arith.index_cast %259 : i32 to index
    %c2_125 = arith.constant 2 : index
    %261 = vector.load %arg4[%c0_123, %c3_124, %260, %c2_125] : memref<1x4x10x10xf32, #tpu.memory_space<vmem>>, vector<1x1x8x8xf32>
    %262 = vector.shape_cast %261 : vector<1x1x8x8xf32> to vector<8x8xf32>
    %263 = vector.broadcast %258 : f32 to vector<8x8xf32>
    %264 = arith.mulf %263, %262 : vector<8x8xf32>
    %265 = arith.addf %257, %264 : vector<8x8xf32>
    %c216 = arith.constant 216 : index
    %266 = memref.load %arg2[%c216] : memref<288xf32, #tpu.memory_space<smem>>
    %c2_i32_126 = arith.constant 2 : i32
    %267 = arith.addi %0, %c2_i32_126 : i32
    %c0_127 = arith.constant 0 : index
    %c3_128 = arith.constant 3 : index
    %268 = arith.index_cast %267 : i32 to index
    %c0_129 = arith.constant 0 : index
    %269 = vector.load %arg4[%c0_127, %c3_128, %268, %c0_129] : memref<1x4x10x10xf32, #tpu.memory_space<vmem>>, vector<1x1x8x8xf32>
    %270 = vector.shape_cast %269 : vector<1x1x8x8xf32> to vector<8x8xf32>
    %271 = vector.broadcast %266 : f32 to vector<8x8xf32>
    %272 = arith.mulf %271, %270 : vector<8x8xf32>
    %273 = arith.addf %265, %272 : vector<8x8xf32>
    %c248 = arith.constant 248 : index
    %274 = memref.load %arg2[%c248] : memref<288xf32, #tpu.memory_space<smem>>
    %c2_i32_130 = arith.constant 2 : i32
    %275 = arith.addi %0, %c2_i32_130 : i32
    %c0_131 = arith.constant 0 : index
    %c3_132 = arith.constant 3 : index
    %276 = arith.index_cast %275 : i32 to index
    %c1_133 = arith.constant 1 : index
    %277 = vector.load %arg4[%c0_131, %c3_132, %276, %c1_133] : memref<1x4x10x10xf32, #tpu.memory_space<vmem>>, vector<1x1x8x8xf32>
    %278 = vector.shape_cast %277 : vector<1x1x8x8xf32> to vector<8x8xf32>
    %279 = vector.broadcast %274 : f32 to vector<8x8xf32>
    %280 = arith.mulf %279, %278 : vector<8x8xf32>
    %281 = arith.addf %273, %280 : vector<8x8xf32>
    %c280 = arith.constant 280 : index
    %282 = memref.load %arg2[%c280] : memref<288xf32, #tpu.memory_space<smem>>
    %c2_i32_134 = arith.constant 2 : i32
    %283 = arith.addi %0, %c2_i32_134 : i32
    %c0_135 = arith.constant 0 : index
    %c3_136 = arith.constant 3 : index
    %284 = arith.index_cast %283 : i32 to index
    %c2_137 = arith.constant 2 : index
    %285 = vector.load %arg4[%c0_135, %c3_136, %284, %c2_137] : memref<1x4x10x10xf32, #tpu.memory_space<vmem>>, vector<1x1x8x8xf32>
    %286 = vector.shape_cast %285 : vector<1x1x8x8xf32> to vector<8x8xf32>
    %287 = vector.broadcast %282 : f32 to vector<8x8xf32>
    %288 = arith.mulf %287, %286 : vector<8x8xf32>
    %289 = arith.addf %281, %288 : vector<8x8xf32>
    %c0_138 = arith.constant 0 : index
    %290 = memref.load %arg3[%c0_138] : memref<8xf32, #tpu.memory_space<smem>>
    %291 = vector.broadcast %290 : f32 to vector<8x8xf32>
    %292 = arith.addf %289, %291 : vector<8x8xf32>
    %c0_139 = arith.constant 0 : index
    %c0_140 = arith.constant 0 : index
    %c0_141 = arith.constant 0 : index
    %c0_142 = arith.constant 0 : index
    %293 = vector.load %arg5[%c0_139, %c0_140, %c0_141, %c0_142] : memref<1x8x8x8xf32, #tpu.memory_space<vmem>>, vector<1x1x8x8xf32>
    %294 = vector.shape_cast %293 : vector<1x1x8x8xf32> to vector<8x8xf32>
    %295 = vector.shape_cast %292 : vector<8x8xf32> to vector<1x1x8x8xf32>
    tpu.vector_store %arg5[%c0_139, %c0_140, %c0_141, %c0_142], %295 {strides = array<i32>} : memref<1x8x8x8xf32, #tpu.memory_space<vmem>>, vector<1x1x8x8xf32>,
    %cst_143 = arith.constant 0.000000e+00 : f32
    %296 = vector.broadcast %cst_143 : f32 to vector<8x8xf32>
    %c1_144 = arith.constant 1 : index
    %297 = memref.load %arg2[%c1_144] : memref<288xf32, #tpu.memory_space<smem>>
    %c0_i32_145 = arith.constant 0 : i32
    %298 = arith.addi %0, %c0_i32_145 : i32
    %c0_146 = arith.constant 0 : index
    %c0_147 = arith.constant 0 : index
    %299 = arith.index_cast %298 : i32 to index
    %c0_148 = arith.constant 0 : index
    %300 = vector.load %arg4[%c0_146, %c0_147, %299, %c0_148] : memref<1x4x10x10xf32, #tpu.memory_space<vmem>>, vector<1x1x8x8xf32>
    %301 = vector.shape_cast %300 : vector<1x1x8x8xf32> to vector<8x8xf32>
    %302 = vector.broadcast %297 : f32 to vector<8x8xf32>
    %303 = arith.mulf %302, %301 : vector<8x8xf32>
    %304 = arith.addf %296, %303 : vector<8x8xf32>
    %c33 = arith.constant 33 : index
    %305 = memref.load %arg2[%c33] : memref<288xf32, #tpu.memory_space<smem>>
    %c0_i32_149 = arith.constant 0 : i32
    %306 = arith.addi %0, %c0_i32_149 : i32
    %c0_150 = arith.constant 0 : index
    %c0_151 = arith.constant 0 : index
    %307 = arith.index_cast %306 : i32 to index
    %c1_152 = arith.constant 1 : index
    %308 = vector.load %arg4[%c0_150, %c0_151, %307, %c1_152] : memref<1x4x10x10xf32, #tpu.memory_space<vmem>>, vector<1x1x8x8xf32>
    %309 = vector.shape_cast %308 : vector<1x1x8x8xf32> to vector<8x8xf32>
    %310 = vector.broadcast %305 : f32 to vector<8x8xf32>
    %311 = arith.mulf %310, %309 : vector<8x8xf32>
    %312 = arith.addf %304, %311 : vector<8x8xf32>
    %c65 = arith.constant 65 : index
    %313 = memref.load %arg2[%c65] : memref<288xf32, #tpu.memory_space<smem>>
    %c0_i32_153 = arith.constant 0 : i32
    %314 = arith.addi %0, %c0_i32_153 : i32
    %c0_154 = arith.constant 0 : index
    %c0_155 = arith.constant 0 : index
    %315 = arith.index_cast %314 : i32 to index
    %c2_156 = arith.constant 2 : index
    %316 = vector.load %arg4[%c0_154, %c0_155, %315, %c2_156] : memref<1x4x10x10xf32, #tpu.memory_space<vmem>>, vector<1x1x8x8xf32>
    %317 = vector.shape_cast %316 : vector<1x1x8x8xf32> to vector<8x8xf32>
    %318 = vector.broadcast %313 : f32 to vector<8x8xf32>
    %319 = arith.mulf %318, %317 : vector<8x8xf32>
    %320 = arith.addf %312, %319 : vector<8x8xf32>
    %c97 = arith.constant 97 : index
    %321 = memref.load %arg2[%c97] : memref<288xf32, #tpu.memory_space<smem>>
    %c1_i32_157 = arith.constant 1 : i32
    %322 = arith.addi %0, %c1_i32_157 : i32
    %c0_158 = arith.constant 0 : index
    %c0_159 = arith.constant 0 : index
    %323 = arith.index_cast %322 : i32 to index
    %c0_160 = arith.constant 0 : index
    %324 = vector.load %arg4[%c0_158, %c0_159, %323, %c0_160] : memref<1x4x10x10xf32, #tpu.memory_space<vmem>>, vector<1x1x8x8xf32>
    %325 = vector.shape_cast %324 : vector<1x1x8x8xf32> to vector<8x8xf32>
    %326 = vector.broadcast %321 : f32 to vector<8x8xf32>
    %327 = arith.mulf %326, %325 : vector<8x8xf32>
    %328 = arith.addf %320, %327 : vector<8x8xf32>
    %c129 = arith.constant 129 : index
    %329 = memref.load %arg2[%c129] : memref<288xf32, #tpu.memory_space<smem>>
    %c1_i32_161 = arith.constant 1 : i32
    %330 = arith.addi %0, %c1_i32_161 : i32
    %c0_162 = arith.constant 0 : index
    %c0_163 = arith.constant 0 : index
    %331 = arith.index_cast %330 : i32 to index
    %c1_164 = arith.constant 1 : index
    %332 = vector.load %arg4[%c0_162, %c0_163, %331, %c1_164] : memref<1x4x10x10xf32, #tpu.memory_space<vmem>>, vector<1x1x8x8xf32>
    %333 = vector.shape_cast %332 : vector<1x1x8x8xf32> to vector<8x8xf32>
    %334 = vector.broadcast %329 : f32 to vector<8x8xf32>
    %335 = arith.mulf %334, %333 : vector<8x8xf32>
    %336 = arith.addf %328, %335 : vector<8x8xf32>
    %c161 = arith.constant 161 : index
    %337 = memref.load %arg2[%c161] : memref<288xf32, #tpu.memory_space<smem>>
    %c1_i32_165 = arith.constant 1 : i32
    %338 = arith.addi %0, %c1_i32_165 : i32
    %c0_166 = arith.constant 0 : index
    %c0_167 = arith.constant 0 : index
    %339 = arith.index_cast %338 : i32 to index
    %c2_168 = arith.constant 2 : index
    %340 = vector.load %arg4[%c0_166, %c0_167, %339, %c2_168] : memref<1x4x10x10xf32, #tpu.memory_space<vmem>>, vector<1x1x8x8xf32>
    %341 = vector.shape_cast %340 : vector<1x1x8x8xf32> to vector<8x8xf32>
    %342 = vector.broadcast %337 : f32 to vector<8x8xf32>
    %343 = arith.mulf %342, %341 : vector<8x8xf32>
    %344 = arith.addf %336, %343 : vector<8x8xf32>
    %c193 = arith.constant 193 : index
    %345 = memref.load %arg2[%c193] : memref<288xf32, #tpu.memory_space<smem>>
    %c2_i32_169 = arith.constant 2 : i32
    %346 = arith.addi %0, %c2_i32_169 : i32
    %c0_170 = arith.constant 0 : index
    %c0_171 = arith.constant 0 : index
    %347 = arith.index_cast %346 : i32 to index
    %c0_172 = arith.constant 0 : index
    %348 = vector.load %arg4[%c0_170, %c0_171, %347, %c0_172] : memref<1x4x10x10xf32, #tpu.memory_space<vmem>>, vector<1x1x8x8xf32>
    %349 = vector.shape_cast %348 : vector<1x1x8x8xf32> to vector<8x8xf32>
    %350 = vector.broadcast %345 : f32 to vector<8x8xf32>
    %351 = arith.mulf %350, %349 : vector<8x8xf32>
    %352 = arith.addf %344, %351 : vector<8x8xf32>
    %c225 = arith.constant 225 : index
    %353 = memref.load %arg2[%c225] : memref<288xf32, #tpu.memory_space<smem>>
    %c2_i32_173 = arith.constant 2 : i32
    %354 = arith.addi %0, %c2_i32_173 : i32
    %c0_174 = arith.constant 0 : index
    %c0_175 = arith.constant 0 : index
    %355 = arith.index_cast %354 : i32 to index
    %c1_176 = arith.constant 1 : index
    %356 = vector.load %arg4[%c0_174, %c0_175, %355, %c1_176] : memref<1x4x10x10xf32, #tpu.memory_space<vmem>>, vector<1x1x8x8xf32>
    %357 = vector.shape_cast %356 : vector<1x1x8x8xf32> to vector<8x8xf32>
    %358 = vector.broadcast %353 : f32 to vector<8x8xf32>
    %359 = arith.mulf %358, %357 : vector<8x8xf32>
    %360 = arith.addf %352, %359 : vector<8x8xf32>
    %c257 = arith.constant 257 : index
    %361 = memref.load %arg2[%c257] : memref<288xf32, #tpu.memory_space<smem>>
    %c2_i32_177 = arith.constant 2 : i32
    %362 = arith.addi %0, %c2_i32_177 : i32
    %c0_178 = arith.constant 0 : index
    %c0_179 = arith.constant 0 : index
    %363 = arith.index_cast %362 : i32 to index
    %c2_180 = arith.constant 2 : index
    %364 = vector.load %arg4[%c0_178, %c0_179, %363, %c2_180] : memref<1x4x10x10xf32, #tpu.memory_space<vmem>>, vector<1x1x8x8xf32>
    %365 = vector.shape_cast %364 : vector<1x1x8x8xf32> to vector<8x8xf32>
    %366 = vector.broadcast %361 : f32 to vector<8x8xf32>
    %367 = arith.mulf %366, %365 : vector<8x8xf32>
    %368 = arith.addf %360, %367 : vector<8x8xf32>
    %c9 = arith.constant 9 : index
    %369 = memref.load %arg2[%c9] : memref<288xf32, #tpu.memory_space<smem>>
    %c0_i32_181 = arith.constant 0 : i32
    %370 = arith.addi %0, %c0_i32_181 : i32
    %c0_182 = arith.constant 0 : index
    %c1_183 = arith.constant 1 : index
    %371 = arith.index_cast %370 : i32 to index
    %c0_184 = arith.constant 0 : index
    %372 = vector.load %arg4[%c0_182, %c1_183, %371, %c0_184] : memref<1x4x10x10xf32, #tpu.memory_space<vmem>>, vector<1x1x8x8xf32>
    %373 = vector.shape_cast %372 : vector<1x1x8x8xf32> to vector<8x8xf32>
    %374 = vector.broadcast %369 : f32 to vector<8x8xf32>
    %375 = arith.mulf %374, %373 : vector<8x8xf32>
    %376 = arith.addf %368, %375 : vector<8x8xf32>
    %c41 = arith.constant 41 : index
    %377 = memref.load %arg2[%c41] : memref<288xf32, #tpu.memory_space<smem>>
    %c0_i32_185 = arith.constant 0 : i32
    %378 = arith.addi %0, %c0_i32_185 : i32
    %c0_186 = arith.constant 0 : index
    %c1_187 = arith.constant 1 : index
    %379 = arith.index_cast %378 : i32 to index
    %c1_188 = arith.constant 1 : index
    %380 = vector.load %arg4[%c0_186, %c1_187, %379, %c1_188] : memref<1x4x10x10xf32, #tpu.memory_space<vmem>>, vector<1x1x8x8xf32>
    %381 = vector.shape_cast %380 : vector<1x1x8x8xf32> to vector<8x8xf32>
    %382 = vector.broadcast %377 : f32 to vector<8x8xf32>
    %383 = arith.mulf %382, %381 : vector<8x8xf32>
    %384 = arith.addf %376, %383 : vector<8x8xf32>
    %c73 = arith.constant 73 : index
    %385 = memref.load %arg2[%c73] : memref<288xf32, #tpu.memory_space<smem>>
    %c0_i32_189 = arith.constant 0 : i32
    %386 = arith.addi %0, %c0_i32_189 : i32
    %c0_190 = arith.constant 0 : index
    %c1_191 = arith.constant 1 : index
    %387 = arith.index_cast %386 : i32 to index
    %c2_192 = arith.constant 2 : index
    %388 = vector.load %arg4[%c0_190, %c1_191, %387, %c2_192] : memref<1x4x10x10xf32, #tpu.memory_space<vmem>>, vector<1x1x8x8xf32>
    %389 = vector.shape_cast %388 : vector<1x1x8x8xf32> to vector<8x8xf32>
    %390 = vector.broadcast %385 : f32 to vector<8x8xf32>
    %391 = arith.mulf %390, %389 : vector<8x8xf32>
    %392 = arith.addf %384, %391 : vector<8x8xf32>
    %c105 = arith.constant 105 : index
    %393 = memref.load %arg2[%c105] : memref<288xf32, #tpu.memory_space<smem>>
    %c1_i32_193 = arith.constant 1 : i32
    %394 = arith.addi %0, %c1_i32_193 : i32
    %c0_194 = arith.constant 0 : index
    %c1_195 = arith.constant 1 : index
    %395 = arith.index_cast %394 : i32 to index
    %c0_196 = arith.constant 0 : index
    %396 = vector.load %arg4[%c0_194, %c1_195, %395, %c0_196] : memref<1x4x10x10xf32, #tpu.memory_space<vmem>>, vector<1x1x8x8xf32>
    %397 = vector.shape_cast %396 : vector<1x1x8x8xf32> to vector<8x8xf32>
    %398 = vector.broadcast %393 : f32 to vector<8x8xf32>
    %399 = arith.mulf %398, %397 : vector<8x8xf32>
    %400 = arith.addf %392, %399 : vector<8x8xf32>
    %c137 = arith.constant 137 : index
    %401 = memref.load %arg2[%c137] : memref<288xf32, #tpu.memory_space<smem>>
    %c1_i32_197 = arith.constant 1 : i32
    %402 = arith.addi %0, %c1_i32_197 : i32
    %c0_198 = arith.constant 0 : index
    %c1_199 = arith.constant 1 : index
    %403 = arith.index_cast %402 : i32 to index
    %c1_200 = arith.constant 1 : index
    %404 = vector.load %arg4[%c0_198, %c1_199, %403, %c1_200] : memref<1x4x10x10xf32, #tpu.memory_space<vmem>>, vector<1x1x8x8xf32>
    %405 = vector.shape_cast %404 : vector<1x1x8x8xf32> to vector<8x8xf32>
    %406 = vector.broadcast %401 : f32 to vector<8x8xf32>
    %407 = arith.mulf %406, %405 : vector<8x8xf32>
    %408 = arith.addf %400, %407 : vector<8x8xf32>
    %c169 = arith.constant 169 : index
    %409 = memref.load %arg2[%c169] : memref<288xf32, #tpu.memory_space<smem>>
    %c1_i32_201 = arith.constant 1 : i32
    %410 = arith.addi %0, %c1_i32_201 : i32
    %c0_202 = arith.constant 0 : index
    %c1_203 = arith.constant 1 : index
    %411 = arith.index_cast %410 : i32 to index
    %c2_204 = arith.constant 2 : index
    %412 = vector.load %arg4[%c0_202, %c1_203, %411, %c2_204] : memref<1x4x10x10xf32, #tpu.memory_space<vmem>>, vector<1x1x8x8xf32>
    %413 = vector.shape_cast %412 : vector<1x1x8x8xf32> to vector<8x8xf32>
    %414 = vector.broadcast %409 : f32 to vector<8x8xf32>
    %415 = arith.mulf %414, %413 : vector<8x8xf32>
    %416 = arith.addf %408, %415 : vector<8x8xf32>
    %c201 = arith.constant 201 : index
    %417 = memref.load %arg2[%c201] : memref<288xf32, #tpu.memory_space<smem>>
    %c2_i32_205 = arith.constant 2 : i32
    %418 = arith.addi %0, %c2_i32_205 : i32
    %c0_206 = arith.constant 0 : index
    %c1_207 = arith.constant 1 : index
    %419 = arith.index_cast %418 : i32 to index
    %c0_208 = arith.constant 0 : index
    %420 = vector.load %arg4[%c0_206, %c1_207, %419, %c0_208] : memref<1x4x10x10xf32, #tpu.memory_space<vmem>>, vector<1x1x8x8xf32>
    %421 = vector.shape_cast %420 : vector<1x1x8x8xf32> to vector<8x8xf32>
    %422 = vector.broadcast %417 : f32 to vector<8x8xf32>
    %423 = arith.mulf %422, %421 : vector<8x8xf32>
    %424 = arith.addf %416, %423 : vector<8x8xf32>
    %c233 = arith.constant 233 : index
    %425 = memref.load %arg2[%c233] : memref<288xf32, #tpu.memory_space<smem>>
    %c2_i32_209 = arith.constant 2 : i32
    %426 = arith.addi %0, %c2_i32_209 : i32
    %c0_210 = arith.constant 0 : index
    %c1_211 = arith.constant 1 : index
    %427 = arith.index_cast %426 : i32 to index
    %c1_212 = arith.constant 1 : index
    %428 = vector.load %arg4[%c0_210, %c1_211, %427, %c1_212] : memref<1x4x10x10xf32, #tpu.memory_space<vmem>>, vector<1x1x8x8xf32>
    %429 = vector.shape_cast %428 : vector<1x1x8x8xf32> to vector<8x8xf32>
    %430 = vector.broadcast %425 : f32 to vector<8x8xf32>
    %431 = arith.mulf %430, %429 : vector<8x8xf32>
    %432 = arith.addf %424, %431 : vector<8x8xf32>
    %c265 = arith.constant 265 : index
    %433 = memref.load %arg2[%c265] : memref<288xf32, #tpu.memory_space<smem>>
    %c2_i32_213 = arith.constant 2 : i32
    %434 = arith.addi %0, %c2_i32_213 : i32
    %c0_214 = arith.constant 0 : index
    %c1_215 = arith.constant 1 : index
    %435 = arith.index_cast %434 : i32 to index
    %c2_216 = arith.constant 2 : index
    %436 = vector.load %arg4[%c0_214, %c1_215, %435, %c2_216] : memref<1x4x10x10xf32, #tpu.memory_space<vmem>>, vector<1x1x8x8xf32>
    %437 = vector.shape_cast %436 : vector<1x1x8x8xf32> to vector<8x8xf32>
    %438 = vector.broadcast %433 : f32 to vector<8x8xf32>
    %439 = arith.mulf %438, %437 : vector<8x8xf32>
    %440 = arith.addf %432, %439 : vector<8x8xf32>
    %c17 = arith.constant 17 : index
    %441 = memref.load %arg2[%c17] : memref<288xf32, #tpu.memory_space<smem>>
    %c0_i32_217 = arith.constant 0 : i32
    %442 = arith.addi %0, %c0_i32_217 : i32
    %c0_218 = arith.constant 0 : index
    %c2_219 = arith.constant 2 : index
    %443 = arith.index_cast %442 : i32 to index
    %c0_220 = arith.constant 0 : index
    %444 = vector.load %arg4[%c0_218, %c2_219, %443, %c0_220] : memref<1x4x10x10xf32, #tpu.memory_space<vmem>>, vector<1x1x8x8xf32>
    %445 = vector.shape_cast %444 : vector<1x1x8x8xf32> to vector<8x8xf32>
    %446 = vector.broadcast %441 : f32 to vector<8x8xf32>
    %447 = arith.mulf %446, %445 : vector<8x8xf32>
    %448 = arith.addf %440, %447 : vector<8x8xf32>
    %c49 = arith.constant 49 : index
    %449 = memref.load %arg2[%c49] : memref<288xf32, #tpu.memory_space<smem>>
    %c0_i32_221 = arith.constant 0 : i32
    %450 = arith.addi %0, %c0_i32_221 : i32
    %c0_222 = arith.constant 0 : index
    %c2_223 = arith.constant 2 : index
    %451 = arith.index_cast %450 : i32 to index
    %c1_224 = arith.constant 1 : index
    %452 = vector.load %arg4[%c0_222, %c2_223, %451, %c1_224] : memref<1x4x10x10xf32, #tpu.memory_space<vmem>>, vector<1x1x8x8xf32>
    %453 = vector.shape_cast %452 : vector<1x1x8x8xf32> to vector<8x8xf32>
    %454 = vector.broadcast %449 : f32 to vector<8x8xf32>
    %455 = arith.mulf %454, %453 : vector<8x8xf32>
    %456 = arith.addf %448, %455 : vector<8x8xf32>
    %c81 = arith.constant 81 : index
    %457 = memref.load %arg2[%c81] : memref<288xf32, #tpu.memory_space<smem>>
    %c0_i32_225 = arith.constant 0 : i32
    %458 = arith.addi %0, %c0_i32_225 : i32
    %c0_226 = arith.constant 0 : index
    %c2_227 = arith.constant 2 : index
    %459 = arith.index_cast %458 : i32 to index
    %c2_228 = arith.constant 2 : index
    %460 = vector.load %arg4[%c0_226, %c2_227, %459, %c2_228] : memref<1x4x10x10xf32, #tpu.memory_space<vmem>>, vector<1x1x8x8xf32>
    %461 = vector.shape_cast %460 : vector<1x1x8x8xf32> to vector<8x8xf32>
    %462 = vector.broadcast %457 : f32 to vector<8x8xf32>
    %463 = arith.mulf %462, %461 : vector<8x8xf32>
    %464 = arith.addf %456, %463 : vector<8x8xf32>
    %c113 = arith.constant 113 : index
    %465 = memref.load %arg2[%c113] : memref<288xf32, #tpu.memory_space<smem>>
    %c1_i32_229 = arith.constant 1 : i32
    %466 = arith.addi %0, %c1_i32_229 : i32
    %c0_230 = arith.constant 0 : index
    %c2_231 = arith.constant 2 : index
    %467 = arith.index_cast %466 : i32 to index
    %c0_232 = arith.constant 0 : index
    %468 = vector.load %arg4[%c0_230, %c2_231, %467, %c0_232] : memref<1x4x10x10xf32, #tpu.memory_space<vmem>>, vector<1x1x8x8xf32>
    %469 = vector.shape_cast %468 : vector<1x1x8x8xf32> to vector<8x8xf32>
    %470 = vector.broadcast %465 : f32 to vector<8x8xf32>
    %471 = arith.mulf %470, %469 : vector<8x8xf32>
    %472 = arith.addf %464, %471 : vector<8x8xf32>
    %c145 = arith.constant 145 : index
    %473 = memref.load %arg2[%c145] : memref<288xf32, #tpu.memory_space<smem>>
    %c1_i32_233 = arith.constant 1 : i32
    %474 = arith.addi %0, %c1_i32_233 : i32
    %c0_234 = arith.constant 0 : index
    %c2_235 = arith.constant 2 : index
    %475 = arith.index_cast %474 : i32 to index
    %c1_236 = arith.constant 1 : index
    %476 = vector.load %arg4[%c0_234, %c2_235, %475, %c1_236] : memref<1x4x10x10xf32, #tpu.memory_space<vmem>>, vector<1x1x8x8xf32>
    %477 = vector.shape_cast %476 : vector<1x1x8x8xf32> to vector<8x8xf32>
    %478 = vector.broadcast %473 : f32 to vector<8x8xf32>
    %479 = arith.mulf %478, %477 : vector<8x8xf32>
    %480 = arith.addf %472, %479 : vector<8x8xf32>
    %c177 = arith.constant 177 : index
    %481 = memref.load %arg2[%c177] : memref<288xf32, #tpu.memory_space<smem>>
    %c1_i32_237 = arith.constant 1 : i32
    %482 = arith.addi %0, %c1_i32_237 : i32
    %c0_238 = arith.constant 0 : index
    %c2_239 = arith.constant 2 : index
    %483 = arith.index_cast %482 : i32 to index
    %c2_240 = arith.constant 2 : index
    %484 = vector.load %arg4[%c0_238, %c2_239, %483, %c2_240] : memref<1x4x10x10xf32, #tpu.memory_space<vmem>>, vector<1x1x8x8xf32>
    %485 = vector.shape_cast %484 : vector<1x1x8x8xf32> to vector<8x8xf32>
    %486 = vector.broadcast %481 : f32 to vector<8x8xf32>
    %487 = arith.mulf %486, %485 : vector<8x8xf32>
    %488 = arith.addf %480, %487 : vector<8x8xf32>
    %c209 = arith.constant 209 : index
    %489 = memref.load %arg2[%c209] : memref<288xf32, #tpu.memory_space<smem>>
    %c2_i32_241 = arith.constant 2 : i32
    %490 = arith.addi %0, %c2_i32_241 : i32
    %c0_242 = arith.constant 0 : index
    %c2_243 = arith.constant 2 : index
    %491 = arith.index_cast %490 : i32 to index
    %c0_244 = arith.constant 0 : index
    %492 = vector.load %arg4[%c0_242, %c2_243, %491, %c0_244] : memref<1x4x10x10xf32, #tpu.memory_space<vmem>>, vector<1x1x8x8xf32>
    %493 = vector.shape_cast %492 : vector<1x1x8x8xf32> to vector<8x8xf32>
    %494 = vector.broadcast %489 : f32 to vector<8x8xf32>
    %495 = arith.mulf %494, %493 : vector<8x8xf32>
    %496 = arith.addf %488, %495 : vector<8x8xf32>
    %c241 = arith.constant 241 : index
    %497 = memref.load %arg2[%c241] : memref<288xf32, #tpu.memory_space<smem>>
    %c2_i32_245 = arith.constant 2 : i32
    %498 = arith.addi %0, %c2_i32_245 : i32
    %c0_246 = arith.constant 0 : index
    %c2_247 = arith.constant 2 : index
    %499 = arith.index_cast %498 : i32 to index
    %c1_248 = arith.constant 1 : index
    %500 = vector.load %arg4[%c0_246, %c2_247, %499, %c1_248] : memref<1x4x10x10xf32, #tpu.memory_space<vmem>>, vector<1x1x8x8xf32>
    %501 = vector.shape_cast %500 : vector<1x1x8x8xf32> to vector<8x8xf32>
    %502 = vector.broadcast %497 : f32 to vector<8x8xf32>
    %503 = arith.mulf %502, %501 : vector<8x8xf32>
    %504 = arith.addf %496, %503 : vector<8x8xf32>
    %c273 = arith.constant 273 : index
    %505 = memref.load %arg2[%c273] : memref<288xf32, #tpu.memory_space<smem>>
    %c2_i32_249 = arith.constant 2 : i32
    %506 = arith.addi %0, %c2_i32_249 : i32
    %c0_250 = arith.constant 0 : index
    %c2_251 = arith.constant 2 : index
    %507 = arith.index_cast %506 : i32 to index
    %c2_252 = arith.constant 2 : index
    %508 = vector.load %arg4[%c0_250, %c2_251, %507, %c2_252] : memref<1x4x10x10xf32, #tpu.memory_space<vmem>>, vector<1x1x8x8xf32>
    %509 = vector.shape_cast %508 : vector<1x1x8x8xf32> to vector<8x8xf32>
    %510 = vector.broadcast %505 : f32 to vector<8x8xf32>
    %511 = arith.mulf %510, %509 : vector<8x8xf32>
    %512 = arith.addf %504, %511 : vector<8x8xf32>
    %c25 = arith.constant 25 : index
    %513 = memref.load %arg2[%c25] : memref<288xf32, #tpu.memory_space<smem>>
    %c0_i32_253 = arith.constant 0 : i32
    %514 = arith.addi %0, %c0_i32_253 : i32
    %c0_254 = arith.constant 0 : index
    %c3_255 = arith.constant 3 : index
    %515 = arith.index_cast %514 : i32 to index
    %c0_256 = arith.constant 0 : index
    %516 = vector.load %arg4[%c0_254, %c3_255, %515, %c0_256] : memref<1x4x10x10xf32, #tpu.memory_space<vmem>>, vector<1x1x8x8xf32>
    %517 = vector.shape_cast %516 : vector<1x1x8x8xf32> to vector<8x8xf32>
    %518 = vector.broadcast %513 : f32 to vector<8x8xf32>
    %519 = arith.mulf %518, %517 : vector<8x8xf32>
    %520 = arith.addf %512, %519 : vector<8x8xf32>
    %c57 = arith.constant 57 : index
    %521 = memref.load %arg2[%c57] : memref<288xf32, #tpu.memory_space<smem>>
    %c0_i32_257 = arith.constant 0 : i32
    %522 = arith.addi %0, %c0_i32_257 : i32
    %c0_258 = arith.constant 0 : index
    %c3_259 = arith.constant 3 : index
    %523 = arith.index_cast %522 : i32 to index
    %c1_260 = arith.constant 1 : index
    %524 = vector.load %arg4[%c0_258, %c3_259, %523, %c1_260] : memref<1x4x10x10xf32, #tpu.memory_space<vmem>>, vector<1x1x8x8xf32>
    %525 = vector.shape_cast %524 : vector<1x1x8x8xf32> to vector<8x8xf32>
    %526 = vector.broadcast %521 : f32 to vector<8x8xf32>
    %527 = arith.mulf %526, %525 : vector<8x8xf32>
    %528 = arith.addf %520, %527 : vector<8x8xf32>
    %c89 = arith.constant 89 : index
    %529 = memref.load %arg2[%c89] : memref<288xf32, #tpu.memory_space<smem>>
    %c0_i32_261 = arith.constant 0 : i32
    %530 = arith.addi %0, %c0_i32_261 : i32
    %c0_262 = arith.constant 0 : index
    %c3_263 = arith.constant 3 : index
    %531 = arith.index_cast %530 : i32 to index
    %c2_264 = arith.constant 2 : index
    %532 = vector.load %arg4[%c0_262, %c3_263, %531, %c2_264] : memref<1x4x10x10xf32, #tpu.memory_space<vmem>>, vector<1x1x8x8xf32>
    %533 = vector.shape_cast %532 : vector<1x1x8x8xf32> to vector<8x8xf32>
    %534 = vector.broadcast %529 : f32 to vector<8x8xf32>
    %535 = arith.mulf %534, %533 : vector<8x8xf32>
    %536 = arith.addf %528, %535 : vector<8x8xf32>
    %c121 = arith.constant 121 : index
    %537 = memref.load %arg2[%c121] : memref<288xf32, #tpu.memory_space<smem>>
    %c1_i32_265 = arith.constant 1 : i32
    %538 = arith.addi %0, %c1_i32_265 : i32
    %c0_266 = arith.constant 0 : index
    %c3_267 = arith.constant 3 : index
    %539 = arith.index_cast %538 : i32 to index
    %c0_268 = arith.constant 0 : index
    %540 = vector.load %arg4[%c0_266, %c3_267, %539, %c0_268] : memref<1x4x10x10xf32, #tpu.memory_space<vmem>>, vector<1x1x8x8xf32>
    %541 = vector.shape_cast %540 : vector<1x1x8x8xf32> to vector<8x8xf32>
    %542 = vector.broadcast %537 : f32 to vector<8x8xf32>
    %543 = arith.mulf %542, %541 : vector<8x8xf32>
    %544 = arith.addf %536, %543 : vector<8x8xf32>
    %c153 = arith.constant 153 : index
    %545 = memref.load %arg2[%c153] : memref<288xf32, #tpu.memory_space<smem>>
    %c1_i32_269 = arith.constant 1 : i32
    %546 = arith.addi %0, %c1_i32_269 : i32
    %c0_270 = arith.constant 0 : index
    %c3_271 = arith.constant 3 : index
    %547 = arith.index_cast %546 : i32 to index
    %c1_272 = arith.constant 1 : index
    %548 = vector.load %arg4[%c0_270, %c3_271, %547, %c1_272] : memref<1x4x10x10xf32, #tpu.memory_space<vmem>>, vector<1x1x8x8xf32>
    %549 = vector.shape_cast %548 : vector<1x1x8x8xf32> to vector<8x8xf32>
    %550 = vector.broadcast %545 : f32 to vector<8x8xf32>
    %551 = arith.mulf %550, %549 : vector<8x8xf32>
    %552 = arith.addf %544, %551 : vector<8x8xf32>
    %c185 = arith.constant 185 : index
    %553 = memref.load %arg2[%c185] : memref<288xf32, #tpu.memory_space<smem>>
    %c1_i32_273 = arith.constant 1 : i32
    %554 = arith.addi %0, %c1_i32_273 : i32
    %c0_274 = arith.constant 0 : index
    %c3_275 = arith.constant 3 : index
    %555 = arith.index_cast %554 : i32 to index
    %c2_276 = arith.constant 2 : index
    %556 = vector.load %arg4[%c0_274, %c3_275, %555, %c2_276] : memref<1x4x10x10xf32, #tpu.memory_space<vmem>>, vector<1x1x8x8xf32>
    %557 = vector.shape_cast %556 : vector<1x1x8x8xf32> to vector<8x8xf32>
    %558 = vector.broadcast %553 : f32 to vector<8x8xf32>
    %559 = arith.mulf %558, %557 : vector<8x8xf32>
    %560 = arith.addf %552, %559 : vector<8x8xf32>
    %c217 = arith.constant 217 : index
    %561 = memref.load %arg2[%c217] : memref<288xf32, #tpu.memory_space<smem>>
    %c2_i32_277 = arith.constant 2 : i32
    %562 = arith.addi %0, %c2_i32_277 : i32
    %c0_278 = arith.constant 0 : index
    %c3_279 = arith.constant 3 : index
    %563 = arith.index_cast %562 : i32 to index
    %c0_280 = arith.constant 0 : index
    %564 = vector.load %arg4[%c0_278, %c3_279, %563, %c0_280] : memref<1x4x10x10xf32, #tpu.memory_space<vmem>>, vector<1x1x8x8xf32>
    %565 = vector.shape_cast %564 : vector<1x1x8x8xf32> to vector<8x8xf32>
    %566 = vector.broadcast %561 : f32 to vector<8x8xf32>
    %567 = arith.mulf %566, %565 : vector<8x8xf32>
    %568 = arith.addf %560, %567 : vector<8x8xf32>
    %c249 = arith.constant 249 : index
    %569 = memref.load %arg2[%c249] : memref<288xf32, #tpu.memory_space<smem>>
    %c2_i32_281 = arith.constant 2 : i32
    %570 = arith.addi %0, %c2_i32_281 : i32
    %c0_282 = arith.constant 0 : index
    %c3_283 = arith.constant 3 : index
    %571 = arith.index_cast %570 : i32 to index
    %c1_284 = arith.constant 1 : index
    %572 = vector.load %arg4[%c0_282, %c3_283, %571, %c1_284] : memref<1x4x10x10xf32, #tpu.memory_space<vmem>>, vector<1x1x8x8xf32>
    %573 = vector.shape_cast %572 : vector<1x1x8x8xf32> to vector<8x8xf32>
    %574 = vector.broadcast %569 : f32 to vector<8x8xf32>
    %575 = arith.mulf %574, %573 : vector<8x8xf32>
    %576 = arith.addf %568, %575 : vector<8x8xf32>
    %c281 = arith.constant 281 : index
    %577 = memref.load %arg2[%c281] : memref<288xf32, #tpu.memory_space<smem>>
    %c2_i32_285 = arith.constant 2 : i32
    %578 = arith.addi %0, %c2_i32_285 : i32
    %c0_286 = arith.constant 0 : index
    %c3_287 = arith.constant 3 : index
    %579 = arith.index_cast %578 : i32 to index
    %c2_288 = arith.constant 2 : index
    %580 = vector.load %arg4[%c0_286, %c3_287, %579, %c2_288] : memref<1x4x10x10xf32, #tpu.memory_space<vmem>>, vector<1x1x8x8xf32>
    %581 = vector.shape_cast %580 : vector<1x1x8x8xf32> to vector<8x8xf32>
    %582 = vector.broadcast %577 : f32 to vector<8x8xf32>
    %583 = arith.mulf %582, %581 : vector<8x8xf32>
    %584 = arith.addf %576, %583 : vector<8x8xf32>
    %c1_289 = arith.constant 1 : index
    %585 = memref.load %arg3[%c1_289] : memref<8xf32, #tpu.memory_space<smem>>
    %586 = vector.broadcast %585 : f32 to vector<8x8xf32>
    %587 = arith.addf %584, %586 : vector<8x8xf32>
    %c0_290 = arith.constant 0 : index
    %c1_291 = arith.constant 1 : index
    %c0_292 = arith.constant 0 : index
    %c0_293 = arith.constant 0 : index
    %588 = vector.load %arg5[%c0_290, %c1_291, %c0_292, %c0_293] : memref<1x8x8x8xf32, #tpu.memory_space<vmem>>, vector<1x1x8x8xf32>
    %589 = vector.shape_cast %588 : vector<1x1x8x8xf32> to vector<8x8xf32>
    %590 = vector.shape_cast %587 : vector<8x8xf32> to vector<1x1x8x8xf32>
    tpu.vector_store %arg5[%c0_290, %c1_291, %c0_292, %c0_293], %590 {strides = array<i32>} : memref<1x8x8x8xf32, #tpu.memory_space<vmem>>, vector<1x1x8x8xf32>,
    %cst_294 = arith.constant 0.000000e+00 : f32
    %591 = vector.broadcast %cst_294 : f32 to vector<8x8xf32>
    %c2_295 = arith.constant 2 : index
    %592 = memref.load %arg2[%c2_295] : memref<288xf32, #tpu.memory_space<smem>>
    %c0_i32_296 = arith.constant 0 : i32
    %593 = arith.addi %0, %c0_i32_296 : i32
    %c0_297 = arith.constant 0 : index
    %c0_298 = arith.constant 0 : index
    %594 = arith.index_cast %593 : i32 to index
    %c0_299 = arith.constant 0 : index
    %595 = vector.load %arg4[%c0_297, %c0_298, %594, %c0_299] : memref<1x4x10x10xf32, #tpu.memory_space<vmem>>, vector<1x1x8x8xf32>
    %596 = vector.shape_cast %595 : vector<1x1x8x8xf32> to vector<8x8xf32>
    %597 = vector.broadcast %592 : f32 to vector<8x8xf32>
    %598 = arith.mulf %597, %596 : vector<8x8xf32>
    %599 = arith.addf %591, %598 : vector<8x8xf32>
    %c34 = arith.constant 34 : index
    %600 = memref.load %arg2[%c34] : memref<288xf32, #tpu.memory_space<smem>>
    %c0_i32_300 = arith.constant 0 : i32
    %601 = arith.addi %0, %c0_i32_300 : i32
    %c0_301 = arith.constant 0 : index
    %c0_302 = arith.constant 0 : index
    %602 = arith.index_cast %601 : i32 to index
    %c1_303 = arith.constant 1 : index
    %603 = vector.load %arg4[%c0_301, %c0_302, %602, %c1_303] : memref<1x4x10x10xf32, #tpu.memory_space<vmem>>, vector<1x1x8x8xf32>
    %604 = vector.shape_cast %603 : vector<1x1x8x8xf32> to vector<8x8xf32>
    %605 = vector.broadcast %600 : f32 to vector<8x8xf32>
    %606 = arith.mulf %605, %604 : vector<8x8xf32>
    %607 = arith.addf %599, %606 : vector<8x8xf32>
    %c66 = arith.constant 66 : index
    %608 = memref.load %arg2[%c66] : memref<288xf32, #tpu.memory_space<smem>>
    %c0_i32_304 = arith.constant 0 : i32
    %609 = arith.addi %0, %c0_i32_304 : i32
    %c0_305 = arith.constant 0 : index
    %c0_306 = arith.constant 0 : index
    %610 = arith.index_cast %609 : i32 to index
    %c2_307 = arith.constant 2 : index
    %611 = vector.load %arg4[%c0_305, %c0_306, %610, %c2_307] : memref<1x4x10x10xf32, #tpu.memory_space<vmem>>, vector<1x1x8x8xf32>
    %612 = vector.shape_cast %611 : vector<1x1x8x8xf32> to vector<8x8xf32>
    %613 = vector.broadcast %608 : f32 to vector<8x8xf32>
    %614 = arith.mulf %613, %612 : vector<8x8xf32>
    %615 = arith.addf %607, %614 : vector<8x8xf32>
    %c98 = arith.constant 98 : index
    %616 = memref.load %arg2[%c98] : memref<288xf32, #tpu.memory_space<smem>>
    %c1_i32_308 = arith.constant 1 : i32
    %617 = arith.addi %0, %c1_i32_308 : i32
    %c0_309 = arith.constant 0 : index
    %c0_310 = arith.constant 0 : index
    %618 = arith.index_cast %617 : i32 to index
    %c0_311 = arith.constant 0 : index
    %619 = vector.load %arg4[%c0_309, %c0_310, %618, %c0_311] : memref<1x4x10x10xf32, #tpu.memory_space<vmem>>, vector<1x1x8x8xf32>
    %620 = vector.shape_cast %619 : vector<1x1x8x8xf32> to vector<8x8xf32>
    %621 = vector.broadcast %616 : f32 to vector<8x8xf32>
    %622 = arith.mulf %621, %620 : vector<8x8xf32>
    %623 = arith.addf %615, %622 : vector<8x8xf32>
    %c130 = arith.constant 130 : index
    %624 = memref.load %arg2[%c130] : memref<288xf32, #tpu.memory_space<smem>>
    %c1_i32_312 = arith.constant 1 : i32
    %625 = arith.addi %0, %c1_i32_312 : i32
    %c0_313 = arith.constant 0 : index
    %c0_314 = arith.constant 0 : index
    %626 = arith.index_cast %625 : i32 to index
    %c1_315 = arith.constant 1 : index
    %627 = vector.load %arg4[%c0_313, %c0_314, %626, %c1_315] : memref<1x4x10x10xf32, #tpu.memory_space<vmem>>, vector<1x1x8x8xf32>
    %628 = vector.shape_cast %627 : vector<1x1x8x8xf32> to vector<8x8xf32>
    %629 = vector.broadcast %624 : f32 to vector<8x8xf32>
    %630 = arith.mulf %629, %628 : vector<8x8xf32>
    %631 = arith.addf %623, %630 : vector<8x8xf32>
    %c162 = arith.constant 162 : index
    %632 = memref.load %arg2[%c162] : memref<288xf32, #tpu.memory_space<smem>>
    %c1_i32_316 = arith.constant 1 : i32
    %633 = arith.addi %0, %c1_i32_316 : i32
    %c0_317 = arith.constant 0 : index
    %c0_318 = arith.constant 0 : index
    %634 = arith.index_cast %633 : i32 to index
    %c2_319 = arith.constant 2 : index
    %635 = vector.load %arg4[%c0_317, %c0_318, %634, %c2_319] : memref<1x4x10x10xf32, #tpu.memory_space<vmem>>, vector<1x1x8x8xf32>
    %636 = vector.shape_cast %635 : vector<1x1x8x8xf32> to vector<8x8xf32>
    %637 = vector.broadcast %632 : f32 to vector<8x8xf32>
    %638 = arith.mulf %637, %636 : vector<8x8xf32>
    %639 = arith.addf %631, %638 : vector<8x8xf32>
    %c194 = arith.constant 194 : index
    %640 = memref.load %arg2[%c194] : memref<288xf32, #tpu.memory_space<smem>>
    %c2_i32_320 = arith.constant 2 : i32
    %641 = arith.addi %0, %c2_i32_320 : i32
    %c0_321 = arith.constant 0 : index
    %c0_322 = arith.constant 0 : index
    %642 = arith.index_cast %641 : i32 to index
    %c0_323 = arith.constant 0 : index
    %643 = vector.load %arg4[%c0_321, %c0_322, %642, %c0_323] : memref<1x4x10x10xf32, #tpu.memory_space<vmem>>, vector<1x1x8x8xf32>
    %644 = vector.shape_cast %643 : vector<1x1x8x8xf32> to vector<8x8xf32>
    %645 = vector.broadcast %640 : f32 to vector<8x8xf32>
    %646 = arith.mulf %645, %644 : vector<8x8xf32>
    %647 = arith.addf %639, %646 : vector<8x8xf32>
    %c226 = arith.constant 226 : index
    %648 = memref.load %arg2[%c226] : memref<288xf32, #tpu.memory_space<smem>>
    %c2_i32_324 = arith.constant 2 : i32
    %649 = arith.addi %0, %c2_i32_324 : i32
    %c0_325 = arith.constant 0 : index
    %c0_326 = arith.constant 0 : index
    %650 = arith.index_cast %649 : i32 to index
    %c1_327 = arith.constant 1 : index
    %651 = vector.load %arg4[%c0_325, %c0_326, %650, %c1_327] : memref<1x4x10x10xf32, #tpu.memory_space<vmem>>, vector<1x1x8x8xf32>
    %652 = vector.shape_cast %651 : vector<1x1x8x8xf32> to vector<8x8xf32>
    %653 = vector.broadcast %648 : f32 to vector<8x8xf32>
    %654 = arith.mulf %653, %652 : vector<8x8xf32>
    %655 = arith.addf %647, %654 : vector<8x8xf32>
    %c258 = arith.constant 258 : index
    %656 = memref.load %arg2[%c258] : memref<288xf32, #tpu.memory_space<smem>>
    %c2_i32_328 = arith.constant 2 : i32
    %657 = arith.addi %0, %c2_i32_328 : i32
    %c0_329 = arith.constant 0 : index
    %c0_330 = arith.constant 0 : index
    %658 = arith.index_cast %657 : i32 to index
    %c2_331 = arith.constant 2 : index
    %659 = vector.load %arg4[%c0_329, %c0_330, %658, %c2_331] : memref<1x4x10x10xf32, #tpu.memory_space<vmem>>, vector<1x1x8x8xf32>
    %660 = vector.shape_cast %659 : vector<1x1x8x8xf32> to vector<8x8xf32>
    %661 = vector.broadcast %656 : f32 to vector<8x8xf32>
    %662 = arith.mulf %661, %660 : vector<8x8xf32>
    %663 = arith.addf %655, %662 : vector<8x8xf32>
    %c10 = arith.constant 10 : index
    %664 = memref.load %arg2[%c10] : memref<288xf32, #tpu.memory_space<smem>>
    %c0_i32_332 = arith.constant 0 : i32
    %665 = arith.addi %0, %c0_i32_332 : i32
    %c0_333 = arith.constant 0 : index
    %c1_334 = arith.constant 1 : index
    %666 = arith.index_cast %665 : i32 to index
    %c0_335 = arith.constant 0 : index
    %667 = vector.load %arg4[%c0_333, %c1_334, %666, %c0_335] : memref<1x4x10x10xf32, #tpu.memory_space<vmem>>, vector<1x1x8x8xf32>
    %668 = vector.shape_cast %667 : vector<1x1x8x8xf32> to vector<8x8xf32>
    %669 = vector.broadcast %664 : f32 to vector<8x8xf32>
    %670 = arith.mulf %669, %668 : vector<8x8xf32>
    %671 = arith.addf %663, %670 : vector<8x8xf32>
    %c42 = arith.constant 42 : index
    %672 = memref.load %arg2[%c42] : memref<288xf32, #tpu.memory_space<smem>>
    %c0_i32_336 = arith.constant 0 : i32
    %673 = arith.addi %0, %c0_i32_336 : i32
    %c0_337 = arith.constant 0 : index
    %c1_338 = arith.constant 1 : index
    %674 = arith.index_cast %673 : i32 to index
    %c1_339 = arith.constant 1 : index
    %675 = vector.load %arg4[%c0_337, %c1_338, %674, %c1_339] : memref<1x4x10x10xf32, #tpu.memory_space<vmem>>, vector<1x1x8x8xf32>
    %676 = vector.shape_cast %675 : vector<1x1x8x8xf32> to vector<8x8xf32>
    %677 = vector.broadcast %672 : f32 to vector<8x8xf32>
    %678 = arith.mulf %677, %676 : vector<8x8xf32>
    %679 = arith.addf %671, %678 : vector<8x8xf32>
    %c74 = arith.constant 74 : index
    %680 = memref.load %arg2[%c74] : memref<288xf32, #tpu.memory_space<smem>>
    %c0_i32_340 = arith.constant 0 : i32
    %681 = arith.addi %0, %c0_i32_340 : i32
    %c0_341 = arith.constant 0 : index
    %c1_342 = arith.constant 1 : index
    %682 = arith.index_cast %681 : i32 to index
    %c2_343 = arith.constant 2 : index
    %683 = vector.load %arg4[%c0_341, %c1_342, %682, %c2_343] : memref<1x4x10x10xf32, #tpu.memory_space<vmem>>, vector<1x1x8x8xf32>
    %684 = vector.shape_cast %683 : vector<1x1x8x8xf32> to vector<8x8xf32>
    %685 = vector.broadcast %680 : f32 to vector<8x8xf32>
    %686 = arith.mulf %685, %684 : vector<8x8xf32>
    %687 = arith.addf %679, %686 : vector<8x8xf32>
    %c106 = arith.constant 106 : index
    %688 = memref.load %arg2[%c106] : memref<288xf32, #tpu.memory_space<smem>>
    %c1_i32_344 = arith.constant 1 : i32
    %689 = arith.addi %0, %c1_i32_344 : i32
    %c0_345 = arith.constant 0 : index
    %c1_346 = arith.constant 1 : index
    %690 = arith.index_cast %689 : i32 to index
    %c0_347 = arith.constant 0 : index
    %691 = vector.load %arg4[%c0_345, %c1_346, %690, %c0_347] : memref<1x4x10x10xf32, #tpu.memory_space<vmem>>, vector<1x1x8x8xf32>
    %692 = vector.shape_cast %691 : vector<1x1x8x8xf32> to vector<8x8xf32>
    %693 = vector.broadcast %688 : f32 to vector<8x8xf32>
    %694 = arith.mulf %693, %692 : vector<8x8xf32>
    %695 = arith.addf %687, %694 : vector<8x8xf32>
    %c138 = arith.constant 138 : index
    %696 = memref.load %arg2[%c138] : memref<288xf32, #tpu.memory_space<smem>>
    %c1_i32_348 = arith.constant 1 : i32
    %697 = arith.addi %0, %c1_i32_348 : i32
    %c0_349 = arith.constant 0 : index
    %c1_350 = arith.constant 1 : index
    %698 = arith.index_cast %697 : i32 to index
    %c1_351 = arith.constant 1 : index
    %699 = vector.load %arg4[%c0_349, %c1_350, %698, %c1_351] : memref<1x4x10x10xf32, #tpu.memory_space<vmem>>, vector<1x1x8x8xf32>
    %700 = vector.shape_cast %699 : vector<1x1x8x8xf32> to vector<8x8xf32>
    %701 = vector.broadcast %696 : f32 to vector<8x8xf32>
    %702 = arith.mulf %701, %700 : vector<8x8xf32>
    %703 = arith.addf %695, %702 : vector<8x8xf32>
    %c170 = arith.constant 170 : index
    %704 = memref.load %arg2[%c170] : memref<288xf32, #tpu.memory_space<smem>>
    %c1_i32_352 = arith.constant 1 : i32
    %705 = arith.addi %0, %c1_i32_352 : i32
    %c0_353 = arith.constant 0 : index
    %c1_354 = arith.constant 1 : index
    %706 = arith.index_cast %705 : i32 to index
    %c2_355 = arith.constant 2 : index
    %707 = vector.load %arg4[%c0_353, %c1_354, %706, %c2_355] : memref<1x4x10x10xf32, #tpu.memory_space<vmem>>, vector<1x1x8x8xf32>
    %708 = vector.shape_cast %707 : vector<1x1x8x8xf32> to vector<8x8xf32>
    %709 = vector.broadcast %704 : f32 to vector<8x8xf32>
    %710 = arith.mulf %709, %708 : vector<8x8xf32>
    %711 = arith.addf %703, %710 : vector<8x8xf32>
    %c202 = arith.constant 202 : index
    %712 = memref.load %arg2[%c202] : memref<288xf32, #tpu.memory_space<smem>>
    %c2_i32_356 = arith.constant 2 : i32
    %713 = arith.addi %0, %c2_i32_356 : i32
    %c0_357 = arith.constant 0 : index
    %c1_358 = arith.constant 1 : index
    %714 = arith.index_cast %713 : i32 to index
    %c0_359 = arith.constant 0 : index
    %715 = vector.load %arg4[%c0_357, %c1_358, %714, %c0_359] : memref<1x4x10x10xf32, #tpu.memory_space<vmem>>, vector<1x1x8x8xf32>
    %716 = vector.shape_cast %715 : vector<1x1x8x8xf32> to vector<8x8xf32>
    %717 = vector.broadcast %712 : f32 to vector<8x8xf32>
    %718 = arith.mulf %717, %716 : vector<8x8xf32>
    %719 = arith.addf %711, %718 : vector<8x8xf32>
    %c234 = arith.constant 234 : index
    %720 = memref.load %arg2[%c234] : memref<288xf32, #tpu.memory_space<smem>>
    %c2_i32_360 = arith.constant 2 : i32
    %721 = arith.addi %0, %c2_i32_360 : i32
    %c0_361 = arith.constant 0 : index
    %c1_362 = arith.constant 1 : index
    %722 = arith.index_cast %721 : i32 to index
    %c1_363 = arith.constant 1 : index
    %723 = vector.load %arg4[%c0_361, %c1_362, %722, %c1_363] : memref<1x4x10x10xf32, #tpu.memory_space<vmem>>, vector<1x1x8x8xf32>
    %724 = vector.shape_cast %723 : vector<1x1x8x8xf32> to vector<8x8xf32>
    %725 = vector.broadcast %720 : f32 to vector<8x8xf32>
    %726 = arith.mulf %725, %724 : vector<8x8xf32>
    %727 = arith.addf %719, %726 : vector<8x8xf32>
    %c266 = arith.constant 266 : index
    %728 = memref.load %arg2[%c266] : memref<288xf32, #tpu.memory_space<smem>>
    %c2_i32_364 = arith.constant 2 : i32
    %729 = arith.addi %0, %c2_i32_364 : i32
    %c0_365 = arith.constant 0 : index
    %c1_366 = arith.constant 1 : index
    %730 = arith.index_cast %729 : i32 to index
    %c2_367 = arith.constant 2 : index
    %731 = vector.load %arg4[%c0_365, %c1_366, %730, %c2_367] : memref<1x4x10x10xf32, #tpu.memory_space<vmem>>, vector<1x1x8x8xf32>
    %732 = vector.shape_cast %731 : vector<1x1x8x8xf32> to vector<8x8xf32>
    %733 = vector.broadcast %728 : f32 to vector<8x8xf32>
    %734 = arith.mulf %733, %732 : vector<8x8xf32>
    %735 = arith.addf %727, %734 : vector<8x8xf32>
    %c18 = arith.constant 18 : index
    %736 = memref.load %arg2[%c18] : memref<288xf32, #tpu.memory_space<smem>>
    %c0_i32_368 = arith.constant 0 : i32
    %737 = arith.addi %0, %c0_i32_368 : i32
    %c0_369 = arith.constant 0 : index
    %c2_370 = arith.constant 2 : index
    %738 = arith.index_cast %737 : i32 to index
    %c0_371 = arith.constant 0 : index
    %739 = vector.load %arg4[%c0_369, %c2_370, %738, %c0_371] : memref<1x4x10x10xf32, #tpu.memory_space<vmem>>, vector<1x1x8x8xf32>
    %740 = vector.shape_cast %739 : vector<1x1x8x8xf32> to vector<8x8xf32>
    %741 = vector.broadcast %736 : f32 to vector<8x8xf32>
    %742 = arith.mulf %741, %740 : vector<8x8xf32>
    %743 = arith.addf %735, %742 : vector<8x8xf32>
    %c50 = arith.constant 50 : index
    %744 = memref.load %arg2[%c50] : memref<288xf32, #tpu.memory_space<smem>>
    %c0_i32_372 = arith.constant 0 : i32
    %745 = arith.addi %0, %c0_i32_372 : i32
    %c0_373 = arith.constant 0 : index
    %c2_374 = arith.constant 2 : index
    %746 = arith.index_cast %745 : i32 to index
    %c1_375 = arith.constant 1 : index
    %747 = vector.load %arg4[%c0_373, %c2_374, %746, %c1_375] : memref<1x4x10x10xf32, #tpu.memory_space<vmem>>, vector<1x1x8x8xf32>
    %748 = vector.shape_cast %747 : vector<1x1x8x8xf32> to vector<8x8xf32>
    %749 = vector.broadcast %744 : f32 to vector<8x8xf32>
    %750 = arith.mulf %749, %748 : vector<8x8xf32>
    %751 = arith.addf %743, %750 : vector<8x8xf32>
    %c82 = arith.constant 82 : index
    %752 = memref.load %arg2[%c82] : memref<288xf32, #tpu.memory_space<smem>>
    %c0_i32_376 = arith.constant 0 : i32
    %753 = arith.addi %0, %c0_i32_376 : i32
    %c0_377 = arith.constant 0 : index
    %c2_378 = arith.constant 2 : index
    %754 = arith.index_cast %753 : i32 to index
    %c2_379 = arith.constant 2 : index
    %755 = vector.load %arg4[%c0_377, %c2_378, %754, %c2_379] : memref<1x4x10x10xf32, #tpu.memory_space<vmem>>, vector<1x1x8x8xf32>
    %756 = vector.shape_cast %755 : vector<1x1x8x8xf32> to vector<8x8xf32>
    %757 = vector.broadcast %752 : f32 to vector<8x8xf32>
    %758 = arith.mulf %757, %756 : vector<8x8xf32>
    %759 = arith.addf %751, %758 : vector<8x8xf32>
    %c114 = arith.constant 114 : index
    %760 = memref.load %arg2[%c114] : memref<288xf32, #tpu.memory_space<smem>>
    %c1_i32_380 = arith.constant 1 : i32
    %761 = arith.addi %0, %c1_i32_380 : i32
    %c0_381 = arith.constant 0 : index
    %c2_382 = arith.constant 2 : index
    %762 = arith.index_cast %761 : i32 to index
    %c0_383 = arith.constant 0 : index
    %763 = vector.load %arg4[%c0_381, %c2_382, %762, %c0_383] : memref<1x4x10x10xf32, #tpu.memory_space<vmem>>, vector<1x1x8x8xf32>
    %764 = vector.shape_cast %763 : vector<1x1x8x8xf32> to vector<8x8xf32>
    %765 = vector.broadcast %760 : f32 to vector<8x8xf32>
    %766 = arith.mulf %765, %764 : vector<8x8xf32>
    %767 = arith.addf %759, %766 : vector<8x8xf32>
    %c146 = arith.constant 146 : index
    %768 = memref.load %arg2[%c146] : memref<288xf32, #tpu.memory_space<smem>>
    %c1_i32_384 = arith.constant 1 : i32
    %769 = arith.addi %0, %c1_i32_384 : i32
    %c0_385 = arith.constant 0 : index
    %c2_386 = arith.constant 2 : index
    %770 = arith.index_cast %769 : i32 to index
    %c1_387 = arith.constant 1 : index
    %771 = vector.load %arg4[%c0_385, %c2_386, %770, %c1_387] : memref<1x4x10x10xf32, #tpu.memory_space<vmem>>, vector<1x1x8x8xf32>
    %772 = vector.shape_cast %771 : vector<1x1x8x8xf32> to vector<8x8xf32>
    %773 = vector.broadcast %768 : f32 to vector<8x8xf32>
    %774 = arith.mulf %773, %772 : vector<8x8xf32>
    %775 = arith.addf %767, %774 : vector<8x8xf32>
    %c178 = arith.constant 178 : index
    %776 = memref.load %arg2[%c178] : memref<288xf32, #tpu.memory_space<smem>>
    %c1_i32_388 = arith.constant 1 : i32
    %777 = arith.addi %0, %c1_i32_388 : i32
    %c0_389 = arith.constant 0 : index
    %c2_390 = arith.constant 2 : index
    %778 = arith.index_cast %777 : i32 to index
    %c2_391 = arith.constant 2 : index
    %779 = vector.load %arg4[%c0_389, %c2_390, %778, %c2_391] : memref<1x4x10x10xf32, #tpu.memory_space<vmem>>, vector<1x1x8x8xf32>
    %780 = vector.shape_cast %779 : vector<1x1x8x8xf32> to vector<8x8xf32>
    %781 = vector.broadcast %776 : f32 to vector<8x8xf32>
    %782 = arith.mulf %781, %780 : vector<8x8xf32>
    %783 = arith.addf %775, %782 : vector<8x8xf32>
    %c210 = arith.constant 210 : index
    %784 = memref.load %arg2[%c210] : memref<288xf32, #tpu.memory_space<smem>>
    %c2_i32_392 = arith.constant 2 : i32
    %785 = arith.addi %0, %c2_i32_392 : i32
    %c0_393 = arith.constant 0 : index
    %c2_394 = arith.constant 2 : index
    %786 = arith.index_cast %785 : i32 to index
    %c0_395 = arith.constant 0 : index
    %787 = vector.load %arg4[%c0_393, %c2_394, %786, %c0_395] : memref<1x4x10x10xf32, #tpu.memory_space<vmem>>, vector<1x1x8x8xf32>
    %788 = vector.shape_cast %787 : vector<1x1x8x8xf32> to vector<8x8xf32>
    %789 = vector.broadcast %784 : f32 to vector<8x8xf32>
    %790 = arith.mulf %789, %788 : vector<8x8xf32>
    %791 = arith.addf %783, %790 : vector<8x8xf32>
    %c242 = arith.constant 242 : index
    %792 = memref.load %arg2[%c242] : memref<288xf32, #tpu.memory_space<smem>>
    %c2_i32_396 = arith.constant 2 : i32
    %793 = arith.addi %0, %c2_i32_396 : i32
    %c0_397 = arith.constant 0 : index
    %c2_398 = arith.constant 2 : index
    %794 = arith.index_cast %793 : i32 to index
    %c1_399 = arith.constant 1 : index
    %795 = vector.load %arg4[%c0_397, %c2_398, %794, %c1_399] : memref<1x4x10x10xf32, #tpu.memory_space<vmem>>, vector<1x1x8x8xf32>
    %796 = vector.shape_cast %795 : vector<1x1x8x8xf32> to vector<8x8xf32>
    %797 = vector.broadcast %792 : f32 to vector<8x8xf32>
    %798 = arith.mulf %797, %796 : vector<8x8xf32>
    %799 = arith.addf %791, %798 : vector<8x8xf32>
    %c274 = arith.constant 274 : index
    %800 = memref.load %arg2[%c274] : memref<288xf32, #tpu.memory_space<smem>>
    %c2_i32_400 = arith.constant 2 : i32
    %801 = arith.addi %0, %c2_i32_400 : i32
    %c0_401 = arith.constant 0 : index
    %c2_402 = arith.constant 2 : index
    %802 = arith.index_cast %801 : i32 to index
    %c2_403 = arith.constant 2 : index
    %803 = vector.load %arg4[%c0_401, %c2_402, %802, %c2_403] : memref<1x4x10x10xf32, #tpu.memory_space<vmem>>, vector<1x1x8x8xf32>
    %804 = vector.shape_cast %803 : vector<1x1x8x8xf32> to vector<8x8xf32>
    %805 = vector.broadcast %800 : f32 to vector<8x8xf32>
    %806 = arith.mulf %805, %804 : vector<8x8xf32>
    %807 = arith.addf %799, %806 : vector<8x8xf32>
    %c26 = arith.constant 26 : index
    %808 = memref.load %arg2[%c26] : memref<288xf32, #tpu.memory_space<smem>>
    %c0_i32_404 = arith.constant 0 : i32
    %809 = arith.addi %0, %c0_i32_404 : i32
    %c0_405 = arith.constant 0 : index
    %c3_406 = arith.constant 3 : index
    %810 = arith.index_cast %809 : i32 to index
    %c0_407 = arith.constant 0 : index
    %811 = vector.load %arg4[%c0_405, %c3_406, %810, %c0_407] : memref<1x4x10x10xf32, #tpu.memory_space<vmem>>, vector<1x1x8x8xf32>
    %812 = vector.shape_cast %811 : vector<1x1x8x8xf32> to vector<8x8xf32>
    %813 = vector.broadcast %808 : f32 to vector<8x8xf32>
    %814 = arith.mulf %813, %812 : vector<8x8xf32>
    %815 = arith.addf %807, %814 : vector<8x8xf32>
    %c58 = arith.constant 58 : index
    %816 = memref.load %arg2[%c58] : memref<288xf32, #tpu.memory_space<smem>>
    %c0_i32_408 = arith.constant 0 : i32
    %817 = arith.addi %0, %c0_i32_408 : i32
    %c0_409 = arith.constant 0 : index
    %c3_410 = arith.constant 3 : index
    %818 = arith.index_cast %817 : i32 to index
    %c1_411 = arith.constant 1 : index
    %819 = vector.load %arg4[%c0_409, %c3_410, %818, %c1_411] : memref<1x4x10x10xf32, #tpu.memory_space<vmem>>, vector<1x1x8x8xf32>
    %820 = vector.shape_cast %819 : vector<1x1x8x8xf32> to vector<8x8xf32>
    %821 = vector.broadcast %816 : f32 to vector<8x8xf32>
    %822 = arith.mulf %821, %820 : vector<8x8xf32>
    %823 = arith.addf %815, %822 : vector<8x8xf32>
    %c90 = arith.constant 90 : index
    %824 = memref.load %arg2[%c90] : memref<288xf32, #tpu.memory_space<smem>>
    %c0_i32_412 = arith.constant 0 : i32
    %825 = arith.addi %0, %c0_i32_412 : i32
    %c0_413 = arith.constant 0 : index
    %c3_414 = arith.constant 3 : index
    %826 = arith.index_cast %825 : i32 to index
    %c2_415 = arith.constant 2 : index
    %827 = vector.load %arg4[%c0_413, %c3_414, %826, %c2_415] : memref<1x4x10x10xf32, #tpu.memory_space<vmem>>, vector<1x1x8x8xf32>
    %828 = vector.shape_cast %827 : vector<1x1x8x8xf32> to vector<8x8xf32>
    %829 = vector.broadcast %824 : f32 to vector<8x8xf32>
    %830 = arith.mulf %829, %828 : vector<8x8xf32>
    %831 = arith.addf %823, %830 : vector<8x8xf32>
    %c122 = arith.constant 122 : index
    %832 = memref.load %arg2[%c122] : memref<288xf32, #tpu.memory_space<smem>>
    %c1_i32_416 = arith.constant 1 : i32
    %833 = arith.addi %0, %c1_i32_416 : i32
    %c0_417 = arith.constant 0 : index
    %c3_418 = arith.constant 3 : index
    %834 = arith.index_cast %833 : i32 to index
    %c0_419 = arith.constant 0 : index
    %835 = vector.load %arg4[%c0_417, %c3_418, %834, %c0_419] : memref<1x4x10x10xf32, #tpu.memory_space<vmem>>, vector<1x1x8x8xf32>
    %836 = vector.shape_cast %835 : vector<1x1x8x8xf32> to vector<8x8xf32>
    %837 = vector.broadcast %832 : f32 to vector<8x8xf32>
    %838 = arith.mulf %837, %836 : vector<8x8xf32>
    %839 = arith.addf %831, %838 : vector<8x8xf32>
    %c154 = arith.constant 154 : index
    %840 = memref.load %arg2[%c154] : memref<288xf32, #tpu.memory_space<smem>>
    %c1_i32_420 = arith.constant 1 : i32
    %841 = arith.addi %0, %c1_i32_420 : i32
    %c0_421 = arith.constant 0 : index
    %c3_422 = arith.constant 3 : index
    %842 = arith.index_cast %841 : i32 to index
    %c1_423 = arith.constant 1 : index
    %843 = vector.load %arg4[%c0_421, %c3_422, %842, %c1_423] : memref<1x4x10x10xf32, #tpu.memory_space<vmem>>, vector<1x1x8x8xf32>
    %844 = vector.shape_cast %843 : vector<1x1x8x8xf32> to vector<8x8xf32>
    %845 = vector.broadcast %840 : f32 to vector<8x8xf32>
    %846 = arith.mulf %845, %844 : vector<8x8xf32>
    %847 = arith.addf %839, %846 : vector<8x8xf32>
    %c186 = arith.constant 186 : index
    %848 = memref.load %arg2[%c186] : memref<288xf32, #tpu.memory_space<smem>>
    %c1_i32_424 = arith.constant 1 : i32
    %849 = arith.addi %0, %c1_i32_424 : i32
    %c0_425 = arith.constant 0 : index
    %c3_426 = arith.constant 3 : index
    %850 = arith.index_cast %849 : i32 to index
    %c2_427 = arith.constant 2 : index
    %851 = vector.load %arg4[%c0_425, %c3_426, %850, %c2_427] : memref<1x4x10x10xf32, #tpu.memory_space<vmem>>, vector<1x1x8x8xf32>
    %852 = vector.shape_cast %851 : vector<1x1x8x8xf32> to vector<8x8xf32>
    %853 = vector.broadcast %848 : f32 to vector<8x8xf32>
    %854 = arith.mulf %853, %852 : vector<8x8xf32>
    %855 = arith.addf %847, %854 : vector<8x8xf32>
    %c218 = arith.constant 218 : index
    %856 = memref.load %arg2[%c218] : memref<288xf32, #tpu.memory_space<smem>>
    %c2_i32_428 = arith.constant 2 : i32
    %857 = arith.addi %0, %c2_i32_428 : i32
    %c0_429 = arith.constant 0 : index
    %c3_430 = arith.constant 3 : index
    %858 = arith.index_cast %857 : i32 to index
    %c0_431 = arith.constant 0 : index
    %859 = vector.load %arg4[%c0_429, %c3_430, %858, %c0_431] : memref<1x4x10x10xf32, #tpu.memory_space<vmem>>, vector<1x1x8x8xf32>
    %860 = vector.shape_cast %859 : vector<1x1x8x8xf32> to vector<8x8xf32>
    %861 = vector.broadcast %856 : f32 to vector<8x8xf32>
    %862 = arith.mulf %861, %860 : vector<8x8xf32>
    %863 = arith.addf %855, %862 : vector<8x8xf32>
    %c250 = arith.constant 250 : index
    %864 = memref.load %arg2[%c250] : memref<288xf32, #tpu.memory_space<smem>>
    %c2_i32_432 = arith.constant 2 : i32
    %865 = arith.addi %0, %c2_i32_432 : i32
    %c0_433 = arith.constant 0 : index
    %c3_434 = arith.constant 3 : index
    %866 = arith.index_cast %865 : i32 to index
    %c1_435 = arith.constant 1 : index
    %867 = vector.load %arg4[%c0_433, %c3_434, %866, %c1_435] : memref<1x4x10x10xf32, #tpu.memory_space<vmem>>, vector<1x1x8x8xf32>
    %868 = vector.shape_cast %867 : vector<1x1x8x8xf32> to vector<8x8xf32>
    %869 = vector.broadcast %864 : f32 to vector<8x8xf32>
    %870 = arith.mulf %869, %868 : vector<8x8xf32>
    %871 = arith.addf %863, %870 : vector<8x8xf32>
    %c282 = arith.constant 282 : index
    %872 = memref.load %arg2[%c282] : memref<288xf32, #tpu.memory_space<smem>>
    %c2_i32_436 = arith.constant 2 : i32
    %873 = arith.addi %0, %c2_i32_436 : i32
    %c0_437 = arith.constant 0 : index
    %c3_438 = arith.constant 3 : index
    %874 = arith.index_cast %873 : i32 to index
    %c2_439 = arith.constant 2 : index
    %875 = vector.load %arg4[%c0_437, %c3_438, %874, %c2_439] : memref<1x4x10x10xf32, #tpu.memory_space<vmem>>, vector<1x1x8x8xf32>
    %876 = vector.shape_cast %875 : vector<1x1x8x8xf32> to vector<8x8xf32>
    %877 = vector.broadcast %872 : f32 to vector<8x8xf32>
    %878 = arith.mulf %877, %876 : vector<8x8xf32>
    %879 = arith.addf %871, %878 : vector<8x8xf32>
    %c2_440 = arith.constant 2 : index
    %880 = memref.load %arg3[%c2_440] : memref<8xf32, #tpu.memory_space<smem>>
    %881 = vector.broadcast %880 : f32 to vector<8x8xf32>
    %882 = arith.addf %879, %881 : vector<8x8xf32>
    %c0_441 = arith.constant 0 : index
    %c2_442 = arith.constant 2 : index
    %c0_443 = arith.constant 0 : index
    %c0_444 = arith.constant 0 : index
    %883 = vector.load %arg5[%c0_441, %c2_442, %c0_443, %c0_444] : memref<1x8x8x8xf32, #tpu.memory_space<vmem>>, vector<1x1x8x8xf32>
    %884 = vector.shape_cast %883 : vector<1x1x8x8xf32> to vector<8x8xf32>
    %885 = vector.shape_cast %882 : vector<8x8xf32> to vector<1x1x8x8xf32>
    tpu.vector_store %arg5[%c0_441, %c2_442, %c0_443, %c0_444], %885 {strides = array<i32>} : memref<1x8x8x8xf32, #tpu.memory_space<vmem>>, vector<1x1x8x8xf32>,
    %cst_445 = arith.constant 0.000000e+00 : f32
    %886 = vector.broadcast %cst_445 : f32 to vector<8x8xf32>
    %c3_446 = arith.constant 3 : index
    %887 = memref.load %arg2[%c3_446] : memref<288xf32, #tpu.memory_space<smem>>
    %c0_i32_447 = arith.constant 0 : i32
    %888 = arith.addi %0, %c0_i32_447 : i32
    %c0_448 = arith.constant 0 : index
    %c0_449 = arith.constant 0 : index
    %889 = arith.index_cast %888 : i32 to index
    %c0_450 = arith.constant 0 : index
    %890 = vector.load %arg4[%c0_448, %c0_449, %889, %c0_450] : memref<1x4x10x10xf32, #tpu.memory_space<vmem>>, vector<1x1x8x8xf32>
    %891 = vector.shape_cast %890 : vector<1x1x8x8xf32> to vector<8x8xf32>
    %892 = vector.broadcast %887 : f32 to vector<8x8xf32>
    %893 = arith.mulf %892, %891 : vector<8x8xf32>
    %894 = arith.addf %886, %893 : vector<8x8xf32>
    %c35 = arith.constant 35 : index
    %895 = memref.load %arg2[%c35] : memref<288xf32, #tpu.memory_space<smem>>
    %c0_i32_451 = arith.constant 0 : i32
    %896 = arith.addi %0, %c0_i32_451 : i32
    %c0_452 = arith.constant 0 : index
    %c0_453 = arith.constant 0 : index
    %897 = arith.index_cast %896 : i32 to index
    %c1_454 = arith.constant 1 : index
    %898 = vector.load %arg4[%c0_452, %c0_453, %897, %c1_454] : memref<1x4x10x10xf32, #tpu.memory_space<vmem>>, vector<1x1x8x8xf32>
    %899 = vector.shape_cast %898 : vector<1x1x8x8xf32> to vector<8x8xf32>
    %900 = vector.broadcast %895 : f32 to vector<8x8xf32>
    %901 = arith.mulf %900, %899 : vector<8x8xf32>
    %902 = arith.addf %894, %901 : vector<8x8xf32>
    %c67 = arith.constant 67 : index
    %903 = memref.load %arg2[%c67] : memref<288xf32, #tpu.memory_space<smem>>
    %c0_i32_455 = arith.constant 0 : i32
    %904 = arith.addi %0, %c0_i32_455 : i32
    %c0_456 = arith.constant 0 : index
    %c0_457 = arith.constant 0 : index
    %905 = arith.index_cast %904 : i32 to index
    %c2_458 = arith.constant 2 : index
    %906 = vector.load %arg4[%c0_456, %c0_457, %905, %c2_458] : memref<1x4x10x10xf32, #tpu.memory_space<vmem>>, vector<1x1x8x8xf32>
    %907 = vector.shape_cast %906 : vector<1x1x8x8xf32> to vector<8x8xf32>
    %908 = vector.broadcast %903 : f32 to vector<8x8xf32>
    %909 = arith.mulf %908, %907 : vector<8x8xf32>
    %910 = arith.addf %902, %909 : vector<8x8xf32>
    %c99 = arith.constant 99 : index
    %911 = memref.load %arg2[%c99] : memref<288xf32, #tpu.memory_space<smem>>
    %c1_i32_459 = arith.constant 1 : i32
    %912 = arith.addi %0, %c1_i32_459 : i32
    %c0_460 = arith.constant 0 : index
    %c0_461 = arith.constant 0 : index
    %913 = arith.index_cast %912 : i32 to index
    %c0_462 = arith.constant 0 : index
    %914 = vector.load %arg4[%c0_460, %c0_461, %913, %c0_462] : memref<1x4x10x10xf32, #tpu.memory_space<vmem>>, vector<1x1x8x8xf32>
    %915 = vector.shape_cast %914 : vector<1x1x8x8xf32> to vector<8x8xf32>
    %916 = vector.broadcast %911 : f32 to vector<8x8xf32>
    %917 = arith.mulf %916, %915 : vector<8x8xf32>
    %918 = arith.addf %910, %917 : vector<8x8xf32>
    %c131 = arith.constant 131 : index
    %919 = memref.load %arg2[%c131] : memref<288xf32, #tpu.memory_space<smem>>
    %c1_i32_463 = arith.constant 1 : i32
    %920 = arith.addi %0, %c1_i32_463 : i32
    %c0_464 = arith.constant 0 : index
    %c0_465 = arith.constant 0 : index
    %921 = arith.index_cast %920 : i32 to index
    %c1_466 = arith.constant 1 : index
    %922 = vector.load %arg4[%c0_464, %c0_465, %921, %c1_466] : memref<1x4x10x10xf32, #tpu.memory_space<vmem>>, vector<1x1x8x8xf32>
    %923 = vector.shape_cast %922 : vector<1x1x8x8xf32> to vector<8x8xf32>
    %924 = vector.broadcast %919 : f32 to vector<8x8xf32>
    %925 = arith.mulf %924, %923 : vector<8x8xf32>
    %926 = arith.addf %918, %925 : vector<8x8xf32>
    %c163 = arith.constant 163 : index
    %927 = memref.load %arg2[%c163] : memref<288xf32, #tpu.memory_space<smem>>
    %c1_i32_467 = arith.constant 1 : i32
    %928 = arith.addi %0, %c1_i32_467 : i32
    %c0_468 = arith.constant 0 : index
    %c0_469 = arith.constant 0 : index
    %929 = arith.index_cast %928 : i32 to index
    %c2_470 = arith.constant 2 : index
    %930 = vector.load %arg4[%c0_468, %c0_469, %929, %c2_470] : memref<1x4x10x10xf32, #tpu.memory_space<vmem>>, vector<1x1x8x8xf32>
    %931 = vector.shape_cast %930 : vector<1x1x8x8xf32> to vector<8x8xf32>
    %932 = vector.broadcast %927 : f32 to vector<8x8xf32>
    %933 = arith.mulf %932, %931 : vector<8x8xf32>
    %934 = arith.addf %926, %933 : vector<8x8xf32>
    %c195 = arith.constant 195 : index
    %935 = memref.load %arg2[%c195] : memref<288xf32, #tpu.memory_space<smem>>
    %c2_i32_471 = arith.constant 2 : i32
    %936 = arith.addi %0, %c2_i32_471 : i32
    %c0_472 = arith.constant 0 : index
    %c0_473 = arith.constant 0 : index
    %937 = arith.index_cast %936 : i32 to index
    %c0_474 = arith.constant 0 : index
    %938 = vector.load %arg4[%c0_472, %c0_473, %937, %c0_474] : memref<1x4x10x10xf32, #tpu.memory_space<vmem>>, vector<1x1x8x8xf32>
    %939 = vector.shape_cast %938 : vector<1x1x8x8xf32> to vector<8x8xf32>
    %940 = vector.broadcast %935 : f32 to vector<8x8xf32>
    %941 = arith.mulf %940, %939 : vector<8x8xf32>
    %942 = arith.addf %934, %941 : vector<8x8xf32>
    %c227 = arith.constant 227 : index
    %943 = memref.load %arg2[%c227] : memref<288xf32, #tpu.memory_space<smem>>
    %c2_i32_475 = arith.constant 2 : i32
    %944 = arith.addi %0, %c2_i32_475 : i32
    %c0_476 = arith.constant 0 : index
    %c0_477 = arith.constant 0 : index
    %945 = arith.index_cast %944 : i32 to index
    %c1_478 = arith.constant 1 : index
    %946 = vector.load %arg4[%c0_476, %c0_477, %945, %c1_478] : memref<1x4x10x10xf32, #tpu.memory_space<vmem>>, vector<1x1x8x8xf32>
    %947 = vector.shape_cast %946 : vector<1x1x8x8xf32> to vector<8x8xf32>
    %948 = vector.broadcast %943 : f32 to vector<8x8xf32>
    %949 = arith.mulf %948, %947 : vector<8x8xf32>
    %950 = arith.addf %942, %949 : vector<8x8xf32>
    %c259 = arith.constant 259 : index
    %951 = memref.load %arg2[%c259] : memref<288xf32, #tpu.memory_space<smem>>
    %c2_i32_479 = arith.constant 2 : i32
    %952 = arith.addi %0, %c2_i32_479 : i32
    %c0_480 = arith.constant 0 : index
    %c0_481 = arith.constant 0 : index
    %953 = arith.index_cast %952 : i32 to index
    %c2_482 = arith.constant 2 : index
    %954 = vector.load %arg4[%c0_480, %c0_481, %953, %c2_482] : memref<1x4x10x10xf32, #tpu.memory_space<vmem>>, vector<1x1x8x8xf32>
    %955 = vector.shape_cast %954 : vector<1x1x8x8xf32> to vector<8x8xf32>
    %956 = vector.broadcast %951 : f32 to vector<8x8xf32>
    %957 = arith.mulf %956, %955 : vector<8x8xf32>
    %958 = arith.addf %950, %957 : vector<8x8xf32>
    %c11 = arith.constant 11 : index
    %959 = memref.load %arg2[%c11] : memref<288xf32, #tpu.memory_space<smem>>
    %c0_i32_483 = arith.constant 0 : i32
    %960 = arith.addi %0, %c0_i32_483 : i32
    %c0_484 = arith.constant 0 : index
    %c1_485 = arith.constant 1 : index
    %961 = arith.index_cast %960 : i32 to index
    %c0_486 = arith.constant 0 : index
    %962 = vector.load %arg4[%c0_484, %c1_485, %961, %c0_486] : memref<1x4x10x10xf32, #tpu.memory_space<vmem>>, vector<1x1x8x8xf32>
    %963 = vector.shape_cast %962 : vector<1x1x8x8xf32> to vector<8x8xf32>
    %964 = vector.broadcast %959 : f32 to vector<8x8xf32>
    %965 = arith.mulf %964, %963 : vector<8x8xf32>
    %966 = arith.addf %958, %965 : vector<8x8xf32>
    %c43 = arith.constant 43 : index
    %967 = memref.load %arg2[%c43] : memref<288xf32, #tpu.memory_space<smem>>
    %c0_i32_487 = arith.constant 0 : i32
    %968 = arith.addi %0, %c0_i32_487 : i32
    %c0_488 = arith.constant 0 : index
    %c1_489 = arith.constant 1 : index
    %969 = arith.index_cast %968 : i32 to index
    %c1_490 = arith.constant 1 : index
    %970 = vector.load %arg4[%c0_488, %c1_489, %969, %c1_490] : memref<1x4x10x10xf32, #tpu.memory_space<vmem>>, vector<1x1x8x8xf32>
    %971 = vector.shape_cast %970 : vector<1x1x8x8xf32> to vector<8x8xf32>
    %972 = vector.broadcast %967 : f32 to vector<8x8xf32>
    %973 = arith.mulf %972, %971 : vector<8x8xf32>
    %974 = arith.addf %966, %973 : vector<8x8xf32>
    %c75 = arith.constant 75 : index
    %975 = memref.load %arg2[%c75] : memref<288xf32, #tpu.memory_space<smem>>
    %c0_i32_491 = arith.constant 0 : i32
    %976 = arith.addi %0, %c0_i32_491 : i32
    %c0_492 = arith.constant 0 : index
    %c1_493 = arith.constant 1 : index
    %977 = arith.index_cast %976 : i32 to index
    %c2_494 = arith.constant 2 : index
    %978 = vector.load %arg4[%c0_492, %c1_493, %977, %c2_494] : memref<1x4x10x10xf32, #tpu.memory_space<vmem>>, vector<1x1x8x8xf32>
    %979 = vector.shape_cast %978 : vector<1x1x8x8xf32> to vector<8x8xf32>
    %980 = vector.broadcast %975 : f32 to vector<8x8xf32>
    %981 = arith.mulf %980, %979 : vector<8x8xf32>
    %982 = arith.addf %974, %981 : vector<8x8xf32>
    %c107 = arith.constant 107 : index
    %983 = memref.load %arg2[%c107] : memref<288xf32, #tpu.memory_space<smem>>
    %c1_i32_495 = arith.constant 1 : i32
    %984 = arith.addi %0, %c1_i32_495 : i32
    %c0_496 = arith.constant 0 : index
    %c1_497 = arith.constant 1 : index
    %985 = arith.index_cast %984 : i32 to index
    %c0_498 = arith.constant 0 : index
    %986 = vector.load %arg4[%c0_496, %c1_497, %985, %c0_498] : memref<1x4x10x10xf32, #tpu.memory_space<vmem>>, vector<1x1x8x8xf32>
    %987 = vector.shape_cast %986 : vector<1x1x8x8xf32> to vector<8x8xf32>
    %988 = vector.broadcast %983 : f32 to vector<8x8xf32>
    %989 = arith.mulf %988, %987 : vector<8x8xf32>
    %990 = arith.addf %982, %989 : vector<8x8xf32>
    %c139 = arith.constant 139 : index
    %991 = memref.load %arg2[%c139] : memref<288xf32, #tpu.memory_space<smem>>
    %c1_i32_499 = arith.constant 1 : i32
    %992 = arith.addi %0, %c1_i32_499 : i32
    %c0_500 = arith.constant 0 : index
    %c1_501 = arith.constant 1 : index
    %993 = arith.index_cast %992 : i32 to index
    %c1_502 = arith.constant 1 : index
    %994 = vector.load %arg4[%c0_500, %c1_501, %993, %c1_502] : memref<1x4x10x10xf32, #tpu.memory_space<vmem>>, vector<1x1x8x8xf32>
    %995 = vector.shape_cast %994 : vector<1x1x8x8xf32> to vector<8x8xf32>
    %996 = vector.broadcast %991 : f32 to vector<8x8xf32>
    %997 = arith.mulf %996, %995 : vector<8x8xf32>
    %998 = arith.addf %990, %997 : vector<8x8xf32>
    %c171 = arith.constant 171 : index
    %999 = memref.load %arg2[%c171] : memref<288xf32, #tpu.memory_space<smem>>
    %c1_i32_503 = arith.constant 1 : i32
    %1000 = arith.addi %0, %c1_i32_503 : i32
    %c0_504 = arith.constant 0 : index
    %c1_505 = arith.constant 1 : index
    %1001 = arith.index_cast %1000 : i32 to index
    %c2_506 = arith.constant 2 : index
    %1002 = vector.load %arg4[%c0_504, %c1_505, %1001, %c2_506] : memref<1x4x10x10xf32, #tpu.memory_space<vmem>>, vector<1x1x8x8xf32>
    %1003 = vector.shape_cast %1002 : vector<1x1x8x8xf32> to vector<8x8xf32>
    %1004 = vector.broadcast %999 : f32 to vector<8x8xf32>
    %1005 = arith.mulf %1004, %1003 : vector<8x8xf32>
    %1006 = arith.addf %998, %1005 : vector<8x8xf32>
    %c203 = arith.constant 203 : index
    %1007 = memref.load %arg2[%c203] : memref<288xf32, #tpu.memory_space<smem>>
    %c2_i32_507 = arith.constant 2 : i32
    %1008 = arith.addi %0, %c2_i32_507 : i32
    %c0_508 = arith.constant 0 : index
    %c1_509 = arith.constant 1 : index
    %1009 = arith.index_cast %1008 : i32 to index
    %c0_510 = arith.constant 0 : index
    %1010 = vector.load %arg4[%c0_508, %c1_509, %1009, %c0_510] : memref<1x4x10x10xf32, #tpu.memory_space<vmem>>, vector<1x1x8x8xf32>
    %1011 = vector.shape_cast %1010 : vector<1x1x8x8xf32> to vector<8x8xf32>
    %1012 = vector.broadcast %1007 : f32 to vector<8x8xf32>
    %1013 = arith.mulf %1012, %1011 : vector<8x8xf32>
    %1014 = arith.addf %1006, %1013 : vector<8x8xf32>
    %c235 = arith.constant 235 : index
    %1015 = memref.load %arg2[%c235] : memref<288xf32, #tpu.memory_space<smem>>
    %c2_i32_511 = arith.constant 2 : i32
    %1016 = arith.addi %0, %c2_i32_511 : i32
    %c0_512 = arith.constant 0 : index
    %c1_513 = arith.constant 1 : index
    %1017 = arith.index_cast %1016 : i32 to index
    %c1_514 = arith.constant 1 : index
    %1018 = vector.load %arg4[%c0_512, %c1_513, %1017, %c1_514] : memref<1x4x10x10xf32, #tpu.memory_space<vmem>>, vector<1x1x8x8xf32>
    %1019 = vector.shape_cast %1018 : vector<1x1x8x8xf32> to vector<8x8xf32>
    %1020 = vector.broadcast %1015 : f32 to vector<8x8xf32>
    %1021 = arith.mulf %1020, %1019 : vector<8x8xf32>
    %1022 = arith.addf %1014, %1021 : vector<8x8xf32>
    %c267 = arith.constant 267 : index
    %1023 = memref.load %arg2[%c267] : memref<288xf32, #tpu.memory_space<smem>>
    %c2_i32_515 = arith.constant 2 : i32
    %1024 = arith.addi %0, %c2_i32_515 : i32
    %c0_516 = arith.constant 0 : index
    %c1_517 = arith.constant 1 : index
    %1025 = arith.index_cast %1024 : i32 to index
    %c2_518 = arith.constant 2 : index
    %1026 = vector.load %arg4[%c0_516, %c1_517, %1025, %c2_518] : memref<1x4x10x10xf32, #tpu.memory_space<vmem>>, vector<1x1x8x8xf32>
    %1027 = vector.shape_cast %1026 : vector<1x1x8x8xf32> to vector<8x8xf32>
    %1028 = vector.broadcast %1023 : f32 to vector<8x8xf32>
    %1029 = arith.mulf %1028, %1027 : vector<8x8xf32>
    %1030 = arith.addf %1022, %1029 : vector<8x8xf32>
    %c19 = arith.constant 19 : index
    %1031 = memref.load %arg2[%c19] : memref<288xf32, #tpu.memory_space<smem>>
    %c0_i32_519 = arith.constant 0 : i32
    %1032 = arith.addi %0, %c0_i32_519 : i32
    %c0_520 = arith.constant 0 : index
    %c2_521 = arith.constant 2 : index
    %1033 = arith.index_cast %1032 : i32 to index
    %c0_522 = arith.constant 0 : index
    %1034 = vector.load %arg4[%c0_520, %c2_521, %1033, %c0_522] : memref<1x4x10x10xf32, #tpu.memory_space<vmem>>, vector<1x1x8x8xf32>
    %1035 = vector.shape_cast %1034 : vector<1x1x8x8xf32> to vector<8x8xf32>
    %1036 = vector.broadcast %1031 : f32 to vector<8x8xf32>
    %1037 = arith.mulf %1036, %1035 : vector<8x8xf32>
    %1038 = arith.addf %1030, %1037 : vector<8x8xf32>
    %c51 = arith.constant 51 : index
    %1039 = memref.load %arg2[%c51] : memref<288xf32, #tpu.memory_space<smem>>
    %c0_i32_523 = arith.constant 0 : i32
    %1040 = arith.addi %0, %c0_i32_523 : i32
    %c0_524 = arith.constant 0 : index
    %c2_525 = arith.constant 2 : index
    %1041 = arith.index_cast %1040 : i32 to index
    %c1_526 = arith.constant 1 : index
    %1042 = vector.load %arg4[%c0_524, %c2_525, %1041, %c1_526] : memref<1x4x10x10xf32, #tpu.memory_space<vmem>>, vector<1x1x8x8xf32>
    %1043 = vector.shape_cast %1042 : vector<1x1x8x8xf32> to vector<8x8xf32>
    %1044 = vector.broadcast %1039 : f32 to vector<8x8xf32>
    %1045 = arith.mulf %1044, %1043 : vector<8x8xf32>
    %1046 = arith.addf %1038, %1045 : vector<8x8xf32>
    %c83 = arith.constant 83 : index
    %1047 = memref.load %arg2[%c83] : memref<288xf32, #tpu.memory_space<smem>>
    %c0_i32_527 = arith.constant 0 : i32
    %1048 = arith.addi %0, %c0_i32_527 : i32
    %c0_528 = arith.constant 0 : index
    %c2_529 = arith.constant 2 : index
    %1049 = arith.index_cast %1048 : i32 to index
    %c2_530 = arith.constant 2 : index
    %1050 = vector.load %arg4[%c0_528, %c2_529, %1049, %c2_530] : memref<1x4x10x10xf32, #tpu.memory_space<vmem>>, vector<1x1x8x8xf32>
    %1051 = vector.shape_cast %1050 : vector<1x1x8x8xf32> to vector<8x8xf32>
    %1052 = vector.broadcast %1047 : f32 to vector<8x8xf32>
    %1053 = arith.mulf %1052, %1051 : vector<8x8xf32>
    %1054 = arith.addf %1046, %1053 : vector<8x8xf32>
    %c115 = arith.constant 115 : index
    %1055 = memref.load %arg2[%c115] : memref<288xf32, #tpu.memory_space<smem>>
    %c1_i32_531 = arith.constant 1 : i32
    %1056 = arith.addi %0, %c1_i32_531 : i32
    %c0_532 = arith.constant 0 : index
    %c2_533 = arith.constant 2 : index
    %1057 = arith.index_cast %1056 : i32 to index
    %c0_534 = arith.constant 0 : index
    %1058 = vector.load %arg4[%c0_532, %c2_533, %1057, %c0_534] : memref<1x4x10x10xf32, #tpu.memory_space<vmem>>, vector<1x1x8x8xf32>
    %1059 = vector.shape_cast %1058 : vector<1x1x8x8xf32> to vector<8x8xf32>
    %1060 = vector.broadcast %1055 : f32 to vector<8x8xf32>
    %1061 = arith.mulf %1060, %1059 : vector<8x8xf32>
    %1062 = arith.addf %1054, %1061 : vector<8x8xf32>
    %c147 = arith.constant 147 : index
    %1063 = memref.load %arg2[%c147] : memref<288xf32, #tpu.memory_space<smem>>
    %c1_i32_535 = arith.constant 1 : i32
    %1064 = arith.addi %0, %c1_i32_535 : i32
    %c0_536 = arith.constant 0 : index
    %c2_537 = arith.constant 2 : index
    %1065 = arith.index_cast %1064 : i32 to index
    %c1_538 = arith.constant 1 : index
    %1066 = vector.load %arg4[%c0_536, %c2_537, %1065, %c1_538] : memref<1x4x10x10xf32, #tpu.memory_space<vmem>>, vector<1x1x8x8xf32>
    %1067 = vector.shape_cast %1066 : vector<1x1x8x8xf32> to vector<8x8xf32>
    %1068 = vector.broadcast %1063 : f32 to vector<8x8xf32>
    %1069 = arith.mulf %1068, %1067 : vector<8x8xf32>
    %1070 = arith.addf %1062, %1069 : vector<8x8xf32>
    %c179 = arith.constant 179 : index
    %1071 = memref.load %arg2[%c179] : memref<288xf32, #tpu.memory_space<smem>>
    %c1_i32_539 = arith.constant 1 : i32
    %1072 = arith.addi %0, %c1_i32_539 : i32
    %c0_540 = arith.constant 0 : index
    %c2_541 = arith.constant 2 : index
    %1073 = arith.index_cast %1072 : i32 to index
    %c2_542 = arith.constant 2 : index
    %1074 = vector.load %arg4[%c0_540, %c2_541, %1073, %c2_542] : memref<1x4x10x10xf32, #tpu.memory_space<vmem>>, vector<1x1x8x8xf32>
    %1075 = vector.shape_cast %1074 : vector<1x1x8x8xf32> to vector<8x8xf32>
    %1076 = vector.broadcast %1071 : f32 to vector<8x8xf32>
    %1077 = arith.mulf %1076, %1075 : vector<8x8xf32>
    %1078 = arith.addf %1070, %1077 : vector<8x8xf32>
    %c211 = arith.constant 211 : index
    %1079 = memref.load %arg2[%c211] : memref<288xf32, #tpu.memory_space<smem>>
    %c2_i32_543 = arith.constant 2 : i32
    %1080 = arith.addi %0, %c2_i32_543 : i32
    %c0_544 = arith.constant 0 : index
    %c2_545 = arith.constant 2 : index
    %1081 = arith.index_cast %1080 : i32 to index
    %c0_546 = arith.constant 0 : index
    %1082 = vector.load %arg4[%c0_544, %c2_545, %1081, %c0_546] : memref<1x4x10x10xf32, #tpu.memory_space<vmem>>, vector<1x1x8x8xf32>
    %1083 = vector.shape_cast %1082 : vector<1x1x8x8xf32> to vector<8x8xf32>
    %1084 = vector.broadcast %1079 : f32 to vector<8x8xf32>
    %1085 = arith.mulf %1084, %1083 : vector<8x8xf32>
    %1086 = arith.addf %1078, %1085 : vector<8x8xf32>
    %c243 = arith.constant 243 : index
    %1087 = memref.load %arg2[%c243] : memref<288xf32, #tpu.memory_space<smem>>
    %c2_i32_547 = arith.constant 2 : i32
    %1088 = arith.addi %0, %c2_i32_547 : i32
    %c0_548 = arith.constant 0 : index
    %c2_549 = arith.constant 2 : index
    %1089 = arith.index_cast %1088 : i32 to index
    %c1_550 = arith.constant 1 : index
    %1090 = vector.load %arg4[%c0_548, %c2_549, %1089, %c1_550] : memref<1x4x10x10xf32, #tpu.memory_space<vmem>>, vector<1x1x8x8xf32>
    %1091 = vector.shape_cast %1090 : vector<1x1x8x8xf32> to vector<8x8xf32>
    %1092 = vector.broadcast %1087 : f32 to vector<8x8xf32>
    %1093 = arith.mulf %1092, %1091 : vector<8x8xf32>
    %1094 = arith.addf %1086, %1093 : vector<8x8xf32>
    %c275 = arith.constant 275 : index
    %1095 = memref.load %arg2[%c275] : memref<288xf32, #tpu.memory_space<smem>>
    %c2_i32_551 = arith.constant 2 : i32
    %1096 = arith.addi %0, %c2_i32_551 : i32
    %c0_552 = arith.constant 0 : index
    %c2_553 = arith.constant 2 : index
    %1097 = arith.index_cast %1096 : i32 to index
    %c2_554 = arith.constant 2 : index
    %1098 = vector.load %arg4[%c0_552, %c2_553, %1097, %c2_554] : memref<1x4x10x10xf32, #tpu.memory_space<vmem>>, vector<1x1x8x8xf32>
    %1099 = vector.shape_cast %1098 : vector<1x1x8x8xf32> to vector<8x8xf32>
    %1100 = vector.broadcast %1095 : f32 to vector<8x8xf32>
    %1101 = arith.mulf %1100, %1099 : vector<8x8xf32>
    %1102 = arith.addf %1094, %1101 : vector<8x8xf32>
    %c27 = arith.constant 27 : index
    %1103 = memref.load %arg2[%c27] : memref<288xf32, #tpu.memory_space<smem>>
    %c0_i32_555 = arith.constant 0 : i32
    %1104 = arith.addi %0, %c0_i32_555 : i32
    %c0_556 = arith.constant 0 : index
    %c3_557 = arith.constant 3 : index
    %1105 = arith.index_cast %1104 : i32 to index
    %c0_558 = arith.constant 0 : index
    %1106 = vector.load %arg4[%c0_556, %c3_557, %1105, %c0_558] : memref<1x4x10x10xf32, #tpu.memory_space<vmem>>, vector<1x1x8x8xf32>
    %1107 = vector.shape_cast %1106 : vector<1x1x8x8xf32> to vector<8x8xf32>
    %1108 = vector.broadcast %1103 : f32 to vector<8x8xf32>
    %1109 = arith.mulf %1108, %1107 : vector<8x8xf32>
    %1110 = arith.addf %1102, %1109 : vector<8x8xf32>
    %c59 = arith.constant 59 : index
    %1111 = memref.load %arg2[%c59] : memref<288xf32, #tpu.memory_space<smem>>
    %c0_i32_559 = arith.constant 0 : i32
    %1112 = arith.addi %0, %c0_i32_559 : i32
    %c0_560 = arith.constant 0 : index
    %c3_561 = arith.constant 3 : index
    %1113 = arith.index_cast %1112 : i32 to index
    %c1_562 = arith.constant 1 : index
    %1114 = vector.load %arg4[%c0_560, %c3_561, %1113, %c1_562] : memref<1x4x10x10xf32, #tpu.memory_space<vmem>>, vector<1x1x8x8xf32>
    %1115 = vector.shape_cast %1114 : vector<1x1x8x8xf32> to vector<8x8xf32>
    %1116 = vector.broadcast %1111 : f32 to vector<8x8xf32>
    %1117 = arith.mulf %1116, %1115 : vector<8x8xf32>
    %1118 = arith.addf %1110, %1117 : vector<8x8xf32>
    %c91 = arith.constant 91 : index
    %1119 = memref.load %arg2[%c91] : memref<288xf32, #tpu.memory_space<smem>>
    %c0_i32_563 = arith.constant 0 : i32
    %1120 = arith.addi %0, %c0_i32_563 : i32
    %c0_564 = arith.constant 0 : index
    %c3_565 = arith.constant 3 : index
    %1121 = arith.index_cast %1120 : i32 to index
    %c2_566 = arith.constant 2 : index
    %1122 = vector.load %arg4[%c0_564, %c3_565, %1121, %c2_566] : memref<1x4x10x10xf32, #tpu.memory_space<vmem>>, vector<1x1x8x8xf32>
    %1123 = vector.shape_cast %1122 : vector<1x1x8x8xf32> to vector<8x8xf32>
    %1124 = vector.broadcast %1119 : f32 to vector<8x8xf32>
    %1125 = arith.mulf %1124, %1123 : vector<8x8xf32>
    %1126 = arith.addf %1118, %1125 : vector<8x8xf32>
    %c123 = arith.constant 123 : index
    %1127 = memref.load %arg2[%c123] : memref<288xf32, #tpu.memory_space<smem>>
    %c1_i32_567 = arith.constant 1 : i32
    %1128 = arith.addi %0, %c1_i32_567 : i32
    %c0_568 = arith.constant 0 : index
    %c3_569 = arith.constant 3 : index
    %1129 = arith.index_cast %1128 : i32 to index
    %c0_570 = arith.constant 0 : index
    %1130 = vector.load %arg4[%c0_568, %c3_569, %1129, %c0_570] : memref<1x4x10x10xf32, #tpu.memory_space<vmem>>, vector<1x1x8x8xf32>
    %1131 = vector.shape_cast %1130 : vector<1x1x8x8xf32> to vector<8x8xf32>
    %1132 = vector.broadcast %1127 : f32 to vector<8x8xf32>
    %1133 = arith.mulf %1132, %1131 : vector<8x8xf32>
    %1134 = arith.addf %1126, %1133 : vector<8x8xf32>
    %c155 = arith.constant 155 : index
    %1135 = memref.load %arg2[%c155] : memref<288xf32, #tpu.memory_space<smem>>
    %c1_i32_571 = arith.constant 1 : i32
    %1136 = arith.addi %0, %c1_i32_571 : i32
    %c0_572 = arith.constant 0 : index
    %c3_573 = arith.constant 3 : index
    %1137 = arith.index_cast %1136 : i32 to index
    %c1_574 = arith.constant 1 : index
    %1138 = vector.load %arg4[%c0_572, %c3_573, %1137, %c1_574] : memref<1x4x10x10xf32, #tpu.memory_space<vmem>>, vector<1x1x8x8xf32>
    %1139 = vector.shape_cast %1138 : vector<1x1x8x8xf32> to vector<8x8xf32>
    %1140 = vector.broadcast %1135 : f32 to vector<8x8xf32>
    %1141 = arith.mulf %1140, %1139 : vector<8x8xf32>
    %1142 = arith.addf %1134, %1141 : vector<8x8xf32>
    %c187 = arith.constant 187 : index
    %1143 = memref.load %arg2[%c187] : memref<288xf32, #tpu.memory_space<smem>>
    %c1_i32_575 = arith.constant 1 : i32
    %1144 = arith.addi %0, %c1_i32_575 : i32
    %c0_576 = arith.constant 0 : index
    %c3_577 = arith.constant 3 : index
    %1145 = arith.index_cast %1144 : i32 to index
    %c2_578 = arith.constant 2 : index
    %1146 = vector.load %arg4[%c0_576, %c3_577, %1145, %c2_578] : memref<1x4x10x10xf32, #tpu.memory_space<vmem>>, vector<1x1x8x8xf32>
    %1147 = vector.shape_cast %1146 : vector<1x1x8x8xf32> to vector<8x8xf32>
    %1148 = vector.broadcast %1143 : f32 to vector<8x8xf32>
    %1149 = arith.mulf %1148, %1147 : vector<8x8xf32>
    %1150 = arith.addf %1142, %1149 : vector<8x8xf32>
    %c219 = arith.constant 219 : index
    %1151 = memref.load %arg2[%c219] : memref<288xf32, #tpu.memory_space<smem>>
    %c2_i32_579 = arith.constant 2 : i32
    %1152 = arith.addi %0, %c2_i32_579 : i32
    %c0_580 = arith.constant 0 : index
    %c3_581 = arith.constant 3 : index
    %1153 = arith.index_cast %1152 : i32 to index
    %c0_582 = arith.constant 0 : index
    %1154 = vector.load %arg4[%c0_580, %c3_581, %1153, %c0_582] : memref<1x4x10x10xf32, #tpu.memory_space<vmem>>, vector<1x1x8x8xf32>
    %1155 = vector.shape_cast %1154 : vector<1x1x8x8xf32> to vector<8x8xf32>
    %1156 = vector.broadcast %1151 : f32 to vector<8x8xf32>
    %1157 = arith.mulf %1156, %1155 : vector<8x8xf32>
    %1158 = arith.addf %1150, %1157 : vector<8x8xf32>
    %c251 = arith.constant 251 : index
    %1159 = memref.load %arg2[%c251] : memref<288xf32, #tpu.memory_space<smem>>
    %c2_i32_583 = arith.constant 2 : i32
    %1160 = arith.addi %0, %c2_i32_583 : i32
    %c0_584 = arith.constant 0 : index
    %c3_585 = arith.constant 3 : index
    %1161 = arith.index_cast %1160 : i32 to index
    %c1_586 = arith.constant 1 : index
    %1162 = vector.load %arg4[%c0_584, %c3_585, %1161, %c1_586] : memref<1x4x10x10xf32, #tpu.memory_space<vmem>>, vector<1x1x8x8xf32>
    %1163 = vector.shape_cast %1162 : vector<1x1x8x8xf32> to vector<8x8xf32>
    %1164 = vector.broadcast %1159 : f32 to vector<8x8xf32>
    %1165 = arith.mulf %1164, %1163 : vector<8x8xf32>
    %1166 = arith.addf %1158, %1165 : vector<8x8xf32>
    %c283 = arith.constant 283 : index
    %1167 = memref.load %arg2[%c283] : memref<288xf32, #tpu.memory_space<smem>>
    %c2_i32_587 = arith.constant 2 : i32
    %1168 = arith.addi %0, %c2_i32_587 : i32
    %c0_588 = arith.constant 0 : index
    %c3_589 = arith.constant 3 : index
    %1169 = arith.index_cast %1168 : i32 to index
    %c2_590 = arith.constant 2 : index
    %1170 = vector.load %arg4[%c0_588, %c3_589, %1169, %c2_590] : memref<1x4x10x10xf32, #tpu.memory_space<vmem>>, vector<1x1x8x8xf32>
    %1171 = vector.shape_cast %1170 : vector<1x1x8x8xf32> to vector<8x8xf32>
    %1172 = vector.broadcast %1167 : f32 to vector<8x8xf32>
    %1173 = arith.mulf %1172, %1171 : vector<8x8xf32>
    %1174 = arith.addf %1166, %1173 : vector<8x8xf32>
    %c3_591 = arith.constant 3 : index
    %1175 = memref.load %arg3[%c3_591] : memref<8xf32, #tpu.memory_space<smem>>
    %1176 = vector.broadcast %1175 : f32 to vector<8x8xf32>
    %1177 = arith.addf %1174, %1176 : vector<8x8xf32>
    %c0_592 = arith.constant 0 : index
    %c3_593 = arith.constant 3 : index
    %c0_594 = arith.constant 0 : index
    %c0_595 = arith.constant 0 : index
    %1178 = vector.load %arg5[%c0_592, %c3_593, %c0_594, %c0_595] : memref<1x8x8x8xf32, #tpu.memory_space<vmem>>, vector<1x1x8x8xf32>
    %1179 = vector.shape_cast %1178 : vector<1x1x8x8xf32> to vector<8x8xf32>
    %1180 = vector.shape_cast %1177 : vector<8x8xf32> to vector<1x1x8x8xf32>
    tpu.vector_store %arg5[%c0_592, %c3_593, %c0_594, %c0_595], %1180 {strides = array<i32>} : memref<1x8x8x8xf32, #tpu.memory_space<vmem>>, vector<1x1x8x8xf32>,
    %cst_596 = arith.constant 0.000000e+00 : f32
    %1181 = vector.broadcast %cst_596 : f32 to vector<8x8xf32>
    %c4 = arith.constant 4 : index
    %1182 = memref.load %arg2[%c4] : memref<288xf32, #tpu.memory_space<smem>>
    %c0_i32_597 = arith.constant 0 : i32
    %1183 = arith.addi %0, %c0_i32_597 : i32
    %c0_598 = arith.constant 0 : index
    %c0_599 = arith.constant 0 : index
    %1184 = arith.index_cast %1183 : i32 to index
    %c0_600 = arith.constant 0 : index
    %1185 = vector.load %arg4[%c0_598, %c0_599, %1184, %c0_600] : memref<1x4x10x10xf32, #tpu.memory_space<vmem>>, vector<1x1x8x8xf32>
    %1186 = vector.shape_cast %1185 : vector<1x1x8x8xf32> to vector<8x8xf32>
    %1187 = vector.broadcast %1182 : f32 to vector<8x8xf32>
    %1188 = arith.mulf %1187, %1186 : vector<8x8xf32>
    %1189 = arith.addf %1181, %1188 : vector<8x8xf32>
    %c36 = arith.constant 36 : index
    %1190 = memref.load %arg2[%c36] : memref<288xf32, #tpu.memory_space<smem>>
    %c0_i32_601 = arith.constant 0 : i32
    %1191 = arith.addi %0, %c0_i32_601 : i32
    %c0_602 = arith.constant 0 : index
    %c0_603 = arith.constant 0 : index
    %1192 = arith.index_cast %1191 : i32 to index
    %c1_604 = arith.constant 1 : index
    %1193 = vector.load %arg4[%c0_602, %c0_603, %1192, %c1_604] : memref<1x4x10x10xf32, #tpu.memory_space<vmem>>, vector<1x1x8x8xf32>
    %1194 = vector.shape_cast %1193 : vector<1x1x8x8xf32> to vector<8x8xf32>
    %1195 = vector.broadcast %1190 : f32 to vector<8x8xf32>
    %1196 = arith.mulf %1195, %1194 : vector<8x8xf32>
    %1197 = arith.addf %1189, %1196 : vector<8x8xf32>
    %c68 = arith.constant 68 : index
    %1198 = memref.load %arg2[%c68] : memref<288xf32, #tpu.memory_space<smem>>
    %c0_i32_605 = arith.constant 0 : i32
    %1199 = arith.addi %0, %c0_i32_605 : i32
    %c0_606 = arith.constant 0 : index
    %c0_607 = arith.constant 0 : index
    %1200 = arith.index_cast %1199 : i32 to index
    %c2_608 = arith.constant 2 : index
    %1201 = vector.load %arg4[%c0_606, %c0_607, %1200, %c2_608] : memref<1x4x10x10xf32, #tpu.memory_space<vmem>>, vector<1x1x8x8xf32>
    %1202 = vector.shape_cast %1201 : vector<1x1x8x8xf32> to vector<8x8xf32>
    %1203 = vector.broadcast %1198 : f32 to vector<8x8xf32>
    %1204 = arith.mulf %1203, %1202 : vector<8x8xf32>
    %1205 = arith.addf %1197, %1204 : vector<8x8xf32>
    %c100 = arith.constant 100 : index
    %1206 = memref.load %arg2[%c100] : memref<288xf32, #tpu.memory_space<smem>>
    %c1_i32_609 = arith.constant 1 : i32
    %1207 = arith.addi %0, %c1_i32_609 : i32
    %c0_610 = arith.constant 0 : index
    %c0_611 = arith.constant 0 : index
    %1208 = arith.index_cast %1207 : i32 to index
    %c0_612 = arith.constant 0 : index
    %1209 = vector.load %arg4[%c0_610, %c0_611, %1208, %c0_612] : memref<1x4x10x10xf32, #tpu.memory_space<vmem>>, vector<1x1x8x8xf32>
    %1210 = vector.shape_cast %1209 : vector<1x1x8x8xf32> to vector<8x8xf32>
    %1211 = vector.broadcast %1206 : f32 to vector<8x8xf32>
    %1212 = arith.mulf %1211, %1210 : vector<8x8xf32>
    %1213 = arith.addf %1205, %1212 : vector<8x8xf32>
    %c132 = arith.constant 132 : index
    %1214 = memref.load %arg2[%c132] : memref<288xf32, #tpu.memory_space<smem>>
    %c1_i32_613 = arith.constant 1 : i32
    %1215 = arith.addi %0, %c1_i32_613 : i32
    %c0_614 = arith.constant 0 : index
    %c0_615 = arith.constant 0 : index
    %1216 = arith.index_cast %1215 : i32 to index
    %c1_616 = arith.constant 1 : index
    %1217 = vector.load %arg4[%c0_614, %c0_615, %1216, %c1_616] : memref<1x4x10x10xf32, #tpu.memory_space<vmem>>, vector<1x1x8x8xf32>
    %1218 = vector.shape_cast %1217 : vector<1x1x8x8xf32> to vector<8x8xf32>
    %1219 = vector.broadcast %1214 : f32 to vector<8x8xf32>
    %1220 = arith.mulf %1219, %1218 : vector<8x8xf32>
    %1221 = arith.addf %1213, %1220 : vector<8x8xf32>
    %c164 = arith.constant 164 : index
    %1222 = memref.load %arg2[%c164] : memref<288xf32, #tpu.memory_space<smem>>
    %c1_i32_617 = arith.constant 1 : i32
    %1223 = arith.addi %0, %c1_i32_617 : i32
    %c0_618 = arith.constant 0 : index
    %c0_619 = arith.constant 0 : index
    %1224 = arith.index_cast %1223 : i32 to index
    %c2_620 = arith.constant 2 : index
    %1225 = vector.load %arg4[%c0_618, %c0_619, %1224, %c2_620] : memref<1x4x10x10xf32, #tpu.memory_space<vmem>>, vector<1x1x8x8xf32>
    %1226 = vector.shape_cast %1225 : vector<1x1x8x8xf32> to vector<8x8xf32>
    %1227 = vector.broadcast %1222 : f32 to vector<8x8xf32>
    %1228 = arith.mulf %1227, %1226 : vector<8x8xf32>
    %1229 = arith.addf %1221, %1228 : vector<8x8xf32>
    %c196 = arith.constant 196 : index
    %1230 = memref.load %arg2[%c196] : memref<288xf32, #tpu.memory_space<smem>>
    %c2_i32_621 = arith.constant 2 : i32
    %1231 = arith.addi %0, %c2_i32_621 : i32
    %c0_622 = arith.constant 0 : index
    %c0_623 = arith.constant 0 : index
    %1232 = arith.index_cast %1231 : i32 to index
    %c0_624 = arith.constant 0 : index
    %1233 = vector.load %arg4[%c0_622, %c0_623, %1232, %c0_624] : memref<1x4x10x10xf32, #tpu.memory_space<vmem>>, vector<1x1x8x8xf32>
    %1234 = vector.shape_cast %1233 : vector<1x1x8x8xf32> to vector<8x8xf32>
    %1235 = vector.broadcast %1230 : f32 to vector<8x8xf32>
    %1236 = arith.mulf %1235, %1234 : vector<8x8xf32>
    %1237 = arith.addf %1229, %1236 : vector<8x8xf32>
    %c228 = arith.constant 228 : index
    %1238 = memref.load %arg2[%c228] : memref<288xf32, #tpu.memory_space<smem>>
    %c2_i32_625 = arith.constant 2 : i32
    %1239 = arith.addi %0, %c2_i32_625 : i32
    %c0_626 = arith.constant 0 : index
    %c0_627 = arith.constant 0 : index
    %1240 = arith.index_cast %1239 : i32 to index
    %c1_628 = arith.constant 1 : index
    %1241 = vector.load %arg4[%c0_626, %c0_627, %1240, %c1_628] : memref<1x4x10x10xf32, #tpu.memory_space<vmem>>, vector<1x1x8x8xf32>
    %1242 = vector.shape_cast %1241 : vector<1x1x8x8xf32> to vector<8x8xf32>
    %1243 = vector.broadcast %1238 : f32 to vector<8x8xf32>
    %1244 = arith.mulf %1243, %1242 : vector<8x8xf32>
    %1245 = arith.addf %1237, %1244 : vector<8x8xf32>
    %c260 = arith.constant 260 : index
    %1246 = memref.load %arg2[%c260] : memref<288xf32, #tpu.memory_space<smem>>
    %c2_i32_629 = arith.constant 2 : i32
    %1247 = arith.addi %0, %c2_i32_629 : i32
    %c0_630 = arith.constant 0 : index
    %c0_631 = arith.constant 0 : index
    %1248 = arith.index_cast %1247 : i32 to index
    %c2_632 = arith.constant 2 : index
    %1249 = vector.load %arg4[%c0_630, %c0_631, %1248, %c2_632] : memref<1x4x10x10xf32, #tpu.memory_space<vmem>>, vector<1x1x8x8xf32>
    %1250 = vector.shape_cast %1249 : vector<1x1x8x8xf32> to vector<8x8xf32>
    %1251 = vector.broadcast %1246 : f32 to vector<8x8xf32>
    %1252 = arith.mulf %1251, %1250 : vector<8x8xf32>
    %1253 = arith.addf %1245, %1252 : vector<8x8xf32>
    %c12 = arith.constant 12 : index
    %1254 = memref.load %arg2[%c12] : memref<288xf32, #tpu.memory_space<smem>>
    %c0_i32_633 = arith.constant 0 : i32
    %1255 = arith.addi %0, %c0_i32_633 : i32
    %c0_634 = arith.constant 0 : index
    %c1_635 = arith.constant 1 : index
    %1256 = arith.index_cast %1255 : i32 to index
    %c0_636 = arith.constant 0 : index
    %1257 = vector.load %arg4[%c0_634, %c1_635, %1256, %c0_636] : memref<1x4x10x10xf32, #tpu.memory_space<vmem>>, vector<1x1x8x8xf32>
    %1258 = vector.shape_cast %1257 : vector<1x1x8x8xf32> to vector<8x8xf32>
    %1259 = vector.broadcast %1254 : f32 to vector<8x8xf32>
    %1260 = arith.mulf %1259, %1258 : vector<8x8xf32>
    %1261 = arith.addf %1253, %1260 : vector<8x8xf32>
    %c44 = arith.constant 44 : index
    %1262 = memref.load %arg2[%c44] : memref<288xf32, #tpu.memory_space<smem>>
    %c0_i32_637 = arith.constant 0 : i32
    %1263 = arith.addi %0, %c0_i32_637 : i32
    %c0_638 = arith.constant 0 : index
    %c1_639 = arith.constant 1 : index
    %1264 = arith.index_cast %1263 : i32 to index
    %c1_640 = arith.constant 1 : index
    %1265 = vector.load %arg4[%c0_638, %c1_639, %1264, %c1_640] : memref<1x4x10x10xf32, #tpu.memory_space<vmem>>, vector<1x1x8x8xf32>
    %1266 = vector.shape_cast %1265 : vector<1x1x8x8xf32> to vector<8x8xf32>
    %1267 = vector.broadcast %1262 : f32 to vector<8x8xf32>
    %1268 = arith.mulf %1267, %1266 : vector<8x8xf32>
    %1269 = arith.addf %1261, %1268 : vector<8x8xf32>
    %c76 = arith.constant 76 : index
    %1270 = memref.load %arg2[%c76] : memref<288xf32, #tpu.memory_space<smem>>
    %c0_i32_641 = arith.constant 0 : i32
    %1271 = arith.addi %0, %c0_i32_641 : i32
    %c0_642 = arith.constant 0 : index
    %c1_643 = arith.constant 1 : index
    %1272 = arith.index_cast %1271 : i32 to index
    %c2_644 = arith.constant 2 : index
    %1273 = vector.load %arg4[%c0_642, %c1_643, %1272, %c2_644] : memref<1x4x10x10xf32, #tpu.memory_space<vmem>>, vector<1x1x8x8xf32>
    %1274 = vector.shape_cast %1273 : vector<1x1x8x8xf32> to vector<8x8xf32>
    %1275 = vector.broadcast %1270 : f32 to vector<8x8xf32>
    %1276 = arith.mulf %1275, %1274 : vector<8x8xf32>
    %1277 = arith.addf %1269, %1276 : vector<8x8xf32>
    %c108 = arith.constant 108 : index
    %1278 = memref.load %arg2[%c108] : memref<288xf32, #tpu.memory_space<smem>>
    %c1_i32_645 = arith.constant 1 : i32
    %1279 = arith.addi %0, %c1_i32_645 : i32
    %c0_646 = arith.constant 0 : index
    %c1_647 = arith.constant 1 : index
    %1280 = arith.index_cast %1279 : i32 to index
    %c0_648 = arith.constant 0 : index
    %1281 = vector.load %arg4[%c0_646, %c1_647, %1280, %c0_648] : memref<1x4x10x10xf32, #tpu.memory_space<vmem>>, vector<1x1x8x8xf32>
    %1282 = vector.shape_cast %1281 : vector<1x1x8x8xf32> to vector<8x8xf32>
    %1283 = vector.broadcast %1278 : f32 to vector<8x8xf32>
    %1284 = arith.mulf %1283, %1282 : vector<8x8xf32>
    %1285 = arith.addf %1277, %1284 : vector<8x8xf32>
    %c140 = arith.constant 140 : index
    %1286 = memref.load %arg2[%c140] : memref<288xf32, #tpu.memory_space<smem>>
    %c1_i32_649 = arith.constant 1 : i32
    %1287 = arith.addi %0, %c1_i32_649 : i32
    %c0_650 = arith.constant 0 : index
    %c1_651 = arith.constant 1 : index
    %1288 = arith.index_cast %1287 : i32 to index
    %c1_652 = arith.constant 1 : index
    %1289 = vector.load %arg4[%c0_650, %c1_651, %1288, %c1_652] : memref<1x4x10x10xf32, #tpu.memory_space<vmem>>, vector<1x1x8x8xf32>
    %1290 = vector.shape_cast %1289 : vector<1x1x8x8xf32> to vector<8x8xf32>
    %1291 = vector.broadcast %1286 : f32 to vector<8x8xf32>
    %1292 = arith.mulf %1291, %1290 : vector<8x8xf32>
    %1293 = arith.addf %1285, %1292 : vector<8x8xf32>
    %c172 = arith.constant 172 : index
    %1294 = memref.load %arg2[%c172] : memref<288xf32, #tpu.memory_space<smem>>
    %c1_i32_653 = arith.constant 1 : i32
    %1295 = arith.addi %0, %c1_i32_653 : i32
    %c0_654 = arith.constant 0 : index
    %c1_655 = arith.constant 1 : index
    %1296 = arith.index_cast %1295 : i32 to index
    %c2_656 = arith.constant 2 : index
    %1297 = vector.load %arg4[%c0_654, %c1_655, %1296, %c2_656] : memref<1x4x10x10xf32, #tpu.memory_space<vmem>>, vector<1x1x8x8xf32>
    %1298 = vector.shape_cast %1297 : vector<1x1x8x8xf32> to vector<8x8xf32>
    %1299 = vector.broadcast %1294 : f32 to vector<8x8xf32>
    %1300 = arith.mulf %1299, %1298 : vector<8x8xf32>
    %1301 = arith.addf %1293, %1300 : vector<8x8xf32>
    %c204 = arith.constant 204 : index
    %1302 = memref.load %arg2[%c204] : memref<288xf32, #tpu.memory_space<smem>>
    %c2_i32_657 = arith.constant 2 : i32
    %1303 = arith.addi %0, %c2_i32_657 : i32
    %c0_658 = arith.constant 0 : index
    %c1_659 = arith.constant 1 : index
    %1304 = arith.index_cast %1303 : i32 to index
    %c0_660 = arith.constant 0 : index
    %1305 = vector.load %arg4[%c0_658, %c1_659, %1304, %c0_660] : memref<1x4x10x10xf32, #tpu.memory_space<vmem>>, vector<1x1x8x8xf32>
    %1306 = vector.shape_cast %1305 : vector<1x1x8x8xf32> to vector<8x8xf32>
    %1307 = vector.broadcast %1302 : f32 to vector<8x8xf32>
    %1308 = arith.mulf %1307, %1306 : vector<8x8xf32>
    %1309 = arith.addf %1301, %1308 : vector<8x8xf32>
    %c236 = arith.constant 236 : index
    %1310 = memref.load %arg2[%c236] : memref<288xf32, #tpu.memory_space<smem>>
    %c2_i32_661 = arith.constant 2 : i32
    %1311 = arith.addi %0, %c2_i32_661 : i32
    %c0_662 = arith.constant 0 : index
    %c1_663 = arith.constant 1 : index
    %1312 = arith.index_cast %1311 : i32 to index
    %c1_664 = arith.constant 1 : index
    %1313 = vector.load %arg4[%c0_662, %c1_663, %1312, %c1_664] : memref<1x4x10x10xf32, #tpu.memory_space<vmem>>, vector<1x1x8x8xf32>
    %1314 = vector.shape_cast %1313 : vector<1x1x8x8xf32> to vector<8x8xf32>
    %1315 = vector.broadcast %1310 : f32 to vector<8x8xf32>
    %1316 = arith.mulf %1315, %1314 : vector<8x8xf32>
    %1317 = arith.addf %1309, %1316 : vector<8x8xf32>
    %c268 = arith.constant 268 : index
    %1318 = memref.load %arg2[%c268] : memref<288xf32, #tpu.memory_space<smem>>
    %c2_i32_665 = arith.constant 2 : i32
    %1319 = arith.addi %0, %c2_i32_665 : i32
    %c0_666 = arith.constant 0 : index
    %c1_667 = arith.constant 1 : index
    %1320 = arith.index_cast %1319 : i32 to index
    %c2_668 = arith.constant 2 : index
    %1321 = vector.load %arg4[%c0_666, %c1_667, %1320, %c2_668] : memref<1x4x10x10xf32, #tpu.memory_space<vmem>>, vector<1x1x8x8xf32>
    %1322 = vector.shape_cast %1321 : vector<1x1x8x8xf32> to vector<8x8xf32>
    %1323 = vector.broadcast %1318 : f32 to vector<8x8xf32>
    %1324 = arith.mulf %1323, %1322 : vector<8x8xf32>
    %1325 = arith.addf %1317, %1324 : vector<8x8xf32>
    %c20 = arith.constant 20 : index
    %1326 = memref.load %arg2[%c20] : memref<288xf32, #tpu.memory_space<smem>>
    %c0_i32_669 = arith.constant 0 : i32
    %1327 = arith.addi %0, %c0_i32_669 : i32
    %c0_670 = arith.constant 0 : index
    %c2_671 = arith.constant 2 : index
    %1328 = arith.index_cast %1327 : i32 to index
    %c0_672 = arith.constant 0 : index
    %1329 = vector.load %arg4[%c0_670, %c2_671, %1328, %c0_672] : memref<1x4x10x10xf32, #tpu.memory_space<vmem>>, vector<1x1x8x8xf32>
    %1330 = vector.shape_cast %1329 : vector<1x1x8x8xf32> to vector<8x8xf32>
    %1331 = vector.broadcast %1326 : f32 to vector<8x8xf32>
    %1332 = arith.mulf %1331, %1330 : vector<8x8xf32>
    %1333 = arith.addf %1325, %1332 : vector<8x8xf32>
    %c52 = arith.constant 52 : index
    %1334 = memref.load %arg2[%c52] : memref<288xf32, #tpu.memory_space<smem>>
    %c0_i32_673 = arith.constant 0 : i32
    %1335 = arith.addi %0, %c0_i32_673 : i32
    %c0_674 = arith.constant 0 : index
    %c2_675 = arith.constant 2 : index
    %1336 = arith.index_cast %1335 : i32 to index
    %c1_676 = arith.constant 1 : index
    %1337 = vector.load %arg4[%c0_674, %c2_675, %1336, %c1_676] : memref<1x4x10x10xf32, #tpu.memory_space<vmem>>, vector<1x1x8x8xf32>
    %1338 = vector.shape_cast %1337 : vector<1x1x8x8xf32> to vector<8x8xf32>
    %1339 = vector.broadcast %1334 : f32 to vector<8x8xf32>
    %1340 = arith.mulf %1339, %1338 : vector<8x8xf32>
    %1341 = arith.addf %1333, %1340 : vector<8x8xf32>
    %c84 = arith.constant 84 : index
    %1342 = memref.load %arg2[%c84] : memref<288xf32, #tpu.memory_space<smem>>
    %c0_i32_677 = arith.constant 0 : i32
    %1343 = arith.addi %0, %c0_i32_677 : i32
    %c0_678 = arith.constant 0 : index
    %c2_679 = arith.constant 2 : index
    %1344 = arith.index_cast %1343 : i32 to index
    %c2_680 = arith.constant 2 : index
    %1345 = vector.load %arg4[%c0_678, %c2_679, %1344, %c2_680] : memref<1x4x10x10xf32, #tpu.memory_space<vmem>>, vector<1x1x8x8xf32>
    %1346 = vector.shape_cast %1345 : vector<1x1x8x8xf32> to vector<8x8xf32>
    %1347 = vector.broadcast %1342 : f32 to vector<8x8xf32>
    %1348 = arith.mulf %1347, %1346 : vector<8x8xf32>
    %1349 = arith.addf %1341, %1348 : vector<8x8xf32>
    %c116 = arith.constant 116 : index
    %1350 = memref.load %arg2[%c116] : memref<288xf32, #tpu.memory_space<smem>>
    %c1_i32_681 = arith.constant 1 : i32
    %1351 = arith.addi %0, %c1_i32_681 : i32
    %c0_682 = arith.constant 0 : index
    %c2_683 = arith.constant 2 : index
    %1352 = arith.index_cast %1351 : i32 to index
    %c0_684 = arith.constant 0 : index
    %1353 = vector.load %arg4[%c0_682, %c2_683, %1352, %c0_684] : memref<1x4x10x10xf32, #tpu.memory_space<vmem>>, vector<1x1x8x8xf32>
    %1354 = vector.shape_cast %1353 : vector<1x1x8x8xf32> to vector<8x8xf32>
    %1355 = vector.broadcast %1350 : f32 to vector<8x8xf32>
    %1356 = arith.mulf %1355, %1354 : vector<8x8xf32>
    %1357 = arith.addf %1349, %1356 : vector<8x8xf32>
    %c148 = arith.constant 148 : index
    %1358 = memref.load %arg2[%c148] : memref<288xf32, #tpu.memory_space<smem>>
    %c1_i32_685 = arith.constant 1 : i32
    %1359 = arith.addi %0, %c1_i32_685 : i32
    %c0_686 = arith.constant 0 : index
    %c2_687 = arith.constant 2 : index
    %1360 = arith.index_cast %1359 : i32 to index
    %c1_688 = arith.constant 1 : index
    %1361 = vector.load %arg4[%c0_686, %c2_687, %1360, %c1_688] : memref<1x4x10x10xf32, #tpu.memory_space<vmem>>, vector<1x1x8x8xf32>
    %1362 = vector.shape_cast %1361 : vector<1x1x8x8xf32> to vector<8x8xf32>
    %1363 = vector.broadcast %1358 : f32 to vector<8x8xf32>
    %1364 = arith.mulf %1363, %1362 : vector<8x8xf32>
    %1365 = arith.addf %1357, %1364 : vector<8x8xf32>
    %c180 = arith.constant 180 : index
    %1366 = memref.load %arg2[%c180] : memref<288xf32, #tpu.memory_space<smem>>
    %c1_i32_689 = arith.constant 1 : i32
    %1367 = arith.addi %0, %c1_i32_689 : i32
    %c0_690 = arith.constant 0 : index
    %c2_691 = arith.constant 2 : index
    %1368 = arith.index_cast %1367 : i32 to index
    %c2_692 = arith.constant 2 : index
    %1369 = vector.load %arg4[%c0_690, %c2_691, %1368, %c2_692] : memref<1x4x10x10xf32, #tpu.memory_space<vmem>>, vector<1x1x8x8xf32>
    %1370 = vector.shape_cast %1369 : vector<1x1x8x8xf32> to vector<8x8xf32>
    %1371 = vector.broadcast %1366 : f32 to vector<8x8xf32>
    %1372 = arith.mulf %1371, %1370 : vector<8x8xf32>
    %1373 = arith.addf %1365, %1372 : vector<8x8xf32>
    %c212 = arith.constant 212 : index
    %1374 = memref.load %arg2[%c212] : memref<288xf32, #tpu.memory_space<smem>>
    %c2_i32_693 = arith.constant 2 : i32
    %1375 = arith.addi %0, %c2_i32_693 : i32
    %c0_694 = arith.constant 0 : index
    %c2_695 = arith.constant 2 : index
    %1376 = arith.index_cast %1375 : i32 to index
    %c0_696 = arith.constant 0 : index
    %1377 = vector.load %arg4[%c0_694, %c2_695, %1376, %c0_696] : memref<1x4x10x10xf32, #tpu.memory_space<vmem>>, vector<1x1x8x8xf32>
    %1378 = vector.shape_cast %1377 : vector<1x1x8x8xf32> to vector<8x8xf32>
    %1379 = vector.broadcast %1374 : f32 to vector<8x8xf32>
    %1380 = arith.mulf %1379, %1378 : vector<8x8xf32>
    %1381 = arith.addf %1373, %1380 : vector<8x8xf32>
    %c244 = arith.constant 244 : index
    %1382 = memref.load %arg2[%c244] : memref<288xf32, #tpu.memory_space<smem>>
    %c2_i32_697 = arith.constant 2 : i32
    %1383 = arith.addi %0, %c2_i32_697 : i32
    %c0_698 = arith.constant 0 : index
    %c2_699 = arith.constant 2 : index
    %1384 = arith.index_cast %1383 : i32 to index
    %c1_700 = arith.constant 1 : index
    %1385 = vector.load %arg4[%c0_698, %c2_699, %1384, %c1_700] : memref<1x4x10x10xf32, #tpu.memory_space<vmem>>, vector<1x1x8x8xf32>
    %1386 = vector.shape_cast %1385 : vector<1x1x8x8xf32> to vector<8x8xf32>
    %1387 = vector.broadcast %1382 : f32 to vector<8x8xf32>
    %1388 = arith.mulf %1387, %1386 : vector<8x8xf32>
    %1389 = arith.addf %1381, %1388 : vector<8x8xf32>
    %c276 = arith.constant 276 : index
    %1390 = memref.load %arg2[%c276] : memref<288xf32, #tpu.memory_space<smem>>
    %c2_i32_701 = arith.constant 2 : i32
    %1391 = arith.addi %0, %c2_i32_701 : i32
    %c0_702 = arith.constant 0 : index
    %c2_703 = arith.constant 2 : index
    %1392 = arith.index_cast %1391 : i32 to index
    %c2_704 = arith.constant 2 : index
    %1393 = vector.load %arg4[%c0_702, %c2_703, %1392, %c2_704] : memref<1x4x10x10xf32, #tpu.memory_space<vmem>>, vector<1x1x8x8xf32>
    %1394 = vector.shape_cast %1393 : vector<1x1x8x8xf32> to vector<8x8xf32>
    %1395 = vector.broadcast %1390 : f32 to vector<8x8xf32>
    %1396 = arith.mulf %1395, %1394 : vector<8x8xf32>
    %1397 = arith.addf %1389, %1396 : vector<8x8xf32>
    %c28 = arith.constant 28 : index
    %1398 = memref.load %arg2[%c28] : memref<288xf32, #tpu.memory_space<smem>>
    %c0_i32_705 = arith.constant 0 : i32
    %1399 = arith.addi %0, %c0_i32_705 : i32
    %c0_706 = arith.constant 0 : index
    %c3_707 = arith.constant 3 : index
    %1400 = arith.index_cast %1399 : i32 to index
    %c0_708 = arith.constant 0 : index
    %1401 = vector.load %arg4[%c0_706, %c3_707, %1400, %c0_708] : memref<1x4x10x10xf32, #tpu.memory_space<vmem>>, vector<1x1x8x8xf32>
    %1402 = vector.shape_cast %1401 : vector<1x1x8x8xf32> to vector<8x8xf32>
    %1403 = vector.broadcast %1398 : f32 to vector<8x8xf32>
    %1404 = arith.mulf %1403, %1402 : vector<8x8xf32>
    %1405 = arith.addf %1397, %1404 : vector<8x8xf32>
    %c60 = arith.constant 60 : index
    %1406 = memref.load %arg2[%c60] : memref<288xf32, #tpu.memory_space<smem>>
    %c0_i32_709 = arith.constant 0 : i32
    %1407 = arith.addi %0, %c0_i32_709 : i32
    %c0_710 = arith.constant 0 : index
    %c3_711 = arith.constant 3 : index
    %1408 = arith.index_cast %1407 : i32 to index
    %c1_712 = arith.constant 1 : index
    %1409 = vector.load %arg4[%c0_710, %c3_711, %1408, %c1_712] : memref<1x4x10x10xf32, #tpu.memory_space<vmem>>, vector<1x1x8x8xf32>
    %1410 = vector.shape_cast %1409 : vector<1x1x8x8xf32> to vector<8x8xf32>
    %1411 = vector.broadcast %1406 : f32 to vector<8x8xf32>
    %1412 = arith.mulf %1411, %1410 : vector<8x8xf32>
    %1413 = arith.addf %1405, %1412 : vector<8x8xf32>
    %c92 = arith.constant 92 : index
    %1414 = memref.load %arg2[%c92] : memref<288xf32, #tpu.memory_space<smem>>
    %c0_i32_713 = arith.constant 0 : i32
    %1415 = arith.addi %0, %c0_i32_713 : i32
    %c0_714 = arith.constant 0 : index
    %c3_715 = arith.constant 3 : index
    %1416 = arith.index_cast %1415 : i32 to index
    %c2_716 = arith.constant 2 : index
    %1417 = vector.load %arg4[%c0_714, %c3_715, %1416, %c2_716] : memref<1x4x10x10xf32, #tpu.memory_space<vmem>>, vector<1x1x8x8xf32>
    %1418 = vector.shape_cast %1417 : vector<1x1x8x8xf32> to vector<8x8xf32>
    %1419 = vector.broadcast %1414 : f32 to vector<8x8xf32>
    %1420 = arith.mulf %1419, %1418 : vector<8x8xf32>
    %1421 = arith.addf %1413, %1420 : vector<8x8xf32>
    %c124 = arith.constant 124 : index
    %1422 = memref.load %arg2[%c124] : memref<288xf32, #tpu.memory_space<smem>>
    %c1_i32_717 = arith.constant 1 : i32
    %1423 = arith.addi %0, %c1_i32_717 : i32
    %c0_718 = arith.constant 0 : index
    %c3_719 = arith.constant 3 : index
    %1424 = arith.index_cast %1423 : i32 to index
    %c0_720 = arith.constant 0 : index
    %1425 = vector.load %arg4[%c0_718, %c3_719, %1424, %c0_720] : memref<1x4x10x10xf32, #tpu.memory_space<vmem>>, vector<1x1x8x8xf32>
    %1426 = vector.shape_cast %1425 : vector<1x1x8x8xf32> to vector<8x8xf32>
    %1427 = vector.broadcast %1422 : f32 to vector<8x8xf32>
    %1428 = arith.mulf %1427, %1426 : vector<8x8xf32>
    %1429 = arith.addf %1421, %1428 : vector<8x8xf32>
    %c156 = arith.constant 156 : index
    %1430 = memref.load %arg2[%c156] : memref<288xf32, #tpu.memory_space<smem>>
    %c1_i32_721 = arith.constant 1 : i32
    %1431 = arith.addi %0, %c1_i32_721 : i32
    %c0_722 = arith.constant 0 : index
    %c3_723 = arith.constant 3 : index
    %1432 = arith.index_cast %1431 : i32 to index
    %c1_724 = arith.constant 1 : index
    %1433 = vector.load %arg4[%c0_722, %c3_723, %1432, %c1_724] : memref<1x4x10x10xf32, #tpu.memory_space<vmem>>, vector<1x1x8x8xf32>
    %1434 = vector.shape_cast %1433 : vector<1x1x8x8xf32> to vector<8x8xf32>
    %1435 = vector.broadcast %1430 : f32 to vector<8x8xf32>
    %1436 = arith.mulf %1435, %1434 : vector<8x8xf32>
    %1437 = arith.addf %1429, %1436 : vector<8x8xf32>
    %c188 = arith.constant 188 : index
    %1438 = memref.load %arg2[%c188] : memref<288xf32, #tpu.memory_space<smem>>
    %c1_i32_725 = arith.constant 1 : i32
    %1439 = arith.addi %0, %c1_i32_725 : i32
    %c0_726 = arith.constant 0 : index
    %c3_727 = arith.constant 3 : index
    %1440 = arith.index_cast %1439 : i32 to index
    %c2_728 = arith.constant 2 : index
    %1441 = vector.load %arg4[%c0_726, %c3_727, %1440, %c2_728] : memref<1x4x10x10xf32, #tpu.memory_space<vmem>>, vector<1x1x8x8xf32>
    %1442 = vector.shape_cast %1441 : vector<1x1x8x8xf32> to vector<8x8xf32>
    %1443 = vector.broadcast %1438 : f32 to vector<8x8xf32>
    %1444 = arith.mulf %1443, %1442 : vector<8x8xf32>
    %1445 = arith.addf %1437, %1444 : vector<8x8xf32>
    %c220 = arith.constant 220 : index
    %1446 = memref.load %arg2[%c220] : memref<288xf32, #tpu.memory_space<smem>>
    %c2_i32_729 = arith.constant 2 : i32
    %1447 = arith.addi %0, %c2_i32_729 : i32
    %c0_730 = arith.constant 0 : index
    %c3_731 = arith.constant 3 : index
    %1448 = arith.index_cast %1447 : i32 to index
    %c0_732 = arith.constant 0 : index
    %1449 = vector.load %arg4[%c0_730, %c3_731, %1448, %c0_732] : memref<1x4x10x10xf32, #tpu.memory_space<vmem>>, vector<1x1x8x8xf32>
    %1450 = vector.shape_cast %1449 : vector<1x1x8x8xf32> to vector<8x8xf32>
    %1451 = vector.broadcast %1446 : f32 to vector<8x8xf32>
    %1452 = arith.mulf %1451, %1450 : vector<8x8xf32>
    %1453 = arith.addf %1445, %1452 : vector<8x8xf32>
    %c252 = arith.constant 252 : index
    %1454 = memref.load %arg2[%c252] : memref<288xf32, #tpu.memory_space<smem>>
    %c2_i32_733 = arith.constant 2 : i32
    %1455 = arith.addi %0, %c2_i32_733 : i32
    %c0_734 = arith.constant 0 : index
    %c3_735 = arith.constant 3 : index
    %1456 = arith.index_cast %1455 : i32 to index
    %c1_736 = arith.constant 1 : index
    %1457 = vector.load %arg4[%c0_734, %c3_735, %1456, %c1_736] : memref<1x4x10x10xf32, #tpu.memory_space<vmem>>, vector<1x1x8x8xf32>
    %1458 = vector.shape_cast %1457 : vector<1x1x8x8xf32> to vector<8x8xf32>
    %1459 = vector.broadcast %1454 : f32 to vector<8x8xf32>
    %1460 = arith.mulf %1459, %1458 : vector<8x8xf32>
    %1461 = arith.addf %1453, %1460 : vector<8x8xf32>
    %c284 = arith.constant 284 : index
    %1462 = memref.load %arg2[%c284] : memref<288xf32, #tpu.memory_space<smem>>
    %c2_i32_737 = arith.constant 2 : i32
    %1463 = arith.addi %0, %c2_i32_737 : i32
    %c0_738 = arith.constant 0 : index
    %c3_739 = arith.constant 3 : index
    %1464 = arith.index_cast %1463 : i32 to index
    %c2_740 = arith.constant 2 : index
    %1465 = vector.load %arg4[%c0_738, %c3_739, %1464, %c2_740] : memref<1x4x10x10xf32, #tpu.memory_space<vmem>>, vector<1x1x8x8xf32>
    %1466 = vector.shape_cast %1465 : vector<1x1x8x8xf32> to vector<8x8xf32>
    %1467 = vector.broadcast %1462 : f32 to vector<8x8xf32>
    %1468 = arith.mulf %1467, %1466 : vector<8x8xf32>
    %1469 = arith.addf %1461, %1468 : vector<8x8xf32>
    %c4_741 = arith.constant 4 : index
    %1470 = memref.load %arg3[%c4_741] : memref<8xf32, #tpu.memory_space<smem>>
    %1471 = vector.broadcast %1470 : f32 to vector<8x8xf32>
    %1472 = arith.addf %1469, %1471 : vector<8x8xf32>
    %c0_742 = arith.constant 0 : index
    %c4_743 = arith.constant 4 : index
    %c0_744 = arith.constant 0 : index
    %c0_745 = arith.constant 0 : index
    %1473 = vector.load %arg5[%c0_742, %c4_743, %c0_744, %c0_745] : memref<1x8x8x8xf32, #tpu.memory_space<vmem>>, vector<1x1x8x8xf32>
    %1474 = vector.shape_cast %1473 : vector<1x1x8x8xf32> to vector<8x8xf32>
    %1475 = vector.shape_cast %1472 : vector<8x8xf32> to vector<1x1x8x8xf32>
    tpu.vector_store %arg5[%c0_742, %c4_743, %c0_744, %c0_745], %1475 {strides = array<i32>} : memref<1x8x8x8xf32, #tpu.memory_space<vmem>>, vector<1x1x8x8xf32>,
    %cst_746 = arith.constant 0.000000e+00 : f32
    %1476 = vector.broadcast %cst_746 : f32 to vector<8x8xf32>
    %c5 = arith.constant 5 : index
    %1477 = memref.load %arg2[%c5] : memref<288xf32, #tpu.memory_space<smem>>
    %c0_i32_747 = arith.constant 0 : i32
    %1478 = arith.addi %0, %c0_i32_747 : i32
    %c0_748 = arith.constant 0 : index
    %c0_749 = arith.constant 0 : index
    %1479 = arith.index_cast %1478 : i32 to index
    %c0_750 = arith.constant 0 : index
    %1480 = vector.load %arg4[%c0_748, %c0_749, %1479, %c0_750] : memref<1x4x10x10xf32, #tpu.memory_space<vmem>>, vector<1x1x8x8xf32>
    %1481 = vector.shape_cast %1480 : vector<1x1x8x8xf32> to vector<8x8xf32>
    %1482 = vector.broadcast %1477 : f32 to vector<8x8xf32>
    %1483 = arith.mulf %1482, %1481 : vector<8x8xf32>
    %1484 = arith.addf %1476, %1483 : vector<8x8xf32>
    %c37 = arith.constant 37 : index
    %1485 = memref.load %arg2[%c37] : memref<288xf32, #tpu.memory_space<smem>>
    %c0_i32_751 = arith.constant 0 : i32
    %1486 = arith.addi %0, %c0_i32_751 : i32
    %c0_752 = arith.constant 0 : index
    %c0_753 = arith.constant 0 : index
    %1487 = arith.index_cast %1486 : i32 to index
    %c1_754 = arith.constant 1 : index
    %1488 = vector.load %arg4[%c0_752, %c0_753, %1487, %c1_754] : memref<1x4x10x10xf32, #tpu.memory_space<vmem>>, vector<1x1x8x8xf32>
    %1489 = vector.shape_cast %1488 : vector<1x1x8x8xf32> to vector<8x8xf32>
    %1490 = vector.broadcast %1485 : f32 to vector<8x8xf32>
    %1491 = arith.mulf %1490, %1489 : vector<8x8xf32>
    %1492 = arith.addf %1484, %1491 : vector<8x8xf32>
    %c69 = arith.constant 69 : index
    %1493 = memref.load %arg2[%c69] : memref<288xf32, #tpu.memory_space<smem>>
    %c0_i32_755 = arith.constant 0 : i32
    %1494 = arith.addi %0, %c0_i32_755 : i32
    %c0_756 = arith.constant 0 : index
    %c0_757 = arith.constant 0 : index
    %1495 = arith.index_cast %1494 : i32 to index
    %c2_758 = arith.constant 2 : index
    %1496 = vector.load %arg4[%c0_756, %c0_757, %1495, %c2_758] : memref<1x4x10x10xf32, #tpu.memory_space<vmem>>, vector<1x1x8x8xf32>
    %1497 = vector.shape_cast %1496 : vector<1x1x8x8xf32> to vector<8x8xf32>
    %1498 = vector.broadcast %1493 : f32 to vector<8x8xf32>
    %1499 = arith.mulf %1498, %1497 : vector<8x8xf32>
    %1500 = arith.addf %1492, %1499 : vector<8x8xf32>
    %c101 = arith.constant 101 : index
    %1501 = memref.load %arg2[%c101] : memref<288xf32, #tpu.memory_space<smem>>
    %c1_i32_759 = arith.constant 1 : i32
    %1502 = arith.addi %0, %c1_i32_759 : i32
    %c0_760 = arith.constant 0 : index
    %c0_761 = arith.constant 0 : index
    %1503 = arith.index_cast %1502 : i32 to index
    %c0_762 = arith.constant 0 : index
    %1504 = vector.load %arg4[%c0_760, %c0_761, %1503, %c0_762] : memref<1x4x10x10xf32, #tpu.memory_space<vmem>>, vector<1x1x8x8xf32>
    %1505 = vector.shape_cast %1504 : vector<1x1x8x8xf32> to vector<8x8xf32>
    %1506 = vector.broadcast %1501 : f32 to vector<8x8xf32>
    %1507 = arith.mulf %1506, %1505 : vector<8x8xf32>
    %1508 = arith.addf %1500, %1507 : vector<8x8xf32>
    %c133 = arith.constant 133 : index
    %1509 = memref.load %arg2[%c133] : memref<288xf32, #tpu.memory_space<smem>>
    %c1_i32_763 = arith.constant 1 : i32
    %1510 = arith.addi %0, %c1_i32_763 : i32
    %c0_764 = arith.constant 0 : index
    %c0_765 = arith.constant 0 : index
    %1511 = arith.index_cast %1510 : i32 to index
    %c1_766 = arith.constant 1 : index
    %1512 = vector.load %arg4[%c0_764, %c0_765, %1511, %c1_766] : memref<1x4x10x10xf32, #tpu.memory_space<vmem>>, vector<1x1x8x8xf32>
    %1513 = vector.shape_cast %1512 : vector<1x1x8x8xf32> to vector<8x8xf32>
    %1514 = vector.broadcast %1509 : f32 to vector<8x8xf32>
    %1515 = arith.mulf %1514, %1513 : vector<8x8xf32>
    %1516 = arith.addf %1508, %1515 : vector<8x8xf32>
    %c165 = arith.constant 165 : index
    %1517 = memref.load %arg2[%c165] : memref<288xf32, #tpu.memory_space<smem>>
    %c1_i32_767 = arith.constant 1 : i32
    %1518 = arith.addi %0, %c1_i32_767 : i32
    %c0_768 = arith.constant 0 : index
    %c0_769 = arith.constant 0 : index
    %1519 = arith.index_cast %1518 : i32 to index
    %c2_770 = arith.constant 2 : index
    %1520 = vector.load %arg4[%c0_768, %c0_769, %1519, %c2_770] : memref<1x4x10x10xf32, #tpu.memory_space<vmem>>, vector<1x1x8x8xf32>
    %1521 = vector.shape_cast %1520 : vector<1x1x8x8xf32> to vector<8x8xf32>
    %1522 = vector.broadcast %1517 : f32 to vector<8x8xf32>
    %1523 = arith.mulf %1522, %1521 : vector<8x8xf32>
    %1524 = arith.addf %1516, %1523 : vector<8x8xf32>
    %c197 = arith.constant 197 : index
    %1525 = memref.load %arg2[%c197] : memref<288xf32, #tpu.memory_space<smem>>
    %c2_i32_771 = arith.constant 2 : i32
    %1526 = arith.addi %0, %c2_i32_771 : i32
    %c0_772 = arith.constant 0 : index
    %c0_773 = arith.constant 0 : index
    %1527 = arith.index_cast %1526 : i32 to index
    %c0_774 = arith.constant 0 : index
    %1528 = vector.load %arg4[%c0_772, %c0_773, %1527, %c0_774] : memref<1x4x10x10xf32, #tpu.memory_space<vmem>>, vector<1x1x8x8xf32>
    %1529 = vector.shape_cast %1528 : vector<1x1x8x8xf32> to vector<8x8xf32>
    %1530 = vector.broadcast %1525 : f32 to vector<8x8xf32>
    %1531 = arith.mulf %1530, %1529 : vector<8x8xf32>
    %1532 = arith.addf %1524, %1531 : vector<8x8xf32>
    %c229 = arith.constant 229 : index
    %1533 = memref.load %arg2[%c229] : memref<288xf32, #tpu.memory_space<smem>>
    %c2_i32_775 = arith.constant 2 : i32
    %1534 = arith.addi %0, %c2_i32_775 : i32
    %c0_776 = arith.constant 0 : index
    %c0_777 = arith.constant 0 : index
    %1535 = arith.index_cast %1534 : i32 to index
    %c1_778 = arith.constant 1 : index
    %1536 = vector.load %arg4[%c0_776, %c0_777, %1535, %c1_778] : memref<1x4x10x10xf32, #tpu.memory_space<vmem>>, vector<1x1x8x8xf32>
    %1537 = vector.shape_cast %1536 : vector<1x1x8x8xf32> to vector<8x8xf32>
    %1538 = vector.broadcast %1533 : f32 to vector<8x8xf32>
    %1539 = arith.mulf %1538, %1537 : vector<8x8xf32>
    %1540 = arith.addf %1532, %1539 : vector<8x8xf32>
    %c261 = arith.constant 261 : index
    %1541 = memref.load %arg2[%c261] : memref<288xf32, #tpu.memory_space<smem>>
    %c2_i32_779 = arith.constant 2 : i32
    %1542 = arith.addi %0, %c2_i32_779 : i32
    %c0_780 = arith.constant 0 : index
    %c0_781 = arith.constant 0 : index
    %1543 = arith.index_cast %1542 : i32 to index
    %c2_782 = arith.constant 2 : index
    %1544 = vector.load %arg4[%c0_780, %c0_781, %1543, %c2_782] : memref<1x4x10x10xf32, #tpu.memory_space<vmem>>, vector<1x1x8x8xf32>
    %1545 = vector.shape_cast %1544 : vector<1x1x8x8xf32> to vector<8x8xf32>
    %1546 = vector.broadcast %1541 : f32 to vector<8x8xf32>
    %1547 = arith.mulf %1546, %1545 : vector<8x8xf32>
    %1548 = arith.addf %1540, %1547 : vector<8x8xf32>
    %c13 = arith.constant 13 : index
    %1549 = memref.load %arg2[%c13] : memref<288xf32, #tpu.memory_space<smem>>
    %c0_i32_783 = arith.constant 0 : i32
    %1550 = arith.addi %0, %c0_i32_783 : i32
    %c0_784 = arith.constant 0 : index
    %c1_785 = arith.constant 1 : index
    %1551 = arith.index_cast %1550 : i32 to index
    %c0_786 = arith.constant 0 : index
    %1552 = vector.load %arg4[%c0_784, %c1_785, %1551, %c0_786] : memref<1x4x10x10xf32, #tpu.memory_space<vmem>>, vector<1x1x8x8xf32>
    %1553 = vector.shape_cast %1552 : vector<1x1x8x8xf32> to vector<8x8xf32>
    %1554 = vector.broadcast %1549 : f32 to vector<8x8xf32>
    %1555 = arith.mulf %1554, %1553 : vector<8x8xf32>
    %1556 = arith.addf %1548, %1555 : vector<8x8xf32>
    %c45 = arith.constant 45 : index
    %1557 = memref.load %arg2[%c45] : memref<288xf32, #tpu.memory_space<smem>>
    %c0_i32_787 = arith.constant 0 : i32
    %1558 = arith.addi %0, %c0_i32_787 : i32
    %c0_788 = arith.constant 0 : index
    %c1_789 = arith.constant 1 : index
    %1559 = arith.index_cast %1558 : i32 to index
    %c1_790 = arith.constant 1 : index
    %1560 = vector.load %arg4[%c0_788, %c1_789, %1559, %c1_790] : memref<1x4x10x10xf32, #tpu.memory_space<vmem>>, vector<1x1x8x8xf32>
    %1561 = vector.shape_cast %1560 : vector<1x1x8x8xf32> to vector<8x8xf32>
    %1562 = vector.broadcast %1557 : f32 to vector<8x8xf32>
    %1563 = arith.mulf %1562, %1561 : vector<8x8xf32>
    %1564 = arith.addf %1556, %1563 : vector<8x8xf32>
    %c77 = arith.constant 77 : index
    %1565 = memref.load %arg2[%c77] : memref<288xf32, #tpu.memory_space<smem>>
    %c0_i32_791 = arith.constant 0 : i32
    %1566 = arith.addi %0, %c0_i32_791 : i32
    %c0_792 = arith.constant 0 : index
    %c1_793 = arith.constant 1 : index
    %1567 = arith.index_cast %1566 : i32 to index
    %c2_794 = arith.constant 2 : index
    %1568 = vector.load %arg4[%c0_792, %c1_793, %1567, %c2_794] : memref<1x4x10x10xf32, #tpu.memory_space<vmem>>, vector<1x1x8x8xf32>
    %1569 = vector.shape_cast %1568 : vector<1x1x8x8xf32> to vector<8x8xf32>
    %1570 = vector.broadcast %1565 : f32 to vector<8x8xf32>
    %1571 = arith.mulf %1570, %1569 : vector<8x8xf32>
    %1572 = arith.addf %1564, %1571 : vector<8x8xf32>
    %c109 = arith.constant 109 : index
    %1573 = memref.load %arg2[%c109] : memref<288xf32, #tpu.memory_space<smem>>
    %c1_i32_795 = arith.constant 1 : i32
    %1574 = arith.addi %0, %c1_i32_795 : i32
    %c0_796 = arith.constant 0 : index
    %c1_797 = arith.constant 1 : index
    %1575 = arith.index_cast %1574 : i32 to index
    %c0_798 = arith.constant 0 : index
    %1576 = vector.load %arg4[%c0_796, %c1_797, %1575, %c0_798] : memref<1x4x10x10xf32, #tpu.memory_space<vmem>>, vector<1x1x8x8xf32>
    %1577 = vector.shape_cast %1576 : vector<1x1x8x8xf32> to vector<8x8xf32>
    %1578 = vector.broadcast %1573 : f32 to vector<8x8xf32>
    %1579 = arith.mulf %1578, %1577 : vector<8x8xf32>
    %1580 = arith.addf %1572, %1579 : vector<8x8xf32>
    %c141 = arith.constant 141 : index
    %1581 = memref.load %arg2[%c141] : memref<288xf32, #tpu.memory_space<smem>>
    %c1_i32_799 = arith.constant 1 : i32
    %1582 = arith.addi %0, %c1_i32_799 : i32
    %c0_800 = arith.constant 0 : index
    %c1_801 = arith.constant 1 : index
    %1583 = arith.index_cast %1582 : i32 to index
    %c1_802 = arith.constant 1 : index
    %1584 = vector.load %arg4[%c0_800, %c1_801, %1583, %c1_802] : memref<1x4x10x10xf32, #tpu.memory_space<vmem>>, vector<1x1x8x8xf32>
    %1585 = vector.shape_cast %1584 : vector<1x1x8x8xf32> to vector<8x8xf32>
    %1586 = vector.broadcast %1581 : f32 to vector<8x8xf32>
    %1587 = arith.mulf %1586, %1585 : vector<8x8xf32>
    %1588 = arith.addf %1580, %1587 : vector<8x8xf32>
    %c173 = arith.constant 173 : index
    %1589 = memref.load %arg2[%c173] : memref<288xf32, #tpu.memory_space<smem>>
    %c1_i32_803 = arith.constant 1 : i32
    %1590 = arith.addi %0, %c1_i32_803 : i32
    %c0_804 = arith.constant 0 : index
    %c1_805 = arith.constant 1 : index
    %1591 = arith.index_cast %1590 : i32 to index
    %c2_806 = arith.constant 2 : index
    %1592 = vector.load %arg4[%c0_804, %c1_805, %1591, %c2_806] : memref<1x4x10x10xf32, #tpu.memory_space<vmem>>, vector<1x1x8x8xf32>
    %1593 = vector.shape_cast %1592 : vector<1x1x8x8xf32> to vector<8x8xf32>
    %1594 = vector.broadcast %1589 : f32 to vector<8x8xf32>
    %1595 = arith.mulf %1594, %1593 : vector<8x8xf32>
    %1596 = arith.addf %1588, %1595 : vector<8x8xf32>
    %c205 = arith.constant 205 : index
    %1597 = memref.load %arg2[%c205] : memref<288xf32, #tpu.memory_space<smem>>
    %c2_i32_807 = arith.constant 2 : i32
    %1598 = arith.addi %0, %c2_i32_807 : i32
    %c0_808 = arith.constant 0 : index
    %c1_809 = arith.constant 1 : index
    %1599 = arith.index_cast %1598 : i32 to index
    %c0_810 = arith.constant 0 : index
    %1600 = vector.load %arg4[%c0_808, %c1_809, %1599, %c0_810] : memref<1x4x10x10xf32, #tpu.memory_space<vmem>>, vector<1x1x8x8xf32>
    %1601 = vector.shape_cast %1600 : vector<1x1x8x8xf32> to vector<8x8xf32>
    %1602 = vector.broadcast %1597 : f32 to vector<8x8xf32>
    %1603 = arith.mulf %1602, %1601 : vector<8x8xf32>
    %1604 = arith.addf %1596, %1603 : vector<8x8xf32>
    %c237 = arith.constant 237 : index
    %1605 = memref.load %arg2[%c237] : memref<288xf32, #tpu.memory_space<smem>>
    %c2_i32_811 = arith.constant 2 : i32
    %1606 = arith.addi %0, %c2_i32_811 : i32
    %c0_812 = arith.constant 0 : index
    %c1_813 = arith.constant 1 : index
    %1607 = arith.index_cast %1606 : i32 to index
    %c1_814 = arith.constant 1 : index
    %1608 = vector.load %arg4[%c0_812, %c1_813, %1607, %c1_814] : memref<1x4x10x10xf32, #tpu.memory_space<vmem>>, vector<1x1x8x8xf32>
    %1609 = vector.shape_cast %1608 : vector<1x1x8x8xf32> to vector<8x8xf32>
    %1610 = vector.broadcast %1605 : f32 to vector<8x8xf32>
    %1611 = arith.mulf %1610, %1609 : vector<8x8xf32>
    %1612 = arith.addf %1604, %1611 : vector<8x8xf32>
    %c269 = arith.constant 269 : index
    %1613 = memref.load %arg2[%c269] : memref<288xf32, #tpu.memory_space<smem>>
    %c2_i32_815 = arith.constant 2 : i32
    %1614 = arith.addi %0, %c2_i32_815 : i32
    %c0_816 = arith.constant 0 : index
    %c1_817 = arith.constant 1 : index
    %1615 = arith.index_cast %1614 : i32 to index
    %c2_818 = arith.constant 2 : index
    %1616 = vector.load %arg4[%c0_816, %c1_817, %1615, %c2_818] : memref<1x4x10x10xf32, #tpu.memory_space<vmem>>, vector<1x1x8x8xf32>
    %1617 = vector.shape_cast %1616 : vector<1x1x8x8xf32> to vector<8x8xf32>
    %1618 = vector.broadcast %1613 : f32 to vector<8x8xf32>
    %1619 = arith.mulf %1618, %1617 : vector<8x8xf32>
    %1620 = arith.addf %1612, %1619 : vector<8x8xf32>
    %c21 = arith.constant 21 : index
    %1621 = memref.load %arg2[%c21] : memref<288xf32, #tpu.memory_space<smem>>
    %c0_i32_819 = arith.constant 0 : i32
    %1622 = arith.addi %0, %c0_i32_819 : i32
    %c0_820 = arith.constant 0 : index
    %c2_821 = arith.constant 2 : index
    %1623 = arith.index_cast %1622 : i32 to index
    %c0_822 = arith.constant 0 : index
    %1624 = vector.load %arg4[%c0_820, %c2_821, %1623, %c0_822] : memref<1x4x10x10xf32, #tpu.memory_space<vmem>>, vector<1x1x8x8xf32>
    %1625 = vector.shape_cast %1624 : vector<1x1x8x8xf32> to vector<8x8xf32>
    %1626 = vector.broadcast %1621 : f32 to vector<8x8xf32>
    %1627 = arith.mulf %1626, %1625 : vector<8x8xf32>
    %1628 = arith.addf %1620, %1627 : vector<8x8xf32>
    %c53 = arith.constant 53 : index
    %1629 = memref.load %arg2[%c53] : memref<288xf32, #tpu.memory_space<smem>>
    %c0_i32_823 = arith.constant 0 : i32
    %1630 = arith.addi %0, %c0_i32_823 : i32
    %c0_824 = arith.constant 0 : index
    %c2_825 = arith.constant 2 : index
    %1631 = arith.index_cast %1630 : i32 to index
    %c1_826 = arith.constant 1 : index
    %1632 = vector.load %arg4[%c0_824, %c2_825, %1631, %c1_826] : memref<1x4x10x10xf32, #tpu.memory_space<vmem>>, vector<1x1x8x8xf32>
    %1633 = vector.shape_cast %1632 : vector<1x1x8x8xf32> to vector<8x8xf32>
    %1634 = vector.broadcast %1629 : f32 to vector<8x8xf32>
    %1635 = arith.mulf %1634, %1633 : vector<8x8xf32>
    %1636 = arith.addf %1628, %1635 : vector<8x8xf32>
    %c85 = arith.constant 85 : index
    %1637 = memref.load %arg2[%c85] : memref<288xf32, #tpu.memory_space<smem>>
    %c0_i32_827 = arith.constant 0 : i32
    %1638 = arith.addi %0, %c0_i32_827 : i32
    %c0_828 = arith.constant 0 : index
    %c2_829 = arith.constant 2 : index
    %1639 = arith.index_cast %1638 : i32 to index
    %c2_830 = arith.constant 2 : index
    %1640 = vector.load %arg4[%c0_828, %c2_829, %1639, %c2_830] : memref<1x4x10x10xf32, #tpu.memory_space<vmem>>, vector<1x1x8x8xf32>
    %1641 = vector.shape_cast %1640 : vector<1x1x8x8xf32> to vector<8x8xf32>
    %1642 = vector.broadcast %1637 : f32 to vector<8x8xf32>
    %1643 = arith.mulf %1642, %1641 : vector<8x8xf32>
    %1644 = arith.addf %1636, %1643 : vector<8x8xf32>
    %c117 = arith.constant 117 : index
    %1645 = memref.load %arg2[%c117] : memref<288xf32, #tpu.memory_space<smem>>
    %c1_i32_831 = arith.constant 1 : i32
    %1646 = arith.addi %0, %c1_i32_831 : i32
    %c0_832 = arith.constant 0 : index
    %c2_833 = arith.constant 2 : index
    %1647 = arith.index_cast %1646 : i32 to index
    %c0_834 = arith.constant 0 : index
    %1648 = vector.load %arg4[%c0_832, %c2_833, %1647, %c0_834] : memref<1x4x10x10xf32, #tpu.memory_space<vmem>>, vector<1x1x8x8xf32>
    %1649 = vector.shape_cast %1648 : vector<1x1x8x8xf32> to vector<8x8xf32>
    %1650 = vector.broadcast %1645 : f32 to vector<8x8xf32>
    %1651 = arith.mulf %1650, %1649 : vector<8x8xf32>
    %1652 = arith.addf %1644, %1651 : vector<8x8xf32>
    %c149 = arith.constant 149 : index
    %1653 = memref.load %arg2[%c149] : memref<288xf32, #tpu.memory_space<smem>>
    %c1_i32_835 = arith.constant 1 : i32
    %1654 = arith.addi %0, %c1_i32_835 : i32
    %c0_836 = arith.constant 0 : index
    %c2_837 = arith.constant 2 : index
    %1655 = arith.index_cast %1654 : i32 to index
    %c1_838 = arith.constant 1 : index
    %1656 = vector.load %arg4[%c0_836, %c2_837, %1655, %c1_838] : memref<1x4x10x10xf32, #tpu.memory_space<vmem>>, vector<1x1x8x8xf32>
    %1657 = vector.shape_cast %1656 : vector<1x1x8x8xf32> to vector<8x8xf32>
    %1658 = vector.broadcast %1653 : f32 to vector<8x8xf32>
    %1659 = arith.mulf %1658, %1657 : vector<8x8xf32>
    %1660 = arith.addf %1652, %1659 : vector<8x8xf32>
    %c181 = arith.constant 181 : index
    %1661 = memref.load %arg2[%c181] : memref<288xf32, #tpu.memory_space<smem>>
    %c1_i32_839 = arith.constant 1 : i32
    %1662 = arith.addi %0, %c1_i32_839 : i32
    %c0_840 = arith.constant 0 : index
    %c2_841 = arith.constant 2 : index
    %1663 = arith.index_cast %1662 : i32 to index
    %c2_842 = arith.constant 2 : index
    %1664 = vector.load %arg4[%c0_840, %c2_841, %1663, %c2_842] : memref<1x4x10x10xf32, #tpu.memory_space<vmem>>, vector<1x1x8x8xf32>
    %1665 = vector.shape_cast %1664 : vector<1x1x8x8xf32> to vector<8x8xf32>
    %1666 = vector.broadcast %1661 : f32 to vector<8x8xf32>
    %1667 = arith.mulf %1666, %1665 : vector<8x8xf32>
    %1668 = arith.addf %1660, %1667 : vector<8x8xf32>
    %c213 = arith.constant 213 : index
    %1669 = memref.load %arg2[%c213] : memref<288xf32, #tpu.memory_space<smem>>
    %c2_i32_843 = arith.constant 2 : i32
    %1670 = arith.addi %0, %c2_i32_843 : i32
    %c0_844 = arith.constant 0 : index
    %c2_845 = arith.constant 2 : index
    %1671 = arith.index_cast %1670 : i32 to index
    %c0_846 = arith.constant 0 : index
    %1672 = vector.load %arg4[%c0_844, %c2_845, %1671, %c0_846] : memref<1x4x10x10xf32, #tpu.memory_space<vmem>>, vector<1x1x8x8xf32>
    %1673 = vector.shape_cast %1672 : vector<1x1x8x8xf32> to vector<8x8xf32>
    %1674 = vector.broadcast %1669 : f32 to vector<8x8xf32>
    %1675 = arith.mulf %1674, %1673 : vector<8x8xf32>
    %1676 = arith.addf %1668, %1675 : vector<8x8xf32>
    %c245 = arith.constant 245 : index
    %1677 = memref.load %arg2[%c245] : memref<288xf32, #tpu.memory_space<smem>>
    %c2_i32_847 = arith.constant 2 : i32
    %1678 = arith.addi %0, %c2_i32_847 : i32
    %c0_848 = arith.constant 0 : index
    %c2_849 = arith.constant 2 : index
    %1679 = arith.index_cast %1678 : i32 to index
    %c1_850 = arith.constant 1 : index
    %1680 = vector.load %arg4[%c0_848, %c2_849, %1679, %c1_850] : memref<1x4x10x10xf32, #tpu.memory_space<vmem>>, vector<1x1x8x8xf32>
    %1681 = vector.shape_cast %1680 : vector<1x1x8x8xf32> to vector<8x8xf32>
    %1682 = vector.broadcast %1677 : f32 to vector<8x8xf32>
    %1683 = arith.mulf %1682, %1681 : vector<8x8xf32>
    %1684 = arith.addf %1676, %1683 : vector<8x8xf32>
    %c277 = arith.constant 277 : index
    %1685 = memref.load %arg2[%c277] : memref<288xf32, #tpu.memory_space<smem>>
    %c2_i32_851 = arith.constant 2 : i32
    %1686 = arith.addi %0, %c2_i32_851 : i32
    %c0_852 = arith.constant 0 : index
    %c2_853 = arith.constant 2 : index
    %1687 = arith.index_cast %1686 : i32 to index
    %c2_854 = arith.constant 2 : index
    %1688 = vector.load %arg4[%c0_852, %c2_853, %1687, %c2_854] : memref<1x4x10x10xf32, #tpu.memory_space<vmem>>, vector<1x1x8x8xf32>
    %1689 = vector.shape_cast %1688 : vector<1x1x8x8xf32> to vector<8x8xf32>
    %1690 = vector.broadcast %1685 : f32 to vector<8x8xf32>
    %1691 = arith.mulf %1690, %1689 : vector<8x8xf32>
    %1692 = arith.addf %1684, %1691 : vector<8x8xf32>
    %c29 = arith.constant 29 : index
    %1693 = memref.load %arg2[%c29] : memref<288xf32, #tpu.memory_space<smem>>
    %c0_i32_855 = arith.constant 0 : i32
    %1694 = arith.addi %0, %c0_i32_855 : i32
    %c0_856 = arith.constant 0 : index
    %c3_857 = arith.constant 3 : index
    %1695 = arith.index_cast %1694 : i32 to index
    %c0_858 = arith.constant 0 : index
    %1696 = vector.load %arg4[%c0_856, %c3_857, %1695, %c0_858] : memref<1x4x10x10xf32, #tpu.memory_space<vmem>>, vector<1x1x8x8xf32>
    %1697 = vector.shape_cast %1696 : vector<1x1x8x8xf32> to vector<8x8xf32>
    %1698 = vector.broadcast %1693 : f32 to vector<8x8xf32>
    %1699 = arith.mulf %1698, %1697 : vector<8x8xf32>
    %1700 = arith.addf %1692, %1699 : vector<8x8xf32>
    %c61 = arith.constant 61 : index
    %1701 = memref.load %arg2[%c61] : memref<288xf32, #tpu.memory_space<smem>>
    %c0_i32_859 = arith.constant 0 : i32
    %1702 = arith.addi %0, %c0_i32_859 : i32
    %c0_860 = arith.constant 0 : index
    %c3_861 = arith.constant 3 : index
    %1703 = arith.index_cast %1702 : i32 to index
    %c1_862 = arith.constant 1 : index
    %1704 = vector.load %arg4[%c0_860, %c3_861, %1703, %c1_862] : memref<1x4x10x10xf32, #tpu.memory_space<vmem>>, vector<1x1x8x8xf32>
    %1705 = vector.shape_cast %1704 : vector<1x1x8x8xf32> to vector<8x8xf32>
    %1706 = vector.broadcast %1701 : f32 to vector<8x8xf32>
    %1707 = arith.mulf %1706, %1705 : vector<8x8xf32>
    %1708 = arith.addf %1700, %1707 : vector<8x8xf32>
    %c93 = arith.constant 93 : index
    %1709 = memref.load %arg2[%c93] : memref<288xf32, #tpu.memory_space<smem>>
    %c0_i32_863 = arith.constant 0 : i32
    %1710 = arith.addi %0, %c0_i32_863 : i32
    %c0_864 = arith.constant 0 : index
    %c3_865 = arith.constant 3 : index
    %1711 = arith.index_cast %1710 : i32 to index
    %c2_866 = arith.constant 2 : index
    %1712 = vector.load %arg4[%c0_864, %c3_865, %1711, %c2_866] : memref<1x4x10x10xf32, #tpu.memory_space<vmem>>, vector<1x1x8x8xf32>
    %1713 = vector.shape_cast %1712 : vector<1x1x8x8xf32> to vector<8x8xf32>
    %1714 = vector.broadcast %1709 : f32 to vector<8x8xf32>
    %1715 = arith.mulf %1714, %1713 : vector<8x8xf32>
    %1716 = arith.addf %1708, %1715 : vector<8x8xf32>
    %c125 = arith.constant 125 : index
    %1717 = memref.load %arg2[%c125] : memref<288xf32, #tpu.memory_space<smem>>
    %c1_i32_867 = arith.constant 1 : i32
    %1718 = arith.addi %0, %c1_i32_867 : i32
    %c0_868 = arith.constant 0 : index
    %c3_869 = arith.constant 3 : index
    %1719 = arith.index_cast %1718 : i32 to index
    %c0_870 = arith.constant 0 : index
    %1720 = vector.load %arg4[%c0_868, %c3_869, %1719, %c0_870] : memref<1x4x10x10xf32, #tpu.memory_space<vmem>>, vector<1x1x8x8xf32>
    %1721 = vector.shape_cast %1720 : vector<1x1x8x8xf32> to vector<8x8xf32>
    %1722 = vector.broadcast %1717 : f32 to vector<8x8xf32>
    %1723 = arith.mulf %1722, %1721 : vector<8x8xf32>
    %1724 = arith.addf %1716, %1723 : vector<8x8xf32>
    %c157 = arith.constant 157 : index
    %1725 = memref.load %arg2[%c157] : memref<288xf32, #tpu.memory_space<smem>>
    %c1_i32_871 = arith.constant 1 : i32
    %1726 = arith.addi %0, %c1_i32_871 : i32
    %c0_872 = arith.constant 0 : index
    %c3_873 = arith.constant 3 : index
    %1727 = arith.index_cast %1726 : i32 to index
    %c1_874 = arith.constant 1 : index
    %1728 = vector.load %arg4[%c0_872, %c3_873, %1727, %c1_874] : memref<1x4x10x10xf32, #tpu.memory_space<vmem>>, vector<1x1x8x8xf32>
    %1729 = vector.shape_cast %1728 : vector<1x1x8x8xf32> to vector<8x8xf32>
    %1730 = vector.broadcast %1725 : f32 to vector<8x8xf32>
    %1731 = arith.mulf %1730, %1729 : vector<8x8xf32>
    %1732 = arith.addf %1724, %1731 : vector<8x8xf32>
    %c189 = arith.constant 189 : index
    %1733 = memref.load %arg2[%c189] : memref<288xf32, #tpu.memory_space<smem>>
    %c1_i32_875 = arith.constant 1 : i32
    %1734 = arith.addi %0, %c1_i32_875 : i32
    %c0_876 = arith.constant 0 : index
    %c3_877 = arith.constant 3 : index
    %1735 = arith.index_cast %1734 : i32 to index
    %c2_878 = arith.constant 2 : index
    %1736 = vector.load %arg4[%c0_876, %c3_877, %1735, %c2_878] : memref<1x4x10x10xf32, #tpu.memory_space<vmem>>, vector<1x1x8x8xf32>
    %1737 = vector.shape_cast %1736 : vector<1x1x8x8xf32> to vector<8x8xf32>
    %1738 = vector.broadcast %1733 : f32 to vector<8x8xf32>
    %1739 = arith.mulf %1738, %1737 : vector<8x8xf32>
    %1740 = arith.addf %1732, %1739 : vector<8x8xf32>
    %c221 = arith.constant 221 : index
    %1741 = memref.load %arg2[%c221] : memref<288xf32, #tpu.memory_space<smem>>
    %c2_i32_879 = arith.constant 2 : i32
    %1742 = arith.addi %0, %c2_i32_879 : i32
    %c0_880 = arith.constant 0 : index
    %c3_881 = arith.constant 3 : index
    %1743 = arith.index_cast %1742 : i32 to index
    %c0_882 = arith.constant 0 : index
    %1744 = vector.load %arg4[%c0_880, %c3_881, %1743, %c0_882] : memref<1x4x10x10xf32, #tpu.memory_space<vmem>>, vector<1x1x8x8xf32>
    %1745 = vector.shape_cast %1744 : vector<1x1x8x8xf32> to vector<8x8xf32>
    %1746 = vector.broadcast %1741 : f32 to vector<8x8xf32>
    %1747 = arith.mulf %1746, %1745 : vector<8x8xf32>
    %1748 = arith.addf %1740, %1747 : vector<8x8xf32>
    %c253 = arith.constant 253 : index
    %1749 = memref.load %arg2[%c253] : memref<288xf32, #tpu.memory_space<smem>>
    %c2_i32_883 = arith.constant 2 : i32
    %1750 = arith.addi %0, %c2_i32_883 : i32
    %c0_884 = arith.constant 0 : index
    %c3_885 = arith.constant 3 : index
    %1751 = arith.index_cast %1750 : i32 to index
    %c1_886 = arith.constant 1 : index
    %1752 = vector.load %arg4[%c0_884, %c3_885, %1751, %c1_886] : memref<1x4x10x10xf32, #tpu.memory_space<vmem>>, vector<1x1x8x8xf32>
    %1753 = vector.shape_cast %1752 : vector<1x1x8x8xf32> to vector<8x8xf32>
    %1754 = vector.broadcast %1749 : f32 to vector<8x8xf32>
    %1755 = arith.mulf %1754, %1753 : vector<8x8xf32>
    %1756 = arith.addf %1748, %1755 : vector<8x8xf32>
    %c285 = arith.constant 285 : index
    %1757 = memref.load %arg2[%c285] : memref<288xf32, #tpu.memory_space<smem>>
    %c2_i32_887 = arith.constant 2 : i32
    %1758 = arith.addi %0, %c2_i32_887 : i32
    %c0_888 = arith.constant 0 : index
    %c3_889 = arith.constant 3 : index
    %1759 = arith.index_cast %1758 : i32 to index
    %c2_890 = arith.constant 2 : index
    %1760 = vector.load %arg4[%c0_888, %c3_889, %1759, %c2_890] : memref<1x4x10x10xf32, #tpu.memory_space<vmem>>, vector<1x1x8x8xf32>
    %1761 = vector.shape_cast %1760 : vector<1x1x8x8xf32> to vector<8x8xf32>
    %1762 = vector.broadcast %1757 : f32 to vector<8x8xf32>
    %1763 = arith.mulf %1762, %1761 : vector<8x8xf32>
    %1764 = arith.addf %1756, %1763 : vector<8x8xf32>
    %c5_891 = arith.constant 5 : index
    %1765 = memref.load %arg3[%c5_891] : memref<8xf32, #tpu.memory_space<smem>>
    %1766 = vector.broadcast %1765 : f32 to vector<8x8xf32>
    %1767 = arith.addf %1764, %1766 : vector<8x8xf32>
    %c0_892 = arith.constant 0 : index
    %c5_893 = arith.constant 5 : index
    %c0_894 = arith.constant 0 : index
    %c0_895 = arith.constant 0 : index
    %1768 = vector.load %arg5[%c0_892, %c5_893, %c0_894, %c0_895] : memref<1x8x8x8xf32, #tpu.memory_space<vmem>>, vector<1x1x8x8xf32>
    %1769 = vector.shape_cast %1768 : vector<1x1x8x8xf32> to vector<8x8xf32>
    %1770 = vector.shape_cast %1767 : vector<8x8xf32> to vector<1x1x8x8xf32>
    tpu.vector_store %arg5[%c0_892, %c5_893, %c0_894, %c0_895], %1770 {strides = array<i32>} : memref<1x8x8x8xf32, #tpu.memory_space<vmem>>, vector<1x1x8x8xf32>,
    %cst_896 = arith.constant 0.000000e+00 : f32
    %1771 = vector.broadcast %cst_896 : f32 to vector<8x8xf32>
    %c6 = arith.constant 6 : index
    %1772 = memref.load %arg2[%c6] : memref<288xf32, #tpu.memory_space<smem>>
    %c0_i32_897 = arith.constant 0 : i32
    %1773 = arith.addi %0, %c0_i32_897 : i32
    %c0_898 = arith.constant 0 : index
    %c0_899 = arith.constant 0 : index
    %1774 = arith.index_cast %1773 : i32 to index
    %c0_900 = arith.constant 0 : index
    %1775 = vector.load %arg4[%c0_898, %c0_899, %1774, %c0_900] : memref<1x4x10x10xf32, #tpu.memory_space<vmem>>, vector<1x1x8x8xf32>
    %1776 = vector.shape_cast %1775 : vector<1x1x8x8xf32> to vector<8x8xf32>
    %1777 = vector.broadcast %1772 : f32 to vector<8x8xf32>
    %1778 = arith.mulf %1777, %1776 : vector<8x8xf32>
    %1779 = arith.addf %1771, %1778 : vector<8x8xf32>
    %c38 = arith.constant 38 : index
    %1780 = memref.load %arg2[%c38] : memref<288xf32, #tpu.memory_space<smem>>
    %c0_i32_901 = arith.constant 0 : i32
    %1781 = arith.addi %0, %c0_i32_901 : i32
    %c0_902 = arith.constant 0 : index
    %c0_903 = arith.constant 0 : index
    %1782 = arith.index_cast %1781 : i32 to index
    %c1_904 = arith.constant 1 : index
    %1783 = vector.load %arg4[%c0_902, %c0_903, %1782, %c1_904] : memref<1x4x10x10xf32, #tpu.memory_space<vmem>>, vector<1x1x8x8xf32>
    %1784 = vector.shape_cast %1783 : vector<1x1x8x8xf32> to vector<8x8xf32>
    %1785 = vector.broadcast %1780 : f32 to vector<8x8xf32>
    %1786 = arith.mulf %1785, %1784 : vector<8x8xf32>
    %1787 = arith.addf %1779, %1786 : vector<8x8xf32>
    %c70 = arith.constant 70 : index
    %1788 = memref.load %arg2[%c70] : memref<288xf32, #tpu.memory_space<smem>>
    %c0_i32_905 = arith.constant 0 : i32
    %1789 = arith.addi %0, %c0_i32_905 : i32
    %c0_906 = arith.constant 0 : index
    %c0_907 = arith.constant 0 : index
    %1790 = arith.index_cast %1789 : i32 to index
    %c2_908 = arith.constant 2 : index
    %1791 = vector.load %arg4[%c0_906, %c0_907, %1790, %c2_908] : memref<1x4x10x10xf32, #tpu.memory_space<vmem>>, vector<1x1x8x8xf32>
    %1792 = vector.shape_cast %1791 : vector<1x1x8x8xf32> to vector<8x8xf32>
    %1793 = vector.broadcast %1788 : f32 to vector<8x8xf32>
    %1794 = arith.mulf %1793, %1792 : vector<8x8xf32>
    %1795 = arith.addf %1787, %1794 : vector<8x8xf32>
    %c102 = arith.constant 102 : index
    %1796 = memref.load %arg2[%c102] : memref<288xf32, #tpu.memory_space<smem>>
    %c1_i32_909 = arith.constant 1 : i32
    %1797 = arith.addi %0, %c1_i32_909 : i32
    %c0_910 = arith.constant 0 : index
    %c0_911 = arith.constant 0 : index
    %1798 = arith.index_cast %1797 : i32 to index
    %c0_912 = arith.constant 0 : index
    %1799 = vector.load %arg4[%c0_910, %c0_911, %1798, %c0_912] : memref<1x4x10x10xf32, #tpu.memory_space<vmem>>, vector<1x1x8x8xf32>
    %1800 = vector.shape_cast %1799 : vector<1x1x8x8xf32> to vector<8x8xf32>
    %1801 = vector.broadcast %1796 : f32 to vector<8x8xf32>
    %1802 = arith.mulf %1801, %1800 : vector<8x8xf32>
    %1803 = arith.addf %1795, %1802 : vector<8x8xf32>
    %c134 = arith.constant 134 : index
    %1804 = memref.load %arg2[%c134] : memref<288xf32, #tpu.memory_space<smem>>
    %c1_i32_913 = arith.constant 1 : i32
    %1805 = arith.addi %0, %c1_i32_913 : i32
    %c0_914 = arith.constant 0 : index
    %c0_915 = arith.constant 0 : index
    %1806 = arith.index_cast %1805 : i32 to index
    %c1_916 = arith.constant 1 : index
    %1807 = vector.load %arg4[%c0_914, %c0_915, %1806, %c1_916] : memref<1x4x10x10xf32, #tpu.memory_space<vmem>>, vector<1x1x8x8xf32>
    %1808 = vector.shape_cast %1807 : vector<1x1x8x8xf32> to vector<8x8xf32>
    %1809 = vector.broadcast %1804 : f32 to vector<8x8xf32>
    %1810 = arith.mulf %1809, %1808 : vector<8x8xf32>
    %1811 = arith.addf %1803, %1810 : vector<8x8xf32>
    %c166 = arith.constant 166 : index
    %1812 = memref.load %arg2[%c166] : memref<288xf32, #tpu.memory_space<smem>>
    %c1_i32_917 = arith.constant 1 : i32
    %1813 = arith.addi %0, %c1_i32_917 : i32
    %c0_918 = arith.constant 0 : index
    %c0_919 = arith.constant 0 : index
    %1814 = arith.index_cast %1813 : i32 to index
    %c2_920 = arith.constant 2 : index
    %1815 = vector.load %arg4[%c0_918, %c0_919, %1814, %c2_920] : memref<1x4x10x10xf32, #tpu.memory_space<vmem>>, vector<1x1x8x8xf32>
    %1816 = vector.shape_cast %1815 : vector<1x1x8x8xf32> to vector<8x8xf32>
    %1817 = vector.broadcast %1812 : f32 to vector<8x8xf32>
    %1818 = arith.mulf %1817, %1816 : vector<8x8xf32>
    %1819 = arith.addf %1811, %1818 : vector<8x8xf32>
    %c198 = arith.constant 198 : index
    %1820 = memref.load %arg2[%c198] : memref<288xf32, #tpu.memory_space<smem>>
    %c2_i32_921 = arith.constant 2 : i32
    %1821 = arith.addi %0, %c2_i32_921 : i32
    %c0_922 = arith.constant 0 : index
    %c0_923 = arith.constant 0 : index
    %1822 = arith.index_cast %1821 : i32 to index
    %c0_924 = arith.constant 0 : index
    %1823 = vector.load %arg4[%c0_922, %c0_923, %1822, %c0_924] : memref<1x4x10x10xf32, #tpu.memory_space<vmem>>, vector<1x1x8x8xf32>
    %1824 = vector.shape_cast %1823 : vector<1x1x8x8xf32> to vector<8x8xf32>
    %1825 = vector.broadcast %1820 : f32 to vector<8x8xf32>
    %1826 = arith.mulf %1825, %1824 : vector<8x8xf32>
    %1827 = arith.addf %1819, %1826 : vector<8x8xf32>
    %c230 = arith.constant 230 : index
    %1828 = memref.load %arg2[%c230] : memref<288xf32, #tpu.memory_space<smem>>
    %c2_i32_925 = arith.constant 2 : i32
    %1829 = arith.addi %0, %c2_i32_925 : i32
    %c0_926 = arith.constant 0 : index
    %c0_927 = arith.constant 0 : index
    %1830 = arith.index_cast %1829 : i32 to index
    %c1_928 = arith.constant 1 : index
    %1831 = vector.load %arg4[%c0_926, %c0_927, %1830, %c1_928] : memref<1x4x10x10xf32, #tpu.memory_space<vmem>>, vector<1x1x8x8xf32>
    %1832 = vector.shape_cast %1831 : vector<1x1x8x8xf32> to vector<8x8xf32>
    %1833 = vector.broadcast %1828 : f32 to vector<8x8xf32>
    %1834 = arith.mulf %1833, %1832 : vector<8x8xf32>
    %1835 = arith.addf %1827, %1834 : vector<8x8xf32>
    %c262 = arith.constant 262 : index
    %1836 = memref.load %arg2[%c262] : memref<288xf32, #tpu.memory_space<smem>>
    %c2_i32_929 = arith.constant 2 : i32
    %1837 = arith.addi %0, %c2_i32_929 : i32
    %c0_930 = arith.constant 0 : index
    %c0_931 = arith.constant 0 : index
    %1838 = arith.index_cast %1837 : i32 to index
    %c2_932 = arith.constant 2 : index
    %1839 = vector.load %arg4[%c0_930, %c0_931, %1838, %c2_932] : memref<1x4x10x10xf32, #tpu.memory_space<vmem>>, vector<1x1x8x8xf32>
    %1840 = vector.shape_cast %1839 : vector<1x1x8x8xf32> to vector<8x8xf32>
    %1841 = vector.broadcast %1836 : f32 to vector<8x8xf32>
    %1842 = arith.mulf %1841, %1840 : vector<8x8xf32>
    %1843 = arith.addf %1835, %1842 : vector<8x8xf32>
    %c14 = arith.constant 14 : index
    %1844 = memref.load %arg2[%c14] : memref<288xf32, #tpu.memory_space<smem>>
    %c0_i32_933 = arith.constant 0 : i32
    %1845 = arith.addi %0, %c0_i32_933 : i32
    %c0_934 = arith.constant 0 : index
    %c1_935 = arith.constant 1 : index
    %1846 = arith.index_cast %1845 : i32 to index
    %c0_936 = arith.constant 0 : index
    %1847 = vector.load %arg4[%c0_934, %c1_935, %1846, %c0_936] : memref<1x4x10x10xf32, #tpu.memory_space<vmem>>, vector<1x1x8x8xf32>
    %1848 = vector.shape_cast %1847 : vector<1x1x8x8xf32> to vector<8x8xf32>
    %1849 = vector.broadcast %1844 : f32 to vector<8x8xf32>
    %1850 = arith.mulf %1849, %1848 : vector<8x8xf32>
    %1851 = arith.addf %1843, %1850 : vector<8x8xf32>
    %c46 = arith.constant 46 : index
    %1852 = memref.load %arg2[%c46] : memref<288xf32, #tpu.memory_space<smem>>
    %c0_i32_937 = arith.constant 0 : i32
    %1853 = arith.addi %0, %c0_i32_937 : i32
    %c0_938 = arith.constant 0 : index
    %c1_939 = arith.constant 1 : index
    %1854 = arith.index_cast %1853 : i32 to index
    %c1_940 = arith.constant 1 : index
    %1855 = vector.load %arg4[%c0_938, %c1_939, %1854, %c1_940] : memref<1x4x10x10xf32, #tpu.memory_space<vmem>>, vector<1x1x8x8xf32>
    %1856 = vector.shape_cast %1855 : vector<1x1x8x8xf32> to vector<8x8xf32>
    %1857 = vector.broadcast %1852 : f32 to vector<8x8xf32>
    %1858 = arith.mulf %1857, %1856 : vector<8x8xf32>
    %1859 = arith.addf %1851, %1858 : vector<8x8xf32>
    %c78 = arith.constant 78 : index
    %1860 = memref.load %arg2[%c78] : memref<288xf32, #tpu.memory_space<smem>>
    %c0_i32_941 = arith.constant 0 : i32
    %1861 = arith.addi %0, %c0_i32_941 : i32
    %c0_942 = arith.constant 0 : index
    %c1_943 = arith.constant 1 : index
    %1862 = arith.index_cast %1861 : i32 to index
    %c2_944 = arith.constant 2 : index
    %1863 = vector.load %arg4[%c0_942, %c1_943, %1862, %c2_944] : memref<1x4x10x10xf32, #tpu.memory_space<vmem>>, vector<1x1x8x8xf32>
    %1864 = vector.shape_cast %1863 : vector<1x1x8x8xf32> to vector<8x8xf32>
    %1865 = vector.broadcast %1860 : f32 to vector<8x8xf32>
    %1866 = arith.mulf %1865, %1864 : vector<8x8xf32>
    %1867 = arith.addf %1859, %1866 : vector<8x8xf32>
    %c110 = arith.constant 110 : index
    %1868 = memref.load %arg2[%c110] : memref<288xf32, #tpu.memory_space<smem>>
    %c1_i32_945 = arith.constant 1 : i32
    %1869 = arith.addi %0, %c1_i32_945 : i32
    %c0_946 = arith.constant 0 : index
    %c1_947 = arith.constant 1 : index
    %1870 = arith.index_cast %1869 : i32 to index
    %c0_948 = arith.constant 0 : index
    %1871 = vector.load %arg4[%c0_946, %c1_947, %1870, %c0_948] : memref<1x4x10x10xf32, #tpu.memory_space<vmem>>, vector<1x1x8x8xf32>
    %1872 = vector.shape_cast %1871 : vector<1x1x8x8xf32> to vector<8x8xf32>
    %1873 = vector.broadcast %1868 : f32 to vector<8x8xf32>
    %1874 = arith.mulf %1873, %1872 : vector<8x8xf32>
    %1875 = arith.addf %1867, %1874 : vector<8x8xf32>
    %c142 = arith.constant 142 : index
    %1876 = memref.load %arg2[%c142] : memref<288xf32, #tpu.memory_space<smem>>
    %c1_i32_949 = arith.constant 1 : i32
    %1877 = arith.addi %0, %c1_i32_949 : i32
    %c0_950 = arith.constant 0 : index
    %c1_951 = arith.constant 1 : index
    %1878 = arith.index_cast %1877 : i32 to index
    %c1_952 = arith.constant 1 : index
    %1879 = vector.load %arg4[%c0_950, %c1_951, %1878, %c1_952] : memref<1x4x10x10xf32, #tpu.memory_space<vmem>>, vector<1x1x8x8xf32>
    %1880 = vector.shape_cast %1879 : vector<1x1x8x8xf32> to vector<8x8xf32>
    %1881 = vector.broadcast %1876 : f32 to vector<8x8xf32>
    %1882 = arith.mulf %1881, %1880 : vector<8x8xf32>
    %1883 = arith.addf %1875, %1882 : vector<8x8xf32>
    %c174 = arith.constant 174 : index
    %1884 = memref.load %arg2[%c174] : memref<288xf32, #tpu.memory_space<smem>>
    %c1_i32_953 = arith.constant 1 : i32
    %1885 = arith.addi %0, %c1_i32_953 : i32
    %c0_954 = arith.constant 0 : index
    %c1_955 = arith.constant 1 : index
    %1886 = arith.index_cast %1885 : i32 to index
    %c2_956 = arith.constant 2 : index
    %1887 = vector.load %arg4[%c0_954, %c1_955, %1886, %c2_956] : memref<1x4x10x10xf32, #tpu.memory_space<vmem>>, vector<1x1x8x8xf32>
    %1888 = vector.shape_cast %1887 : vector<1x1x8x8xf32> to vector<8x8xf32>
    %1889 = vector.broadcast %1884 : f32 to vector<8x8xf32>
    %1890 = arith.mulf %1889, %1888 : vector<8x8xf32>
    %1891 = arith.addf %1883, %1890 : vector<8x8xf32>
    %c206 = arith.constant 206 : index
    %1892 = memref.load %arg2[%c206] : memref<288xf32, #tpu.memory_space<smem>>
    %c2_i32_957 = arith.constant 2 : i32
    %1893 = arith.addi %0, %c2_i32_957 : i32
    %c0_958 = arith.constant 0 : index
    %c1_959 = arith.constant 1 : index
    %1894 = arith.index_cast %1893 : i32 to index
    %c0_960 = arith.constant 0 : index
    %1895 = vector.load %arg4[%c0_958, %c1_959, %1894, %c0_960] : memref<1x4x10x10xf32, #tpu.memory_space<vmem>>, vector<1x1x8x8xf32>
    %1896 = vector.shape_cast %1895 : vector<1x1x8x8xf32> to vector<8x8xf32>
    %1897 = vector.broadcast %1892 : f32 to vector<8x8xf32>
    %1898 = arith.mulf %1897, %1896 : vector<8x8xf32>
    %1899 = arith.addf %1891, %1898 : vector<8x8xf32>
    %c238 = arith.constant 238 : index
    %1900 = memref.load %arg2[%c238] : memref<288xf32, #tpu.memory_space<smem>>
    %c2_i32_961 = arith.constant 2 : i32
    %1901 = arith.addi %0, %c2_i32_961 : i32
    %c0_962 = arith.constant 0 : index
    %c1_963 = arith.constant 1 : index
    %1902 = arith.index_cast %1901 : i32 to index
    %c1_964 = arith.constant 1 : index
    %1903 = vector.load %arg4[%c0_962, %c1_963, %1902, %c1_964] : memref<1x4x10x10xf32, #tpu.memory_space<vmem>>, vector<1x1x8x8xf32>
    %1904 = vector.shape_cast %1903 : vector<1x1x8x8xf32> to vector<8x8xf32>
    %1905 = vector.broadcast %1900 : f32 to vector<8x8xf32>
    %1906 = arith.mulf %1905, %1904 : vector<8x8xf32>
    %1907 = arith.addf %1899, %1906 : vector<8x8xf32>
    %c270 = arith.constant 270 : index
    %1908 = memref.load %arg2[%c270] : memref<288xf32, #tpu.memory_space<smem>>
    %c2_i32_965 = arith.constant 2 : i32
    %1909 = arith.addi %0, %c2_i32_965 : i32
    %c0_966 = arith.constant 0 : index
    %c1_967 = arith.constant 1 : index
    %1910 = arith.index_cast %1909 : i32 to index
    %c2_968 = arith.constant 2 : index
    %1911 = vector.load %arg4[%c0_966, %c1_967, %1910, %c2_968] : memref<1x4x10x10xf32, #tpu.memory_space<vmem>>, vector<1x1x8x8xf32>
    %1912 = vector.shape_cast %1911 : vector<1x1x8x8xf32> to vector<8x8xf32>
    %1913 = vector.broadcast %1908 : f32 to vector<8x8xf32>
    %1914 = arith.mulf %1913, %1912 : vector<8x8xf32>
    %1915 = arith.addf %1907, %1914 : vector<8x8xf32>
    %c22 = arith.constant 22 : index
    %1916 = memref.load %arg2[%c22] : memref<288xf32, #tpu.memory_space<smem>>
    %c0_i32_969 = arith.constant 0 : i32
    %1917 = arith.addi %0, %c0_i32_969 : i32
    %c0_970 = arith.constant 0 : index
    %c2_971 = arith.constant 2 : index
    %1918 = arith.index_cast %1917 : i32 to index
    %c0_972 = arith.constant 0 : index
    %1919 = vector.load %arg4[%c0_970, %c2_971, %1918, %c0_972] : memref<1x4x10x10xf32, #tpu.memory_space<vmem>>, vector<1x1x8x8xf32>
    %1920 = vector.shape_cast %1919 : vector<1x1x8x8xf32> to vector<8x8xf32>
    %1921 = vector.broadcast %1916 : f32 to vector<8x8xf32>
    %1922 = arith.mulf %1921, %1920 : vector<8x8xf32>
    %1923 = arith.addf %1915, %1922 : vector<8x8xf32>
    %c54 = arith.constant 54 : index
    %1924 = memref.load %arg2[%c54] : memref<288xf32, #tpu.memory_space<smem>>
    %c0_i32_973 = arith.constant 0 : i32
    %1925 = arith.addi %0, %c0_i32_973 : i32
    %c0_974 = arith.constant 0 : index
    %c2_975 = arith.constant 2 : index
    %1926 = arith.index_cast %1925 : i32 to index
    %c1_976 = arith.constant 1 : index
    %1927 = vector.load %arg4[%c0_974, %c2_975, %1926, %c1_976] : memref<1x4x10x10xf32, #tpu.memory_space<vmem>>, vector<1x1x8x8xf32>
    %1928 = vector.shape_cast %1927 : vector<1x1x8x8xf32> to vector<8x8xf32>
    %1929 = vector.broadcast %1924 : f32 to vector<8x8xf32>
    %1930 = arith.mulf %1929, %1928 : vector<8x8xf32>
    %1931 = arith.addf %1923, %1930 : vector<8x8xf32>
    %c86 = arith.constant 86 : index
    %1932 = memref.load %arg2[%c86] : memref<288xf32, #tpu.memory_space<smem>>
    %c0_i32_977 = arith.constant 0 : i32
    %1933 = arith.addi %0, %c0_i32_977 : i32
    %c0_978 = arith.constant 0 : index
    %c2_979 = arith.constant 2 : index
    %1934 = arith.index_cast %1933 : i32 to index
    %c2_980 = arith.constant 2 : index
    %1935 = vector.load %arg4[%c0_978, %c2_979, %1934, %c2_980] : memref<1x4x10x10xf32, #tpu.memory_space<vmem>>, vector<1x1x8x8xf32>
    %1936 = vector.shape_cast %1935 : vector<1x1x8x8xf32> to vector<8x8xf32>
    %1937 = vector.broadcast %1932 : f32 to vector<8x8xf32>
    %1938 = arith.mulf %1937, %1936 : vector<8x8xf32>
    %1939 = arith.addf %1931, %1938 : vector<8x8xf32>
    %c118 = arith.constant 118 : index
    %1940 = memref.load %arg2[%c118] : memref<288xf32, #tpu.memory_space<smem>>
    %c1_i32_981 = arith.constant 1 : i32
    %1941 = arith.addi %0, %c1_i32_981 : i32
    %c0_982 = arith.constant 0 : index
    %c2_983 = arith.constant 2 : index
    %1942 = arith.index_cast %1941 : i32 to index
    %c0_984 = arith.constant 0 : index
    %1943 = vector.load %arg4[%c0_982, %c2_983, %1942, %c0_984] : memref<1x4x10x10xf32, #tpu.memory_space<vmem>>, vector<1x1x8x8xf32>
    %1944 = vector.shape_cast %1943 : vector<1x1x8x8xf32> to vector<8x8xf32>
    %1945 = vector.broadcast %1940 : f32 to vector<8x8xf32>
    %1946 = arith.mulf %1945, %1944 : vector<8x8xf32>
    %1947 = arith.addf %1939, %1946 : vector<8x8xf32>
    %c150 = arith.constant 150 : index
    %1948 = memref.load %arg2[%c150] : memref<288xf32, #tpu.memory_space<smem>>
    %c1_i32_985 = arith.constant 1 : i32
    %1949 = arith.addi %0, %c1_i32_985 : i32
    %c0_986 = arith.constant 0 : index
    %c2_987 = arith.constant 2 : index
    %1950 = arith.index_cast %1949 : i32 to index
    %c1_988 = arith.constant 1 : index
    %1951 = vector.load %arg4[%c0_986, %c2_987, %1950, %c1_988] : memref<1x4x10x10xf32, #tpu.memory_space<vmem>>, vector<1x1x8x8xf32>
    %1952 = vector.shape_cast %1951 : vector<1x1x8x8xf32> to vector<8x8xf32>
    %1953 = vector.broadcast %1948 : f32 to vector<8x8xf32>
    %1954 = arith.mulf %1953, %1952 : vector<8x8xf32>
    %1955 = arith.addf %1947, %1954 : vector<8x8xf32>
    %c182 = arith.constant 182 : index
    %1956 = memref.load %arg2[%c182] : memref<288xf32, #tpu.memory_space<smem>>
    %c1_i32_989 = arith.constant 1 : i32
    %1957 = arith.addi %0, %c1_i32_989 : i32
    %c0_990 = arith.constant 0 : index
    %c2_991 = arith.constant 2 : index
    %1958 = arith.index_cast %1957 : i32 to index
    %c2_992 = arith.constant 2 : index
    %1959 = vector.load %arg4[%c0_990, %c2_991, %1958, %c2_992] : memref<1x4x10x10xf32, #tpu.memory_space<vmem>>, vector<1x1x8x8xf32>
    %1960 = vector.shape_cast %1959 : vector<1x1x8x8xf32> to vector<8x8xf32>
    %1961 = vector.broadcast %1956 : f32 to vector<8x8xf32>
    %1962 = arith.mulf %1961, %1960 : vector<8x8xf32>
    %1963 = arith.addf %1955, %1962 : vector<8x8xf32>
    %c214 = arith.constant 214 : index
    %1964 = memref.load %arg2[%c214] : memref<288xf32, #tpu.memory_space<smem>>
    %c2_i32_993 = arith.constant 2 : i32
    %1965 = arith.addi %0, %c2_i32_993 : i32
    %c0_994 = arith.constant 0 : index
    %c2_995 = arith.constant 2 : index
    %1966 = arith.index_cast %1965 : i32 to index
    %c0_996 = arith.constant 0 : index
    %1967 = vector.load %arg4[%c0_994, %c2_995, %1966, %c0_996] : memref<1x4x10x10xf32, #tpu.memory_space<vmem>>, vector<1x1x8x8xf32>
    %1968 = vector.shape_cast %1967 : vector<1x1x8x8xf32> to vector<8x8xf32>
    %1969 = vector.broadcast %1964 : f32 to vector<8x8xf32>
    %1970 = arith.mulf %1969, %1968 : vector<8x8xf32>
    %1971 = arith.addf %1963, %1970 : vector<8x8xf32>
    %c246 = arith.constant 246 : index
    %1972 = memref.load %arg2[%c246] : memref<288xf32, #tpu.memory_space<smem>>
    %c2_i32_997 = arith.constant 2 : i32
    %1973 = arith.addi %0, %c2_i32_997 : i32
    %c0_998 = arith.constant 0 : index
    %c2_999 = arith.constant 2 : index
    %1974 = arith.index_cast %1973 : i32 to index
    %c1_1000 = arith.constant 1 : index
    %1975 = vector.load %arg4[%c0_998, %c2_999, %1974, %c1_1000] : memref<1x4x10x10xf32, #tpu.memory_space<vmem>>, vector<1x1x8x8xf32>
    %1976 = vector.shape_cast %1975 : vector<1x1x8x8xf32> to vector<8x8xf32>
    %1977 = vector.broadcast %1972 : f32 to vector<8x8xf32>
    %1978 = arith.mulf %1977, %1976 : vector<8x8xf32>
    %1979 = arith.addf %1971, %1978 : vector<8x8xf32>
    %c278 = arith.constant 278 : index
    %1980 = memref.load %arg2[%c278] : memref<288xf32, #tpu.memory_space<smem>>
    %c2_i32_1001 = arith.constant 2 : i32
    %1981 = arith.addi %0, %c2_i32_1001 : i32
    %c0_1002 = arith.constant 0 : index
    %c2_1003 = arith.constant 2 : index
    %1982 = arith.index_cast %1981 : i32 to index
    %c2_1004 = arith.constant 2 : index
    %1983 = vector.load %arg4[%c0_1002, %c2_1003, %1982, %c2_1004] : memref<1x4x10x10xf32, #tpu.memory_space<vmem>>, vector<1x1x8x8xf32>
    %1984 = vector.shape_cast %1983 : vector<1x1x8x8xf32> to vector<8x8xf32>
    %1985 = vector.broadcast %1980 : f32 to vector<8x8xf32>
    %1986 = arith.mulf %1985, %1984 : vector<8x8xf32>
    %1987 = arith.addf %1979, %1986 : vector<8x8xf32>
    %c30 = arith.constant 30 : index
    %1988 = memref.load %arg2[%c30] : memref<288xf32, #tpu.memory_space<smem>>
    %c0_i32_1005 = arith.constant 0 : i32
    %1989 = arith.addi %0, %c0_i32_1005 : i32
    %c0_1006 = arith.constant 0 : index
    %c3_1007 = arith.constant 3 : index
    %1990 = arith.index_cast %1989 : i32 to index
    %c0_1008 = arith.constant 0 : index
    %1991 = vector.load %arg4[%c0_1006, %c3_1007, %1990, %c0_1008] : memref<1x4x10x10xf32, #tpu.memory_space<vmem>>, vector<1x1x8x8xf32>
    %1992 = vector.shape_cast %1991 : vector<1x1x8x8xf32> to vector<8x8xf32>
    %1993 = vector.broadcast %1988 : f32 to vector<8x8xf32>
    %1994 = arith.mulf %1993, %1992 : vector<8x8xf32>
    %1995 = arith.addf %1987, %1994 : vector<8x8xf32>
    %c62 = arith.constant 62 : index
    %1996 = memref.load %arg2[%c62] : memref<288xf32, #tpu.memory_space<smem>>
    %c0_i32_1009 = arith.constant 0 : i32
    %1997 = arith.addi %0, %c0_i32_1009 : i32
    %c0_1010 = arith.constant 0 : index
    %c3_1011 = arith.constant 3 : index
    %1998 = arith.index_cast %1997 : i32 to index
    %c1_1012 = arith.constant 1 : index
    %1999 = vector.load %arg4[%c0_1010, %c3_1011, %1998, %c1_1012] : memref<1x4x10x10xf32, #tpu.memory_space<vmem>>, vector<1x1x8x8xf32>
    %2000 = vector.shape_cast %1999 : vector<1x1x8x8xf32> to vector<8x8xf32>
    %2001 = vector.broadcast %1996 : f32 to vector<8x8xf32>
    %2002 = arith.mulf %2001, %2000 : vector<8x8xf32>
    %2003 = arith.addf %1995, %2002 : vector<8x8xf32>
    %c94 = arith.constant 94 : index
    %2004 = memref.load %arg2[%c94] : memref<288xf32, #tpu.memory_space<smem>>
    %c0_i32_1013 = arith.constant 0 : i32
    %2005 = arith.addi %0, %c0_i32_1013 : i32
    %c0_1014 = arith.constant 0 : index
    %c3_1015 = arith.constant 3 : index
    %2006 = arith.index_cast %2005 : i32 to index
    %c2_1016 = arith.constant 2 : index
    %2007 = vector.load %arg4[%c0_1014, %c3_1015, %2006, %c2_1016] : memref<1x4x10x10xf32, #tpu.memory_space<vmem>>, vector<1x1x8x8xf32>
    %2008 = vector.shape_cast %2007 : vector<1x1x8x8xf32> to vector<8x8xf32>
    %2009 = vector.broadcast %2004 : f32 to vector<8x8xf32>
    %2010 = arith.mulf %2009, %2008 : vector<8x8xf32>
    %2011 = arith.addf %2003, %2010 : vector<8x8xf32>
    %c126 = arith.constant 126 : index
    %2012 = memref.load %arg2[%c126] : memref<288xf32, #tpu.memory_space<smem>>
    %c1_i32_1017 = arith.constant 1 : i32
    %2013 = arith.addi %0, %c1_i32_1017 : i32
    %c0_1018 = arith.constant 0 : index
    %c3_1019 = arith.constant 3 : index
    %2014 = arith.index_cast %2013 : i32 to index
    %c0_1020 = arith.constant 0 : index
    %2015 = vector.load %arg4[%c0_1018, %c3_1019, %2014, %c0_1020] : memref<1x4x10x10xf32, #tpu.memory_space<vmem>>, vector<1x1x8x8xf32>
    %2016 = vector.shape_cast %2015 : vector<1x1x8x8xf32> to vector<8x8xf32>
    %2017 = vector.broadcast %2012 : f32 to vector<8x8xf32>
    %2018 = arith.mulf %2017, %2016 : vector<8x8xf32>
    %2019 = arith.addf %2011, %2018 : vector<8x8xf32>
    %c158 = arith.constant 158 : index
    %2020 = memref.load %arg2[%c158] : memref<288xf32, #tpu.memory_space<smem>>
    %c1_i32_1021 = arith.constant 1 : i32
    %2021 = arith.addi %0, %c1_i32_1021 : i32
    %c0_1022 = arith.constant 0 : index
    %c3_1023 = arith.constant 3 : index
    %2022 = arith.index_cast %2021 : i32 to index
    %c1_1024 = arith.constant 1 : index
    %2023 = vector.load %arg4[%c0_1022, %c3_1023, %2022, %c1_1024] : memref<1x4x10x10xf32, #tpu.memory_space<vmem>>, vector<1x1x8x8xf32>
    %2024 = vector.shape_cast %2023 : vector<1x1x8x8xf32> to vector<8x8xf32>
    %2025 = vector.broadcast %2020 : f32 to vector<8x8xf32>
    %2026 = arith.mulf %2025, %2024 : vector<8x8xf32>
    %2027 = arith.addf %2019, %2026 : vector<8x8xf32>
    %c190 = arith.constant 190 : index
    %2028 = memref.load %arg2[%c190] : memref<288xf32, #tpu.memory_space<smem>>
    %c1_i32_1025 = arith.constant 1 : i32
    %2029 = arith.addi %0, %c1_i32_1025 : i32
    %c0_1026 = arith.constant 0 : index
    %c3_1027 = arith.constant 3 : index
    %2030 = arith.index_cast %2029 : i32 to index
    %c2_1028 = arith.constant 2 : index
    %2031 = vector.load %arg4[%c0_1026, %c3_1027, %2030, %c2_1028] : memref<1x4x10x10xf32, #tpu.memory_space<vmem>>, vector<1x1x8x8xf32>
    %2032 = vector.shape_cast %2031 : vector<1x1x8x8xf32> to vector<8x8xf32>
    %2033 = vector.broadcast %2028 : f32 to vector<8x8xf32>
    %2034 = arith.mulf %2033, %2032 : vector<8x8xf32>
    %2035 = arith.addf %2027, %2034 : vector<8x8xf32>
    %c222 = arith.constant 222 : index
    %2036 = memref.load %arg2[%c222] : memref<288xf32, #tpu.memory_space<smem>>
    %c2_i32_1029 = arith.constant 2 : i32
    %2037 = arith.addi %0, %c2_i32_1029 : i32
    %c0_1030 = arith.constant 0 : index
    %c3_1031 = arith.constant 3 : index
    %2038 = arith.index_cast %2037 : i32 to index
    %c0_1032 = arith.constant 0 : index
    %2039 = vector.load %arg4[%c0_1030, %c3_1031, %2038, %c0_1032] : memref<1x4x10x10xf32, #tpu.memory_space<vmem>>, vector<1x1x8x8xf32>
    %2040 = vector.shape_cast %2039 : vector<1x1x8x8xf32> to vector<8x8xf32>
    %2041 = vector.broadcast %2036 : f32 to vector<8x8xf32>
    %2042 = arith.mulf %2041, %2040 : vector<8x8xf32>
    %2043 = arith.addf %2035, %2042 : vector<8x8xf32>
    %c254 = arith.constant 254 : index
    %2044 = memref.load %arg2[%c254] : memref<288xf32, #tpu.memory_space<smem>>
    %c2_i32_1033 = arith.constant 2 : i32
    %2045 = arith.addi %0, %c2_i32_1033 : i32
    %c0_1034 = arith.constant 0 : index
    %c3_1035 = arith.constant 3 : index
    %2046 = arith.index_cast %2045 : i32 to index
    %c1_1036 = arith.constant 1 : index
    %2047 = vector.load %arg4[%c0_1034, %c3_1035, %2046, %c1_1036] : memref<1x4x10x10xf32, #tpu.memory_space<vmem>>, vector<1x1x8x8xf32>
    %2048 = vector.shape_cast %2047 : vector<1x1x8x8xf32> to vector<8x8xf32>
    %2049 = vector.broadcast %2044 : f32 to vector<8x8xf32>
    %2050 = arith.mulf %2049, %2048 : vector<8x8xf32>
    %2051 = arith.addf %2043, %2050 : vector<8x8xf32>
    %c286 = arith.constant 286 : index
    %2052 = memref.load %arg2[%c286] : memref<288xf32, #tpu.memory_space<smem>>
    %c2_i32_1037 = arith.constant 2 : i32
    %2053 = arith.addi %0, %c2_i32_1037 : i32
    %c0_1038 = arith.constant 0 : index
    %c3_1039 = arith.constant 3 : index
    %2054 = arith.index_cast %2053 : i32 to index
    %c2_1040 = arith.constant 2 : index
    %2055 = vector.load %arg4[%c0_1038, %c3_1039, %2054, %c2_1040] : memref<1x4x10x10xf32, #tpu.memory_space<vmem>>, vector<1x1x8x8xf32>
    %2056 = vector.shape_cast %2055 : vector<1x1x8x8xf32> to vector<8x8xf32>
    %2057 = vector.broadcast %2052 : f32 to vector<8x8xf32>
    %2058 = arith.mulf %2057, %2056 : vector<8x8xf32>
    %2059 = arith.addf %2051, %2058 : vector<8x8xf32>
    %c6_1041 = arith.constant 6 : index
    %2060 = memref.load %arg3[%c6_1041] : memref<8xf32, #tpu.memory_space<smem>>
    %2061 = vector.broadcast %2060 : f32 to vector<8x8xf32>
    %2062 = arith.addf %2059, %2061 : vector<8x8xf32>
    %c0_1042 = arith.constant 0 : index
    %c6_1043 = arith.constant 6 : index
    %c0_1044 = arith.constant 0 : index
    %c0_1045 = arith.constant 0 : index
    %2063 = vector.load %arg5[%c0_1042, %c6_1043, %c0_1044, %c0_1045] : memref<1x8x8x8xf32, #tpu.memory_space<vmem>>, vector<1x1x8x8xf32>
    %2064 = vector.shape_cast %2063 : vector<1x1x8x8xf32> to vector<8x8xf32>
    %2065 = vector.shape_cast %2062 : vector<8x8xf32> to vector<1x1x8x8xf32>
    tpu.vector_store %arg5[%c0_1042, %c6_1043, %c0_1044, %c0_1045], %2065 {strides = array<i32>} : memref<1x8x8x8xf32, #tpu.memory_space<vmem>>, vector<1x1x8x8xf32>,
    %cst_1046 = arith.constant 0.000000e+00 : f32
    %2066 = vector.broadcast %cst_1046 : f32 to vector<8x8xf32>
    %c7 = arith.constant 7 : index
    %2067 = memref.load %arg2[%c7] : memref<288xf32, #tpu.memory_space<smem>>
    %c0_i32_1047 = arith.constant 0 : i32
    %2068 = arith.addi %0, %c0_i32_1047 : i32
    %c0_1048 = arith.constant 0 : index
    %c0_1049 = arith.constant 0 : index
    %2069 = arith.index_cast %2068 : i32 to index
    %c0_1050 = arith.constant 0 : index
    %2070 = vector.load %arg4[%c0_1048, %c0_1049, %2069, %c0_1050] : memref<1x4x10x10xf32, #tpu.memory_space<vmem>>, vector<1x1x8x8xf32>
    %2071 = vector.shape_cast %2070 : vector<1x1x8x8xf32> to vector<8x8xf32>
    %2072 = vector.broadcast %2067 : f32 to vector<8x8xf32>
    %2073 = arith.mulf %2072, %2071 : vector<8x8xf32>
    %2074 = arith.addf %2066, %2073 : vector<8x8xf32>
    %c39 = arith.constant 39 : index
    %2075 = memref.load %arg2[%c39] : memref<288xf32, #tpu.memory_space<smem>>
    %c0_i32_1051 = arith.constant 0 : i32
    %2076 = arith.addi %0, %c0_i32_1051 : i32
    %c0_1052 = arith.constant 0 : index
    %c0_1053 = arith.constant 0 : index
    %2077 = arith.index_cast %2076 : i32 to index
    %c1_1054 = arith.constant 1 : index
    %2078 = vector.load %arg4[%c0_1052, %c0_1053, %2077, %c1_1054] : memref<1x4x10x10xf32, #tpu.memory_space<vmem>>, vector<1x1x8x8xf32>
    %2079 = vector.shape_cast %2078 : vector<1x1x8x8xf32> to vector<8x8xf32>
    %2080 = vector.broadcast %2075 : f32 to vector<8x8xf32>
    %2081 = arith.mulf %2080, %2079 : vector<8x8xf32>
    %2082 = arith.addf %2074, %2081 : vector<8x8xf32>
    %c71 = arith.constant 71 : index
    %2083 = memref.load %arg2[%c71] : memref<288xf32, #tpu.memory_space<smem>>
    %c0_i32_1055 = arith.constant 0 : i32
    %2084 = arith.addi %0, %c0_i32_1055 : i32
    %c0_1056 = arith.constant 0 : index
    %c0_1057 = arith.constant 0 : index
    %2085 = arith.index_cast %2084 : i32 to index
    %c2_1058 = arith.constant 2 : index
    %2086 = vector.load %arg4[%c0_1056, %c0_1057, %2085, %c2_1058] : memref<1x4x10x10xf32, #tpu.memory_space<vmem>>, vector<1x1x8x8xf32>
    %2087 = vector.shape_cast %2086 : vector<1x1x8x8xf32> to vector<8x8xf32>
    %2088 = vector.broadcast %2083 : f32 to vector<8x8xf32>
    %2089 = arith.mulf %2088, %2087 : vector<8x8xf32>
    %2090 = arith.addf %2082, %2089 : vector<8x8xf32>
    %c103 = arith.constant 103 : index
    %2091 = memref.load %arg2[%c103] : memref<288xf32, #tpu.memory_space<smem>>
    %c1_i32_1059 = arith.constant 1 : i32
    %2092 = arith.addi %0, %c1_i32_1059 : i32
    %c0_1060 = arith.constant 0 : index
    %c0_1061 = arith.constant 0 : index
    %2093 = arith.index_cast %2092 : i32 to index
    %c0_1062 = arith.constant 0 : index
    %2094 = vector.load %arg4[%c0_1060, %c0_1061, %2093, %c0_1062] : memref<1x4x10x10xf32, #tpu.memory_space<vmem>>, vector<1x1x8x8xf32>
    %2095 = vector.shape_cast %2094 : vector<1x1x8x8xf32> to vector<8x8xf32>
    %2096 = vector.broadcast %2091 : f32 to vector<8x8xf32>
    %2097 = arith.mulf %2096, %2095 : vector<8x8xf32>
    %2098 = arith.addf %2090, %2097 : vector<8x8xf32>
    %c135 = arith.constant 135 : index
    %2099 = memref.load %arg2[%c135] : memref<288xf32, #tpu.memory_space<smem>>
    %c1_i32_1063 = arith.constant 1 : i32
    %2100 = arith.addi %0, %c1_i32_1063 : i32
    %c0_1064 = arith.constant 0 : index
    %c0_1065 = arith.constant 0 : index
    %2101 = arith.index_cast %2100 : i32 to index
    %c1_1066 = arith.constant 1 : index
    %2102 = vector.load %arg4[%c0_1064, %c0_1065, %2101, %c1_1066] : memref<1x4x10x10xf32, #tpu.memory_space<vmem>>, vector<1x1x8x8xf32>
    %2103 = vector.shape_cast %2102 : vector<1x1x8x8xf32> to vector<8x8xf32>
    %2104 = vector.broadcast %2099 : f32 to vector<8x8xf32>
    %2105 = arith.mulf %2104, %2103 : vector<8x8xf32>
    %2106 = arith.addf %2098, %2105 : vector<8x8xf32>
    %c167 = arith.constant 167 : index
    %2107 = memref.load %arg2[%c167] : memref<288xf32, #tpu.memory_space<smem>>
    %c1_i32_1067 = arith.constant 1 : i32
    %2108 = arith.addi %0, %c1_i32_1067 : i32
    %c0_1068 = arith.constant 0 : index
    %c0_1069 = arith.constant 0 : index
    %2109 = arith.index_cast %2108 : i32 to index
    %c2_1070 = arith.constant 2 : index
    %2110 = vector.load %arg4[%c0_1068, %c0_1069, %2109, %c2_1070] : memref<1x4x10x10xf32, #tpu.memory_space<vmem>>, vector<1x1x8x8xf32>
    %2111 = vector.shape_cast %2110 : vector<1x1x8x8xf32> to vector<8x8xf32>
    %2112 = vector.broadcast %2107 : f32 to vector<8x8xf32>
    %2113 = arith.mulf %2112, %2111 : vector<8x8xf32>
    %2114 = arith.addf %2106, %2113 : vector<8x8xf32>
    %c199 = arith.constant 199 : index
    %2115 = memref.load %arg2[%c199] : memref<288xf32, #tpu.memory_space<smem>>
    %c2_i32_1071 = arith.constant 2 : i32
    %2116 = arith.addi %0, %c2_i32_1071 : i32
    %c0_1072 = arith.constant 0 : index
    %c0_1073 = arith.constant 0 : index
    %2117 = arith.index_cast %2116 : i32 to index
    %c0_1074 = arith.constant 0 : index
    %2118 = vector.load %arg4[%c0_1072, %c0_1073, %2117, %c0_1074] : memref<1x4x10x10xf32, #tpu.memory_space<vmem>>, vector<1x1x8x8xf32>
    %2119 = vector.shape_cast %2118 : vector<1x1x8x8xf32> to vector<8x8xf32>
    %2120 = vector.broadcast %2115 : f32 to vector<8x8xf32>
    %2121 = arith.mulf %2120, %2119 : vector<8x8xf32>
    %2122 = arith.addf %2114, %2121 : vector<8x8xf32>
    %c231 = arith.constant 231 : index
    %2123 = memref.load %arg2[%c231] : memref<288xf32, #tpu.memory_space<smem>>
    %c2_i32_1075 = arith.constant 2 : i32
    %2124 = arith.addi %0, %c2_i32_1075 : i32
    %c0_1076 = arith.constant 0 : index
    %c0_1077 = arith.constant 0 : index
    %2125 = arith.index_cast %2124 : i32 to index
    %c1_1078 = arith.constant 1 : index
    %2126 = vector.load %arg4[%c0_1076, %c0_1077, %2125, %c1_1078] : memref<1x4x10x10xf32, #tpu.memory_space<vmem>>, vector<1x1x8x8xf32>
    %2127 = vector.shape_cast %2126 : vector<1x1x8x8xf32> to vector<8x8xf32>
    %2128 = vector.broadcast %2123 : f32 to vector<8x8xf32>
    %2129 = arith.mulf %2128, %2127 : vector<8x8xf32>
    %2130 = arith.addf %2122, %2129 : vector<8x8xf32>
    %c263 = arith.constant 263 : index
    %2131 = memref.load %arg2[%c263] : memref<288xf32, #tpu.memory_space<smem>>
    %c2_i32_1079 = arith.constant 2 : i32
    %2132 = arith.addi %0, %c2_i32_1079 : i32
    %c0_1080 = arith.constant 0 : index
    %c0_1081 = arith.constant 0 : index
    %2133 = arith.index_cast %2132 : i32 to index
    %c2_1082 = arith.constant 2 : index
    %2134 = vector.load %arg4[%c0_1080, %c0_1081, %2133, %c2_1082] : memref<1x4x10x10xf32, #tpu.memory_space<vmem>>, vector<1x1x8x8xf32>
    %2135 = vector.shape_cast %2134 : vector<1x1x8x8xf32> to vector<8x8xf32>
    %2136 = vector.broadcast %2131 : f32 to vector<8x8xf32>
    %2137 = arith.mulf %2136, %2135 : vector<8x8xf32>
    %2138 = arith.addf %2130, %2137 : vector<8x8xf32>
    %c15 = arith.constant 15 : index
    %2139 = memref.load %arg2[%c15] : memref<288xf32, #tpu.memory_space<smem>>
    %c0_i32_1083 = arith.constant 0 : i32
    %2140 = arith.addi %0, %c0_i32_1083 : i32
    %c0_1084 = arith.constant 0 : index
    %c1_1085 = arith.constant 1 : index
    %2141 = arith.index_cast %2140 : i32 to index
    %c0_1086 = arith.constant 0 : index
    %2142 = vector.load %arg4[%c0_1084, %c1_1085, %2141, %c0_1086] : memref<1x4x10x10xf32, #tpu.memory_space<vmem>>, vector<1x1x8x8xf32>
    %2143 = vector.shape_cast %2142 : vector<1x1x8x8xf32> to vector<8x8xf32>
    %2144 = vector.broadcast %2139 : f32 to vector<8x8xf32>
    %2145 = arith.mulf %2144, %2143 : vector<8x8xf32>
    %2146 = arith.addf %2138, %2145 : vector<8x8xf32>
    %c47 = arith.constant 47 : index
    %2147 = memref.load %arg2[%c47] : memref<288xf32, #tpu.memory_space<smem>>
    %c0_i32_1087 = arith.constant 0 : i32
    %2148 = arith.addi %0, %c0_i32_1087 : i32
    %c0_1088 = arith.constant 0 : index
    %c1_1089 = arith.constant 1 : index
    %2149 = arith.index_cast %2148 : i32 to index
    %c1_1090 = arith.constant 1 : index
    %2150 = vector.load %arg4[%c0_1088, %c1_1089, %2149, %c1_1090] : memref<1x4x10x10xf32, #tpu.memory_space<vmem>>, vector<1x1x8x8xf32>
    %2151 = vector.shape_cast %2150 : vector<1x1x8x8xf32> to vector<8x8xf32>
    %2152 = vector.broadcast %2147 : f32 to vector<8x8xf32>
    %2153 = arith.mulf %2152, %2151 : vector<8x8xf32>
    %2154 = arith.addf %2146, %2153 : vector<8x8xf32>
    %c79 = arith.constant 79 : index
    %2155 = memref.load %arg2[%c79] : memref<288xf32, #tpu.memory_space<smem>>
    %c0_i32_1091 = arith.constant 0 : i32
    %2156 = arith.addi %0, %c0_i32_1091 : i32
    %c0_1092 = arith.constant 0 : index
    %c1_1093 = arith.constant 1 : index
    %2157 = arith.index_cast %2156 : i32 to index
    %c2_1094 = arith.constant 2 : index
    %2158 = vector.load %arg4[%c0_1092, %c1_1093, %2157, %c2_1094] : memref<1x4x10x10xf32, #tpu.memory_space<vmem>>, vector<1x1x8x8xf32>
    %2159 = vector.shape_cast %2158 : vector<1x1x8x8xf32> to vector<8x8xf32>
    %2160 = vector.broadcast %2155 : f32 to vector<8x8xf32>
    %2161 = arith.mulf %2160, %2159 : vector<8x8xf32>
    %2162 = arith.addf %2154, %2161 : vector<8x8xf32>
    %c111 = arith.constant 111 : index
    %2163 = memref.load %arg2[%c111] : memref<288xf32, #tpu.memory_space<smem>>
    %c1_i32_1095 = arith.constant 1 : i32
    %2164 = arith.addi %0, %c1_i32_1095 : i32
    %c0_1096 = arith.constant 0 : index
    %c1_1097 = arith.constant 1 : index
    %2165 = arith.index_cast %2164 : i32 to index
    %c0_1098 = arith.constant 0 : index
    %2166 = vector.load %arg4[%c0_1096, %c1_1097, %2165, %c0_1098] : memref<1x4x10x10xf32, #tpu.memory_space<vmem>>, vector<1x1x8x8xf32>
    %2167 = vector.shape_cast %2166 : vector<1x1x8x8xf32> to vector<8x8xf32>
    %2168 = vector.broadcast %2163 : f32 to vector<8x8xf32>
    %2169 = arith.mulf %2168, %2167 : vector<8x8xf32>
    %2170 = arith.addf %2162, %2169 : vector<8x8xf32>
    %c143 = arith.constant 143 : index
    %2171 = memref.load %arg2[%c143] : memref<288xf32, #tpu.memory_space<smem>>
    %c1_i32_1099 = arith.constant 1 : i32
    %2172 = arith.addi %0, %c1_i32_1099 : i32
    %c0_1100 = arith.constant 0 : index
    %c1_1101 = arith.constant 1 : index
    %2173 = arith.index_cast %2172 : i32 to index
    %c1_1102 = arith.constant 1 : index
    %2174 = vector.load %arg4[%c0_1100, %c1_1101, %2173, %c1_1102] : memref<1x4x10x10xf32, #tpu.memory_space<vmem>>, vector<1x1x8x8xf32>
    %2175 = vector.shape_cast %2174 : vector<1x1x8x8xf32> to vector<8x8xf32>
    %2176 = vector.broadcast %2171 : f32 to vector<8x8xf32>
    %2177 = arith.mulf %2176, %2175 : vector<8x8xf32>
    %2178 = arith.addf %2170, %2177 : vector<8x8xf32>
    %c175 = arith.constant 175 : index
    %2179 = memref.load %arg2[%c175] : memref<288xf32, #tpu.memory_space<smem>>
    %c1_i32_1103 = arith.constant 1 : i32
    %2180 = arith.addi %0, %c1_i32_1103 : i32
    %c0_1104 = arith.constant 0 : index
    %c1_1105 = arith.constant 1 : index
    %2181 = arith.index_cast %2180 : i32 to index
    %c2_1106 = arith.constant 2 : index
    %2182 = vector.load %arg4[%c0_1104, %c1_1105, %2181, %c2_1106] : memref<1x4x10x10xf32, #tpu.memory_space<vmem>>, vector<1x1x8x8xf32>
    %2183 = vector.shape_cast %2182 : vector<1x1x8x8xf32> to vector<8x8xf32>
    %2184 = vector.broadcast %2179 : f32 to vector<8x8xf32>
    %2185 = arith.mulf %2184, %2183 : vector<8x8xf32>
    %2186 = arith.addf %2178, %2185 : vector<8x8xf32>
    %c207 = arith.constant 207 : index
    %2187 = memref.load %arg2[%c207] : memref<288xf32, #tpu.memory_space<smem>>
    %c2_i32_1107 = arith.constant 2 : i32
    %2188 = arith.addi %0, %c2_i32_1107 : i32
    %c0_1108 = arith.constant 0 : index
    %c1_1109 = arith.constant 1 : index
    %2189 = arith.index_cast %2188 : i32 to index
    %c0_1110 = arith.constant 0 : index
    %2190 = vector.load %arg4[%c0_1108, %c1_1109, %2189, %c0_1110] : memref<1x4x10x10xf32, #tpu.memory_space<vmem>>, vector<1x1x8x8xf32>
    %2191 = vector.shape_cast %2190 : vector<1x1x8x8xf32> to vector<8x8xf32>
    %2192 = vector.broadcast %2187 : f32 to vector<8x8xf32>
    %2193 = arith.mulf %2192, %2191 : vector<8x8xf32>
    %2194 = arith.addf %2186, %2193 : vector<8x8xf32>
    %c239 = arith.constant 239 : index
    %2195 = memref.load %arg2[%c239] : memref<288xf32, #tpu.memory_space<smem>>
    %c2_i32_1111 = arith.constant 2 : i32
    %2196 = arith.addi %0, %c2_i32_1111 : i32
    %c0_1112 = arith.constant 0 : index
    %c1_1113 = arith.constant 1 : index
    %2197 = arith.index_cast %2196 : i32 to index
    %c1_1114 = arith.constant 1 : index
    %2198 = vector.load %arg4[%c0_1112, %c1_1113, %2197, %c1_1114] : memref<1x4x10x10xf32, #tpu.memory_space<vmem>>, vector<1x1x8x8xf32>
    %2199 = vector.shape_cast %2198 : vector<1x1x8x8xf32> to vector<8x8xf32>
    %2200 = vector.broadcast %2195 : f32 to vector<8x8xf32>
    %2201 = arith.mulf %2200, %2199 : vector<8x8xf32>
    %2202 = arith.addf %2194, %2201 : vector<8x8xf32>
    %c271 = arith.constant 271 : index
    %2203 = memref.load %arg2[%c271] : memref<288xf32, #tpu.memory_space<smem>>
    %c2_i32_1115 = arith.constant 2 : i32
    %2204 = arith.addi %0, %c2_i32_1115 : i32
    %c0_1116 = arith.constant 0 : index
    %c1_1117 = arith.constant 1 : index
    %2205 = arith.index_cast %2204 : i32 to index
    %c2_1118 = arith.constant 2 : index
    %2206 = vector.load %arg4[%c0_1116, %c1_1117, %2205, %c2_1118] : memref<1x4x10x10xf32, #tpu.memory_space<vmem>>, vector<1x1x8x8xf32>
    %2207 = vector.shape_cast %2206 : vector<1x1x8x8xf32> to vector<8x8xf32>
    %2208 = vector.broadcast %2203 : f32 to vector<8x8xf32>
    %2209 = arith.mulf %2208, %2207 : vector<8x8xf32>
    %2210 = arith.addf %2202, %2209 : vector<8x8xf32>
    %c23 = arith.constant 23 : index
    %2211 = memref.load %arg2[%c23] : memref<288xf32, #tpu.memory_space<smem>>
    %c0_i32_1119 = arith.constant 0 : i32
    %2212 = arith.addi %0, %c0_i32_1119 : i32
    %c0_1120 = arith.constant 0 : index
    %c2_1121 = arith.constant 2 : index
    %2213 = arith.index_cast %2212 : i32 to index
    %c0_1122 = arith.constant 0 : index
    %2214 = vector.load %arg4[%c0_1120, %c2_1121, %2213, %c0_1122] : memref<1x4x10x10xf32, #tpu.memory_space<vmem>>, vector<1x1x8x8xf32>
    %2215 = vector.shape_cast %2214 : vector<1x1x8x8xf32> to vector<8x8xf32>
    %2216 = vector.broadcast %2211 : f32 to vector<8x8xf32>
    %2217 = arith.mulf %2216, %2215 : vector<8x8xf32>
    %2218 = arith.addf %2210, %2217 : vector<8x8xf32>
    %c55 = arith.constant 55 : index
    %2219 = memref.load %arg2[%c55] : memref<288xf32, #tpu.memory_space<smem>>
    %c0_i32_1123 = arith.constant 0 : i32
    %2220 = arith.addi %0, %c0_i32_1123 : i32
    %c0_1124 = arith.constant 0 : index
    %c2_1125 = arith.constant 2 : index
    %2221 = arith.index_cast %2220 : i32 to index
    %c1_1126 = arith.constant 1 : index
    %2222 = vector.load %arg4[%c0_1124, %c2_1125, %2221, %c1_1126] : memref<1x4x10x10xf32, #tpu.memory_space<vmem>>, vector<1x1x8x8xf32>
    %2223 = vector.shape_cast %2222 : vector<1x1x8x8xf32> to vector<8x8xf32>
    %2224 = vector.broadcast %2219 : f32 to vector<8x8xf32>
    %2225 = arith.mulf %2224, %2223 : vector<8x8xf32>
    %2226 = arith.addf %2218, %2225 : vector<8x8xf32>
    %c87 = arith.constant 87 : index
    %2227 = memref.load %arg2[%c87] : memref<288xf32, #tpu.memory_space<smem>>
    %c0_i32_1127 = arith.constant 0 : i32
    %2228 = arith.addi %0, %c0_i32_1127 : i32
    %c0_1128 = arith.constant 0 : index
    %c2_1129 = arith.constant 2 : index
    %2229 = arith.index_cast %2228 : i32 to index
    %c2_1130 = arith.constant 2 : index
    %2230 = vector.load %arg4[%c0_1128, %c2_1129, %2229, %c2_1130] : memref<1x4x10x10xf32, #tpu.memory_space<vmem>>, vector<1x1x8x8xf32>
    %2231 = vector.shape_cast %2230 : vector<1x1x8x8xf32> to vector<8x8xf32>
    %2232 = vector.broadcast %2227 : f32 to vector<8x8xf32>
    %2233 = arith.mulf %2232, %2231 : vector<8x8xf32>
    %2234 = arith.addf %2226, %2233 : vector<8x8xf32>
    %c119 = arith.constant 119 : index
    %2235 = memref.load %arg2[%c119] : memref<288xf32, #tpu.memory_space<smem>>
    %c1_i32_1131 = arith.constant 1 : i32
    %2236 = arith.addi %0, %c1_i32_1131 : i32
    %c0_1132 = arith.constant 0 : index
    %c2_1133 = arith.constant 2 : index
    %2237 = arith.index_cast %2236 : i32 to index
    %c0_1134 = arith.constant 0 : index
    %2238 = vector.load %arg4[%c0_1132, %c2_1133, %2237, %c0_1134] : memref<1x4x10x10xf32, #tpu.memory_space<vmem>>, vector<1x1x8x8xf32>
    %2239 = vector.shape_cast %2238 : vector<1x1x8x8xf32> to vector<8x8xf32>
    %2240 = vector.broadcast %2235 : f32 to vector<8x8xf32>
    %2241 = arith.mulf %2240, %2239 : vector<8x8xf32>
    %2242 = arith.addf %2234, %2241 : vector<8x8xf32>
    %c151 = arith.constant 151 : index
    %2243 = memref.load %arg2[%c151] : memref<288xf32, #tpu.memory_space<smem>>
    %c1_i32_1135 = arith.constant 1 : i32
    %2244 = arith.addi %0, %c1_i32_1135 : i32
    %c0_1136 = arith.constant 0 : index
    %c2_1137 = arith.constant 2 : index
    %2245 = arith.index_cast %2244 : i32 to index
    %c1_1138 = arith.constant 1 : index
    %2246 = vector.load %arg4[%c0_1136, %c2_1137, %2245, %c1_1138] : memref<1x4x10x10xf32, #tpu.memory_space<vmem>>, vector<1x1x8x8xf32>
    %2247 = vector.shape_cast %2246 : vector<1x1x8x8xf32> to vector<8x8xf32>
    %2248 = vector.broadcast %2243 : f32 to vector<8x8xf32>
    %2249 = arith.mulf %2248, %2247 : vector<8x8xf32>
    %2250 = arith.addf %2242, %2249 : vector<8x8xf32>
    %c183 = arith.constant 183 : index
    %2251 = memref.load %arg2[%c183] : memref<288xf32, #tpu.memory_space<smem>>
    %c1_i32_1139 = arith.constant 1 : i32
    %2252 = arith.addi %0, %c1_i32_1139 : i32
    %c0_1140 = arith.constant 0 : index
    %c2_1141 = arith.constant 2 : index
    %2253 = arith.index_cast %2252 : i32 to index
    %c2_1142 = arith.constant 2 : index
    %2254 = vector.load %arg4[%c0_1140, %c2_1141, %2253, %c2_1142] : memref<1x4x10x10xf32, #tpu.memory_space<vmem>>, vector<1x1x8x8xf32>
    %2255 = vector.shape_cast %2254 : vector<1x1x8x8xf32> to vector<8x8xf32>
    %2256 = vector.broadcast %2251 : f32 to vector<8x8xf32>
    %2257 = arith.mulf %2256, %2255 : vector<8x8xf32>
    %2258 = arith.addf %2250, %2257 : vector<8x8xf32>
    %c215 = arith.constant 215 : index
    %2259 = memref.load %arg2[%c215] : memref<288xf32, #tpu.memory_space<smem>>
    %c2_i32_1143 = arith.constant 2 : i32
    %2260 = arith.addi %0, %c2_i32_1143 : i32
    %c0_1144 = arith.constant 0 : index
    %c2_1145 = arith.constant 2 : index
    %2261 = arith.index_cast %2260 : i32 to index
    %c0_1146 = arith.constant 0 : index
    %2262 = vector.load %arg4[%c0_1144, %c2_1145, %2261, %c0_1146] : memref<1x4x10x10xf32, #tpu.memory_space<vmem>>, vector<1x1x8x8xf32>
    %2263 = vector.shape_cast %2262 : vector<1x1x8x8xf32> to vector<8x8xf32>
    %2264 = vector.broadcast %2259 : f32 to vector<8x8xf32>
    %2265 = arith.mulf %2264, %2263 : vector<8x8xf32>
    %2266 = arith.addf %2258, %2265 : vector<8x8xf32>
    %c247 = arith.constant 247 : index
    %2267 = memref.load %arg2[%c247] : memref<288xf32, #tpu.memory_space<smem>>
    %c2_i32_1147 = arith.constant 2 : i32
    %2268 = arith.addi %0, %c2_i32_1147 : i32
    %c0_1148 = arith.constant 0 : index
    %c2_1149 = arith.constant 2 : index
    %2269 = arith.index_cast %2268 : i32 to index
    %c1_1150 = arith.constant 1 : index
    %2270 = vector.load %arg4[%c0_1148, %c2_1149, %2269, %c1_1150] : memref<1x4x10x10xf32, #tpu.memory_space<vmem>>, vector<1x1x8x8xf32>
    %2271 = vector.shape_cast %2270 : vector<1x1x8x8xf32> to vector<8x8xf32>
    %2272 = vector.broadcast %2267 : f32 to vector<8x8xf32>
    %2273 = arith.mulf %2272, %2271 : vector<8x8xf32>
    %2274 = arith.addf %2266, %2273 : vector<8x8xf32>
    %c279 = arith.constant 279 : index
    %2275 = memref.load %arg2[%c279] : memref<288xf32, #tpu.memory_space<smem>>
    %c2_i32_1151 = arith.constant 2 : i32
    %2276 = arith.addi %0, %c2_i32_1151 : i32
    %c0_1152 = arith.constant 0 : index
    %c2_1153 = arith.constant 2 : index
    %2277 = arith.index_cast %2276 : i32 to index
    %c2_1154 = arith.constant 2 : index
    %2278 = vector.load %arg4[%c0_1152, %c2_1153, %2277, %c2_1154] : memref<1x4x10x10xf32, #tpu.memory_space<vmem>>, vector<1x1x8x8xf32>
    %2279 = vector.shape_cast %2278 : vector<1x1x8x8xf32> to vector<8x8xf32>
    %2280 = vector.broadcast %2275 : f32 to vector<8x8xf32>
    %2281 = arith.mulf %2280, %2279 : vector<8x8xf32>
    %2282 = arith.addf %2274, %2281 : vector<8x8xf32>
    %c31 = arith.constant 31 : index
    %2283 = memref.load %arg2[%c31] : memref<288xf32, #tpu.memory_space<smem>>
    %c0_i32_1155 = arith.constant 0 : i32
    %2284 = arith.addi %0, %c0_i32_1155 : i32
    %c0_1156 = arith.constant 0 : index
    %c3_1157 = arith.constant 3 : index
    %2285 = arith.index_cast %2284 : i32 to index
    %c0_1158 = arith.constant 0 : index
    %2286 = vector.load %arg4[%c0_1156, %c3_1157, %2285, %c0_1158] : memref<1x4x10x10xf32, #tpu.memory_space<vmem>>, vector<1x1x8x8xf32>
    %2287 = vector.shape_cast %2286 : vector<1x1x8x8xf32> to vector<8x8xf32>
    %2288 = vector.broadcast %2283 : f32 to vector<8x8xf32>
    %2289 = arith.mulf %2288, %2287 : vector<8x8xf32>
    %2290 = arith.addf %2282, %2289 : vector<8x8xf32>
    %c63 = arith.constant 63 : index
    %2291 = memref.load %arg2[%c63] : memref<288xf32, #tpu.memory_space<smem>>
    %c0_i32_1159 = arith.constant 0 : i32
    %2292 = arith.addi %0, %c0_i32_1159 : i32
    %c0_1160 = arith.constant 0 : index
    %c3_1161 = arith.constant 3 : index
    %2293 = arith.index_cast %2292 : i32 to index
    %c1_1162 = arith.constant 1 : index
    %2294 = vector.load %arg4[%c0_1160, %c3_1161, %2293, %c1_1162] : memref<1x4x10x10xf32, #tpu.memory_space<vmem>>, vector<1x1x8x8xf32>
    %2295 = vector.shape_cast %2294 : vector<1x1x8x8xf32> to vector<8x8xf32>
    %2296 = vector.broadcast %2291 : f32 to vector<8x8xf32>
    %2297 = arith.mulf %2296, %2295 : vector<8x8xf32>
    %2298 = arith.addf %2290, %2297 : vector<8x8xf32>
    %c95 = arith.constant 95 : index
    %2299 = memref.load %arg2[%c95] : memref<288xf32, #tpu.memory_space<smem>>
    %c0_i32_1163 = arith.constant 0 : i32
    %2300 = arith.addi %0, %c0_i32_1163 : i32
    %c0_1164 = arith.constant 0 : index
    %c3_1165 = arith.constant 3 : index
    %2301 = arith.index_cast %2300 : i32 to index
    %c2_1166 = arith.constant 2 : index
    %2302 = vector.load %arg4[%c0_1164, %c3_1165, %2301, %c2_1166] : memref<1x4x10x10xf32, #tpu.memory_space<vmem>>, vector<1x1x8x8xf32>
    %2303 = vector.shape_cast %2302 : vector<1x1x8x8xf32> to vector<8x8xf32>
    %2304 = vector.broadcast %2299 : f32 to vector<8x8xf32>
    %2305 = arith.mulf %2304, %2303 : vector<8x8xf32>
    %2306 = arith.addf %2298, %2305 : vector<8x8xf32>
    %c127 = arith.constant 127 : index
    %2307 = memref.load %arg2[%c127] : memref<288xf32, #tpu.memory_space<smem>>
    %c1_i32_1167 = arith.constant 1 : i32
    %2308 = arith.addi %0, %c1_i32_1167 : i32
    %c0_1168 = arith.constant 0 : index
    %c3_1169 = arith.constant 3 : index
    %2309 = arith.index_cast %2308 : i32 to index
    %c0_1170 = arith.constant 0 : index
    %2310 = vector.load %arg4[%c0_1168, %c3_1169, %2309, %c0_1170] : memref<1x4x10x10xf32, #tpu.memory_space<vmem>>, vector<1x1x8x8xf32>
    %2311 = vector.shape_cast %2310 : vector<1x1x8x8xf32> to vector<8x8xf32>
    %2312 = vector.broadcast %2307 : f32 to vector<8x8xf32>
    %2313 = arith.mulf %2312, %2311 : vector<8x8xf32>
    %2314 = arith.addf %2306, %2313 : vector<8x8xf32>
    %c159 = arith.constant 159 : index
    %2315 = memref.load %arg2[%c159] : memref<288xf32, #tpu.memory_space<smem>>
    %c1_i32_1171 = arith.constant 1 : i32
    %2316 = arith.addi %0, %c1_i32_1171 : i32
    %c0_1172 = arith.constant 0 : index
    %c3_1173 = arith.constant 3 : index
    %2317 = arith.index_cast %2316 : i32 to index
    %c1_1174 = arith.constant 1 : index
    %2318 = vector.load %arg4[%c0_1172, %c3_1173, %2317, %c1_1174] : memref<1x4x10x10xf32, #tpu.memory_space<vmem>>, vector<1x1x8x8xf32>
    %2319 = vector.shape_cast %2318 : vector<1x1x8x8xf32> to vector<8x8xf32>
    %2320 = vector.broadcast %2315 : f32 to vector<8x8xf32>
    %2321 = arith.mulf %2320, %2319 : vector<8x8xf32>
    %2322 = arith.addf %2314, %2321 : vector<8x8xf32>
    %c191 = arith.constant 191 : index
    %2323 = memref.load %arg2[%c191] : memref<288xf32, #tpu.memory_space<smem>>
    %c1_i32_1175 = arith.constant 1 : i32
    %2324 = arith.addi %0, %c1_i32_1175 : i32
    %c0_1176 = arith.constant 0 : index
    %c3_1177 = arith.constant 3 : index
    %2325 = arith.index_cast %2324 : i32 to index
    %c2_1178 = arith.constant 2 : index
    %2326 = vector.load %arg4[%c0_1176, %c3_1177, %2325, %c2_1178] : memref<1x4x10x10xf32, #tpu.memory_space<vmem>>, vector<1x1x8x8xf32>
    %2327 = vector.shape_cast %2326 : vector<1x1x8x8xf32> to vector<8x8xf32>
    %2328 = vector.broadcast %2323 : f32 to vector<8x8xf32>
    %2329 = arith.mulf %2328, %2327 : vector<8x8xf32>
    %2330 = arith.addf %2322, %2329 : vector<8x8xf32>
    %c223 = arith.constant 223 : index
    %2331 = memref.load %arg2[%c223] : memref<288xf32, #tpu.memory_space<smem>>
    %c2_i32_1179 = arith.constant 2 : i32
    %2332 = arith.addi %0, %c2_i32_1179 : i32
    %c0_1180 = arith.constant 0 : index
    %c3_1181 = arith.constant 3 : index
    %2333 = arith.index_cast %2332 : i32 to index
    %c0_1182 = arith.constant 0 : index
    %2334 = vector.load %arg4[%c0_1180, %c3_1181, %2333, %c0_1182] : memref<1x4x10x10xf32, #tpu.memory_space<vmem>>, vector<1x1x8x8xf32>
    %2335 = vector.shape_cast %2334 : vector<1x1x8x8xf32> to vector<8x8xf32>
    %2336 = vector.broadcast %2331 : f32 to vector<8x8xf32>
    %2337 = arith.mulf %2336, %2335 : vector<8x8xf32>
    %2338 = arith.addf %2330, %2337 : vector<8x8xf32>
    %c255 = arith.constant 255 : index
    %2339 = memref.load %arg2[%c255] : memref<288xf32, #tpu.memory_space<smem>>
    %c2_i32_1183 = arith.constant 2 : i32
    %2340 = arith.addi %0, %c2_i32_1183 : i32
    %c0_1184 = arith.constant 0 : index
    %c3_1185 = arith.constant 3 : index
    %2341 = arith.index_cast %2340 : i32 to index
    %c1_1186 = arith.constant 1 : index
    %2342 = vector.load %arg4[%c0_1184, %c3_1185, %2341, %c1_1186] : memref<1x4x10x10xf32, #tpu.memory_space<vmem>>, vector<1x1x8x8xf32>
    %2343 = vector.shape_cast %2342 : vector<1x1x8x8xf32> to vector<8x8xf32>
    %2344 = vector.broadcast %2339 : f32 to vector<8x8xf32>
    %2345 = arith.mulf %2344, %2343 : vector<8x8xf32>
    %2346 = arith.addf %2338, %2345 : vector<8x8xf32>
    %c287 = arith.constant 287 : index
    %2347 = memref.load %arg2[%c287] : memref<288xf32, #tpu.memory_space<smem>>
    %c2_i32_1187 = arith.constant 2 : i32
    %2348 = arith.addi %0, %c2_i32_1187 : i32
    %c0_1188 = arith.constant 0 : index
    %c3_1189 = arith.constant 3 : index
    %2349 = arith.index_cast %2348 : i32 to index
    %c2_1190 = arith.constant 2 : index
    %2350 = vector.load %arg4[%c0_1188, %c3_1189, %2349, %c2_1190] : memref<1x4x10x10xf32, #tpu.memory_space<vmem>>, vector<1x1x8x8xf32>
    %2351 = vector.shape_cast %2350 : vector<1x1x8x8xf32> to vector<8x8xf32>
    %2352 = vector.broadcast %2347 : f32 to vector<8x8xf32>
    %2353 = arith.mulf %2352, %2351 : vector<8x8xf32>
    %2354 = arith.addf %2346, %2353 : vector<8x8xf32>
    %c7_1191 = arith.constant 7 : index
    %2355 = memref.load %arg3[%c7_1191] : memref<8xf32, #tpu.memory_space<smem>>
    %2356 = vector.broadcast %2355 : f32 to vector<8x8xf32>
    %2357 = arith.addf %2354, %2356 : vector<8x8xf32>
    %c0_1192 = arith.constant 0 : index
    %c7_1193 = arith.constant 7 : index
    %c0_1194 = arith.constant 0 : index
    %c0_1195 = arith.constant 0 : index
    %2358 = vector.load %arg5[%c0_1192, %c7_1193, %c0_1194, %c0_1195] : memref<1x8x8x8xf32, #tpu.memory_space<vmem>>, vector<1x1x8x8xf32>
    %2359 = vector.shape_cast %2358 : vector<1x1x8x8xf32> to vector<8x8xf32>
    %2360 = vector.shape_cast %2357 : vector<8x8xf32> to vector<1x1x8x8xf32>
    tpu.vector_store %arg5[%c0_1192, %c7_1193, %c0_1194, %c0_1195], %2360 {strides = array<i32>} : memref<1x8x8x8xf32, #tpu.memory_space<vmem>>, vector<1x1x8x8xf32>,
    return
  }
  func.func @transform_0(%arg0: i32, %arg1: i32) -> i32 {
    %c0_i32 = arith.constant 0 : i32
    %c0_i32_0 = arith.constant 0 : i32
    return %c0_i32 : i32
  }
  func.func @transform_1(%arg0: i32, %arg1: i32) -> i32 {
    %c0_i32 = arith.constant 0 : i32
    %c0_i32_0 = arith.constant 0 : i32
    return %c0_i32 : i32
  }
  func.func @transform_2(%arg0: i32, %arg1: i32) -> (i32, i32, i32, i32) {
    %c0_i32 = arith.constant 0 : i32
    %c0_i32_0 = arith.constant 0 : i32
    %c0_i32_1 = arith.constant 0 : i32
    %c0_i32_2 = arith.constant 0 : i32
    return %arg0, %c0_i32, %c0_i32_0, %c0_i32_1 : i32, i32, i32, i32
  }
  func.func @transform_3(%arg0: i32, %arg1: i32) -> (i32, i32, i32, i32) {
    %c0_i32 = arith.constant 0 : i32
    %c0_i32_0 = arith.constant 0 : i32
    %c0_i32_1 = arith.constant 0 : i32
    return %arg0, %c0_i32, %arg1, %c0_i32_0 : i32, i32, i32, i32
  }
}

</mosaic_0001>

<llo_original>
// kernel: tpu_custom_call.1
$region0: #{tpu_custom_call.1}
  #allocation0 [shape = 'u32[]', space=smem, size = 0x4, offset = 0x4, fixed_abs, tag = 'smem constant byte address 0x4 - core index']
  #allocation1 [shape = 'u32[144,128]{1,0:T(1,128)}', space=vmem, size = 0x12000, scoped, tag = 'internal scratch']
  %s0 = inlined_call_operand.vmem [shape: f32[288], index: 0, kind: input, shape index: {}]
  %s1 = inlined_call_operand.vmem [shape: f32[8], index: 1, kind: input, shape index: {}]
  %s2 = inlined_call_operand.vmem [shape: f32[2,4,10,10], index: 2, kind: input, shape index: {}]
  %s3 = inlined_call_operand.hbm [shape: f32[2,8,8,8], index: 3, kind: output, shape index: {}]
  %s4 = sld [smem:[#allocation0]]
  $region53: #{tpu_custom_call.1} parent=0
    _
  %s6 = ssub.s32 1, %s4
  %s7 = scalar_select 0, %s6, %s4
  $region1: #{tpu_custom_call.1} parent=0
    #allocation2 [shape = 'u8[1536]{0}', space=smem, size = 0x600, scoped, tag = 'input window, operand 0, single buffered']
    #allocation3 [shape = 's32[2]{0}', space=sflag, size = 0x8, scoped, tag = 'scoped memory for tpu_custom_call.1']
    #allocation4 [shape = 's32[2]{0}', space=sflag, size = 0x8, scoped, tag = 'scoped memory for tpu_custom_call.1']
    #allocation5 [shape = 'u8[512]{0}', space=smem, size = 0x200, scoped, tag = 'input window, operand 1, single buffered']
    #allocation6 [shape = 's32[1]{0}', space=sflag, size = 0x4, scoped, tag = 'scoped memory for tpu_custom_call.1']
    #allocation7 [shape = 'u8[65536]{0}', space=vmem, size = 0x10000, scoped, tag = 'output window, operand 0']
    %8 = vsyncpa [#allocation4], 0
    %9 = vsyncpa [#allocation6], 0
    %10 = vsyncpa [#allocation3], 0
    %s11 = scalar_lea.sflag [#allocation3], 1
    %12 = vsyncpa %s11, 0
    loop: start=0, step=1, limit=4
    $region2: #{tpu_custom_call.1} parent=1 // loop_pre_header
      _
    $region3: #{tpu_custom_call.1} parent=1 // loop_header
      %s14 = sphi 0, %s18
      %p15 = scmp.ge.s32.totalorder %s14, 4
      %s21 = sphi 0, %s33
      %s22 = sphi 0, %s29
      %s23 = sphi 0, %s21
      %s24 = sphi 0, %s22
      %s25 = sphi 0, %s23
      %s26 = sphi 0, %s24
      %s34 = sphi 0, %s34
      %s36 = sphi 0, %s34
      %s37 = sphi 0, %s36
      %s51 = sphi 0, %s37
      %s55 = sphi 0, %s55
      %s57 = sphi 0, %s55
      %s58 = sphi 0, %s57
      %s72 = sphi 0, %s58
      %s78 = sphi 0, %s80
      %s81 = sphi 0, %s78
      %s82 = sphi 0, %s81
      %s98 = sphi 0, %s82
      %s106 = sphi 0, %s108
      %s109 = sphi 0, %s106
      %s110 = sphi 0, %s109
      %s126 = sphi 0, %s110
    $region4: #{tpu_custom_call.1} parent=1 // loop_header_branch
      %17 = sbr.rel (%p15) target = $region8
    $region5: #{tpu_custom_call.1} parent=1 // loop_body
      %s19 = ssub.s32 %s14, 1
      %s20 = ssub.s32 %s14, 2
      %s27 = sadd.s32 1, %s22
      %p28 = scmp.ge.s32.totalorder %s27, 1
      %s29 = scalar_select %p28, 0, %s27
      %s30 = sadd.s32 1, %s21
      %s31 = scalar_select %p28, %s30, %s21
      %p32 = scmp.ge.s32.totalorder %s31, 2
      %s33 = scalar_select %p32, 0, %s31
      %s35 = sadd.s32 %s34, 1
      %p38 = scmp.eq.s32.totalorder %s14, 1
      %p39 = scmp.ne.s32.totalorder %s34, %s36
      %p40 = scmp.eq.s32.totalorder %s14, 0
      %p41 = por %p39, %p40
      %p42 = scmp.ne.s32.totalorder %s34, %s36
      %p43 = scmp.eq.s32.totalorder %s19, 1
      %p44 = por %p42, %p43
      %p45 = scmp.ne.s32.totalorder %s36, %s37
      %p46 = scmp.eq.s32.totalorder %s19, 0
      %p47 = por %p45, %p46
      %p48 = scmp.ne.s32.totalorder %s36, %s37
      %p49 = scmp.eq.s32.totalorder %s20, 1
      %p50 = por %p48, %p49
      %p52 = scmp.ne.s32.totalorder %s37, %s51
      %p53 = scmp.eq.s32.totalorder %s20, 0
      %p54 = por %p52, %p53
      %s56 = sadd.s32 %s55, 1
      %p59 = scmp.eq.s32.totalorder %s14, 1
      %p60 = scmp.ne.s32.totalorder %s55, %s57
      %p61 = scmp.eq.s32.totalorder %s14, 0
      %p62 = por %p60, %p61
      %p63 = scmp.ne.s32.totalorder %s55, %s57
      %p64 = scmp.eq.s32.totalorder %s19, 1
      %p65 = por %p63, %p64
      %p66 = scmp.ne.s32.totalorder %s57, %s58
      %p67 = scmp.eq.s32.totalorder %s19, 0
      %p68 = por %p66, %p67
      %p69 = scmp.ne.s32.totalorder %s57, %s58
      %p70 = scmp.eq.s32.totalorder %s20, 1
      %p71 = por %p69, %p70
      %p73 = scmp.ne.s32.totalorder %s58, %s72
      %p74 = scmp.eq.s32.totalorder %s20, 0
      %p75 = por %p73, %p74
      %s76 = ssub.s32 %s21, %s33
      %p77 = scmp.eq.s32.totalorder %s76, 0
      %s79 = sadd.s32 %s78, 1
      %s80 = scalar_select %p77, %s78, %s79
      %p83 = pneg %p77
      %p84 = scmp.eq.s32.totalorder %s14, 1
      %p85 = por %p83, %p84
      %p86 = scmp.ne.s32.totalorder %s78, %s81
      %p87 = scmp.eq.s32.totalorder %s14, 0
      %p88 = por %p86, %p87
      %p89 = scmp.ne.s32.totalorder %s78, %s81
      %p90 = scmp.eq.s32.totalorder %s19, 1
      %p91 = por %p89, %p90
      %p92 = scmp.ne.s32.totalorder %s81, %s82
      %p93 = scmp.eq.s32.totalorder %s19, 0
      %p94 = por %p92, %p93
      %p95 = scmp.ne.s32.totalorder %s81, %s82
      %p96 = scmp.eq.s32.totalorder %s20, 1
      %p97 = por %p95, %p96
      %p99 = scmp.ne.s32.totalorder %s82, %s98
      %p100 = scmp.eq.s32.totalorder %s20, 0
      %p101 = por %p99, %p100
      %s102 = ssub.s32 %s21, %s33
      %s103 = ssub.s32 %s22, %s29
      %s104 = sor.u32 %s102, %s103
      %p105 = scmp.eq.s32.totalorder %s104, 0
      %s107 = sadd.s32 %s106, 1
      %s108 = scalar_select %p105, %s106, %s107
      %p111 = pneg %p105
      %p112 = scmp.eq.s32.totalorder %s14, 1
      %p113 = por %p111, %p112
      %p114 = scmp.ne.s32.totalorder %s106, %s109
      %p115 = scmp.eq.s32.totalorder %s14, 0
      %p116 = por %p114, %p115
      %p117 = scmp.ne.s32.totalorder %s106, %s109
      %p118 = scmp.eq.s32.totalorder %s19, 1
      %p119 = por %p117, %p118
      %p120 = scmp.ne.s32.totalorder %s109, %s110
      %p121 = scmp.eq.s32.totalorder %s19, 0
      %p122 = por %p120, %p121
      %p123 = scmp.ne.s32.totalorder %s109, %s110
      %p124 = scmp.eq.s32.totalorder %s20, 1
      %p125 = por %p123, %p124
      %p127 = scmp.ne.s32.totalorder %s110, %s126
      %p128 = scmp.eq.s32.totalorder %s20, 0
      %p129 = por %p127, %p128
      %p130 = scmp.le.s32.totalorder 1, %s14
      %p131 = scmp.lt.s32.totalorder %s14, 3
      %p132 = pnand %p130, %p131
      %p133 = pneg %p132
      // Predicated region
      $region9: #{tpu_custom_call.1} parent=5 // pred_check
        _
      $region10: #{tpu_custom_call.1} parent=5 // pred_check_branch
        %135 = sbr.rel (%p132) target = $region12
      $region11: #{tpu_custom_call.1} parent=5 // pred_region
        %s136 = ssub.s32 %s14, 1
        // Predicated region
        $region13: #{tpu_custom_call.1} parent=11 // pred_check
          %p137 = pneg %p47
        $region14: #{tpu_custom_call.1} parent=11 // pred_check_branch
          %139 = sbr.rel (%p137) target = $region16
        $region15: #{tpu_custom_call.1} parent=11 // pred_region
          %s141 = ssub.s32 48, 48
          %142 = vsyncadd [#allocation4], %s141
          %s144 = sshll.u32 %s0, 4
          %s145 = int_to_ptr.vmem [resolvable:$true] %s144
          %147 = dma.vmem_to_smem %s145, 48, [#allocation2], [#allocation4]
        $region16: #{tpu_custom_call.1} parent=11 // pred_fallthru
          _
        // Predicated region
        $region17: #{tpu_custom_call.1} parent=11 // pred_check
          %p148 = pneg %p68
        $region18: #{tpu_custom_call.1} parent=11 // pred_check_branch
          %150 = sbr.rel (%p148) target = $region20
        $region19: #{tpu_custom_call.1} parent=11 // pred_region
          %s152 = ssub.s32 16, 16
          %153 = vsyncadd [#allocation6], %s152
          %s155 = sshll.u32 %s1, 4
          %s156 = int_to_ptr.vmem [resolvable:$true] %s155
          %158 = dma.vmem_to_smem %s156, 16, [#allocation5], [#allocation6]
        $region20: #{tpu_custom_call.1} parent=11 // pred_fallthru
          _
      $region12: #{tpu_custom_call.1} parent=5 // pred_fallthru
        _
      %p159 = scmp.lt.s32.totalorder %s14, 2
      // Predicated region
      $region21: #{tpu_custom_call.1} parent=5 // pred_check
        %p160 = pneg %p159
      $region22: #{tpu_custom_call.1} parent=5 // pred_check_branch
        %162 = sbr.rel (%p160) target = $region24
      $region23: #{tpu_custom_call.1} parent=5 // pred_region
        // Predicated region
        $region25: #{tpu_custom_call.1} parent=23 // pred_check
          %p163 = pneg %p88
        $region26: #{tpu_custom_call.1} parent=23 // pred_check_branch
          %165 = sbr.rel (%p163) target = $region28
        $region27: #{tpu_custom_call.1} parent=23 // pred_region
          %p166 = scmp.lt.s32.totalorder %s21, 1
          %s167 = scalar_select %p166, %s21, 1
          %s168 = smul.addr %s167, 8
          %s169 = smul.addr %s168, 8
          %s170 = scalar_lea.vmem %s2, %s169
        $region28: #{tpu_custom_call.1} parent=23 // pred_fallthru
          _
      $region24: #{tpu_custom_call.1} parent=5 // pred_fallthru
        _
      %p171 = scmp.le.s32.totalorder 1, %s14
      %p172 = scmp.lt.s32.totalorder %s14, 3
      %p173 = pnand %p171, %p172
      %p174 = pneg %p173
      // Predicated region
      $region29: #{tpu_custom_call.1} parent=5 // pred_check
        _
      $region30: #{tpu_custom_call.1} parent=5 // pred_check_branch
        %176 = sbr.rel (%p173) target = $region32
      $region31: #{tpu_custom_call.1} parent=5 // pred_region
        %s177 = ssub.s32 %s14, 1
        // Predicated region
        $region33: #{tpu_custom_call.1} parent=31 // pred_check
          %p178 = pneg %p47
        $region34: #{tpu_custom_call.1} parent=31 // pred_check_branch
          %180 = sbr.rel (%p178) target = $region36
        $region35: #{tpu_custom_call.1} parent=31 // pred_region
          %181 = dma.done [#allocation4], 48
        $region36: #{tpu_custom_call.1} parent=31 // pred_fallthru
          _
        // Predicated region
        $region37: #{tpu_custom_call.1} parent=31 // pred_check
          %p182 = pneg %p68
        $region38: #{tpu_custom_call.1} parent=31 // pred_check_branch
          %184 = sbr.rel (%p182) target = $region40
        $region39: #{tpu_custom_call.1} parent=31 // pred_region
          %185 = dma.done [#allocation6], 16
        $region40: #{tpu_custom_call.1} parent=31 // pred_fallthru
          _
        %186 = sfence
        %p187 = pneg %p47
        %p188 = pneg %p44
        %p189 = pneg %p68
        %p190 = pneg %p65
        %p191 = scmp.lt.s32.totalorder %s23, 1
        %s192 = scalar_select %p191, %s23, 1
        %s193 = smul.addr %s192, 8
        %s194 = smul.addr %s193, 8
        %s195 = scalar_lea.vmem %s2, %s194
        %p196 = pneg %p94
        %p197 = pneg %p91
        %p198 = pneg %p122
        %p199 = pneg %p119
        %s200 = sand.u32 %s109, 1
        %s201 = scalar_lea.sflag [#allocation3], %s200
        %s202 = sand.u32 %s109, 1
        %s203 = smul.addr %s202, 64
        %s204 = scalar_lea.vmem [#allocation7], %s203
        %p205 = scmp.lt.s32.totalorder %s23, 1
        %s206 = scalar_select %p205, %s23, 1
        %s207 = smul.addr %s206, 8
        %s208 = smul.addr %s207, 8
        %s209 = scalar_lea.vmem %s2, %s208
        %s210 = smul.u32 %s24, 8
        %s211 = sld [smem:[#allocation2]]
        %s212 = scalar_lea.vmem %s209, %s210
        %v213 = vld [vmem:[%s212] sm:$0xff]
        %v214 = vstv %s211
        %v215 = vmul.f32 %v214, %v213
        %v216 = vadd.f32 %v215, 0.0
        %s217 = sld [smem:[#allocation2 + $0x20]]
        %v218 = vstv %s217
        %v219 = vmul.f32 %v218, %v213
        %221 = vrot.lane.b32.xlu0 %v219, 127
        %v222 = vpop.permute.xlu0 %221
        %v224 = vadd.f32 %v216, %v222
        %s225 = sld [smem:[#allocation2 + $0x40]]
        %v226 = vstv %s225
        %v227 = vmul.f32 %v226, %v213
        %229 = vrot.lane.b32.xlu0 %v227, 126
        %v230 = vpop.permute.xlu0 %229
        %v232 = vadd.f32 %v224, %v230
        %s233 = sld [smem:[#allocation2 + $0x60]]
        %s234 = sadd.s32 %s210, 1
        %s235 = scalar_lea.vmem %s209, %s234
        %v236 = vld [vmem:[%s235] sm:$0xff]
        %v237 = vstv %s233
        %v238 = vmul.f32 %v237, %v236
        %v239 = vadd.f32 %v232, %v238
        %s240 = sld [smem:[#allocation2 + $0x80]]
        %v241 = vstv %s240
        %v242 = vmul.f32 %v241, %v236
        %244 = vrot.lane.b32.xlu0 %v242, 127
        %v245 = vpop.permute.xlu0 %244
        %v247 = vadd.f32 %v239, %v245
        %s248 = sld [smem:[#allocation2 + $0xa0]]
        %v249 = vstv %s248
        %v250 = vmul.f32 %v249, %v236
        %252 = vrot.lane.b32.xlu0 %v250, 126
        %v253 = vpop.permute.xlu0 %252
        %v255 = vadd.f32 %v247, %v253
        %s256 = sld [smem:[#allocation2 + $0xc0]]
        %s257 = sadd.s32 %s210, 2
        %s258 = scalar_lea.vmem %s209, %s257
        %v259 = vld [vmem:[%s258] sm:$0xff]
        %v260 = vstv %s256
        %v261 = vmul.f32 %v260, %v259
        %v262 = vadd.f32 %v255, %v261
        %s263 = sld [smem:[#allocation2 + $0xe0]]
        %v264 = vstv %s263
        %v265 = vmul.f32 %v264, %v259
        %267 = vrot.lane.b32.xlu0 %v265, 127
        %v268 = vpop.permute.xlu0 %267
        %v270 = vadd.f32 %v262, %v268
        %s271 = sld [smem:[#allocation2 + $0x100]]
        %v272 = vstv %s271
        %v273 = vmul.f32 %v272, %v259
        %275 = vrot.lane.b32.xlu0 %v273, 126
        %v276 = vpop.permute.xlu0 %275
        %v278 = vadd.f32 %v270, %v276
        %s279 = sld [smem:[#allocation2 + $0x8]]
        %s280 = sadd.s32 %s210, 16
        %s281 = scalar_lea.vmem %s209, %s280
        %v282 = vld [vmem:[%s281] sm:$0xff]
        %v283 = vstv %s279
        %v284 = vmul.f32 %v283, %v282
        %v285 = vadd.f32 %v278, %v284
        %s286 = sld [smem:[#allocation2 + $0x28]]
        %v287 = vstv %s286
        %v288 = vmul.f32 %v287, %v282
        %290 = vrot.lane.b32.xlu0 %v288, 127
        %v291 = vpop.permute.xlu0 %290
        %v293 = vadd.f32 %v285, %v291
        %s294 = sld [smem:[#allocation2 + $0x48]]
        %v295 = vstv %s294
        %v296 = vmul.f32 %v295, %v282
        %298 = vrot.lane.b32.xlu0 %v296, 126
        %v299 = vpop.permute.xlu0 %298
        %v301 = vadd.f32 %v293, %v299
        %s302 = sld [smem:[#allocation2 + $0x68]]
        %s303 = sadd.s32 %s234, 16
        %s304 = scalar_lea.vmem %s209, %s303
        %v305 = vld [vmem:[%s304] sm:$0xff]
        %v306 = vstv %s302
        %v307 = vmul.f32 %v306, %v305
        %v308 = vadd.f32 %v301, %v307
        %s309 = sld [smem:[#allocation2 + $0x88]]
        %v310 = vstv %s309
        %v311 = vmul.f32 %v310, %v305
        %313 = vrot.lane.b32.xlu0 %v311, 127
        %v314 = vpop.permute.xlu0 %313
        %v316 = vadd.f32 %v308, %v314
        %s317 = sld [smem:[#allocation2 + $0xa8]]
        %v318 = vstv %s317
        %v319 = vmul.f32 %v318, %v305
        %321 = vrot.lane.b32.xlu0 %v319, 126
        %v322 = vpop.permute.xlu0 %321
        %v324 = vadd.f32 %v316, %v322
        %s325 = sld [smem:[#allocation2 + $0xc8]]
        %s326 = sadd.s32 %s257, 16
        %s327 = scalar_lea.vmem %s209, %s326
        %v328 = vld [vmem:[%s327] sm:$0xff]
        %v329 = vstv %s325
        %v330 = vmul.f32 %v329, %v328
        %v331 = vadd.f32 %v324, %v330
        %s332 = sld [smem:[#allocation2 + $0xe8]]
        %v333 = vstv %s332
        %v334 = vmul.f32 %v333, %v328
        %336 = vrot.lane.b32.xlu0 %v334, 127
        %v337 = vpop.permute.xlu0 %336
        %v339 = vadd.f32 %v331, %v337
        %s340 = sld [smem:[#allocation2 + $0x108]]
        %v341 = vstv %s340
        %v342 = vmul.f32 %v341, %v328
        %344 = vrot.lane.b32.xlu0 %v342, 126
        %v345 = vpop.permute.xlu0 %344
        %v347 = vadd.f32 %v339, %v345
        %s348 = sld [smem:[#allocation2 + $0x10]]
        %s349 = sadd.s32 %s210, 32
        %s350 = scalar_lea.vmem %s209, %s349
        %v351 = vld [vmem:[%s350] sm:$0xff]
        %v352 = vstv %s348
        %v353 = vmul.f32 %v352, %v351
        %v354 = vadd.f32 %v347, %v353
        %s355 = sld [smem:[#allocation2 + $0x30]]
        %v356 = vstv %s355
        %v357 = vmul.f32 %v356, %v351
        %359 = vrot.lane.b32.xlu0 %v357, 127
        %v360 = vpop.permute.xlu0 %359
        %v362 = vadd.f32 %v354, %v360
        %s363 = sld [smem:[#allocation2 + $0x50]]
        %v364 = vstv %s363
        %v365 = vmul.f32 %v364, %v351
        %367 = vrot.lane.b32.xlu0 %v365, 126
        %v368 = vpop.permute.xlu0 %367
        %v370 = vadd.f32 %v362, %v368
        %s371 = sld [smem:[#allocation2 + $0x70]]
        %s372 = sadd.s32 %s234, 32
        %s373 = scalar_lea.vmem %s209, %s372
        %v374 = vld [vmem:[%s373] sm:$0xff]
        %v375 = vstv %s371
        %v376 = vmul.f32 %v375, %v374
        %v377 = vadd.f32 %v370, %v376
        %s378 = sld [smem:[#allocation2 + $0x90]]
        %v379 = vstv %s378
        %v380 = vmul.f32 %v379, %v374
        %382 = vrot.lane.b32.xlu0 %v380, 127
        %v383 = vpop.permute.xlu0 %382
        %v385 = vadd.f32 %v377, %v383
        %s386 = sld [smem:[#allocation2 + $0xb0]]
        %v387 = vstv %s386
        %v388 = vmul.f32 %v387, %v374
        %390 = vrot.lane.b32.xlu0 %v388, 126
        %v391 = vpop.permute.xlu0 %390
        %v393 = vadd.f32 %v385, %v391
        %s394 = sld [smem:[#allocation2 + $0xd0]]
        %s395 = sadd.s32 %s257, 32
        %s396 = scalar_lea.vmem %s209, %s395
        %v397 = vld [vmem:[%s396] sm:$0xff]
        %v398 = vstv %s394
        %v399 = vmul.f32 %v398, %v397
        %v400 = vadd.f32 %v393, %v399
        %s401 = sld [smem:[#allocation2 + $0xf0]]
        %v402 = vstv %s401
        %v403 = vmul.f32 %v402, %v397
        %405 = vrot.lane.b32.xlu0 %v403, 127
        %v406 = vpop.permute.xlu0 %405
        %v408 = vadd.f32 %v400, %v406
        %s409 = sld [smem:[#allocation2 + $0x110]]
        %v410 = vstv %s409
        %v411 = vmul.f32 %v410, %v397
        %413 = vrot.lane.b32.xlu0 %v411, 126
        %v414 = vpop.permute.xlu0 %413
        %v416 = vadd.f32 %v408, %v414
        %s417 = sld [smem:[#allocation2 + $0x18]]
        %s418 = sadd.s32 %s210, 48
        %s419 = scalar_lea.vmem %s209, %s418
        %v420 = vld [vmem:[%s419] sm:$0xff]
        %v421 = vstv %s417
        %v422 = vmul.f32 %v421, %v420
        %v423 = vadd.f32 %v416, %v422
        %s424 = sld [smem:[#allocation2 + $0x38]]
        %v425 = vstv %s424
        %v426 = vmul.f32 %v425, %v420
        %428 = vrot.lane.b32.xlu0 %v426, 127
        %v429 = vpop.permute.xlu0 %428
        %v431 = vadd.f32 %v423, %v429
        %s432 = sld [smem:[#allocation2 + $0x58]]
        %v433 = vstv %s432
        %v434 = vmul.f32 %v433, %v420
        %436 = vrot.lane.b32.xlu0 %v434, 126
        %v437 = vpop.permute.xlu0 %436
        %v439 = vadd.f32 %v431, %v437
        %s440 = sld [smem:[#allocation2 + $0x78]]
        %s441 = sadd.s32 %s234, 48
        %s442 = scalar_lea.vmem %s209, %s441
        %v443 = vld [vmem:[%s442] sm:$0xff]
        %v444 = vstv %s440
        %v445 = vmul.f32 %v444, %v443
        %v446 = vadd.f32 %v439, %v445
        %s447 = sld [smem:[#allocation2 + $0x98]]
        %v448 = vstv %s447
        %v449 = vmul.f32 %v448, %v443
        %451 = vrot.lane.b32.xlu0 %v449, 127
        %v452 = vpop.permute.xlu0 %451
        %v454 = vadd.f32 %v446, %v452
        %s455 = sld [smem:[#allocation2 + $0xb8]]
        %v456 = vstv %s455
        %v457 = vmul.f32 %v456, %v443
        %459 = vrot.lane.b32.xlu0 %v457, 126
        %v460 = vpop.permute.xlu0 %459
        %v462 = vadd.f32 %v454, %v460
        %s463 = sld [smem:[#allocation2 + $0xd8]]
        %s464 = sadd.s32 %s257, 48
        %s465 = scalar_lea.vmem %s209, %s464
        %v466 = vld [vmem:[%s465] sm:$0xff]
        %v467 = vstv %s463
        %v468 = vmul.f32 %v467, %v466
        %v469 = vadd.f32 %v462, %v468
        %s470 = sld [smem:[#allocation2 + $0xf8]]
        %v471 = vstv %s470
        %v472 = vmul.f32 %v471, %v466
        %474 = vrot.lane.b32.xlu0 %v472, 127
        %v475 = vpop.permute.xlu0 %474
        %v477 = vadd.f32 %v469, %v475
        %s478 = sld [smem:[#allocation2 + $0x118]]
        %v479 = vstv %s478
        %v480 = vmul.f32 %v479, %v466
        %482 = vrot.lane.b32.xlu0 %v480, 126
        %v483 = vpop.permute.xlu0 %482
        %v485 = vadd.f32 %v477, %v483
        %s486 = sld [smem:[#allocation5]]
        %v487 = vstv %s486
        %v488 = vadd.f32 %v485, %v487
        %vm489 = vcmask 64512
        %490 = vst.msk [vmem:[%s204] sm:$0xff] %vm489, %v488
        %s491 = sld [smem:[#allocation2 + $0x1]]
        %v492 = vld [vmem:[%s212] sm:$0xff]
        %v493 = vstv %s491
        %v494 = vmul.f32 %v493, %v492
        %v495 = vadd.f32 %v494, 0.0
        %s496 = sld [smem:[#allocation2 + $0x21]]
        %v497 = vstv %s496
        %v498 = vmul.f32 %v497, %v492
        %500 = vrot.lane.b32.xlu0 %v498, 127
        %v501 = vpop.permute.xlu0 %500
        %v503 = vadd.f32 %v495, %v501
        %s504 = sld [smem:[#allocation2 + $0x41]]
        %v505 = vstv %s504
        %v506 = vmul.f32 %v505, %v492
        %508 = vrot.lane.b32.xlu0 %v506, 126
        %v509 = vpop.permute.xlu0 %508
        %v511 = vadd.f32 %v503, %v509
        %s512 = sld [smem:[#allocation2 + $0x61]]
        %v513 = vld [vmem:[%s235] sm:$0xff]
        %v514 = vstv %s512
        %v515 = vmul.f32 %v514, %v513
        %v516 = vadd.f32 %v511, %v515
        %s517 = sld [smem:[#allocation2 + $0x81]]
        %v518 = vstv %s517
        %v519 = vmul.f32 %v518, %v513
        %521 = vrot.lane.b32.xlu0 %v519, 127
        %v522 = vpop.permute.xlu0 %521
        %v524 = vadd.f32 %v516, %v522
        %s525 = sld [smem:[#allocation2 + $0xa1]]
        %v526 = vstv %s525
        %v527 = vmul.f32 %v526, %v513
        %529 = vrot.lane.b32.xlu0 %v527, 126
        %v530 = vpop.permute.xlu0 %529
        %v532 = vadd.f32 %v524, %v530
        %s533 = sld [smem:[#allocation2 + $0xc1]]
        %v534 = vld [vmem:[%s258] sm:$0xff]
        %v535 = vstv %s533
        %v536 = vmul.f32 %v535, %v534
        %v537 = vadd.f32 %v532, %v536
        %s538 = sld [smem:[#allocation2 + $0xe1]]
        %v539 = vstv %s538
        %v540 = vmul.f32 %v539, %v534
        %542 = vrot.lane.b32.xlu0 %v540, 127
        %v543 = vpop.permute.xlu0 %542
        %v545 = vadd.f32 %v537, %v543
        %s546 = sld [smem:[#allocation2 + $0x101]]
        %v547 = vstv %s546
        %v548 = vmul.f32 %v547, %v534
        %550 = vrot.lane.b32.xlu0 %v548, 126
        %v551 = vpop.permute.xlu0 %550
        %v553 = vadd.f32 %v545, %v551
        %s554 = sld [smem:[#allocation2 + $0x9]]
        %v555 = vld [vmem:[%s281] sm:$0xff]
        %v556 = vstv %s554
        %v557 = vmul.f32 %v556, %v555
        %v558 = vadd.f32 %v553, %v557
        %s559 = sld [smem:[#allocation2 + $0x29]]
        %v560 = vstv %s559
        %v561 = vmul.f32 %v560, %v555
        %563 = vrot.lane.b32.xlu0 %v561, 127
        %v564 = vpop.permute.xlu0 %563
        %v566 = vadd.f32 %v558, %v564
        %s567 = sld [smem:[#allocation2 + $0x49]]
        %v568 = vstv %s567
        %v569 = vmul.f32 %v568, %v555
        %571 = vrot.lane.b32.xlu0 %v569, 126
        %v572 = vpop.permute.xlu0 %571
        %v574 = vadd.f32 %v566, %v572
        %s575 = sld [smem:[#allocation2 + $0x69]]
        %v576 = vld [vmem:[%s304] sm:$0xff]
        %v577 = vstv %s575
        %v578 = vmul.f32 %v577, %v576
        %v579 = vadd.f32 %v574, %v578
        %s580 = sld [smem:[#allocation2 + $0x89]]
        %v581 = vstv %s580
        %v582 = vmul.f32 %v581, %v576
        %584 = vrot.lane.b32.xlu0 %v582, 127
        %v585 = vpop.permute.xlu0 %584
        %v587 = vadd.f32 %v579, %v585
        %s588 = sld [smem:[#allocation2 + $0xa9]]
        %v589 = vstv %s588
        %v590 = vmul.f32 %v589, %v576
        %592 = vrot.lane.b32.xlu0 %v590, 126
        %v593 = vpop.permute.xlu0 %592
        %v595 = vadd.f32 %v587, %v593
        %s596 = sld [smem:[#allocation2 + $0xc9]]
        %v597 = vld [vmem:[%s327] sm:$0xff]
        %v598 = vstv %s596
        %v599 = vmul.f32 %v598, %v597
        %v600 = vadd.f32 %v595, %v599
        %s601 = sld [smem:[#allocation2 + $0xe9]]
        %v602 = vstv %s601
        %v603 = vmul.f32 %v602, %v597
        %605 = vrot.lane.b32.xlu0 %v603, 127
        %v606 = vpop.permute.xlu0 %605
        %v608 = vadd.f32 %v600, %v606
        %s609 = sld [smem:[#allocation2 + $0x109]]
        %v610 = vstv %s609
        %v611 = vmul.f32 %v610, %v597
        %613 = vrot.lane.b32.xlu0 %v611, 126
        %v614 = vpop.permute.xlu0 %613
        %v616 = vadd.f32 %v608, %v614
        %s617 = sld [smem:[#allocation2 + $0x11]]
        %v618 = vld [vmem:[%s350] sm:$0xff]
        %v619 = vstv %s617
        %v620 = vmul.f32 %v619, %v618
        %v621 = vadd.f32 %v616, %v620
        %s622 = sld [smem:[#allocation2 + $0x31]]
        %v623 = vstv %s622
        %v624 = vmul.f32 %v623, %v618
        %626 = vrot.lane.b32.xlu0 %v624, 127
        %v627 = vpop.permute.xlu0 %626
        %v629 = vadd.f32 %v621, %v627
        %s630 = sld [smem:[#allocation2 + $0x51]]
        %v631 = vstv %s630
        %v632 = vmul.f32 %v631, %v618
        %634 = vrot.lane.b32.xlu0 %v632, 126
        %v635 = vpop.permute.xlu0 %634
        %v637 = vadd.f32 %v629, %v635
        %s638 = sld [smem:[#allocation2 + $0x71]]
        %v639 = vld [vmem:[%s373] sm:$0xff]
        %v640 = vstv %s638
        %v641 = vmul.f32 %v640, %v639
        %v642 = vadd.f32 %v637, %v641
        %s643 = sld [smem:[#allocation2 + $0x91]]
        %v644 = vstv %s643
        %v645 = vmul.f32 %v644, %v639
        %647 = vrot.lane.b32.xlu0 %v645, 127
        %v648 = vpop.permute.xlu0 %647
        %v650 = vadd.f32 %v642, %v648
        %s651 = sld [smem:[#allocation2 + $0xb1]]
        %v652 = vstv %s651
        %v653 = vmul.f32 %v652, %v639
        %655 = vrot.lane.b32.xlu0 %v653, 126
        %v656 = vpop.permute.xlu0 %655
        %v658 = vadd.f32 %v650, %v656
        %s659 = sld [smem:[#allocation2 + $0xd1]]
        %v660 = vld [vmem:[%s396] sm:$0xff]
        %v661 = vstv %s659
        %v662 = vmul.f32 %v661, %v660
        %v663 = vadd.f32 %v658, %v662
        %s664 = sld [smem:[#allocation2 + $0xf1]]
        %v665 = vstv %s664
        %v666 = vmul.f32 %v665, %v660
        %668 = vrot.lane.b32.xlu0 %v666, 127
        %v669 = vpop.permute.xlu0 %668
        %v671 = vadd.f32 %v663, %v669
        %s672 = sld [smem:[#allocation2 + $0x111]]
        %v673 = vstv %s672
        %v674 = vmul.f32 %v673, %v660
        %676 = vrot.lane.b32.xlu0 %v674, 126
        %v677 = vpop.permute.xlu0 %676
        %v679 = vadd.f32 %v671, %v677
        %s680 = sld [smem:[#allocation2 + $0x19]]
        %v681 = vld [vmem:[%s419] sm:$0xff]
        %v682 = vstv %s680
        %v683 = vmul.f32 %v682, %v681
        %v684 = vadd.f32 %v679, %v683
        %s685 = sld [smem:[#allocation2 + $0x39]]
        %v686 = vstv %s685
        %v687 = vmul.f32 %v686, %v681
        %689 = vrot.lane.b32.xlu0 %v687, 127
        %v690 = vpop.permute.xlu0 %689
        %v692 = vadd.f32 %v684, %v690
        %s693 = sld [smem:[#allocation2 + $0x59]]
        %v694 = vstv %s693
        %v695 = vmul.f32 %v694, %v681
        %697 = vrot.lane.b32.xlu0 %v695, 126
        %v698 = vpop.permute.xlu0 %697
        %v700 = vadd.f32 %v692, %v698
        %s701 = sld [smem:[#allocation2 + $0x79]]
        %v702 = vld [vmem:[%s442] sm:$0xff]
        %v703 = vstv %s701
        %v704 = vmul.f32 %v703, %v702
        %v705 = vadd.f32 %v700, %v704
        %s706 = sld [smem:[#allocation2 + $0x99]]
        %v707 = vstv %s706
        %v708 = vmul.f32 %v707, %v702
        %710 = vrot.lane.b32.xlu0 %v708, 127
        %v711 = vpop.permute.xlu0 %710
        %v713 = vadd.f32 %v705, %v711
        %s714 = sld [smem:[#allocation2 + $0xb9]]
        %v715 = vstv %s714
        %v716 = vmul.f32 %v715, %v702
        %718 = vrot.lane.b32.xlu0 %v716, 126
        %v719 = vpop.permute.xlu0 %718
        %v721 = vadd.f32 %v713, %v719
        %s722 = sld [smem:[#allocation2 + $0xd9]]
        %v723 = vld [vmem:[%s465] sm:$0xff]
        %v724 = vstv %s722
        %v725 = vmul.f32 %v724, %v723
        %v726 = vadd.f32 %v721, %v725
        %s727 = sld [smem:[#allocation2 + $0xf9]]
        %v728 = vstv %s727
        %v729 = vmul.f32 %v728, %v723
        %731 = vrot.lane.b32.xlu0 %v729, 127
        %v732 = vpop.permute.xlu0 %731
        %v734 = vadd.f32 %v726, %v732
        %s735 = sld [smem:[#allocation2 + $0x119]]
        %v736 = vstv %s735
        %v737 = vmul.f32 %v736, %v723
        %739 = vrot.lane.b32.xlu0 %v737, 126
        %v740 = vpop.permute.xlu0 %739
        %v742 = vadd.f32 %v734, %v740
        %s743 = sld [smem:[#allocation5 + $0x1]]
        %v744 = vstv %s743
        %v745 = vadd.f32 %v742, %v744
        %s746 = scalar_lea.vmem %s204, 8 [#allocation7]
        %747 = vst.msk [vmem:[%s746] sm:$0xff] %vm489, %v745
        %s748 = sld [smem:[#allocation2 + $0x2]]
        %v749 = vld [vmem:[%s212] sm:$0xff]
        %v750 = vstv %s748
        %v751 = vmul.f32 %v750, %v749
        %v752 = vadd.f32 %v751, 0.0
        %s753 = sld [smem:[#allocation2 + $0x22]]
        %v754 = vstv %s753
        %v755 = vmul.f32 %v754, %v749
        %757 = vrot.lane.b32.xlu0 %v755, 127
        %v758 = vpop.permute.xlu0 %757
        %v760 = vadd.f32 %v752, %v758
        %s761 = sld [smem:[#allocation2 + $0x42]]
        %v762 = vstv %s761
        %v763 = vmul.f32 %v762, %v749
        %765 = vrot.lane.b32.xlu0 %v763, 126
        %v766 = vpop.permute.xlu0 %765
        %v768 = vadd.f32 %v760, %v766
        %s769 = sld [smem:[#allocation2 + $0x62]]
        %v770 = vld [vmem:[%s235] sm:$0xff]
        %v771 = vstv %s769
        %v772 = vmul.f32 %v771, %v770
        %v773 = vadd.f32 %v768, %v772
        %s774 = sld [smem:[#allocation2 + $0x82]]
        %v775 = vstv %s774
        %v776 = vmul.f32 %v775, %v770
        %778 = vrot.lane.b32.xlu0 %v776, 127
        %v779 = vpop.permute.xlu0 %778
        %v781 = vadd.f32 %v773, %v779
        %s782 = sld [smem:[#allocation2 + $0xa2]]
        %v783 = vstv %s782
        %v784 = vmul.f32 %v783, %v770
        %786 = vrot.lane.b32.xlu0 %v784, 126
        %v787 = vpop.permute.xlu0 %786
        %v789 = vadd.f32 %v781, %v787
        %s790 = sld [smem:[#allocation2 + $0xc2]]
        %v791 = vld [vmem:[%s258] sm:$0xff]
        %v792 = vstv %s790
        %v793 = vmul.f32 %v792, %v791
        %v794 = vadd.f32 %v789, %v793
        %s795 = sld [smem:[#allocation2 + $0xe2]]
        %v796 = vstv %s795
        %v797 = vmul.f32 %v796, %v791
        %799 = vrot.lane.b32.xlu0 %v797, 127
        %v800 = vpop.permute.xlu0 %799
        %v802 = vadd.f32 %v794, %v800
        %s803 = sld [smem:[#allocation2 + $0x102]]
        %v804 = vstv %s803
        %v805 = vmul.f32 %v804, %v791
        %807 = vrot.lane.b32.xlu0 %v805, 126
        %v808 = vpop.permute.xlu0 %807
        %v810 = vadd.f32 %v802, %v808
        %s811 = sld [smem:[#allocation2 + $0xa]]
        %v812 = vld [vmem:[%s281] sm:$0xff]
        %v813 = vstv %s811
        %v814 = vmul.f32 %v813, %v812
        %v815 = vadd.f32 %v810, %v814
        %s816 = sld [smem:[#allocation2 + $0x2a]]
        %v817 = vstv %s816
        %v818 = vmul.f32 %v817, %v812
        %820 = vrot.lane.b32.xlu0 %v818, 127
        %v821 = vpop.permute.xlu0 %820
        %v823 = vadd.f32 %v815, %v821
        %s824 = sld [smem:[#allocation2 + $0x4a]]
        %v825 = vstv %s824
        %v826 = vmul.f32 %v825, %v812
        %828 = vrot.lane.b32.xlu0 %v826, 126
        %v829 = vpop.permute.xlu0 %828
        %v831 = vadd.f32 %v823, %v829
        %s832 = sld [smem:[#allocation2 + $0x6a]]
        %v833 = vld [vmem:[%s304] sm:$0xff]
        %v834 = vstv %s832
        %v835 = vmul.f32 %v834, %v833
        %v836 = vadd.f32 %v831, %v835
        %s837 = sld [smem:[#allocation2 + $0x8a]]
        %v838 = vstv %s837
        %v839 = vmul.f32 %v838, %v833
        %841 = vrot.lane.b32.xlu0 %v839, 127
        %v842 = vpop.permute.xlu0 %841
        %v844 = vadd.f32 %v836, %v842
        %s845 = sld [smem:[#allocation2 + $0xaa]]
        %v846 = vstv %s845
        %v847 = vmul.f32 %v846, %v833
        %849 = vrot.lane.b32.xlu0 %v847, 126
        %v850 = vpop.permute.xlu0 %849
        %v852 = vadd.f32 %v844, %v850
        %s853 = sld [smem:[#allocation2 + $0xca]]
        %v854 = vld [vmem:[%s327] sm:$0xff]
        %v855 = vstv %s853
        %v856 = vmul.f32 %v855, %v854
        %v857 = vadd.f32 %v852, %v856
        %s858 = sld [smem:[#allocation2 + $0xea]]
        %v859 = vstv %s858
        %v860 = vmul.f32 %v859, %v854
        %862 = vrot.lane.b32.xlu0 %v860, 127
        %v863 = vpop.permute.xlu0 %862
        %v865 = vadd.f32 %v857, %v863
        %s866 = sld [smem:[#allocation2 + $0x10a]]
        %v867 = vstv %s866
        %v868 = vmul.f32 %v867, %v854
        %870 = vrot.lane.b32.xlu0 %v868, 126
        %v871 = vpop.permute.xlu0 %870
        %v873 = vadd.f32 %v865, %v871
        %s874 = sld [smem:[#allocation2 + $0x12]]
        %v875 = vld [vmem:[%s350] sm:$0xff]
        %v876 = vstv %s874
        %v877 = vmul.f32 %v876, %v875
        %v878 = vadd.f32 %v873, %v877
        %s879 = sld [smem:[#allocation2 + $0x32]]
        %v880 = vstv %s879
        %v881 = vmul.f32 %v880, %v875
        %883 = vrot.lane.b32.xlu0 %v881, 127
        %v884 = vpop.permute.xlu0 %883
        %v886 = vadd.f32 %v878, %v884
        %s887 = sld [smem:[#allocation2 + $0x52]]
        %v888 = vstv %s887
        %v889 = vmul.f32 %v888, %v875
        %891 = vrot.lane.b32.xlu0 %v889, 126
        %v892 = vpop.permute.xlu0 %891
        %v894 = vadd.f32 %v886, %v892
        %s895 = sld [smem:[#allocation2 + $0x72]]
        %v896 = vld [vmem:[%s373] sm:$0xff]
        %v897 = vstv %s895
        %v898 = vmul.f32 %v897, %v896
        %v899 = vadd.f32 %v894, %v898
        %s900 = sld [smem:[#allocation2 + $0x92]]
        %v901 = vstv %s900
        %v902 = vmul.f32 %v901, %v896
        %904 = vrot.lane.b32.xlu0 %v902, 127
        %v905 = vpop.permute.xlu0 %904
        %v907 = vadd.f32 %v899, %v905
        %s908 = sld [smem:[#allocation2 + $0xb2]]
        %v909 = vstv %s908
        %v910 = vmul.f32 %v909, %v896
        %912 = vrot.lane.b32.xlu0 %v910, 126
        %v913 = vpop.permute.xlu0 %912
        %v915 = vadd.f32 %v907, %v913
        %s916 = sld [smem:[#allocation2 + $0xd2]]
        %v917 = vld [vmem:[%s396] sm:$0xff]
        %v918 = vstv %s916
        %v919 = vmul.f32 %v918, %v917
        %v920 = vadd.f32 %v915, %v919
        %s921 = sld [smem:[#allocation2 + $0xf2]]
        %v922 = vstv %s921
        %v923 = vmul.f32 %v922, %v917
        %925 = vrot.lane.b32.xlu0 %v923, 127
        %v926 = vpop.permute.xlu0 %925
        %v928 = vadd.f32 %v920, %v926
        %s929 = sld [smem:[#allocation2 + $0x112]]
        %v930 = vstv %s929
        %v931 = vmul.f32 %v930, %v917
        %933 = vrot.lane.b32.xlu0 %v931, 126
        %v934 = vpop.permute.xlu0 %933
        %v936 = vadd.f32 %v928, %v934
        %s937 = sld [smem:[#allocation2 + $0x1a]]
        %v938 = vld [vmem:[%s419] sm:$0xff]
        %v939 = vstv %s937
        %v940 = vmul.f32 %v939, %v938
        %v941 = vadd.f32 %v936, %v940
        %s942 = sld [smem:[#allocation2 + $0x3a]]
        %v943 = vstv %s942
        %v944 = vmul.f32 %v943, %v938
        %946 = vrot.lane.b32.xlu0 %v944, 127
        %v947 = vpop.permute.xlu0 %946
        %v949 = vadd.f32 %v941, %v947
        %s950 = sld [smem:[#allocation2 + $0x5a]]
        %v951 = vstv %s950
        %v952 = vmul.f32 %v951, %v938
        %954 = vrot.lane.b32.xlu0 %v952, 126
        %v955 = vpop.permute.xlu0 %954
        %v957 = vadd.f32 %v949, %v955
        %s958 = sld [smem:[#allocation2 + $0x7a]]
        %v959 = vld [vmem:[%s442] sm:$0xff]
        %v960 = vstv %s958
        %v961 = vmul.f32 %v960, %v959
        %v962 = vadd.f32 %v957, %v961
        %s963 = sld [smem:[#allocation2 + $0x9a]]
        %v964 = vstv %s963
        %v965 = vmul.f32 %v964, %v959
        %967 = vrot.lane.b32.xlu0 %v965, 127
        %v968 = vpop.permute.xlu0 %967
        %v970 = vadd.f32 %v962, %v968
        %s971 = sld [smem:[#allocation2 + $0xba]]
        %v972 = vstv %s971
        %v973 = vmul.f32 %v972, %v959
        %975 = vrot.lane.b32.xlu0 %v973, 126
        %v976 = vpop.permute.xlu0 %975
        %v978 = vadd.f32 %v970, %v976
        %s979 = sld [smem:[#allocation2 + $0xda]]
        %v980 = vld [vmem:[%s465] sm:$0xff]
        %v981 = vstv %s979
        %v982 = vmul.f32 %v981, %v980
        %v983 = vadd.f32 %v978, %v982
        %s984 = sld [smem:[#allocation2 + $0xfa]]
        %v985 = vstv %s984
        %v986 = vmul.f32 %v985, %v980
        %988 = vrot.lane.b32.xlu0 %v986, 127
        %v989 = vpop.permute.xlu0 %988
        %v991 = vadd.f32 %v983, %v989
        %s992 = sld [smem:[#allocation2 + $0x11a]]
        %v993 = vstv %s992
        %v994 = vmul.f32 %v993, %v980
        %996 = vrot.lane.b32.xlu0 %v994, 126
        %v997 = vpop.permute.xlu0 %996
        %v999 = vadd.f32 %v991, %v997
        %s1000 = sld [smem:[#allocation5 + $0x2]]
        %v1001 = vstv %s1000
        %v1002 = vadd.f32 %v999, %v1001
        %s1003 = scalar_lea.vmem %s204, 16 [#allocation7]
        %1004 = vst.msk [vmem:[%s1003] sm:$0xff] %vm489, %v1002
        %s1005 = sld [smem:[#allocation2 + $0x3]]
        %v1006 = vld [vmem:[%s212] sm:$0xff]
        %v1007 = vstv %s1005
        %v1008 = vmul.f32 %v1007, %v1006
        %v1009 = vadd.f32 %v1008, 0.0
        %s1010 = sld [smem:[#allocation2 + $0x23]]
        %v1011 = vstv %s1010
        %v1012 = vmul.f32 %v1011, %v1006
        %1014 = vrot.lane.b32.xlu0 %v1012, 127
        %v1015 = vpop.permute.xlu0 %1014
        %v1017 = vadd.f32 %v1009, %v1015
        %s1018 = sld [smem:[#allocation2 + $0x43]]
        %v1019 = vstv %s1018
        %v1020 = vmul.f32 %v1019, %v1006
        %1022 = vrot.lane.b32.xlu0 %v1020, 126
        %v1023 = vpop.permute.xlu0 %1022
        %v1025 = vadd.f32 %v1017, %v1023
        %s1026 = sld [smem:[#allocation2 + $0x63]]
        %v1027 = vld [vmem:[%s235] sm:$0xff]
        %v1028 = vstv %s1026
        %v1029 = vmul.f32 %v1028, %v1027
        %v1030 = vadd.f32 %v1025, %v1029
        %s1031 = sld [smem:[#allocation2 + $0x83]]
        %v1032 = vstv %s1031
        %v1033 = vmul.f32 %v1032, %v1027
        %1035 = vrot.lane.b32.xlu0 %v1033, 127
        %v1036 = vpop.permute.xlu0 %1035
        %v1038 = vadd.f32 %v1030, %v1036
        %s1039 = sld [smem:[#allocation2 + $0xa3]]
        %v1040 = vstv %s1039
        %v1041 = vmul.f32 %v1040, %v1027
        %1043 = vrot.lane.b32.xlu0 %v1041, 126
        %v1044 = vpop.permute.xlu0 %1043
        %v1046 = vadd.f32 %v1038, %v1044
        %s1047 = sld [smem:[#allocation2 + $0xc3]]
        %v1048 = vld [vmem:[%s258] sm:$0xff]
        %v1049 = vstv %s1047
        %v1050 = vmul.f32 %v1049, %v1048
        %v1051 = vadd.f32 %v1046, %v1050
        %s1052 = sld [smem:[#allocation2 + $0xe3]]
        %v1053 = vstv %s1052
        %v1054 = vmul.f32 %v1053, %v1048
        %1056 = vrot.lane.b32.xlu0 %v1054, 127
        %v1057 = vpop.permute.xlu0 %1056
        %v1059 = vadd.f32 %v1051, %v1057
        %s1060 = sld [smem:[#allocation2 + $0x103]]
        %v1061 = vstv %s1060
        %v1062 = vmul.f32 %v1061, %v1048
        %1064 = vrot.lane.b32.xlu0 %v1062, 126
        %v1065 = vpop.permute.xlu0 %1064
        %v1067 = vadd.f32 %v1059, %v1065
        %s1068 = sld [smem:[#allocation2 + $0xb]]
        %v1069 = vld [vmem:[%s281] sm:$0xff]
        %v1070 = vstv %s1068
        %v1071 = vmul.f32 %v1070, %v1069
        %v1072 = vadd.f32 %v1067, %v1071
        %s1073 = sld [smem:[#allocation2 + $0x2b]]
        %v1074 = vstv %s1073
        %v1075 = vmul.f32 %v1074, %v1069
        %1077 = vrot.lane.b32.xlu0 %v1075, 127
        %v1078 = vpop.permute.xlu0 %1077
        %v1080 = vadd.f32 %v1072, %v1078
        %s1081 = sld [smem:[#allocation2 + $0x4b]]
        %v1082 = vstv %s1081
        %v1083 = vmul.f32 %v1082, %v1069
        %1085 = vrot.lane.b32.xlu0 %v1083, 126
        %v1086 = vpop.permute.xlu0 %1085
        %v1088 = vadd.f32 %v1080, %v1086
        %s1089 = sld [smem:[#allocation2 + $0x6b]]
        %v1090 = vld [vmem:[%s304] sm:$0xff]
        %v1091 = vstv %s1089
        %v1092 = vmul.f32 %v1091, %v1090
        %v1093 = vadd.f32 %v1088, %v1092
        %s1094 = sld [smem:[#allocation2 + $0x8b]]
        %v1095 = vstv %s1094
        %v1096 = vmul.f32 %v1095, %v1090
        %1098 = vrot.lane.b32.xlu0 %v1096, 127
        %v1099 = vpop.permute.xlu0 %1098
        %v1101 = vadd.f32 %v1093, %v1099
        %s1102 = sld [smem:[#allocation2 + $0xab]]
        %v1103 = vstv %s1102
        %v1104 = vmul.f32 %v1103, %v1090
        %1106 = vrot.lane.b32.xlu0 %v1104, 126
        %v1107 = vpop.permute.xlu0 %1106
        %v1109 = vadd.f32 %v1101, %v1107
        %s1110 = sld [smem:[#allocation2 + $0xcb]]
        %v1111 = vld [vmem:[%s327] sm:$0xff]
        %v1112 = vstv %s1110
        %v1113 = vmul.f32 %v1112, %v1111
        %v1114 = vadd.f32 %v1109, %v1113
        %s1115 = sld [smem:[#allocation2 + $0xeb]]
        %v1116 = vstv %s1115
        %v1117 = vmul.f32 %v1116, %v1111
        %1119 = vrot.lane.b32.xlu0 %v1117, 127
        %v1120 = vpop.permute.xlu0 %1119
        %v1122 = vadd.f32 %v1114, %v1120
        %s1123 = sld [smem:[#allocation2 + $0x10b]]
        %v1124 = vstv %s1123
        %v1125 = vmul.f32 %v1124, %v1111
        %1127 = vrot.lane.b32.xlu0 %v1125, 126
        %v1128 = vpop.permute.xlu0 %1127
        %v1130 = vadd.f32 %v1122, %v1128
        %s1131 = sld [smem:[#allocation2 + $0x13]]
        %v1132 = vld [vmem:[%s350] sm:$0xff]
        %v1133 = vstv %s1131
        %v1134 = vmul.f32 %v1133, %v1132
        %v1135 = vadd.f32 %v1130, %v1134
        %s1136 = sld [smem:[#allocation2 + $0x33]]
        %v1137 = vstv %s1136
        %v1138 = vmul.f32 %v1137, %v1132
        %1140 = vrot.lane.b32.xlu0 %v1138, 127
        %v1141 = vpop.permute.xlu0 %1140
        %v1143 = vadd.f32 %v1135, %v1141
        %s1144 = sld [smem:[#allocation2 + $0x53]]
        %v1145 = vstv %s1144
        %v1146 = vmul.f32 %v1145, %v1132
        %1148 = vrot.lane.b32.xlu0 %v1146, 126
        %v1149 = vpop.permute.xlu0 %1148
        %v1151 = vadd.f32 %v1143, %v1149
        %s1152 = sld [smem:[#allocation2 + $0x73]]
        %v1153 = vld [vmem:[%s373] sm:$0xff]
        %v1154 = vstv %s1152
        %v1155 = vmul.f32 %v1154, %v1153
        %v1156 = vadd.f32 %v1151, %v1155
        %s1157 = sld [smem:[#allocation2 + $0x93]]
        %v1158 = vstv %s1157
        %v1159 = vmul.f32 %v1158, %v1153
        %1161 = vrot.lane.b32.xlu0 %v1159, 127
        %v1162 = vpop.permute.xlu0 %1161
        %v1164 = vadd.f32 %v1156, %v1162
        %s1165 = sld [smem:[#allocation2 + $0xb3]]
        %v1166 = vstv %s1165
        %v1167 = vmul.f32 %v1166, %v1153
        %1169 = vrot.lane.b32.xlu0 %v1167, 126
        %v1170 = vpop.permute.xlu0 %1169
        %v1172 = vadd.f32 %v1164, %v1170
        %s1173 = sld [smem:[#allocation2 + $0xd3]]
        %v1174 = vld [vmem:[%s396] sm:$0xff]
        %v1175 = vstv %s1173
        %v1176 = vmul.f32 %v1175, %v1174
        %v1177 = vadd.f32 %v1172, %v1176
        %s1178 = sld [smem:[#allocation2 + $0xf3]]
        %v1179 = vstv %s1178
        %v1180 = vmul.f32 %v1179, %v1174
        %1182 = vrot.lane.b32.xlu0 %v1180, 127
        %v1183 = vpop.permute.xlu0 %1182
        %v1185 = vadd.f32 %v1177, %v1183
        %s1186 = sld [smem:[#allocation2 + $0x113]]
        %v1187 = vstv %s1186
        %v1188 = vmul.f32 %v1187, %v1174
        %1190 = vrot.lane.b32.xlu0 %v1188, 126
        %v1191 = vpop.permute.xlu0 %1190
        %v1193 = vadd.f32 %v1185, %v1191
        %s1194 = sld [smem:[#allocation2 + $0x1b]]
        %v1195 = vld [vmem:[%s419] sm:$0xff]
        %v1196 = vstv %s1194
        %v1197 = vmul.f32 %v1196, %v1195
        %v1198 = vadd.f32 %v1193, %v1197
        %s1199 = sld [smem:[#allocation2 + $0x3b]]
        %v1200 = vstv %s1199
        %v1201 = vmul.f32 %v1200, %v1195
        %1203 = vrot.lane.b32.xlu0 %v1201, 127
        %v1204 = vpop.permute.xlu0 %1203
        %v1206 = vadd.f32 %v1198, %v1204
        %s1207 = sld [smem:[#allocation2 + $0x5b]]
        %v1208 = vstv %s1207
        %v1209 = vmul.f32 %v1208, %v1195
        %1211 = vrot.lane.b32.xlu0 %v1209, 126
        %v1212 = vpop.permute.xlu0 %1211
        %v1214 = vadd.f32 %v1206, %v1212
        %s1215 = sld [smem:[#allocation2 + $0x7b]]
        %v1216 = vld [vmem:[%s442] sm:$0xff]
        %v1217 = vstv %s1215
        %v1218 = vmul.f32 %v1217, %v1216
        %v1219 = vadd.f32 %v1214, %v1218
        %s1220 = sld [smem:[#allocation2 + $0x9b]]
        %v1221 = vstv %s1220
        %v1222 = vmul.f32 %v1221, %v1216
        %1224 = vrot.lane.b32.xlu0 %v1222, 127
        %v1225 = vpop.permute.xlu0 %1224
        %v1227 = vadd.f32 %v1219, %v1225
        %s1228 = sld [smem:[#allocation2 + $0xbb]]
        %v1229 = vstv %s1228
        %v1230 = vmul.f32 %v1229, %v1216
        %1232 = vrot.lane.b32.xlu0 %v1230, 126
        %v1233 = vpop.permute.xlu0 %1232
        %v1235 = vadd.f32 %v1227, %v1233
        %s1236 = sld [smem:[#allocation2 + $0xdb]]
        %v1237 = vld [vmem:[%s465] sm:$0xff]
        %v1238 = vstv %s1236
        %v1239 = vmul.f32 %v1238, %v1237
        %v1240 = vadd.f32 %v1235, %v1239
        %s1241 = sld [smem:[#allocation2 + $0xfb]]
        %v1242 = vstv %s1241
        %v1243 = vmul.f32 %v1242, %v1237
        %1245 = vrot.lane.b32.xlu0 %v1243, 127
        %v1246 = vpop.permute.xlu0 %1245
        %v1248 = vadd.f32 %v1240, %v1246
        %s1249 = sld [smem:[#allocation2 + $0x11b]]
        %v1250 = vstv %s1249
        %v1251 = vmul.f32 %v1250, %v1237
        %1253 = vrot.lane.b32.xlu0 %v1251, 126
        %v1254 = vpop.permute.xlu0 %1253
        %v1256 = vadd.f32 %v1248, %v1254
        %s1257 = sld [smem:[#allocation5 + $0x3]]
        %v1258 = vstv %s1257
        %v1259 = vadd.f32 %v1256, %v1258
        %s1260 = scalar_lea.vmem %s204, 24 [#allocation7]
        %1261 = vst.msk [vmem:[%s1260] sm:$0xff] %vm489, %v1259
        %s1262 = sld [smem:[#allocation2 + $0x4]]
        %v1263 = vld [vmem:[%s212] sm:$0xff]
        %v1264 = vstv %s1262
        %v1265 = vmul.f32 %v1264, %v1263
        %v1266 = vadd.f32 %v1265, 0.0
        %s1267 = sld [smem:[#allocation2 + $0x24]]
        %v1268 = vstv %s1267
        %v1269 = vmul.f32 %v1268, %v1263
        %1271 = vrot.lane.b32.xlu0 %v1269, 127
        %v1272 = vpop.permute.xlu0 %1271
        %v1274 = vadd.f32 %v1266, %v1272
        %s1275 = sld [smem:[#allocation2 + $0x44]]
        %v1276 = vstv %s1275
        %v1277 = vmul.f32 %v1276, %v1263
        %1279 = vrot.lane.b32.xlu0 %v1277, 126
        %v1280 = vpop.permute.xlu0 %1279
        %v1282 = vadd.f32 %v1274, %v1280
        %s1283 = sld [smem:[#allocation2 + $0x64]]
        %v1284 = vld [vmem:[%s235] sm:$0xff]
        %v1285 = vstv %s1283
        %v1286 = vmul.f32 %v1285, %v1284
        %v1287 = vadd.f32 %v1282, %v1286
        %s1288 = sld [smem:[#allocation2 + $0x84]]
        %v1289 = vstv %s1288
        %v1290 = vmul.f32 %v1289, %v1284
        %1292 = vrot.lane.b32.xlu0 %v1290, 127
        %v1293 = vpop.permute.xlu0 %1292
        %v1295 = vadd.f32 %v1287, %v1293
        %s1296 = sld [smem:[#allocation2 + $0xa4]]
        %v1297 = vstv %s1296
        %v1298 = vmul.f32 %v1297, %v1284
        %1300 = vrot.lane.b32.xlu0 %v1298, 126
        %v1301 = vpop.permute.xlu0 %1300
        %v1303 = vadd.f32 %v1295, %v1301
        %s1304 = sld [smem:[#allocation2 + $0xc4]]
        %v1305 = vld [vmem:[%s258] sm:$0xff]
        %v1306 = vstv %s1304
        %v1307 = vmul.f32 %v1306, %v1305
        %v1308 = vadd.f32 %v1303, %v1307
        %s1309 = sld [smem:[#allocation2 + $0xe4]]
        %v1310 = vstv %s1309
        %v1311 = vmul.f32 %v1310, %v1305
        %1313 = vrot.lane.b32.xlu0 %v1311, 127
        %v1314 = vpop.permute.xlu0 %1313
        %v1316 = vadd.f32 %v1308, %v1314
        %s1317 = sld [smem:[#allocation2 + $0x104]]
        %v1318 = vstv %s1317
        %v1319 = vmul.f32 %v1318, %v1305
        %1321 = vrot.lane.b32.xlu0 %v1319, 126
        %v1322 = vpop.permute.xlu0 %1321
        %v1324 = vadd.f32 %v1316, %v1322
        %s1325 = sld [smem:[#allocation2 + $0xc]]
        %v1326 = vld [vmem:[%s281] sm:$0xff]
        %v1327 = vstv %s1325
        %v1328 = vmul.f32 %v1327, %v1326
        %v1329 = vadd.f32 %v1324, %v1328
        %s1330 = sld [smem:[#allocation2 + $0x2c]]
        %v1331 = vstv %s1330
        %v1332 = vmul.f32 %v1331, %v1326
        %1334 = vrot.lane.b32.xlu0 %v1332, 127
        %v1335 = vpop.permute.xlu0 %1334
        %v1337 = vadd.f32 %v1329, %v1335
        %s1338 = sld [smem:[#allocation2 + $0x4c]]
        %v1339 = vstv %s1338
        %v1340 = vmul.f32 %v1339, %v1326
        %1342 = vrot.lane.b32.xlu0 %v1340, 126
        %v1343 = vpop.permute.xlu0 %1342
        %v1345 = vadd.f32 %v1337, %v1343
        %s1346 = sld [smem:[#allocation2 + $0x6c]]
        %v1347 = vld [vmem:[%s304] sm:$0xff]
        %v1348 = vstv %s1346
        %v1349 = vmul.f32 %v1348, %v1347
        %v1350 = vadd.f32 %v1345, %v1349
        %s1351 = sld [smem:[#allocation2 + $0x8c]]
        %v1352 = vstv %s1351
        %v1353 = vmul.f32 %v1352, %v1347
        %1355 = vrot.lane.b32.xlu0 %v1353, 127
        %v1356 = vpop.permute.xlu0 %1355
        %v1358 = vadd.f32 %v1350, %v1356
        %s1359 = sld [smem:[#allocation2 + $0xac]]
        %v1360 = vstv %s1359
        %v1361 = vmul.f32 %v1360, %v1347
        %1363 = vrot.lane.b32.xlu0 %v1361, 126
        %v1364 = vpop.permute.xlu0 %1363
        %v1366 = vadd.f32 %v1358, %v1364
        %s1367 = sld [smem:[#allocation2 + $0xcc]]
        %v1368 = vld [vmem:[%s327] sm:$0xff]
        %v1369 = vstv %s1367
        %v1370 = vmul.f32 %v1369, %v1368
        %v1371 = vadd.f32 %v1366, %v1370
        %s1372 = sld [smem:[#allocation2 + $0xec]]
        %v1373 = vstv %s1372
        %v1374 = vmul.f32 %v1373, %v1368
        %1376 = vrot.lane.b32.xlu0 %v1374, 127
        %v1377 = vpop.permute.xlu0 %1376
        %v1379 = vadd.f32 %v1371, %v1377
        %s1380 = sld [smem:[#allocation2 + $0x10c]]
        %v1381 = vstv %s1380
        %v1382 = vmul.f32 %v1381, %v1368
        %1384 = vrot.lane.b32.xlu0 %v1382, 126
        %v1385 = vpop.permute.xlu0 %1384
        %v1387 = vadd.f32 %v1379, %v1385
        %s1388 = sld [smem:[#allocation2 + $0x14]]
        %v1389 = vld [vmem:[%s350] sm:$0xff]
        %v1390 = vstv %s1388
        %v1391 = vmul.f32 %v1390, %v1389
        %v1392 = vadd.f32 %v1387, %v1391
        %s1393 = sld [smem:[#allocation2 + $0x34]]
        %v1394 = vstv %s1393
        %v1395 = vmul.f32 %v1394, %v1389
        %1397 = vrot.lane.b32.xlu0 %v1395, 127
        %v1398 = vpop.permute.xlu0 %1397
        %v1400 = vadd.f32 %v1392, %v1398
        %s1401 = sld [smem:[#allocation2 + $0x54]]
        %v1402 = vstv %s1401
        %v1403 = vmul.f32 %v1402, %v1389
        %1405 = vrot.lane.b32.xlu0 %v1403, 126
        %v1406 = vpop.permute.xlu0 %1405
        %v1408 = vadd.f32 %v1400, %v1406
        %s1409 = sld [smem:[#allocation2 + $0x74]]
        %v1410 = vld [vmem:[%s373] sm:$0xff]
        %v1411 = vstv %s1409
        %v1412 = vmul.f32 %v1411, %v1410
        %v1413 = vadd.f32 %v1408, %v1412
        %s1414 = sld [smem:[#allocation2 + $0x94]]
        %v1415 = vstv %s1414
        %v1416 = vmul.f32 %v1415, %v1410
        %1418 = vrot.lane.b32.xlu0 %v1416, 127
        %v1419 = vpop.permute.xlu0 %1418
        %v1421 = vadd.f32 %v1413, %v1419
        %s1422 = sld [smem:[#allocation2 + $0xb4]]
        %v1423 = vstv %s1422
        %v1424 = vmul.f32 %v1423, %v1410
        %1426 = vrot.lane.b32.xlu0 %v1424, 126
        %v1427 = vpop.permute.xlu0 %1426
        %v1429 = vadd.f32 %v1421, %v1427
        %s1430 = sld [smem:[#allocation2 + $0xd4]]
        %v1431 = vld [vmem:[%s396] sm:$0xff]
        %v1432 = vstv %s1430
        %v1433 = vmul.f32 %v1432, %v1431
        %v1434 = vadd.f32 %v1429, %v1433
        %s1435 = sld [smem:[#allocation2 + $0xf4]]
        %v1436 = vstv %s1435
        %v1437 = vmul.f32 %v1436, %v1431
        %1439 = vrot.lane.b32.xlu0 %v1437, 127
        %v1440 = vpop.permute.xlu0 %1439
        %v1442 = vadd.f32 %v1434, %v1440
        %s1443 = sld [smem:[#allocation2 + $0x114]]
        %v1444 = vstv %s1443
        %v1445 = vmul.f32 %v1444, %v1431
        %1447 = vrot.lane.b32.xlu0 %v1445, 126
        %v1448 = vpop.permute.xlu0 %1447
        %v1450 = vadd.f32 %v1442, %v1448
        %s1451 = sld [smem:[#allocation2 + $0x1c]]
        %v1452 = vld [vmem:[%s419] sm:$0xff]
        %v1453 = vstv %s1451
        %v1454 = vmul.f32 %v1453, %v1452
        %v1455 = vadd.f32 %v1450, %v1454
        %s1456 = sld [smem:[#allocation2 + $0x3c]]
        %v1457 = vstv %s1456
        %v1458 = vmul.f32 %v1457, %v1452
        %1460 = vrot.lane.b32.xlu0 %v1458, 127
        %v1461 = vpop.permute.xlu0 %1460
        %v1463 = vadd.f32 %v1455, %v1461
        %s1464 = sld [smem:[#allocation2 + $0x5c]]
        %v1465 = vstv %s1464
        %v1466 = vmul.f32 %v1465, %v1452
        %1468 = vrot.lane.b32.xlu0 %v1466, 126
        %v1469 = vpop.permute.xlu0 %1468
        %v1471 = vadd.f32 %v1463, %v1469
        %s1472 = sld [smem:[#allocation2 + $0x7c]]
        %v1473 = vld [vmem:[%s442] sm:$0xff]
        %v1474 = vstv %s1472
        %v1475 = vmul.f32 %v1474, %v1473
        %v1476 = vadd.f32 %v1471, %v1475
        %s1477 = sld [smem:[#allocation2 + $0x9c]]
        %v1478 = vstv %s1477
        %v1479 = vmul.f32 %v1478, %v1473
        %1481 = vrot.lane.b32.xlu0 %v1479, 127
        %v1482 = vpop.permute.xlu0 %1481
        %v1484 = vadd.f32 %v1476, %v1482
        %s1485 = sld [smem:[#allocation2 + $0xbc]]
        %v1486 = vstv %s1485
        %v1487 = vmul.f32 %v1486, %v1473
        %1489 = vrot.lane.b32.xlu0 %v1487, 126
        %v1490 = vpop.permute.xlu0 %1489
        %v1492 = vadd.f32 %v1484, %v1490
        %s1493 = sld [smem:[#allocation2 + $0xdc]]
        %v1494 = vld [vmem:[%s465] sm:$0xff]
        %v1495 = vstv %s1493
        %v1496 = vmul.f32 %v1495, %v1494
        %v1497 = vadd.f32 %v1492, %v1496
        %s1498 = sld [smem:[#allocation2 + $0xfc]]
        %v1499 = vstv %s1498
        %v1500 = vmul.f32 %v1499, %v1494
        %1502 = vrot.lane.b32.xlu0 %v1500, 127
        %v1503 = vpop.permute.xlu0 %1502
        %v1505 = vadd.f32 %v1497, %v1503
        %s1506 = sld [smem:[#allocation2 + $0x11c]]
        %v1507 = vstv %s1506
        %v1508 = vmul.f32 %v1507, %v1494
        %1510 = vrot.lane.b32.xlu0 %v1508, 126
        %v1511 = vpop.permute.xlu0 %1510
        %v1513 = vadd.f32 %v1505, %v1511
        %s1514 = sld [smem:[#allocation5 + $0x4]]
        %v1515 = vstv %s1514
        %v1516 = vadd.f32 %v1513, %v1515
        %s1517 = scalar_lea.vmem %s204, 32 [#allocation7]
        %1518 = vst.msk [vmem:[%s1517] sm:$0xff] %vm489, %v1516
        %s1519 = sld [smem:[#allocation2 + $0x5]]
        %v1520 = vld [vmem:[%s212] sm:$0xff]
        %v1521 = vstv %s1519
        %v1522 = vmul.f32 %v1521, %v1520
        %v1523 = vadd.f32 %v1522, 0.0
        %s1524 = sld [smem:[#allocation2 + $0x25]]
        %v1525 = vstv %s1524
        %v1526 = vmul.f32 %v1525, %v1520
        %1528 = vrot.lane.b32.xlu0 %v1526, 127
        %v1529 = vpop.permute.xlu0 %1528
        %v1531 = vadd.f32 %v1523, %v1529
        %s1532 = sld [smem:[#allocation2 + $0x45]]
        %v1533 = vstv %s1532
        %v1534 = vmul.f32 %v1533, %v1520
        %1536 = vrot.lane.b32.xlu0 %v1534, 126
        %v1537 = vpop.permute.xlu0 %1536
        %v1539 = vadd.f32 %v1531, %v1537
        %s1540 = sld [smem:[#allocation2 + $0x65]]
        %v1541 = vld [vmem:[%s235] sm:$0xff]
        %v1542 = vstv %s1540
        %v1543 = vmul.f32 %v1542, %v1541
        %v1544 = vadd.f32 %v1539, %v1543
        %s1545 = sld [smem:[#allocation2 + $0x85]]
        %v1546 = vstv %s1545
        %v1547 = vmul.f32 %v1546, %v1541
        %1549 = vrot.lane.b32.xlu0 %v1547, 127
        %v1550 = vpop.permute.xlu0 %1549
        %v1552 = vadd.f32 %v1544, %v1550
        %s1553 = sld [smem:[#allocation2 + $0xa5]]
        %v1554 = vstv %s1553
        %v1555 = vmul.f32 %v1554, %v1541
        %1557 = vrot.lane.b32.xlu0 %v1555, 126
        %v1558 = vpop.permute.xlu0 %1557
        %v1560 = vadd.f32 %v1552, %v1558
        %s1561 = sld [smem:[#allocation2 + $0xc5]]
        %v1562 = vld [vmem:[%s258] sm:$0xff]
        %v1563 = vstv %s1561
        %v1564 = vmul.f32 %v1563, %v1562
        %v1565 = vadd.f32 %v1560, %v1564
        %s1566 = sld [smem:[#allocation2 + $0xe5]]
        %v1567 = vstv %s1566
        %v1568 = vmul.f32 %v1567, %v1562
        %1570 = vrot.lane.b32.xlu0 %v1568, 127
        %v1571 = vpop.permute.xlu0 %1570
        %v1573 = vadd.f32 %v1565, %v1571
        %s1574 = sld [smem:[#allocation2 + $0x105]]
        %v1575 = vstv %s1574
        %v1576 = vmul.f32 %v1575, %v1562
        %1578 = vrot.lane.b32.xlu0 %v1576, 126
        %v1579 = vpop.permute.xlu0 %1578
        %v1581 = vadd.f32 %v1573, %v1579
        %s1582 = sld [smem:[#allocation2 + $0xd]]
        %v1583 = vld [vmem:[%s281] sm:$0xff]
        %v1584 = vstv %s1582
        %v1585 = vmul.f32 %v1584, %v1583
        %v1586 = vadd.f32 %v1581, %v1585
        %s1587 = sld [smem:[#allocation2 + $0x2d]]
        %v1588 = vstv %s1587
        %v1589 = vmul.f32 %v1588, %v1583
        %1591 = vrot.lane.b32.xlu0 %v1589, 127
        %v1592 = vpop.permute.xlu0 %1591
        %v1594 = vadd.f32 %v1586, %v1592
        %s1595 = sld [smem:[#allocation2 + $0x4d]]
        %v1596 = vstv %s1595
        %v1597 = vmul.f32 %v1596, %v1583
        %1599 = vrot.lane.b32.xlu0 %v1597, 126
        %v1600 = vpop.permute.xlu0 %1599
        %v1602 = vadd.f32 %v1594, %v1600
        %s1603 = sld [smem:[#allocation2 + $0x6d]]
        %v1604 = vld [vmem:[%s304] sm:$0xff]
        %v1605 = vstv %s1603
        %v1606 = vmul.f32 %v1605, %v1604
        %v1607 = vadd.f32 %v1602, %v1606
        %s1608 = sld [smem:[#allocation2 + $0x8d]]
        %v1609 = vstv %s1608
        %v1610 = vmul.f32 %v1609, %v1604
        %1612 = vrot.lane.b32.xlu0 %v1610, 127
        %v1613 = vpop.permute.xlu0 %1612
        %v1615 = vadd.f32 %v1607, %v1613
        %s1616 = sld [smem:[#allocation2 + $0xad]]
        %v1617 = vstv %s1616
        %v1618 = vmul.f32 %v1617, %v1604
        %1620 = vrot.lane.b32.xlu0 %v1618, 126
        %v1621 = vpop.permute.xlu0 %1620
        %v1623 = vadd.f32 %v1615, %v1621
        %s1624 = sld [smem:[#allocation2 + $0xcd]]
        %v1625 = vld [vmem:[%s327] sm:$0xff]
        %v1626 = vstv %s1624
        %v1627 = vmul.f32 %v1626, %v1625
        %v1628 = vadd.f32 %v1623, %v1627
        %s1629 = sld [smem:[#allocation2 + $0xed]]
        %v1630 = vstv %s1629
        %v1631 = vmul.f32 %v1630, %v1625
        %1633 = vrot.lane.b32.xlu0 %v1631, 127
        %v1634 = vpop.permute.xlu0 %1633
        %v1636 = vadd.f32 %v1628, %v1634
        %s1637 = sld [smem:[#allocation2 + $0x10d]]
        %v1638 = vstv %s1637
        %v1639 = vmul.f32 %v1638, %v1625
        %1641 = vrot.lane.b32.xlu0 %v1639, 126
        %v1642 = vpop.permute.xlu0 %1641
        %v1644 = vadd.f32 %v1636, %v1642
        %s1645 = sld [smem:[#allocation2 + $0x15]]
        %v1646 = vld [vmem:[%s350] sm:$0xff]
        %v1647 = vstv %s1645
        %v1648 = vmul.f32 %v1647, %v1646
        %v1649 = vadd.f32 %v1644, %v1648
        %s1650 = sld [smem:[#allocation2 + $0x35]]
        %v1651 = vstv %s1650
        %v1652 = vmul.f32 %v1651, %v1646
        %1654 = vrot.lane.b32.xlu0 %v1652, 127
        %v1655 = vpop.permute.xlu0 %1654
        %v1657 = vadd.f32 %v1649, %v1655
        %s1658 = sld [smem:[#allocation2 + $0x55]]
        %v1659 = vstv %s1658
        %v1660 = vmul.f32 %v1659, %v1646
        %1662 = vrot.lane.b32.xlu0 %v1660, 126
        %v1663 = vpop.permute.xlu0 %1662
        %v1665 = vadd.f32 %v1657, %v1663
        %s1666 = sld [smem:[#allocation2 + $0x75]]
        %v1667 = vld [vmem:[%s373] sm:$0xff]
        %v1668 = vstv %s1666
        %v1669 = vmul.f32 %v1668, %v1667
        %v1670 = vadd.f32 %v1665, %v1669
        %s1671 = sld [smem:[#allocation2 + $0x95]]
        %v1672 = vstv %s1671
        %v1673 = vmul.f32 %v1672, %v1667
        %1675 = vrot.lane.b32.xlu0 %v1673, 127
        %v1676 = vpop.permute.xlu0 %1675
        %v1678 = vadd.f32 %v1670, %v1676
        %s1679 = sld [smem:[#allocation2 + $0xb5]]
        %v1680 = vstv %s1679
        %v1681 = vmul.f32 %v1680, %v1667
        %1683 = vrot.lane.b32.xlu0 %v1681, 126
        %v1684 = vpop.permute.xlu0 %1683
        %v1686 = vadd.f32 %v1678, %v1684
        %s1687 = sld [smem:[#allocation2 + $0xd5]]
        %v1688 = vld [vmem:[%s396] sm:$0xff]
        %v1689 = vstv %s1687
        %v1690 = vmul.f32 %v1689, %v1688
        %v1691 = vadd.f32 %v1686, %v1690
        %s1692 = sld [smem:[#allocation2 + $0xf5]]
        %v1693 = vstv %s1692
        %v1694 = vmul.f32 %v1693, %v1688
        %1696 = vrot.lane.b32.xlu0 %v1694, 127
        %v1697 = vpop.permute.xlu0 %1696
        %v1699 = vadd.f32 %v1691, %v1697
        %s1700 = sld [smem:[#allocation2 + $0x115]]
        %v1701 = vstv %s1700
        %v1702 = vmul.f32 %v1701, %v1688
        %1704 = vrot.lane.b32.xlu0 %v1702, 126
        %v1705 = vpop.permute.xlu0 %1704
        %v1707 = vadd.f32 %v1699, %v1705
        %s1708 = sld [smem:[#allocation2 + $0x1d]]
        %v1709 = vld [vmem:[%s419] sm:$0xff]
        %v1710 = vstv %s1708
        %v1711 = vmul.f32 %v1710, %v1709
        %v1712 = vadd.f32 %v1707, %v1711
        %s1713 = sld [smem:[#allocation2 + $0x3d]]
        %v1714 = vstv %s1713
        %v1715 = vmul.f32 %v1714, %v1709
        %1717 = vrot.lane.b32.xlu0 %v1715, 127
        %v1718 = vpop.permute.xlu0 %1717
        %v1720 = vadd.f32 %v1712, %v1718
        %s1721 = sld [smem:[#allocation2 + $0x5d]]
        %v1722 = vstv %s1721
        %v1723 = vmul.f32 %v1722, %v1709
        %1725 = vrot.lane.b32.xlu0 %v1723, 126
        %v1726 = vpop.permute.xlu0 %1725
        %v1728 = vadd.f32 %v1720, %v1726
        %s1729 = sld [smem:[#allocation2 + $0x7d]]
        %v1730 = vld [vmem:[%s442] sm:$0xff]
        %v1731 = vstv %s1729
        %v1732 = vmul.f32 %v1731, %v1730
        %v1733 = vadd.f32 %v1728, %v1732
        %s1734 = sld [smem:[#allocation2 + $0x9d]]
        %v1735 = vstv %s1734
        %v1736 = vmul.f32 %v1735, %v1730
        %1738 = vrot.lane.b32.xlu0 %v1736, 127
        %v1739 = vpop.permute.xlu0 %1738
        %v1741 = vadd.f32 %v1733, %v1739
        %s1742 = sld [smem:[#allocation2 + $0xbd]]
        %v1743 = vstv %s1742
        %v1744 = vmul.f32 %v1743, %v1730
        %1746 = vrot.lane.b32.xlu0 %v1744, 126
        %v1747 = vpop.permute.xlu0 %1746
        %v1749 = vadd.f32 %v1741, %v1747
        %s1750 = sld [smem:[#allocation2 + $0xdd]]
        %v1751 = vld [vmem:[%s465] sm:$0xff]
        %v1752 = vstv %s1750
        %v1753 = vmul.f32 %v1752, %v1751
        %v1754 = vadd.f32 %v1749, %v1753
        %s1755 = sld [smem:[#allocation2 + $0xfd]]
        %v1756 = vstv %s1755
        %v1757 = vmul.f32 %v1756, %v1751
        %1759 = vrot.lane.b32.xlu0 %v1757, 127
        %v1760 = vpop.permute.xlu0 %1759
        %v1762 = vadd.f32 %v1754, %v1760
        %s1763 = sld [smem:[#allocation2 + $0x11d]]
        %v1764 = vstv %s1763
        %v1765 = vmul.f32 %v1764, %v1751
        %1767 = vrot.lane.b32.xlu0 %v1765, 126
        %v1768 = vpop.permute.xlu0 %1767
        %v1770 = vadd.f32 %v1762, %v1768
        %s1771 = sld [smem:[#allocation5 + $0x5]]
        %v1772 = vstv %s1771
        %v1773 = vadd.f32 %v1770, %v1772
        %s1774 = scalar_lea.vmem %s204, 40 [#allocation7]
        %1775 = vst.msk [vmem:[%s1774] sm:$0xff] %vm489, %v1773
        %s1776 = sld [smem:[#allocation2 + $0x6]]
        %v1777 = vld [vmem:[%s212] sm:$0xff]
        %v1778 = vstv %s1776
        %v1779 = vmul.f32 %v1778, %v1777
        %v1780 = vadd.f32 %v1779, 0.0
        %s1781 = sld [smem:[#allocation2 + $0x26]]
        %v1782 = vstv %s1781
        %v1783 = vmul.f32 %v1782, %v1777
        %1785 = vrot.lane.b32.xlu0 %v1783, 127
        %v1786 = vpop.permute.xlu0 %1785
        %v1788 = vadd.f32 %v1780, %v1786
        %s1789 = sld [smem:[#allocation2 + $0x46]]
        %v1790 = vstv %s1789
        %v1791 = vmul.f32 %v1790, %v1777
        %1793 = vrot.lane.b32.xlu0 %v1791, 126
        %v1794 = vpop.permute.xlu0 %1793
        %v1796 = vadd.f32 %v1788, %v1794
        %s1797 = sld [smem:[#allocation2 + $0x66]]
        %v1798 = vld [vmem:[%s235] sm:$0xff]
        %v1799 = vstv %s1797
        %v1800 = vmul.f32 %v1799, %v1798
        %v1801 = vadd.f32 %v1796, %v1800
        %s1802 = sld [smem:[#allocation2 + $0x86]]
        %v1803 = vstv %s1802
        %v1804 = vmul.f32 %v1803, %v1798
        %1806 = vrot.lane.b32.xlu0 %v1804, 127
        %v1807 = vpop.permute.xlu0 %1806
        %v1809 = vadd.f32 %v1801, %v1807
        %s1810 = sld [smem:[#allocation2 + $0xa6]]
        %v1811 = vstv %s1810
        %v1812 = vmul.f32 %v1811, %v1798
        %1814 = vrot.lane.b32.xlu0 %v1812, 126
        %v1815 = vpop.permute.xlu0 %1814
        %v1817 = vadd.f32 %v1809, %v1815
        %s1818 = sld [smem:[#allocation2 + $0xc6]]
        %v1819 = vld [vmem:[%s258] sm:$0xff]
        %v1820 = vstv %s1818
        %v1821 = vmul.f32 %v1820, %v1819
        %v1822 = vadd.f32 %v1817, %v1821
        %s1823 = sld [smem:[#allocation2 + $0xe6]]
        %v1824 = vstv %s1823
        %v1825 = vmul.f32 %v1824, %v1819
        %1827 = vrot.lane.b32.xlu0 %v1825, 127
        %v1828 = vpop.permute.xlu0 %1827
        %v1830 = vadd.f32 %v1822, %v1828
        %s1831 = sld [smem:[#allocation2 + $0x106]]
        %v1832 = vstv %s1831
        %v1833 = vmul.f32 %v1832, %v1819
        %1835 = vrot.lane.b32.xlu0 %v1833, 126
        %v1836 = vpop.permute.xlu0 %1835
        %v1838 = vadd.f32 %v1830, %v1836
        %s1839 = sld [smem:[#allocation2 + $0xe]]
        %v1840 = vld [vmem:[%s281] sm:$0xff]
        %v1841 = vstv %s1839
        %v1842 = vmul.f32 %v1841, %v1840
        %v1843 = vadd.f32 %v1838, %v1842
        %s1844 = sld [smem:[#allocation2 + $0x2e]]
        %v1845 = vstv %s1844
        %v1846 = vmul.f32 %v1845, %v1840
        %1848 = vrot.lane.b32.xlu0 %v1846, 127
        %v1849 = vpop.permute.xlu0 %1848
        %v1851 = vadd.f32 %v1843, %v1849
        %s1852 = sld [smem:[#allocation2 + $0x4e]]
        %v1853 = vstv %s1852
        %v1854 = vmul.f32 %v1853, %v1840
        %1856 = vrot.lane.b32.xlu0 %v1854, 126
        %v1857 = vpop.permute.xlu0 %1856
        %v1859 = vadd.f32 %v1851, %v1857
        %s1860 = sld [smem:[#allocation2 + $0x6e]]
        %v1861 = vld [vmem:[%s304] sm:$0xff]
        %v1862 = vstv %s1860
        %v1863 = vmul.f32 %v1862, %v1861
        %v1864 = vadd.f32 %v1859, %v1863
        %s1865 = sld [smem:[#allocation2 + $0x8e]]
        %v1866 = vstv %s1865
        %v1867 = vmul.f32 %v1866, %v1861
        %1869 = vrot.lane.b32.xlu0 %v1867, 127
        %v1870 = vpop.permute.xlu0 %1869
        %v1872 = vadd.f32 %v1864, %v1870
        %s1873 = sld [smem:[#allocation2 + $0xae]]
        %v1874 = vstv %s1873
        %v1875 = vmul.f32 %v1874, %v1861
        %1877 = vrot.lane.b32.xlu0 %v1875, 126
        %v1878 = vpop.permute.xlu0 %1877
        %v1880 = vadd.f32 %v1872, %v1878
        %s1881 = sld [smem:[#allocation2 + $0xce]]
        %v1882 = vld [vmem:[%s327] sm:$0xff]
        %v1883 = vstv %s1881
        %v1884 = vmul.f32 %v1883, %v1882
        %v1885 = vadd.f32 %v1880, %v1884
        %s1886 = sld [smem:[#allocation2 + $0xee]]
        %v1887 = vstv %s1886
        %v1888 = vmul.f32 %v1887, %v1882
        %1890 = vrot.lane.b32.xlu0 %v1888, 127
        %v1891 = vpop.permute.xlu0 %1890
        %v1893 = vadd.f32 %v1885, %v1891
        %s1894 = sld [smem:[#allocation2 + $0x10e]]
        %v1895 = vstv %s1894
        %v1896 = vmul.f32 %v1895, %v1882
        %1898 = vrot.lane.b32.xlu0 %v1896, 126
        %v1899 = vpop.permute.xlu0 %1898
        %v1901 = vadd.f32 %v1893, %v1899
        %s1902 = sld [smem:[#allocation2 + $0x16]]
        %v1903 = vld [vmem:[%s350] sm:$0xff]
        %v1904 = vstv %s1902
        %v1905 = vmul.f32 %v1904, %v1903
        %v1906 = vadd.f32 %v1901, %v1905
        %s1907 = sld [smem:[#allocation2 + $0x36]]
        %v1908 = vstv %s1907
        %v1909 = vmul.f32 %v1908, %v1903
        %1911 = vrot.lane.b32.xlu0 %v1909, 127
        %v1912 = vpop.permute.xlu0 %1911
        %v1914 = vadd.f32 %v1906, %v1912
        %s1915 = sld [smem:[#allocation2 + $0x56]]
        %v1916 = vstv %s1915
        %v1917 = vmul.f32 %v1916, %v1903
        %1919 = vrot.lane.b32.xlu0 %v1917, 126
        %v1920 = vpop.permute.xlu0 %1919
        %v1922 = vadd.f32 %v1914, %v1920
        %s1923 = sld [smem:[#allocation2 + $0x76]]
        %v1924 = vld [vmem:[%s373] sm:$0xff]
        %v1925 = vstv %s1923
        %v1926 = vmul.f32 %v1925, %v1924
        %v1927 = vadd.f32 %v1922, %v1926
        %s1928 = sld [smem:[#allocation2 + $0x96]]
        %v1929 = vstv %s1928
        %v1930 = vmul.f32 %v1929, %v1924
        %1932 = vrot.lane.b32.xlu0 %v1930, 127
        %v1933 = vpop.permute.xlu0 %1932
        %v1935 = vadd.f32 %v1927, %v1933
        %s1936 = sld [smem:[#allocation2 + $0xb6]]
        %v1937 = vstv %s1936
        %v1938 = vmul.f32 %v1937, %v1924
        %1940 = vrot.lane.b32.xlu0 %v1938, 126
        %v1941 = vpop.permute.xlu0 %1940
        %v1943 = vadd.f32 %v1935, %v1941
        %s1944 = sld [smem:[#allocation2 + $0xd6]]
        %v1945 = vld [vmem:[%s396] sm:$0xff]
        %v1946 = vstv %s1944
        %v1947 = vmul.f32 %v1946, %v1945
        %v1948 = vadd.f32 %v1943, %v1947
        %s1949 = sld [smem:[#allocation2 + $0xf6]]
        %v1950 = vstv %s1949
        %v1951 = vmul.f32 %v1950, %v1945
        %1953 = vrot.lane.b32.xlu0 %v1951, 127
        %v1954 = vpop.permute.xlu0 %1953
        %v1956 = vadd.f32 %v1948, %v1954
        %s1957 = sld [smem:[#allocation2 + $0x116]]
        %v1958 = vstv %s1957
        %v1959 = vmul.f32 %v1958, %v1945
        %1961 = vrot.lane.b32.xlu0 %v1959, 126
        %v1962 = vpop.permute.xlu0 %1961
        %v1964 = vadd.f32 %v1956, %v1962
        %s1965 = sld [smem:[#allocation2 + $0x1e]]
        %v1966 = vld [vmem:[%s419] sm:$0xff]
        %v1967 = vstv %s1965
        %v1968 = vmul.f32 %v1967, %v1966
        %v1969 = vadd.f32 %v1964, %v1968
        %s1970 = sld [smem:[#allocation2 + $0x3e]]
        %v1971 = vstv %s1970
        %v1972 = vmul.f32 %v1971, %v1966
        %1974 = vrot.lane.b32.xlu0 %v1972, 127
        %v1975 = vpop.permute.xlu0 %1974
        %v1977 = vadd.f32 %v1969, %v1975
        %s1978 = sld [smem:[#allocation2 + $0x5e]]
        %v1979 = vstv %s1978
        %v1980 = vmul.f32 %v1979, %v1966
        %1982 = vrot.lane.b32.xlu0 %v1980, 126
        %v1983 = vpop.permute.xlu0 %1982
        %v1985 = vadd.f32 %v1977, %v1983
        %s1986 = sld [smem:[#allocation2 + $0x7e]]
        %v1987 = vld [vmem:[%s442] sm:$0xff]
        %v1988 = vstv %s1986
        %v1989 = vmul.f32 %v1988, %v1987
        %v1990 = vadd.f32 %v1985, %v1989
        %s1991 = sld [smem:[#allocation2 + $0x9e]]
        %v1992 = vstv %s1991
        %v1993 = vmul.f32 %v1992, %v1987
        %1995 = vrot.lane.b32.xlu0 %v1993, 127
        %v1996 = vpop.permute.xlu0 %1995
        %v1998 = vadd.f32 %v1990, %v1996
        %s1999 = sld [smem:[#allocation2 + $0xbe]]
        %v2000 = vstv %s1999
        %v2001 = vmul.f32 %v2000, %v1987
        %2003 = vrot.lane.b32.xlu0 %v2001, 126
        %v2004 = vpop.permute.xlu0 %2003
        %v2006 = vadd.f32 %v1998, %v2004
        %s2007 = sld [smem:[#allocation2 + $0xde]]
        %v2008 = vld [vmem:[%s465] sm:$0xff]
        %v2009 = vstv %s2007
        %v2010 = vmul.f32 %v2009, %v2008
        %v2011 = vadd.f32 %v2006, %v2010
        %s2012 = sld [smem:[#allocation2 + $0xfe]]
        %v2013 = vstv %s2012
        %v2014 = vmul.f32 %v2013, %v2008
        %2016 = vrot.lane.b32.xlu0 %v2014, 127
        %v2017 = vpop.permute.xlu0 %2016
        %v2019 = vadd.f32 %v2011, %v2017
        %s2020 = sld [smem:[#allocation2 + $0x11e]]
        %v2021 = vstv %s2020
        %v2022 = vmul.f32 %v2021, %v2008
        %2024 = vrot.lane.b32.xlu0 %v2022, 126
        %v2025 = vpop.permute.xlu0 %2024
        %v2027 = vadd.f32 %v2019, %v2025
        %s2028 = sld [smem:[#allocation5 + $0x6]]
        %v2029 = vstv %s2028
        %v2030 = vadd.f32 %v2027, %v2029
        %s2031 = scalar_lea.vmem %s204, 48 [#allocation7]
        %2032 = vst.msk [vmem:[%s2031] sm:$0xff] %vm489, %v2030
        %s2033 = sld [smem:[#allocation2 + $0x7]]
        %v2034 = vld [vmem:[%s212] sm:$0xff]
        %v2035 = vstv %s2033
        %v2036 = vmul.f32 %v2035, %v2034
        %v2037 = vadd.f32 %v2036, 0.0
        %s2038 = sld [smem:[#allocation2 + $0x27]]
        %v2039 = vstv %s2038
        %v2040 = vmul.f32 %v2039, %v2034
        %2042 = vrot.lane.b32.xlu0 %v2040, 127
        %v2043 = vpop.permute.xlu0 %2042
        %v2045 = vadd.f32 %v2037, %v2043
        %s2046 = sld [smem:[#allocation2 + $0x47]]
        %v2047 = vstv %s2046
        %v2048 = vmul.f32 %v2047, %v2034
        %2050 = vrot.lane.b32.xlu0 %v2048, 126
        %v2051 = vpop.permute.xlu0 %2050
        %v2053 = vadd.f32 %v2045, %v2051
        %s2054 = sld [smem:[#allocation2 + $0x67]]
        %v2055 = vld [vmem:[%s235] sm:$0xff]
        %v2056 = vstv %s2054
        %v2057 = vmul.f32 %v2056, %v2055
        %v2058 = vadd.f32 %v2053, %v2057
        %s2059 = sld [smem:[#allocation2 + $0x87]]
        %v2060 = vstv %s2059
        %v2061 = vmul.f32 %v2060, %v2055
        %2063 = vrot.lane.b32.xlu0 %v2061, 127
        %v2064 = vpop.permute.xlu0 %2063
        %v2066 = vadd.f32 %v2058, %v2064
        %s2067 = sld [smem:[#allocation2 + $0xa7]]
        %v2068 = vstv %s2067
        %v2069 = vmul.f32 %v2068, %v2055
        %2071 = vrot.lane.b32.xlu0 %v2069, 126
        %v2072 = vpop.permute.xlu0 %2071
        %v2074 = vadd.f32 %v2066, %v2072
        %s2075 = sld [smem:[#allocation2 + $0xc7]]
        %v2076 = vld [vmem:[%s258] sm:$0xff]
        %v2077 = vstv %s2075
        %v2078 = vmul.f32 %v2077, %v2076
        %v2079 = vadd.f32 %v2074, %v2078
        %s2080 = sld [smem:[#allocation2 + $0xe7]]
        %v2081 = vstv %s2080
        %v2082 = vmul.f32 %v2081, %v2076
        %2084 = vrot.lane.b32.xlu0 %v2082, 127
        %v2085 = vpop.permute.xlu0 %2084
        %v2087 = vadd.f32 %v2079, %v2085
        %s2088 = sld [smem:[#allocation2 + $0x107]]
        %v2089 = vstv %s2088
        %v2090 = vmul.f32 %v2089, %v2076
        %2092 = vrot.lane.b32.xlu0 %v2090, 126
        %v2093 = vpop.permute.xlu0 %2092
        %v2095 = vadd.f32 %v2087, %v2093
        %s2096 = sld [smem:[#allocation2 + $0xf]]
        %v2097 = vld [vmem:[%s281] sm:$0xff]
        %v2098 = vstv %s2096
        %v2099 = vmul.f32 %v2098, %v2097
        %v2100 = vadd.f32 %v2095, %v2099
        %s2101 = sld [smem:[#allocation2 + $0x2f]]
        %v2102 = vstv %s2101
        %v2103 = vmul.f32 %v2102, %v2097
        %2105 = vrot.lane.b32.xlu0 %v2103, 127
        %v2106 = vpop.permute.xlu0 %2105
        %v2108 = vadd.f32 %v2100, %v2106
        %s2109 = sld [smem:[#allocation2 + $0x4f]]
        %v2110 = vstv %s2109
        %v2111 = vmul.f32 %v2110, %v2097
        %2113 = vrot.lane.b32.xlu0 %v2111, 126
        %v2114 = vpop.permute.xlu0 %2113
        %v2116 = vadd.f32 %v2108, %v2114
        %s2117 = sld [smem:[#allocation2 + $0x6f]]
        %v2118 = vld [vmem:[%s304] sm:$0xff]
        %v2119 = vstv %s2117
        %v2120 = vmul.f32 %v2119, %v2118
        %v2121 = vadd.f32 %v2116, %v2120
        %s2122 = sld [smem:[#allocation2 + $0x8f]]
        %v2123 = vstv %s2122
        %v2124 = vmul.f32 %v2123, %v2118
        %2126 = vrot.lane.b32.xlu0 %v2124, 127
        %v2127 = vpop.permute.xlu0 %2126
        %v2129 = vadd.f32 %v2121, %v2127
        %s2130 = sld [smem:[#allocation2 + $0xaf]]
        %v2131 = vstv %s2130
        %v2132 = vmul.f32 %v2131, %v2118
        %2134 = vrot.lane.b32.xlu0 %v2132, 126
        %v2135 = vpop.permute.xlu0 %2134
        %v2137 = vadd.f32 %v2129, %v2135
        %s2138 = sld [smem:[#allocation2 + $0xcf]]
        %v2139 = vld [vmem:[%s327] sm:$0xff]
        %v2140 = vstv %s2138
        %v2141 = vmul.f32 %v2140, %v2139
        %v2142 = vadd.f32 %v2137, %v2141
        %s2143 = sld [smem:[#allocation2 + $0xef]]
        %v2144 = vstv %s2143
        %v2145 = vmul.f32 %v2144, %v2139
        %2147 = vrot.lane.b32.xlu0 %v2145, 127
        %v2148 = vpop.permute.xlu0 %2147
        %v2150 = vadd.f32 %v2142, %v2148
        %s2151 = sld [smem:[#allocation2 + $0x10f]]
        %v2152 = vstv %s2151
        %v2153 = vmul.f32 %v2152, %v2139
        %2155 = vrot.lane.b32.xlu0 %v2153, 126
        %v2156 = vpop.permute.xlu0 %2155
        %v2158 = vadd.f32 %v2150, %v2156
        %s2159 = sld [smem:[#allocation2 + $0x17]]
        %v2160 = vld [vmem:[%s350] sm:$0xff]
        %v2161 = vstv %s2159
        %v2162 = vmul.f32 %v2161, %v2160
        %v2163 = vadd.f32 %v2158, %v2162
        %s2164 = sld [smem:[#allocation2 + $0x37]]
        %v2165 = vstv %s2164
        %v2166 = vmul.f32 %v2165, %v2160
        %2168 = vrot.lane.b32.xlu0 %v2166, 127
        %v2169 = vpop.permute.xlu0 %2168
        %v2171 = vadd.f32 %v2163, %v2169
        %s2172 = sld [smem:[#allocation2 + $0x57]]
        %v2173 = vstv %s2172
        %v2174 = vmul.f32 %v2173, %v2160
        %2176 = vrot.lane.b32.xlu0 %v2174, 126
        %v2177 = vpop.permute.xlu0 %2176
        %v2179 = vadd.f32 %v2171, %v2177
        %s2180 = sld [smem:[#allocation2 + $0x77]]
        %v2181 = vld [vmem:[%s373] sm:$0xff]
        %v2182 = vstv %s2180
        %v2183 = vmul.f32 %v2182, %v2181
        %v2184 = vadd.f32 %v2179, %v2183
        %s2185 = sld [smem:[#allocation2 + $0x97]]
        %v2186 = vstv %s2185
        %v2187 = vmul.f32 %v2186, %v2181
        %2189 = vrot.lane.b32.xlu0 %v2187, 127
        %v2190 = vpop.permute.xlu0 %2189
        %v2192 = vadd.f32 %v2184, %v2190
        %s2193 = sld [smem:[#allocation2 + $0xb7]]
        %v2194 = vstv %s2193
        %v2195 = vmul.f32 %v2194, %v2181
        %2197 = vrot.lane.b32.xlu0 %v2195, 126
        %v2198 = vpop.permute.xlu0 %2197
        %v2200 = vadd.f32 %v2192, %v2198
        %s2201 = sld [smem:[#allocation2 + $0xd7]]
        %v2202 = vld [vmem:[%s396] sm:$0xff]
        %v2203 = vstv %s2201
        %v2204 = vmul.f32 %v2203, %v2202
        %v2205 = vadd.f32 %v2200, %v2204
        %s2206 = sld [smem:[#allocation2 + $0xf7]]
        %v2207 = vstv %s2206
        %v2208 = vmul.f32 %v2207, %v2202
        %2210 = vrot.lane.b32.xlu0 %v2208, 127
        %v2211 = vpop.permute.xlu0 %2210
        %v2213 = vadd.f32 %v2205, %v2211
        %s2214 = sld [smem:[#allocation2 + $0x117]]
        %v2215 = vstv %s2214
        %v2216 = vmul.f32 %v2215, %v2202
        %2218 = vrot.lane.b32.xlu0 %v2216, 126
        %v2219 = vpop.permute.xlu0 %2218
        %v2221 = vadd.f32 %v2213, %v2219
        %s2222 = sld [smem:[#allocation2 + $0x1f]]
        %v2223 = vld [vmem:[%s419] sm:$0xff]
        %v2224 = vstv %s2222
        %v2225 = vmul.f32 %v2224, %v2223
        %v2226 = vadd.f32 %v2221, %v2225
        %s2227 = sld [smem:[#allocation2 + $0x3f]]
        %v2228 = vstv %s2227
        %v2229 = vmul.f32 %v2228, %v2223
        %2231 = vrot.lane.b32.xlu0 %v2229, 127
        %v2232 = vpop.permute.xlu0 %2231
        %v2234 = vadd.f32 %v2226, %v2232
        %s2235 = sld [smem:[#allocation2 + $0x5f]]
        %v2236 = vstv %s2235
        %v2237 = vmul.f32 %v2236, %v2223
        %2239 = vrot.lane.b32.xlu0 %v2237, 126
        %v2240 = vpop.permute.xlu0 %2239
        %v2242 = vadd.f32 %v2234, %v2240
        %s2243 = sld [smem:[#allocation2 + $0x7f]]
        %v2244 = vld [vmem:[%s442] sm:$0xff]
        %v2245 = vstv %s2243
        %v2246 = vmul.f32 %v2245, %v2244
        %v2247 = vadd.f32 %v2242, %v2246
        %s2248 = sld [smem:[#allocation2 + $0x9f]]
        %v2249 = vstv %s2248
        %v2250 = vmul.f32 %v2249, %v2244
        %2252 = vrot.lane.b32.xlu0 %v2250, 127
        %v2253 = vpop.permute.xlu0 %2252
        %v2255 = vadd.f32 %v2247, %v2253
        %s2256 = sld [smem:[#allocation2 + $0xbf]]
        %v2257 = vstv %s2256
        %v2258 = vmul.f32 %v2257, %v2244
        %2260 = vrot.lane.b32.xlu0 %v2258, 126
        %v2261 = vpop.permute.xlu0 %2260
        %v2263 = vadd.f32 %v2255, %v2261
        %s2264 = sld [smem:[#allocation2 + $0xdf]]
        %v2265 = vld [vmem:[%s465] sm:$0xff]
        %v2266 = vstv %s2264
        %v2267 = vmul.f32 %v2266, %v2265
        %v2268 = vadd.f32 %v2263, %v2267
        %s2269 = sld [smem:[#allocation2 + $0xff]]
        %v2270 = vstv %s2269
        %v2271 = vmul.f32 %v2270, %v2265
        %2273 = vrot.lane.b32.xlu0 %v2271, 127
        %v2274 = vpop.permute.xlu0 %2273
        %v2276 = vadd.f32 %v2268, %v2274
        %s2277 = sld [smem:[#allocation2 + $0x11f]]
        %v2278 = vstv %s2277
        %v2279 = vmul.f32 %v2278, %v2265
        %2281 = vrot.lane.b32.xlu0 %v2279, 126
        %v2282 = vpop.permute.xlu0 %2281
        %v2284 = vadd.f32 %v2276, %v2282
        %s2285 = sld [smem:[#allocation5 + $0x7]]
        %v2286 = vstv %s2285
        %v2287 = vadd.f32 %v2284, %v2286
        %s2288 = scalar_lea.vmem %s204, 56 [#allocation7]
        %2289 = vst.msk [vmem:[%s2288] sm:$0xff] %vm489, %v2287
        %s2290 = sand.u32 %s109, 1
        %s2291 = scalar_lea.sflag [#allocation3], %s2290
        %s2292 = sand.u32 %s109, 1
        %s2293 = smul.addr %s2292, 64
        %s2294 = scalar_lea.vmem [#allocation7], %s2293
        // Predicated region
        $region41: #{tpu_custom_call.1} parent=31 // pred_check
          %p2295 = pneg %p119
        $region42: #{tpu_custom_call.1} parent=31 // pred_check_branch
          %2297 = sbr.rel (%p2295) target = $region44
        $region43: #{tpu_custom_call.1} parent=31 // pred_region
          %s2299 = ssub.s32 1024, 1024
          %2300 = vsyncadd %s2291, %s2299
          %s2301 = smul.addr %s23, 8
          %s2302 = sadd.s32 %s24, %s2301
          %s2303 = smul.addr %s2302, 128
          %s2304 = scalar_lea.hbm %s3, %s2303
          %s2305 = sshll.u32 %s2294, 4
          %s2306 = int_to_ptr.vmem [resolvable:$true] %s2305
          %2311 = dma.vmem_to_hbm [thread:$0]  %s2306, 1024, %s2304, %s2291, 128, 128, 8
        $region44: #{tpu_custom_call.1} parent=31 // pred_fallthru
          _
      $region32: #{tpu_custom_call.1} parent=5 // pred_fallthru
        _
      %p2312 = scmp.le.s32.totalorder 2, %s14
      // Predicated region
      $region45: #{tpu_custom_call.1} parent=5 // pred_check
        %p2313 = pneg %p2312
      $region46: #{tpu_custom_call.1} parent=5 // pred_check_branch
        %2315 = sbr.rel (%p2313) target = $region48
      $region47: #{tpu_custom_call.1} parent=5 // pred_region
        %s2316 = ssub.s32 %s14, 2
        // Predicated region
        $region49: #{tpu_custom_call.1} parent=47 // pred_check
          %p2317 = pneg %p125
        $region50: #{tpu_custom_call.1} parent=47 // pred_check_branch
          %2319 = sbr.rel (%p2317) target = $region52
        $region51: #{tpu_custom_call.1} parent=47 // pred_region
          %s2320 = sand.u32 %s110, 1
          %s2321 = scalar_lea.sflag [#allocation3], %s2320
          %s2322 = sand.u32 %s110, 1
          %s2323 = smul.addr %s2322, 64
          %s2324 = scalar_lea.vmem [#allocation7], %s2323
          %2325 = dma.done %s2321, 1024
        $region52: #{tpu_custom_call.1} parent=47 // pred_fallthru
          _
      $region48: #{tpu_custom_call.1} parent=5 // pred_fallthru
        _
    $region6: #{tpu_custom_call.1} parent=1 // loop_footer
      %s18 = sadd.s32 1, %s14
    $region7: #{tpu_custom_call.1} parent=1 // loop_footer_branch
      %13 = sbr.rel target = $region3
    $region8: #{tpu_custom_call.1} parent=1 // loop_exit
      _
    %2326 = vsyncpa [#allocation3], 1
    %s2327 = scalar_lea.sflag [#allocation3], 1
    %2328 = vsyncpa %s2327, 1
    %2329 = vsyncpa [#allocation4], 1
    %s2330 = scalar_lea.sflag [#allocation4], 1
    %2331 = vsyncpa %s2330, 1
    %2332 = vsyncpa [#allocation6], 1

</llo_original>
